<compile_context>
chip_gen: v5e
topology: v5e:2x2
jax: 0.10.0
libtpu: 0.0.40
codegen_flags: <defaults>
</compile_context>

<pallas_src>
import math
import jax
import jax.numpy as jnp
from jax.experimental import pallas as pl
from jax.experimental.pallas import tpu as pltpu

BN_EPS = 1e-5


# ----------------------------------------------------------------------------
# Pallas kernels
# ----------------------------------------------------------------------------
def _asppx_kernel(x_ref, w_ref, sa_ref, ba_ref, sb_ref, bb_ref, o_ref):
    # 1x1 conv (as bf16 matmul, f32 accumulate) + BN + ReLU + bn2 + ReLU fused.
    y = jnp.dot(x_ref[...], w_ref[...], preferred_element_type=jnp.float32)
    y = jnp.maximum(y * sa_ref[...] + ba_ref[...], 0.0)
    y = jnp.maximum(y * sb_ref[...] + bb_ref[...], 0.0)
    o_ref[...] = y.astype(o_ref.dtype)


def asppx_fused(x, w, sa, ba, sb, bb, tm=256):
    """relu(bn2(relu(bn(x @ w)))) ; x:(M,K) bf16, w:(K,Cout) bf16 -> (M,Cout) bf16."""
    M, K = x.shape
    Kw, N = w.shape
    assert K == Kw
    if M % tm != 0:
        tm = M
    return pl.pallas_call(
        _asppx_kernel,
        out_shape=jax.ShapeDtypeStruct((M, N), jnp.bfloat16),
        grid_spec=pltpu.PrefetchScalarGridSpec(
            num_scalar_prefetch=0,
            grid=(M // tm,),
            in_specs=[
                pl.BlockSpec((tm, K), lambda i: (i, 0)),
                pl.BlockSpec((K, N), lambda i: (0, 0)),
                pl.BlockSpec((1, N), lambda i: (0, 0)),
                pl.BlockSpec((1, N), lambda i: (0, 0)),
                pl.BlockSpec((1, N), lambda i: (0, 0)),
                pl.BlockSpec((1, N), lambda i: (0, 0)),
            ],
            out_specs=pl.BlockSpec((tm, N), lambda i: (i, 0)),
        ),
        compiler_params=pltpu.CompilerParams(dimension_semantics=("parallel",)),
    )(x, w, sa, ba, sb, bb)


def _aspp_fused_kernel(xx_ref, p2_ref, p3_ref, p4_ref, x5_ref,
                       w1_ref, w2_ref, w3_ref, w4_ref,
                       c1_ref, c2_ref, c3_ref, c4_ref, c5_ref,
                       scb_ref, bcb_ref, sc1_ref, bc1_ref, o_ref):
    # All four xx-branches (conv-as-matmul + BN + ReLU) plus the concat-folded
    # conv1 accumulation and bn1 + ReLU, fully fused.  Branch intermediates
    # x1..x4 never leave VMEM; MXU runs in bf16 with f32 accumulation.
    def branch(p, w_ref):
        y = jnp.dot(p, w_ref[...], preferred_element_type=jnp.float32)
        y = jnp.maximum(y * scb_ref[...] + bcb_ref[...], 0.0)   # BN(eval) + ReLU, f32
        return y.astype(jnp.bfloat16)

    x1 = branch(xx_ref[...], w1_ref)        # aspp1: 1x1 conv 64->256
    x2 = branch(p2_ref[...], w2_ref)        # aspp2: dilated 3x3 (d=6)
    x3 = branch(p3_ref[...], w3_ref)        # aspp3: dilated 3x3 (d=10)
    x4 = branch(p4_ref[...], w4_ref)        # aspp4: dilated 3x3 (d=16)

    # conv1 with the duplicated concat folded into per-branch weight slices.
    acc = jnp.dot(x1, c1_ref[...], preferred_element_type=jnp.float32)
    acc = acc + jnp.dot(x2, c2_ref[...], preferred_element_type=jnp.float32)
    acc = acc + jnp.dot(x3, c3_ref[...], preferred_element_type=jnp.float32)
    acc = acc + jnp.dot(x4, c4_ref[...], preferred_element_type=jnp.float32)
    acc = acc + jnp.dot(x5_ref[...], c5_ref[...], preferred_element_type=jnp.float32)

    o_ref[...] = jnp.maximum(acc * sc1_ref[...] + bc1_ref[...], 0.0)   # bn1 + relu


def aspp_branches_fused(xx, p2, p3, p4, x5, w1, w2, w3, w4,
                        c1, c2, c3, c4, c5, scb, bcb, sc1, bc1, tm=256):
    M = xx.shape[0]
    Cout = c1.shape[1]
    if M % tm != 0:
        tm = M
    grid = (M // tm,)

    def row_spec(arr):
        k = arr.shape[1]
        return pl.BlockSpec((tm, k), lambda i: (i, 0))

    def full_spec(arr):
        r, c = arr.shape
        return pl.BlockSpec((r, c), lambda i: (0, 0))

    in_specs = ([row_spec(a) for a in (xx, p2, p3, p4, x5)]
                + [full_spec(a) for a in (w1, w2, w3, w4,
                                          c1, c2, c3, c4, c5,
                                          scb, bcb, sc1, bc1)])

    return pl.pallas_call(
        _aspp_fused_kernel,
        out_shape=jax.ShapeDtypeStruct((M, Cout), jnp.float32),
        grid_spec=pltpu.PrefetchScalarGridSpec(
            num_scalar_prefetch=0,
            grid=grid,
            in_specs=in_specs,
            out_specs=pl.BlockSpec((tm, Cout), lambda i: (i, 0)),
        ),
        compiler_params=pltpu.CompilerParams(dimension_semantics=("parallel",)),
    )(xx, p2, p3, p4, x5, w1, w2, w3, w4, c1, c2, c3, c4, c5, scb, bcb, sc1, bc1)


# ----------------------------------------------------------------------------
# Glue: parameters, im2col (tap-pruned), adaptive pool, bilinear upsample
# ----------------------------------------------------------------------------
def kaiming_conv_weight(key, cout, cin, kh, kw):
    fan_in = cin * kh * kw
    std = math.sqrt(2.0 / fan_in)   # kaiming_normal_ default
    return jax.random.normal(key, (cout, cin, kh, kw), jnp.float32) * std


def conv1x1_to_mat(w):
    # (Cout, Cin, 1, 1) -> (Cin, Cout)
    return jnp.transpose(w[:, :, 0, 0], (1, 0))


def conv3x3_to_mat(w):
    # (Cout, Cin, 3, 3) -> (9*Cin, Cout), row order (ky, kx, cin) to match im2col
    return jnp.transpose(w, (2, 3, 1, 0)).reshape(-1, w.shape[0])


def bn_scale_bias(c):
    # gamma=1, beta=0, running_mean=0, running_var=1 (fresh BN, eval mode)
    scale = jnp.full((1, c), 1.0 / math.sqrt(1.0 + BN_EPS), jnp.float32)
    bias = jnp.zeros((1, c), jnp.float32)
    return scale, bias


def dilated_patches_and_weight(x_nhwc, w_mat_full, d):
    """im2col for a 3x3 conv with dilation=padding=d (same spatial size).

    Taps whose offset lies entirely outside the map (|offset| >= H or W) read
    only zero padding, so both the tap and its weight rows are dropped — a
    bit-identical simplification (e.g. d=16 on a 16x16 map -> center tap only).
    Returns (patches (N*H*W, K_kept*C), weight (K_kept*C, Cout)).
    """
    N, H, W, C = x_nhwc.shape
    cols, wrows = [], []
    for ky in range(3):
        for kx in range(3):
            oy, ox = (ky - 1) * d, (kx - 1) * d
            if abs(oy) >= H or abs(ox) >= W:
                continue
            y0, y1 = max(0, -oy), min(H, H - oy)
            x0, x1 = max(0, -ox), min(W, W - ox)
            core = x_nhwc[:, y0 + oy:y1 + oy, x0 + ox:x1 + ox, :]
            cols.append(jnp.pad(core, ((0, 0), (y0, H - y1), (x0, W - x1), (0, 0))))
            t = ky * 3 + kx
            wrows.append(w_mat_full[t * C:(t + 1) * C])
    patches = jnp.concatenate(cols, axis=-1).reshape(N * H * W, len(cols) * C)
    weight = jnp.concatenate(wrows, axis=0)
    return patches, weight


def adaptive_avg_pool_3x3(x_nhwc):
    """PyTorch AdaptiveAvgPool2d((3,3)) semantics."""
    N, H, W, C = x_nhwc.shape

    def bounds(size):
        starts = [(i * size) // 3 for i in range(3)]
        ends = [-(-((i + 1) * size) // 3) for i in range(3)]   # ceil
        return starts, ends

    ys, ye = bounds(H)
    xs, xe = bounds(W)
    rows = []
    for i in range(3):
        row = []
        for j in range(3):
            region = x_nhwc[:, ys[i]:ye[i], xs[j]:xe[j], :]
            row.append(jnp.mean(region, axis=(1, 2)))
        rows.append(jnp.stack(row, axis=1))
    return jnp.stack(rows, axis=1)   # (N, 3, 3, C)


def bilinear_weight_matrix(out_size, in_size=3):
    """align_corners=True interpolation weights, (out_size, in_size)."""
    if out_size == 1:
        return jnp.eye(1, in_size, dtype=jnp.float32)
    src = jnp.arange(out_size, dtype=jnp.float32) * (in_size - 1) / (out_size - 1)
    i0 = jnp.clip(jnp.floor(src).astype(jnp.int32), 0, in_size - 2)
    frac = src - i0.astype(jnp.float32)
    Wm = jnp.zeros((out_size, in_size), jnp.float32)
    idx = jnp.arange(out_size)
    Wm = Wm.at[idx, i0].add(1.0 - frac)
    Wm = Wm.at[idx, i0 + 1].add(frac)
    return Wm


def make_params(key, inplanes=512):
    ks = jax.random.split(key, 7)
    p = {}
    p["asppx_w"] = conv1x1_to_mat(kaiming_conv_weight(ks[0], 64, inplanes, 1, 1))
    p["aspp1_w"] = conv1x1_to_mat(kaiming_conv_weight(ks[1], 256, 64, 1, 1))
    p["aspp2_w"] = conv3x3_to_mat(kaiming_conv_weight(ks[2], 256, 64, 3, 3))
    p["aspp3_w"] = conv3x3_to_mat(kaiming_conv_weight(ks[3], 256, 64, 3, 3))
    p["aspp4_w"] = conv3x3_to_mat(kaiming_conv_weight(ks[4], 256, 64, 3, 3))
    p["gap_w"] = conv1x1_to_mat(kaiming_conv_weight(ks[5], 256, inplanes, 1, 1))
    p["conv1_w"] = conv1x1_to_mat(kaiming_conv_weight(ks[6], 256, 2048, 1, 1))
    p["sc64"], p["b64"] = bn_scale_bias(64)
    p["sc256"], p["b256"] = bn_scale_bias(256)
    return p


# ----------------------------------------------------------------------------
# ASPP forward (output_stride=16 -> dilations [1, 6, 10, 16], inplanes=512)
# ----------------------------------------------------------------------------
def aspp_forward(params, x_nchw):
    N, Cin, H, W = x_nchw.shape
    d2, d3, d4 = 6, 10, 16
    M = N * H * W
    bf16 = jnp.bfloat16

    x_nhwc = jnp.transpose(x_nchw, (0, 2, 3, 1)).astype(jnp.float32)

    # asppx: 1x1 conv 512->64 + BN + ReLU + bn2 + ReLU (single fused kernel).
    # All branch BNs / bn1 / bn2 share identical eval-mode params under the
    # module's _init_weight (gamma=1, beta=0, fresh running stats).
    xx = asppx_fused(x_nhwc.reshape(M, Cin).astype(bf16),
                     params["asppx_w"].astype(bf16),
                     params["sc64"], params["b64"], params["sc64"], params["b64"])
    xx_nhwc = xx.reshape(N, H, W, 64)

    # Dilated-branch patches (im2col with fully-out-of-bounds taps dropped).
    p2, w2 = dilated_patches_and_weight(xx_nhwc, params["aspp2_w"], d2)
    p3, w3 = dilated_patches_and_weight(xx_nhwc, params["aspp3_w"], d3)
    p4, w4 = dilated_patches_and_weight(xx_nhwc, params["aspp4_w"], d4)

    # global_avg_pool branch in plain XLA (18-row matmul is below launch scale):
    # AdaptiveAvgPool2d((3,3)) -> 1x1 conv -> BN -> ReLU -> bilinear upsample.
    pooled = adaptive_avg_pool_3x3(x_nhwc).reshape(N * 9, Cin)
    g = jnp.dot(pooled, params["gap_w"])
    g = jnp.maximum(g * params["sc256"] + params["b256"], 0.0).reshape(N, 3, 3, 256)
    Wy = bilinear_weight_matrix(H)
    Wx = bilinear_weight_matrix(W)
    x5 = jnp.einsum("yi,nijc,xj->nyxc", Wy, g, Wx).reshape(M, 256)

    # Fold the duplicated concat [x1,x2,x2,x3,x2,x3,x4,x5] into conv1 slices.
    Wc = params["conv1_w"]                     # (2048, 256)
    blk = lambda k: Wc[256 * k:256 * (k + 1)]
    c1 = blk(0)
    c2 = blk(1) + blk(2) + blk(4)
    c3 = blk(3) + blk(5)
    c4 = blk(6)
    c5 = blk(7)

    out = aspp_branches_fused(
        xx, p2, p3, p4, x5.astype(bf16),
        params["aspp1_w"].astype(bf16), w2.astype(bf16),
        w3.astype(bf16), w4.astype(bf16),
        c1.astype(bf16), c2.astype(bf16), c3.astype(bf16),
        c4.astype(bf16), c5.astype(bf16),
        params["sc256"], params["b256"],      # branch BN (eval)
        params["sc256"], params["b256"])      # bn1 (eval)

    # TODO(synk): dropout(0.5) is identity here (inference mode); training-mode
    # stochastic masking not implemented.
    return jnp.transpose(out.reshape(N, H, W, 256), (0, 3, 1, 2))   # NCHW


if __name__ == "__main__":
    key = jax.random.PRNGKey(0)
    k_param, k_input = jax.random.split(key)

    N, C, H, W = 2, 512, 16, 16            # inplanes=512 (non-drn/mobilenet backbone)
    x = jax.random.normal(k_input, (N, C, H, W), jnp.float32)

    params = make_params(k_param, inplanes=C)
    fwd = jax.jit(aspp_forward)
    out = fwd(params, x)
    out = jax.block_until_ready(out)

    assert out.shape == (N, 256, H, W), out.shape
    assert bool(jnp.all(jnp.isfinite(out)))
    print("KERNEL_OK")
</pallas_src>

<mosaic_0001>
module attributes {stable_mosaic.version = 11 : i64} {
  func.func @_asppx_kernel(%arg0: i32, %arg1: memref<256x512xbf16, #tpu.memory_space<vmem>>, %arg2: memref<512x64xbf16, #tpu.memory_space<vmem>>, %arg3: memref<1x64xf32, #tpu.memory_space<vmem>>, %arg4: memref<1x64xf32, #tpu.memory_space<vmem>>, %arg5: memref<1x64xf32, #tpu.memory_space<vmem>>, %arg6: memref<1x64xf32, #tpu.memory_space<vmem>>, %arg7: memref<256x64xbf16, #tpu.memory_space<vmem>>) attributes {dimension_semantics = [#tpu.dimension_semantics<parallel>], iteration_bounds = array<i64: 2>, scalar_prefetch = 0 : i64, scratch_operands = 0 : i64, tpu.core_type = #tpu.core_type<tc>, window_params = [{transform_indices = @transform_0, window_bounds = array<i64: 256, 512>}, {pipeline_mode = #tpu.pipeline_mode<synchronous>, transform_indices = @transform_1, window_bounds = array<i64: 512, 64>}, {pipeline_mode = #tpu.pipeline_mode<synchronous>, transform_indices = @transform_2, window_bounds = array<i64: 1, 64>}, {pipeline_mode = #tpu.pipeline_mode<synchronous>, transform_indices = @transform_3, window_bounds = array<i64: 1, 64>}, {pipeline_mode = #tpu.pipeline_mode<synchronous>, transform_indices = @transform_4, window_bounds = array<i64: 1, 64>}, {pipeline_mode = #tpu.pipeline_mode<synchronous>, transform_indices = @transform_5, window_bounds = array<i64: 1, 64>}, {transform_indices = @transform_6, window_bounds = array<i64: 256, 64>}]} {
    %c0 = arith.constant 0 : index
    %c0_0 = arith.constant 0 : index
    %0 = vector.load %arg1[%c0, %c0_0] : memref<256x512xbf16, #tpu.memory_space<vmem>>, vector<256x512xbf16>
    %c0_1 = arith.constant 0 : index
    %c0_2 = arith.constant 0 : index
    %1 = vector.load %arg2[%c0_1, %c0_2] : memref<512x64xbf16, #tpu.memory_space<vmem>>, vector<512x64xbf16>
    %cst = arith.constant dense<0.000000e+00> : vector<256x64xf32>
    %2 = tpu.matmul %0, %1, %cst {dimension_numbers = #tpu.dot_dimension_numbers<[1], [0], [0], [1], [0, 0, 1, 1], [], []>} : vector<256x512xbf16>, vector<512x64xbf16>, vector<256x64xf32> -> vector<256x64xf32>
    %c0_3 = arith.constant 0 : index
    %c0_4 = arith.constant 0 : index
    %3 = vector.load %arg3[%c0_3, %c0_4] : memref<1x64xf32, #tpu.memory_space<vmem>>, vector<1x64xf32>
    %4 = vector.broadcast %3 : vector<1x64xf32> to vector<256x64xf32>
    %5 = arith.mulf %2, %4 : vector<256x64xf32>
    %c0_5 = arith.constant 0 : index
    %c0_6 = arith.constant 0 : index
    %6 = vector.load %arg4[%c0_5, %c0_6] : memref<1x64xf32, #tpu.memory_space<vmem>>, vector<1x64xf32>
    %7 = vector.broadcast %6 : vector<1x64xf32> to vector<256x64xf32>
    %8 = arith.addf %5, %7 : vector<256x64xf32>
    %cst_7 = arith.constant 0.000000e+00 : f32
    %9 = vector.broadcast %cst_7 : f32 to vector<256x64xf32>
    %10 = arith.maximumf %8, %9 : vector<256x64xf32>
    %c0_8 = arith.constant 0 : index
    %c0_9 = arith.constant 0 : index
    %11 = vector.load %arg5[%c0_8, %c0_9] : memref<1x64xf32, #tpu.memory_space<vmem>>, vector<1x64xf32>
    %12 = vector.broadcast %11 : vector<1x64xf32> to vector<256x64xf32>
    %13 = arith.mulf %10, %12 : vector<256x64xf32>
    %c0_10 = arith.constant 0 : index
    %c0_11 = arith.constant 0 : index
    %14 = vector.load %arg6[%c0_10, %c0_11] : memref<1x64xf32, #tpu.memory_space<vmem>>, vector<1x64xf32>
    %15 = vector.broadcast %14 : vector<1x64xf32> to vector<256x64xf32>
    %16 = arith.addf %13, %15 : vector<256x64xf32>
    %cst_12 = arith.constant 0.000000e+00 : f32
    %17 = vector.broadcast %cst_12 : f32 to vector<256x64xf32>
    %18 = arith.maximumf %16, %17 : vector<256x64xf32>
    %19 = arith.truncf %18 : vector<256x64xf32> to vector<256x64xbf16>
    %c0_13 = arith.constant 0 : index
    %c0_14 = arith.constant 0 : index
    %20 = vector.load %arg7[%c0_13, %c0_14] : memref<256x64xbf16, #tpu.memory_space<vmem>>, vector<256x64xbf16>
    tpu.vector_store %arg7[%c0_13, %c0_14], %19 {strides = array<i32>} : memref<256x64xbf16, #tpu.memory_space<vmem>>, vector<256x64xbf16>,
    return
  }
  func.func @transform_0(%arg0: i32) -> (i32, i32) {
    %c0_i32 = arith.constant 0 : i32
    %c0_i32_0 = arith.constant 0 : i32
    return %arg0, %c0_i32 : i32, i32
  }
  func.func @transform_1(%arg0: i32) -> (i32, i32) {
    %c0_i32 = arith.constant 0 : i32
    %c0_i32_0 = arith.constant 0 : i32
    %c0_i32_1 = arith.constant 0 : i32
    return %c0_i32, %c0_i32_0 : i32, i32
  }
  func.func @transform_2(%arg0: i32) -> (i32, i32) {
    %c0_i32 = arith.constant 0 : i32
    %c0_i32_0 = arith.constant 0 : i32
    %c0_i32_1 = arith.constant 0 : i32
    return %c0_i32, %c0_i32_0 : i32, i32
  }
  func.func @transform_3(%arg0: i32) -> (i32, i32) {
    %c0_i32 = arith.constant 0 : i32
    %c0_i32_0 = arith.constant 0 : i32
    %c0_i32_1 = arith.constant 0 : i32
    return %c0_i32, %c0_i32_0 : i32, i32
  }
  func.func @transform_4(%arg0: i32) -> (i32, i32) {
    %c0_i32 = arith.constant 0 : i32
    %c0_i32_0 = arith.constant 0 : i32
    %c0_i32_1 = arith.constant 0 : i32
    return %c0_i32, %c0_i32_0 : i32, i32
  }
  func.func @transform_5(%arg0: i32) -> (i32, i32) {
    %c0_i32 = arith.constant 0 : i32
    %c0_i32_0 = arith.constant 0 : i32
    %c0_i32_1 = arith.constant 0 : i32
    return %c0_i32, %c0_i32_0 : i32, i32
  }
  func.func @transform_6(%arg0: i32) -> (i32, i32) {
    %c0_i32 = arith.constant 0 : i32
    %c0_i32_0 = arith.constant 0 : i32
    return %arg0, %c0_i32 : i32, i32
  }
}

module attributes {stable_mosaic.version = 11 : i64} {
  func.func @_aspp_fused_kernel(%arg0: i32, %arg1: memref<256x64xbf16, #tpu.memory_space<vmem>>, %arg2: memref<256x576xbf16, #tpu.memory_space<vmem>>, %arg3: memref<256x576xbf16, #tpu.memory_space<vmem>>, %arg4: memref<256x64xbf16, #tpu.memory_space<vmem>>, %arg5: memref<256x256xbf16, #tpu.memory_space<vmem>>, %arg6: memref<64x256xbf16, #tpu.memory_space<vmem>>, %arg7: memref<576x256xbf16, #tpu.memory_space<vmem>>, %arg8: memref<576x256xbf16, #tpu.memory_space<vmem>>, %arg9: memref<64x256xbf16, #tpu.memory_space<vmem>>, %arg10: memref<256x256xbf16, #tpu.memory_space<vmem>>, %arg11: memref<256x256xbf16, #tpu.memory_space<vmem>>, %arg12: memref<256x256xbf16, #tpu.memory_space<vmem>>, %arg13: memref<256x256xbf16, #tpu.memory_space<vmem>>, %arg14: memref<256x256xbf16, #tpu.memory_space<vmem>>, %arg15: memref<1x256xf32, #tpu.memory_space<vmem>>, %arg16: memref<1x256xf32, #tpu.memory_space<vmem>>, %arg17: memref<1x256xf32, #tpu.memory_space<vmem>>, %arg18: memref<1x256xf32, #tpu.memory_space<vmem>>, %arg19: memref<256x256xf32, #tpu.memory_space<vmem>>) attributes {dimension_semantics = [#tpu.dimension_semantics<parallel>], iteration_bounds = array<i64: 2>, scalar_prefetch = 0 : i64, scratch_operands = 0 : i64, tpu.core_type = #tpu.core_type<tc>, window_params = [{transform_indices = @transform_0, window_bounds = array<i64: 256, 64>}, {transform_indices = @transform_1, window_bounds = array<i64: 256, 576>}, {transform_indices = @transform_2, window_bounds = array<i64: 256, 576>}, {transform_indices = @transform_3, window_bounds = array<i64: 256, 64>}, {transform_indices = @transform_4, window_bounds = array<i64: 256, 256>}, {pipeline_mode = #tpu.pipeline_mode<synchronous>, transform_indices = @transform_5, window_bounds = array<i64: 64, 256>}, {pipeline_mode = #tpu.pipeline_mode<synchronous>, transform_indices = @transform_6, window_bounds = array<i64: 576, 256>}, {pipeline_mode = #tpu.pipeline_mode<synchronous>, transform_indices = @transform_7, window_bounds = array<i64: 576, 256>}, {pipeline_mode = #tpu.pipeline_mode<synchronous>, transform_indices = @transform_8, window_bounds = array<i64: 64, 256>}, {pipeline_mode = #tpu.pipeline_mode<synchronous>, transform_indices = @transform_9, window_bounds = array<i64: 256, 256>}, {pipeline_mode = #tpu.pipeline_mode<synchronous>, transform_indices = @transform_10, window_bounds = array<i64: 256, 256>}, {pipeline_mode = #tpu.pipeline_mode<synchronous>, transform_indices = @transform_11, window_bounds = array<i64: 256, 256>}, {pipeline_mode = #tpu.pipeline_mode<synchronous>, transform_indices = @transform_12, window_bounds = array<i64: 256, 256>}, {pipeline_mode = #tpu.pipeline_mode<synchronous>, transform_indices = @transform_13, window_bounds = array<i64: 256, 256>}, {pipeline_mode = #tpu.pipeline_mode<synchronous>, transform_indices = @transform_14, window_bounds = array<i64: 1, 256>}, {pipeline_mode = #tpu.pipeline_mode<synchronous>, transform_indices = @transform_15, window_bounds = array<i64: 1, 256>}, {pipeline_mode = #tpu.pipeline_mode<synchronous>, transform_indices = @transform_16, window_bounds = array<i64: 1, 256>}, {pipeline_mode = #tpu.pipeline_mode<synchronous>, transform_indices = @transform_17, window_bounds = array<i64: 1, 256>}, {transform_indices = @transform_18, window_bounds = array<i64: 256, 256>}]} {
    %c0 = arith.constant 0 : index
    %c0_0 = arith.constant 0 : index
    %0 = vector.load %arg1[%c0, %c0_0] : memref<256x64xbf16, #tpu.memory_space<vmem>>, vector<256x64xbf16>
    %c0_1 = arith.constant 0 : index
    %c0_2 = arith.constant 0 : index
    %1 = vector.load %arg6[%c0_1, %c0_2] : memref<64x256xbf16, #tpu.memory_space<vmem>>, vector<64x256xbf16>
    %cst = arith.constant dense<0.000000e+00> : vector<256x256xf32>
    %2 = tpu.matmul %0, %1, %cst {dimension_numbers = #tpu.dot_dimension_numbers<[1], [0], [0], [1], [0, 0, 1, 1], [], []>} : vector<256x64xbf16>, vector<64x256xbf16>, vector<256x256xf32> -> vector<256x256xf32>
    %c0_3 = arith.constant 0 : index
    %c0_4 = arith.constant 0 : index
    %3 = vector.load %arg15[%c0_3, %c0_4] : memref<1x256xf32, #tpu.memory_space<vmem>>, vector<1x256xf32>
    %4 = vector.broadcast %3 : vector<1x256xf32> to vector<256x256xf32>
    %5 = arith.mulf %2, %4 : vector<256x256xf32>
    %c0_5 = arith.constant 0 : index
    %c0_6 = arith.constant 0 : index
    %6 = vector.load %arg16[%c0_5, %c0_6] : memref<1x256xf32, #tpu.memory_space<vmem>>, vector<1x256xf32>
    %7 = vector.broadcast %6 : vector<1x256xf32> to vector<256x256xf32>
    %8 = arith.addf %5, %7 : vector<256x256xf32>
    %cst_7 = arith.constant 0.000000e+00 : f32
    %9 = vector.broadcast %cst_7 : f32 to vector<256x256xf32>
    %10 = arith.maximumf %8, %9 : vector<256x256xf32>
    %11 = arith.truncf %10 : vector<256x256xf32> to vector<256x256xbf16>
    %c0_8 = arith.constant 0 : index
    %c0_9 = arith.constant 0 : index
    %12 = vector.load %arg2[%c0_8, %c0_9] : memref<256x576xbf16, #tpu.memory_space<vmem>>, vector<256x576xbf16>
    %c0_10 = arith.constant 0 : index
    %c0_11 = arith.constant 0 : index
    %13 = vector.load %arg7[%c0_10, %c0_11] : memref<576x256xbf16, #tpu.memory_space<vmem>>, vector<576x256xbf16>
    %cst_12 = arith.constant dense<0.000000e+00> : vector<256x256xf32>
    %14 = tpu.matmul %12, %13, %cst_12 {dimension_numbers = #tpu.dot_dimension_numbers<[1], [0], [0], [1], [0, 0, 1, 1], [], []>} : vector<256x576xbf16>, vector<576x256xbf16>, vector<256x256xf32> -> vector<256x256xf32>
    %c0_13 = arith.constant 0 : index
    %c0_14 = arith.constant 0 : index
    %15 = vector.load %arg15[%c0_13, %c0_14] : memref<1x256xf32, #tpu.memory_space<vmem>>, vector<1x256xf32>
    %16 = vector.broadcast %15 : vector<1x256xf32> to vector<256x256xf32>
    %17 = arith.mulf %14, %16 : vector<256x256xf32>
    %c0_15 = arith.constant 0 : index
    %c0_16 = arith.constant 0 : index
    %18 = vector.load %arg16[%c0_15, %c0_16] : memref<1x256xf32, #tpu.memory_space<vmem>>, vector<1x256xf32>
    %19 = vector.broadcast %18 : vector<1x256xf32> to vector<256x256xf32>
    %20 = arith.addf %17, %19 : vector<256x256xf32>
    %cst_17 = arith.constant 0.000000e+00 : f32
    %21 = vector.broadcast %cst_17 : f32 to vector<256x256xf32>
    %22 = arith.maximumf %20, %21 : vector<256x256xf32>
    %23 = arith.truncf %22 : vector<256x256xf32> to vector<256x256xbf16>
    %c0_18 = arith.constant 0 : index
    %c0_19 = arith.constant 0 : index
    %24 = vector.load %arg3[%c0_18, %c0_19] : memref<256x576xbf16, #tpu.memory_space<vmem>>, vector<256x576xbf16>
    %c0_20 = arith.constant 0 : index
    %c0_21 = arith.constant 0 : index
    %25 = vector.load %arg8[%c0_20, %c0_21] : memref<576x256xbf16, #tpu.memory_space<vmem>>, vector<576x256xbf16>
    %cst_22 = arith.constant dense<0.000000e+00> : vector<256x256xf32>
    %26 = tpu.matmul %24, %25, %cst_22 {dimension_numbers = #tpu.dot_dimension_numbers<[1], [0], [0], [1], [0, 0, 1, 1], [], []>} : vector<256x576xbf16>, vector<576x256xbf16>, vector<256x256xf32> -> vector<256x256xf32>
    %c0_23 = arith.constant 0 : index
    %c0_24 = arith.constant 0 : index
    %27 = vector.load %arg15[%c0_23, %c0_24] : memref<1x256xf32, #tpu.memory_space<vmem>>, vector<1x256xf32>
    %28 = vector.broadcast %27 : vector<1x256xf32> to vector<256x256xf32>
    %29 = arith.mulf %26, %28 : vector<256x256xf32>
    %c0_25 = arith.constant 0 : index
    %c0_26 = arith.constant 0 : index
    %30 = vector.load %arg16[%c0_25, %c0_26] : memref<1x256xf32, #tpu.memory_space<vmem>>, vector<1x256xf32>
    %31 = vector.broadcast %30 : vector<1x256xf32> to vector<256x256xf32>
    %32 = arith.addf %29, %31 : vector<256x256xf32>
    %cst_27 = arith.constant 0.000000e+00 : f32
    %33 = vector.broadcast %cst_27 : f32 to vector<256x256xf32>
    %34 = arith.maximumf %32, %33 : vector<256x256xf32>
    %35 = arith.truncf %34 : vector<256x256xf32> to vector<256x256xbf16>
    %c0_28 = arith.constant 0 : index
    %c0_29 = arith.constant 0 : index
    %36 = vector.load %arg4[%c0_28, %c0_29] : memref<256x64xbf16, #tpu.memory_space<vmem>>, vector<256x64xbf16>
    %c0_30 = arith.constant 0 : index
    %c0_31 = arith.constant 0 : index
    %37 = vector.load %arg9[%c0_30, %c0_31] : memref<64x256xbf16, #tpu.memory_space<vmem>>, vector<64x256xbf16>
    %cst_32 = arith.constant dense<0.000000e+00> : vector<256x256xf32>
    %38 = tpu.matmul %36, %37, %cst_32 {dimension_numbers = #tpu.dot_dimension_numbers<[1], [0], [0], [1], [0, 0, 1, 1], [], []>} : vector<256x64xbf16>, vector<64x256xbf16>, vector<256x256xf32> -> vector<256x256xf32>
    %c0_33 = arith.constant 0 : index
    %c0_34 = arith.constant 0 : index
    %39 = vector.load %arg15[%c0_33, %c0_34] : memref<1x256xf32, #tpu.memory_space<vmem>>, vector<1x256xf32>
    %40 = vector.broadcast %39 : vector<1x256xf32> to vector<256x256xf32>
    %41 = arith.mulf %38, %40 : vector<256x256xf32>
    %c0_35 = arith.constant 0 : index
    %c0_36 = arith.constant 0 : index
    %42 = vector.load %arg16[%c0_35, %c0_36] : memref<1x256xf32, #tpu.memory_space<vmem>>, vector<1x256xf32>
    %43 = vector.broadcast %42 : vector<1x256xf32> to vector<256x256xf32>
    %44 = arith.addf %41, %43 : vector<256x256xf32>
    %cst_37 = arith.constant 0.000000e+00 : f32
    %45 = vector.broadcast %cst_37 : f32 to vector<256x256xf32>
    %46 = arith.maximumf %44, %45 : vector<256x256xf32>
    %47 = arith.truncf %46 : vector<256x256xf32> to vector<256x256xbf16>
    %c0_38 = arith.constant 0 : index
    %c0_39 = arith.constant 0 : index
    %48 = vector.load %arg10[%c0_38, %c0_39] : memref<256x256xbf16, #tpu.memory_space<vmem>>, vector<256x256xbf16>
    %cst_40 = arith.constant dense<0.000000e+00> : vector<256x256xf32>
    %49 = tpu.matmul %11, %48, %cst_40 {dimension_numbers = #tpu.dot_dimension_numbers<[1], [0], [0], [1], [0, 0, 1, 1], [], []>} : vector<256x256xbf16>, vector<256x256xbf16>, vector<256x256xf32> -> vector<256x256xf32>
    %c0_41 = arith.constant 0 : index
    %c0_42 = arith.constant 0 : index
    %50 = vector.load %arg11[%c0_41, %c0_42] : memref<256x256xbf16, #tpu.memory_space<vmem>>, vector<256x256xbf16>
    %cst_43 = arith.constant dense<0.000000e+00> : vector<256x256xf32>
    %51 = tpu.matmul %23, %50, %cst_43 {dimension_numbers = #tpu.dot_dimension_numbers<[1], [0], [0], [1], [0, 0, 1, 1], [], []>} : vector<256x256xbf16>, vector<256x256xbf16>, vector<256x256xf32> -> vector<256x256xf32>
    %52 = arith.addf %49, %51 : vector<256x256xf32>
    %c0_44 = arith.constant 0 : index
    %c0_45 = arith.constant 0 : index
    %53 = vector.load %arg12[%c0_44, %c0_45] : memref<256x256xbf16, #tpu.memory_space<vmem>>, vector<256x256xbf16>
    %cst_46 = arith.constant dense<0.000000e+00> : vector<256x256xf32>
    %54 = tpu.matmul %35, %53, %cst_46 {dimension_numbers = #tpu.dot_dimension_numbers<[1], [0], [0], [1], [0, 0, 1, 1], [], []>} : vector<256x256xbf16>, vector<256x256xbf16>, vector<256x256xf32> -> vector<256x256xf32>
    %55 = arith.addf %52, %54 : vector<256x256xf32>
    %c0_47 = arith.constant 0 : index
    %c0_48 = arith.constant 0 : index
    %56 = vector.load %arg13[%c0_47, %c0_48] : memref<256x256xbf16, #tpu.memory_space<vmem>>, vector<256x256xbf16>
    %cst_49 = arith.constant dense<0.000000e+00> : vector<256x256xf32>
    %57 = tpu.matmul %47, %56, %cst_49 {dimension_numbers = #tpu.dot_dimension_numbers<[1], [0], [0], [1], [0, 0, 1, 1], [], []>} : vector<256x256xbf16>, vector<256x256xbf16>, vector<256x256xf32> -> vector<256x256xf32>
    %58 = arith.addf %55, %57 : vector<256x256xf32>
    %c0_50 = arith.constant 0 : index
    %c0_51 = arith.constant 0 : index
    %59 = vector.load %arg5[%c0_50, %c0_51] : memref<256x256xbf16, #tpu.memory_space<vmem>>, vector<256x256xbf16>
    %c0_52 = arith.constant 0 : index
    %c0_53 = arith.constant 0 : index
    %60 = vector.load %arg14[%c0_52, %c0_53] : memref<256x256xbf16, #tpu.memory_space<vmem>>, vector<256x256xbf16>
    %cst_54 = arith.constant dense<0.000000e+00> : vector<256x256xf32>
    %61 = tpu.matmul %59, %60, %cst_54 {dimension_numbers = #tpu.dot_dimension_numbers<[1], [0], [0], [1], [0, 0, 1, 1], [], []>} : vector<256x256xbf16>, vector<256x256xbf16>, vector<256x256xf32> -> vector<256x256xf32>
    %62 = arith.addf %58, %61 : vector<256x256xf32>
    %c0_55 = arith.constant 0 : index
    %c0_56 = arith.constant 0 : index
    %63 = vector.load %arg17[%c0_55, %c0_56] : memref<1x256xf32, #tpu.memory_space<vmem>>, vector<1x256xf32>
    %64 = vector.broadcast %63 : vector<1x256xf32> to vector<256x256xf32>
    %65 = arith.mulf %62, %64 : vector<256x256xf32>
    %c0_57 = arith.constant 0 : index
    %c0_58 = arith.constant 0 : index
    %66 = vector.load %arg18[%c0_57, %c0_58] : memref<1x256xf32, #tpu.memory_space<vmem>>, vector<1x256xf32>
    %67 = vector.broadcast %66 : vector<1x256xf32> to vector<256x256xf32>
    %68 = arith.addf %65, %67 : vector<256x256xf32>
    %cst_59 = arith.constant 0.000000e+00 : f32
    %69 = vector.broadcast %cst_59 : f32 to vector<256x256xf32>
    %70 = arith.maximumf %68, %69 : vector<256x256xf32>
    %c0_60 = arith.constant 0 : index
    %c0_61 = arith.constant 0 : index
    %71 = vector.load %arg19[%c0_60, %c0_61] : memref<256x256xf32, #tpu.memory_space<vmem>>, vector<256x256xf32>
    tpu.vector_store %arg19[%c0_60, %c0_61], %70 {strides = array<i32>} : memref<256x256xf32, #tpu.memory_space<vmem>>, vector<256x256xf32>,
    return
  }
  func.func @transform_0(%arg0: i32) -> (i32, i32) {
    %c0_i32 = arith.constant 0 : i32
    %c0_i32_0 = arith.constant 0 : i32
    return %arg0, %c0_i32 : i32, i32
  }
  func.func @transform_1(%arg0: i32) -> (i32, i32) {
    %c0_i32 = arith.constant 0 : i32
    %c0_i32_0 = arith.constant 0 : i32
    return %arg0, %c0_i32 : i32, i32
  }
  func.func @transform_2(%arg0: i32) -> (i32, i32) {
    %c0_i32 = arith.constant 0 : i32
    %c0_i32_0 = arith.constant 0 : i32
    return %arg0, %c0_i32 : i32, i32
  }
  func.func @transform_3(%arg0: i32) -> (i32, i32) {
    %c0_i32 = arith.constant 0 : i32
    %c0_i32_0 = arith.constant 0 : i32
    return %arg0, %c0_i32 : i32, i32
  }
  func.func @transform_4(%arg0: i32) -> (i32, i32) {
    %c0_i32 = arith.constant 0 : i32
    %c0_i32_0 = arith.constant 0 : i32
    return %arg0, %c0_i32 : i32, i32
  }
  func.func @transform_5(%arg0: i32) -> (i32, i32) {
    %c0_i32 = arith.constant 0 : i32
    %c0_i32_0 = arith.constant 0 : i32
    %c0_i32_1 = arith.constant 0 : i32
    return %c0_i32, %c0_i32_0 : i32, i32
  }
  func.func @transform_6(%arg0: i32) -> (i32, i32) {
    %c0_i32 = arith.constant 0 : i32
    %c0_i32_0 = arith.constant 0 : i32
    %c0_i32_1 = arith.constant 0 : i32
    return %c0_i32, %c0_i32_0 : i32, i32
  }
  func.func @transform_7(%arg0: i32) -> (i32, i32) {
    %c0_i32 = arith.constant 0 : i32
    %c0_i32_0 = arith.constant 0 : i32
    %c0_i32_1 = arith.constant 0 : i32
    return %c0_i32, %c0_i32_0 : i32, i32
  }
  func.func @transform_8(%arg0: i32) -> (i32, i32) {
    %c0_i32 = arith.constant 0 : i32
    %c0_i32_0 = arith.constant 0 : i32
    %c0_i32_1 = arith.constant 0 : i32
    return %c0_i32, %c0_i32_0 : i32, i32
  }
  func.func @transform_9(%arg0: i32) -> (i32, i32) {
    %c0_i32 = arith.constant 0 : i32
    %c0_i32_0 = arith.constant 0 : i32
    %c0_i32_1 = arith.constant 0 : i32
    return %c0_i32, %c0_i32_0 : i32, i32
  }
  func.func @transform_10(%arg0: i32) -> (i32, i32) {
    %c0_i32 = arith.constant 0 : i32
    %c0_i32_0 = arith.constant 0 : i32
    %c0_i32_1 = arith.constant 0 : i32
    return %c0_i32, %c0_i32_0 : i32, i32
  }
  func.func @transform_11(%arg0: i32) -> (i32, i32) {
    %c0_i32 = arith.constant 0 : i32
    %c0_i32_0 = arith.constant 0 : i32
    %c0_i32_1 = arith.constant 0 : i32
    return %c0_i32, %c0_i32_0 : i32, i32
  }
  func.func @transform_12(%arg0: i32) -> (i32, i32) {
    %c0_i32 = arith.constant 0 : i32
    %c0_i32_0 = arith.constant 0 : i32
    %c0_i32_1 = arith.constant 0 : i32
    return %c0_i32, %c0_i32_0 : i32, i32
  }
  func.func @transform_13(%arg0: i32) -> (i32, i32) {
    %c0_i32 = arith.constant 0 : i32
    %c0_i32_0 = arith.constant 0 : i32
    %c0_i32_1 = arith.constant 0 : i32
    return %c0_i32, %c0_i32_0 : i32, i32
  }
  func.func @transform_14(%arg0: i32) -> (i32, i32) {
    %c0_i32 = arith.constant 0 : i32
    %c0_i32_0 = arith.constant 0 : i32
    %c0_i32_1 = arith.constant 0 : i32
    return %c0_i32, %c0_i32_0 : i32, i32
  }
  func.func @transform_15(%arg0: i32) -> (i32, i32) {
    %c0_i32 = arith.constant 0 : i32
    %c0_i32_0 = arith.constant 0 : i32
    %c0_i32_1 = arith.constant 0 : i32
    return %c0_i32, %c0_i32_0 : i32, i32
  }
  func.func @transform_16(%arg0: i32) -> (i32, i32) {
    %c0_i32 = arith.constant 0 : i32
    %c0_i32_0 = arith.constant 0 : i32
    %c0_i32_1 = arith.constant 0 : i32
    return %c0_i32, %c0_i32_0 : i32, i32
  }
  func.func @transform_17(%arg0: i32) -> (i32, i32) {
    %c0_i32 = arith.constant 0 : i32
    %c0_i32_0 = arith.constant 0 : i32
    %c0_i32_1 = arith.constant 0 : i32
    return %c0_i32, %c0_i32_0 : i32, i32
  }
  func.func @transform_18(%arg0: i32) -> (i32, i32) {
    %c0_i32 = arith.constant 0 : i32
    %c0_i32_0 = arith.constant 0 : i32
    return %arg0, %c0_i32 : i32, i32
  }
}

</mosaic_0001>

<llo_original>
// kernel: aspp_forward.2
$region0: #{aspp_forward.2}
  #allocation0 [shape = 'u32[]', space=smem, size = 0x4, offset = 0x4, fixed_abs, tag = 'smem constant byte address 0x4 - core index']
  #allocation1 [shape = 'u32[72,128]{1,0:T(1,128)}', space=vmem, size = 0x9000, scoped, tag = 'internal scratch']
  %s0 = inlined_call_operand.vmem [shape: bf16[512,512], index: 0, kind: input, shape index: {}]
  %s1 = inlined_call_operand.vmem [shape: bf16[512,64], index: 1, kind: input, shape index: {}]
  %s2 = inlined_call_operand.hbm [shape: f32[1,64], index: 2, kind: input, shape index: {}, may-alias: {2,4}]
  %s3 = inlined_call_operand.hbm [shape: f32[1,64], index: 3, kind: input, shape index: {}, may-alias: {3,5}]
  %s4 = inlined_call_operand.hbm [shape: f32[1,64], index: 4, kind: input, shape index: {}, may-alias: {2,4}]
  %s5 = inlined_call_operand.hbm [shape: f32[1,64], index: 5, kind: input, shape index: {}, may-alias: {3,5}]
  %s6 = inlined_call_operand.vmem [shape: bf16[512,64], index: 6, kind: output, shape index: {}]
  %s7 = sld [smem:[#allocation0]]
  $region73: #{aspp_forward.2} parent=0
    _
  %s9 = ssub.s32 1, %s7
  %s10 = scalar_select 0, %s9, %s7
  $region1: #{aspp_forward.2} parent=0
    #allocation2 [shape = 'u8[512]{0}', space=vmem, size = 0x400, scoped, tag = 'input window, operand 2, single buffered']
    #allocation3 [shape = 's32[2]{0}', space=sflag, size = 0x8, scoped, tag = 'scoped memory for aspp_forward.2']
    #allocation4 [shape = 'u8[512]{0}', space=vmem, size = 0x400, scoped, tag = 'input window, operand 3, single buffered']
    #allocation5 [shape = 's32[1]{0}', space=sflag, size = 0x4, scoped, tag = 'scoped memory for aspp_forward.2']
    #allocation6 [shape = 'u8[512]{0}', space=vmem, size = 0x400, scoped, tag = 'input window, operand 4, single buffered']
    #allocation7 [shape = 'u8[512]{0}', space=vmem, size = 0x400, scoped, tag = 'input window, operand 5, single buffered']
    #allocation8 [shape = 's32[1]{0}', space=sflag, size = 0x4, scoped, tag = 'scoped memory for aspp_forward.2']
    %11 = vsyncpa [#allocation3], 0
    %12 = vsyncpa [#allocation5], 0
    %13 = vsyncpa [#allocation8], 0
    loop: start=0, step=1, limit=4
    $region2: #{aspp_forward.2} parent=1 // loop_pre_header
      _
    $region3: #{aspp_forward.2} parent=1 // loop_header
      %s15 = sphi 0, %s19
      %p16 = scmp.ge.s32.totalorder %s15, 4
      %s25 = sphi 0, %s27
      %s28 = sphi 0, %s25
      %s29 = sphi 0, %s28
      %s45 = sphi 0, %s29
      %s49 = sphi 0, %s49
      %s51 = sphi 0, %s49
      %s52 = sphi 0, %s51
      %s66 = sphi 0, %s52
      %s70 = sphi 0, %s70
      %s72 = sphi 0, %s70
      %s73 = sphi 0, %s72
      %s87 = sphi 0, %s73
      %s91 = sphi 0, %s91
      %s93 = sphi 0, %s91
      %s94 = sphi 0, %s93
      %s108 = sphi 0, %s94
      %s112 = sphi 0, %s112
      %s114 = sphi 0, %s112
      %s115 = sphi 0, %s114
      %s129 = sphi 0, %s115
      %s133 = sphi 0, %s133
      %s135 = sphi 0, %s133
      %s136 = sphi 0, %s135
      %s150 = sphi 0, %s136
      %s156 = sphi 0, %s158
      %s159 = sphi 0, %s156
      %s160 = sphi 0, %s159
      %s176 = sphi 0, %s160
    $region4: #{aspp_forward.2} parent=1 // loop_header_branch
      %18 = sbr.rel (%p16) target = $region8
    $region5: #{aspp_forward.2} parent=1 // loop_body
      %s20 = ssub.s32 %s15, 1
      %s21 = ssub.s32 %s15, 2
      %s22 = sadd.s32 %s15, 1
      %s23 = ssub.s32 %s15, %s22
      %p24 = scmp.eq.s32.totalorder %s23, 0
      %s26 = sadd.s32 %s25, 1
      %s27 = scalar_select %p24, %s25, %s26
      %p30 = pneg %p24
      %p31 = scmp.eq.s32.totalorder %s15, 1
      %p32 = por %p30, %p31
      %p33 = scmp.ne.s32.totalorder %s25, %s28
      %p34 = scmp.eq.s32.totalorder %s15, 0
      %p35 = por %p33, %p34
      %p36 = scmp.ne.s32.totalorder %s25, %s28
      %p37 = scmp.eq.s32.totalorder %s20, 1
      %p38 = por %p36, %p37
      %p39 = scmp.ne.s32.totalorder %s28, %s29
      %p40 = scmp.eq.s32.totalorder %s20, 0
      %p41 = por %p39, %p40
      %p42 = scmp.ne.s32.totalorder %s28, %s29
      %p43 = scmp.eq.s32.totalorder %s21, 1
      %p44 = por %p42, %p43
      %p46 = scmp.ne.s32.totalorder %s29, %s45
      %p47 = scmp.eq.s32.totalorder %s21, 0
      %p48 = por %p46, %p47
      %s50 = sadd.s32 %s49, 1
      %p53 = scmp.eq.s32.totalorder %s15, 1
      %p54 = scmp.ne.s32.totalorder %s49, %s51
      %p55 = scmp.eq.s32.totalorder %s15, 0
      %p56 = por %p54, %p55
      %p57 = scmp.ne.s32.totalorder %s49, %s51
      %p58 = scmp.eq.s32.totalorder %s20, 1
      %p59 = por %p57, %p58
      %p60 = scmp.ne.s32.totalorder %s51, %s52
      %p61 = scmp.eq.s32.totalorder %s20, 0
      %p62 = por %p60, %p61
      %p63 = scmp.ne.s32.totalorder %s51, %s52
      %p64 = scmp.eq.s32.totalorder %s21, 1
      %p65 = por %p63, %p64
      %p67 = scmp.ne.s32.totalorder %s52, %s66
      %p68 = scmp.eq.s32.totalorder %s21, 0
      %p69 = por %p67, %p68
      %s71 = sadd.s32 %s70, 1
      %p74 = scmp.eq.s32.totalorder %s15, 1
      %p75 = scmp.ne.s32.totalorder %s70, %s72
      %p76 = scmp.eq.s32.totalorder %s15, 0
      %p77 = por %p75, %p76
      %p78 = scmp.ne.s32.totalorder %s70, %s72
      %p79 = scmp.eq.s32.totalorder %s20, 1
      %p80 = por %p78, %p79
      %p81 = scmp.ne.s32.totalorder %s72, %s73
      %p82 = scmp.eq.s32.totalorder %s20, 0
      %p83 = por %p81, %p82
      %p84 = scmp.ne.s32.totalorder %s72, %s73
      %p85 = scmp.eq.s32.totalorder %s21, 1
      %p86 = por %p84, %p85
      %p88 = scmp.ne.s32.totalorder %s73, %s87
      %p89 = scmp.eq.s32.totalorder %s21, 0
      %p90 = por %p88, %p89
      %s92 = sadd.s32 %s91, 1
      %p95 = scmp.eq.s32.totalorder %s15, 1
      %p96 = scmp.ne.s32.totalorder %s91, %s93
      %p97 = scmp.eq.s32.totalorder %s15, 0
      %p98 = por %p96, %p97
      %p99 = scmp.ne.s32.totalorder %s91, %s93
      %p100 = scmp.eq.s32.totalorder %s20, 1
      %p101 = por %p99, %p100
      %p102 = scmp.ne.s32.totalorder %s93, %s94
      %p103 = scmp.eq.s32.totalorder %s20, 0
      %p104 = por %p102, %p103
      %p105 = scmp.ne.s32.totalorder %s93, %s94
      %p106 = scmp.eq.s32.totalorder %s21, 1
      %p107 = por %p105, %p106
      %p109 = scmp.ne.s32.totalorder %s94, %s108
      %p110 = scmp.eq.s32.totalorder %s21, 0
      %p111 = por %p109, %p110
      %s113 = sadd.s32 %s112, 1
      %p116 = scmp.eq.s32.totalorder %s15, 1
      %p117 = scmp.ne.s32.totalorder %s112, %s114
      %p118 = scmp.eq.s32.totalorder %s15, 0
      %p119 = por %p117, %p118
      %p120 = scmp.ne.s32.totalorder %s112, %s114
      %p121 = scmp.eq.s32.totalorder %s20, 1
      %p122 = por %p120, %p121
      %p123 = scmp.ne.s32.totalorder %s114, %s115
      %p124 = scmp.eq.s32.totalorder %s20, 0
      %p125 = por %p123, %p124
      %p126 = scmp.ne.s32.totalorder %s114, %s115
      %p127 = scmp.eq.s32.totalorder %s21, 1
      %p128 = por %p126, %p127
      %p130 = scmp.ne.s32.totalorder %s115, %s129
      %p131 = scmp.eq.s32.totalorder %s21, 0
      %p132 = por %p130, %p131
      %s134 = sadd.s32 %s133, 1
      %p137 = scmp.eq.s32.totalorder %s15, 1
      %p138 = scmp.ne.s32.totalorder %s133, %s135
      %p139 = scmp.eq.s32.totalorder %s15, 0
      %p140 = por %p138, %p139
      %p141 = scmp.ne.s32.totalorder %s133, %s135
      %p142 = scmp.eq.s32.totalorder %s20, 1
      %p143 = por %p141, %p142
      %p144 = scmp.ne.s32.totalorder %s135, %s136
      %p145 = scmp.eq.s32.totalorder %s20, 0
      %p146 = por %p144, %p145
      %p147 = scmp.ne.s32.totalorder %s135, %s136
      %p148 = scmp.eq.s32.totalorder %s21, 1
      %p149 = por %p147, %p148
      %p151 = scmp.ne.s32.totalorder %s136, %s150
      %p152 = scmp.eq.s32.totalorder %s21, 0
      %p153 = por %p151, %p152
      %s154 = ssub.s32 %s15, %s22
      %p155 = scmp.eq.s32.totalorder %s154, 0
      %s157 = sadd.s32 %s156, 1
      %s158 = scalar_select %p155, %s156, %s157
      %p161 = pneg %p155
      %p162 = scmp.eq.s32.totalorder %s15, 1
      %p163 = por %p161, %p162
      %p164 = scmp.ne.s32.totalorder %s156, %s159
      %p165 = scmp.eq.s32.totalorder %s15, 0
      %p166 = por %p164, %p165
      %p167 = scmp.ne.s32.totalorder %s156, %s159
      %p168 = scmp.eq.s32.totalorder %s20, 1
      %p169 = por %p167, %p168
      %p170 = scmp.ne.s32.totalorder %s159, %s160
      %p171 = scmp.eq.s32.totalorder %s20, 0
      %p172 = por %p170, %p171
      %p173 = scmp.ne.s32.totalorder %s159, %s160
      %p174 = scmp.eq.s32.totalorder %s21, 1
      %p175 = por %p173, %p174
      %p177 = scmp.ne.s32.totalorder %s160, %s176
      %p178 = scmp.eq.s32.totalorder %s21, 0
      %p179 = por %p177, %p178
      %p180 = scmp.le.s32.totalorder 1, %s15
      %p181 = scmp.lt.s32.totalorder %s15, 3
      %p182 = pnand %p180, %p181
      %p183 = pneg %p182
      // Predicated region
      $region9: #{aspp_forward.2} parent=5 // pred_check
        _
      $region10: #{aspp_forward.2} parent=5 // pred_check_branch
        %185 = sbr.rel (%p182) target = $region12
      $region11: #{aspp_forward.2} parent=5 // pred_region
        %s186 = ssub.s32 %s15, 1
        // Predicated region
        $region13: #{aspp_forward.2} parent=11 // pred_check
          %p187 = pneg %p62
        $region14: #{aspp_forward.2} parent=11 // pred_check_branch
          %189 = sbr.rel (%p187) target = $region16
        $region15: #{aspp_forward.2} parent=11 // pred_region
          _
        $region16: #{aspp_forward.2} parent=11 // pred_fallthru
          _
        // Predicated region
        $region17: #{aspp_forward.2} parent=11 // pred_check
          %p190 = pneg %p83
        $region18: #{aspp_forward.2} parent=11 // pred_check_branch
          %192 = sbr.rel (%p190) target = $region20
        $region19: #{aspp_forward.2} parent=11 // pred_region
          %194 = vsyncadd [#allocation3], 0
          %s196 = sshll.u32 %s2, 4
          %s197 = int_to_ptr.hbm [resolvable:$true] %s196
          %s198 = sshll.u32 [#allocation2], 4
          %s199 = int_to_ptr.vmem [resolvable:$true] %s198
          %201 = dma.hbm_to_vmem [thread:$0]  %s197, 16, %s199, [#allocation3]
        $region20: #{aspp_forward.2} parent=11 // pred_fallthru
          _
        // Predicated region
        $region21: #{aspp_forward.2} parent=11 // pred_check
          %p202 = pneg %p104
        $region22: #{aspp_forward.2} parent=11 // pred_check_branch
          %204 = sbr.rel (%p202) target = $region24
        $region23: #{aspp_forward.2} parent=11 // pred_region
          %206 = vsyncadd [#allocation5], 0
          %s208 = sshll.u32 %s3, 4
          %s209 = int_to_ptr.hbm [resolvable:$true] %s208
          %s210 = sshll.u32 [#allocation4], 4
          %s211 = int_to_ptr.vmem [resolvable:$true] %s210
          %213 = dma.hbm_to_vmem [thread:$0]  %s209, 16, %s211, [#allocation5]
        $region24: #{aspp_forward.2} parent=11 // pred_fallthru
          _
        // Predicated region
        $region25: #{aspp_forward.2} parent=11 // pred_check
          %p214 = pneg %p125
        $region26: #{aspp_forward.2} parent=11 // pred_check_branch
          %216 = sbr.rel (%p214) target = $region28
        $region27: #{aspp_forward.2} parent=11 // pred_region
          %218 = vsyncadd [#allocation5], 0
          %s220 = sshll.u32 %s4, 4
          %s221 = int_to_ptr.hbm [resolvable:$true] %s220
          %s222 = sshll.u32 [#allocation6], 4
          %s223 = int_to_ptr.vmem [resolvable:$true] %s222
          %225 = dma.hbm_to_vmem [thread:$0]  %s221, 16, %s223, [#allocation5]
        $region28: #{aspp_forward.2} parent=11 // pred_fallthru
          _
        // Predicated region
        $region29: #{aspp_forward.2} parent=11 // pred_check
          %p226 = pneg %p146
        $region30: #{aspp_forward.2} parent=11 // pred_check_branch
          %228 = sbr.rel (%p226) target = $region32
        $region31: #{aspp_forward.2} parent=11 // pred_region
          %230 = vsyncadd [#allocation8], 0
          %s232 = sshll.u32 %s5, 4
          %s233 = int_to_ptr.hbm [resolvable:$true] %s232
          %s234 = sshll.u32 [#allocation7], 4
          %s235 = int_to_ptr.vmem [resolvable:$true] %s234
          %237 = dma.hbm_to_vmem [thread:$0]  %s233, 16, %s235, [#allocation8]
        $region32: #{aspp_forward.2} parent=11 // pred_fallthru
          _
      $region12: #{aspp_forward.2} parent=5 // pred_fallthru
        _
      %p238 = scmp.lt.s32.totalorder %s15, 2
      // Predicated region
      $region33: #{aspp_forward.2} parent=5 // pred_check
        %p239 = pneg %p238
      $region34: #{aspp_forward.2} parent=5 // pred_check_branch
        %241 = sbr.rel (%p239) target = $region36
      $region35: #{aspp_forward.2} parent=5 // pred_region
        // Predicated region
        $region37: #{aspp_forward.2} parent=35 // pred_check
          %p242 = pneg %p35
        $region38: #{aspp_forward.2} parent=35 // pred_check_branch
          %244 = sbr.rel (%p242) target = $region40
        $region39: #{aspp_forward.2} parent=35 // pred_region
          %s245 = smul.u32 32, %s15
          %p246 = scmp.lt.s32.totalorder %s245, 63
          %s247 = scalar_select %p246, %s245, 63
          %s248 = smul.addr %s247, 4
          %s249 = smul.addr %s248, 4
          %s250 = scalar_lea.vmem %s0, %s249
          %s251 = smul.u32 32, %s15
        $region40: #{aspp_forward.2} parent=35 // pred_fallthru
          _
      $region36: #{aspp_forward.2} parent=5 // pred_fallthru
        _
      %p252 = scmp.le.s32.totalorder 1, %s15
      %p253 = scmp.lt.s32.totalorder %s15, 3
      %p254 = pnand %p252, %p253
      %p255 = pneg %p254
      // Predicated region
      $region41: #{aspp_forward.2} parent=5 // pred_check
        _
      $region42: #{aspp_forward.2} parent=5 // pred_check_branch
        %257 = sbr.rel (%p254) target = $region44
      $region43: #{aspp_forward.2} parent=5 // pred_region
        %s258 = ssub.s32 %s15, 1
        // Predicated region
        $region45: #{aspp_forward.2} parent=43 // pred_check
          %p259 = pneg %p83
        $region46: #{aspp_forward.2} parent=43 // pred_check_branch
          %261 = sbr.rel (%p259) target = $region48
        $region47: #{aspp_forward.2} parent=43 // pred_region
          %263 = dma.done [#allocation3], 16
        $region48: #{aspp_forward.2} parent=43 // pred_fallthru
          _
        // Predicated region
        $region49: #{aspp_forward.2} parent=43 // pred_check
          %p264 = pneg %p104
        $region50: #{aspp_forward.2} parent=43 // pred_check_branch
          %266 = sbr.rel (%p264) target = $region52
        $region51: #{aspp_forward.2} parent=43 // pred_region
          %268 = dma.done [#allocation5], 16
        $region52: #{aspp_forward.2} parent=43 // pred_fallthru
          _
        // Predicated region
        $region53: #{aspp_forward.2} parent=43 // pred_check
          %p269 = pneg %p125
        $region54: #{aspp_forward.2} parent=43 // pred_check_branch
          %271 = sbr.rel (%p269) target = $region56
        $region55: #{aspp_forward.2} parent=43 // pred_region
          %273 = dma.done [#allocation5], 16
        $region56: #{aspp_forward.2} parent=43 // pred_fallthru
          _
        // Predicated region
        $region57: #{aspp_forward.2} parent=43 // pred_check
          %p274 = pneg %p146
        $region58: #{aspp_forward.2} parent=43 // pred_check_branch
          %276 = sbr.rel (%p274) target = $region60
        $region59: #{aspp_forward.2} parent=43 // pred_region
          %278 = dma.done [#allocation8], 16
        $region60: #{aspp_forward.2} parent=43 // pred_fallthru
          _
        %s279 = smul.u32 32, %s20
        %p280 = scmp.lt.s32.totalorder %s279, 63
        %s281 = scalar_select %p280, %s279, 63
        %s282 = smul.addr %s281, 4
        %s283 = smul.addr %s282, 4
        %s284 = scalar_lea.vmem %s0, %s283
        %p285 = pneg %p41
        %p286 = pneg %p38
        %p287 = pneg %p62
        %p288 = pneg %p59
        %p289 = pneg %p83
        %p290 = pneg %p80
        %p291 = pneg %p104
        %p292 = pneg %p101
        %p293 = pneg %p125
        %p294 = pneg %p122
        %p295 = pneg %p146
        %p296 = pneg %p143
        %p297 = pneg %p172
        %p298 = pneg %p169
        %s299 = smul.u32 32, %s20
        %p300 = scmp.lt.s32.totalorder %s299, 63
        %s301 = scalar_select %p300, %s299, 63
        %s302 = smul.addr %s301, 4
        %s303 = scalar_lea.vmem %s6, %s302
        %s304 = smul.u32 32, %s20
        %p305 = scmp.lt.s32.totalorder %s304, 63
        %s306 = scalar_select %p305, %s304, 63
        %s307 = smul.addr %s306, 4
        %s308 = smul.addr %s307, 4
        %s309 = scalar_lea.vmem %s0, %s308
        %s310 = smul.u32 32, %s20
        %s311 = smul.u32 32, %s20
        %p312 = scmp.lt.s32.totalorder %s311, 63
        %s313 = scalar_select %p312, %s311, 63
        %s314 = smul.addr %s313, 4
        %s315 = scalar_lea.vmem %s6, %s314
        %s316 = smul.u32 32, %s20
        %v317 = vld [vmem:[%s309] sm:$0xff]
        %v318 = vld [vmem:[%s309 + $0x8] sm:$0xff]
        %v319 = vld [vmem:[%s309 + $0x10] sm:$0xff]
        %v320 = vld [vmem:[%s309 + $0x18] sm:$0xff]
        %v321 = vld [vmem:[%s309 + $0x20] sm:$0xff]
        %v322 = vld [vmem:[%s309 + $0x28] sm:$0xff]
        %v323 = vld [vmem:[%s309 + $0x30] sm:$0xff]
        %v324 = vld [vmem:[%s309 + $0x38] sm:$0xff]
        %v325 = vld [vmem:[%s309 + $0x40] sm:$0xff]
        %v326 = vld [vmem:[%s309 + $0x48] sm:$0xff]
        %v327 = vld [vmem:[%s309 + $0x50] sm:$0xff]
        %v328 = vld [vmem:[%s309 + $0x58] sm:$0xff]
        %v329 = vld [vmem:[%s309 + $0x60] sm:$0xff]
        %v330 = vld [vmem:[%s309 + $0x68] sm:$0xff]
        %v331 = vld [vmem:[%s309 + $0x70] sm:$0xff]
        %v332 = vld [vmem:[%s309 + $0x78] sm:$0xff]
        %v333 = vld [vmem:[%s309 + $0x80] sm:$0xff]
        %v334 = vld [vmem:[%s309 + $0x88] sm:$0xff]
        %v335 = vld [vmem:[%s309 + $0x90] sm:$0xff]
        %v336 = vld [vmem:[%s309 + $0x98] sm:$0xff]
        %v337 = vld [vmem:[%s309 + $0xa0] sm:$0xff]
        %v338 = vld [vmem:[%s309 + $0xa8] sm:$0xff]
        %v339 = vld [vmem:[%s309 + $0xb0] sm:$0xff]
        %v340 = vld [vmem:[%s309 + $0xb8] sm:$0xff]
        %v341 = vld [vmem:[%s309 + $0xc0] sm:$0xff]
        %v342 = vld [vmem:[%s309 + $0xc8] sm:$0xff]
        %v343 = vld [vmem:[%s309 + $0xd0] sm:$0xff]
        %v344 = vld [vmem:[%s309 + $0xd8] sm:$0xff]
        %v345 = vld [vmem:[%s309 + $0xe0] sm:$0xff]
        %v346 = vld [vmem:[%s309 + $0xe8] sm:$0xff]
        %v347 = vld [vmem:[%s309 + $0xf0] sm:$0xff]
        %v348 = vld [vmem:[%s309 + $0xf8] sm:$0xff]
        %v349 = vld [vmem:[%s309 + $0x100] sm:$0xff]
        %v350 = vld [vmem:[%s309 + $0x108] sm:$0xff]
        %v351 = vld [vmem:[%s309 + $0x110] sm:$0xff]
        %v352 = vld [vmem:[%s309 + $0x118] sm:$0xff]
        %v353 = vld [vmem:[%s309 + $0x120] sm:$0xff]
        %v354 = vld [vmem:[%s309 + $0x128] sm:$0xff]
        %v355 = vld [vmem:[%s309 + $0x130] sm:$0xff]
        %v356 = vld [vmem:[%s309 + $0x138] sm:$0xff]
        %v357 = vld [vmem:[%s309 + $0x140] sm:$0xff]
        %v358 = vld [vmem:[%s309 + $0x148] sm:$0xff]
        %v359 = vld [vmem:[%s309 + $0x150] sm:$0xff]
        %v360 = vld [vmem:[%s309 + $0x158] sm:$0xff]
        %v361 = vld [vmem:[%s309 + $0x160] sm:$0xff]
        %v362 = vld [vmem:[%s309 + $0x168] sm:$0xff]
        %v363 = vld [vmem:[%s309 + $0x170] sm:$0xff]
        %v364 = vld [vmem:[%s309 + $0x178] sm:$0xff]
        %v365 = vld [vmem:[%s309 + $0x180] sm:$0xff]
        %v366 = vld [vmem:[%s309 + $0x188] sm:$0xff]
        %v367 = vld [vmem:[%s309 + $0x190] sm:$0xff]
        %v368 = vld [vmem:[%s309 + $0x198] sm:$0xff]
        %v369 = vld [vmem:[%s309 + $0x1a0] sm:$0xff]
        %v370 = vld [vmem:[%s309 + $0x1a8] sm:$0xff]
        %v371 = vld [vmem:[%s309 + $0x1b0] sm:$0xff]
        %v372 = vld [vmem:[%s309 + $0x1b8] sm:$0xff]
        %v373 = vld [vmem:[%s309 + $0x1c0] sm:$0xff]
        %v374 = vld [vmem:[%s309 + $0x1c8] sm:$0xff]
        %v375 = vld [vmem:[%s309 + $0x1d0] sm:$0xff]
        %v376 = vld [vmem:[%s309 + $0x1d8] sm:$0xff]
        %v377 = vld [vmem:[%s309 + $0x1e0] sm:$0xff]
        %v378 = vld [vmem:[%s309 + $0x1e8] sm:$0xff]
        %v379 = vld [vmem:[%s309 + $0x1f0] sm:$0xff]
        %v380 = vld [vmem:[%s309 + $0x1f8] sm:$0xff]
        %v381 = vld [vmem:[%s1] sm:$0xf]
        %v382 = vld [vmem:[%s1 + $0x4] sm:$0xf]
        %v383 = vld [vmem:[%s1 + $0x8] sm:$0xf]
        %v384 = vld [vmem:[%s1 + $0xc] sm:$0xf]
        %v385 = vld [vmem:[%s1 + $0x10] sm:$0xf]
        %v386 = vld [vmem:[%s1 + $0x14] sm:$0xf]
        %v387 = vld [vmem:[%s1 + $0x18] sm:$0xf]
        %v388 = vld [vmem:[%s1 + $0x1c] sm:$0xf]
        %v389 = vld [vmem:[%s1 + $0x20] sm:$0xf]
        %v390 = vld [vmem:[%s1 + $0x24] sm:$0xf]
        %v391 = vld [vmem:[%s1 + $0x28] sm:$0xf]
        %v392 = vld [vmem:[%s1 + $0x2c] sm:$0xf]
        %v393 = vld [vmem:[%s1 + $0x30] sm:$0xf]
        %v394 = vld [vmem:[%s1 + $0x34] sm:$0xf]
        %v395 = vld [vmem:[%s1 + $0x38] sm:$0xf]
        %v396 = vld [vmem:[%s1 + $0x3c] sm:$0xf]
        %v397 = vld [vmem:[%s1 + $0x40] sm:$0xf]
        %v398 = vld [vmem:[%s1 + $0x44] sm:$0xf]
        %v399 = vld [vmem:[%s1 + $0x48] sm:$0xf]
        %v400 = vld [vmem:[%s1 + $0x4c] sm:$0xf]
        %v401 = vld [vmem:[%s1 + $0x50] sm:$0xf]
        %v402 = vld [vmem:[%s1 + $0x54] sm:$0xf]
        %v403 = vld [vmem:[%s1 + $0x58] sm:$0xf]
        %v404 = vld [vmem:[%s1 + $0x5c] sm:$0xf]
        %v405 = vld [vmem:[%s1 + $0x60] sm:$0xf]
        %v406 = vld [vmem:[%s1 + $0x64] sm:$0xf]
        %v407 = vld [vmem:[%s1 + $0x68] sm:$0xf]
        %v408 = vld [vmem:[%s1 + $0x6c] sm:$0xf]
        %v409 = vld [vmem:[%s1 + $0x70] sm:$0xf]
        %v410 = vld [vmem:[%s1 + $0x74] sm:$0xf]
        %v411 = vld [vmem:[%s1 + $0x78] sm:$0xf]
        %v412 = vld [vmem:[%s1 + $0x7c] sm:$0xf]
        %v413 = vld [vmem:[%s1 + $0x80] sm:$0xf]
        %v414 = vld [vmem:[%s1 + $0x84] sm:$0xf]
        %v415 = vld [vmem:[%s1 + $0x88] sm:$0xf]
        %v416 = vld [vmem:[%s1 + $0x8c] sm:$0xf]
        %v417 = vld [vmem:[%s1 + $0x90] sm:$0xf]
        %v418 = vld [vmem:[%s1 + $0x94] sm:$0xf]
        %v419 = vld [vmem:[%s1 + $0x98] sm:$0xf]
        %v420 = vld [vmem:[%s1 + $0x9c] sm:$0xf]
        %v421 = vld [vmem:[%s1 + $0xa0] sm:$0xf]
        %v422 = vld [vmem:[%s1 + $0xa4] sm:$0xf]
        %v423 = vld [vmem:[%s1 + $0xa8] sm:$0xf]
        %v424 = vld [vmem:[%s1 + $0xac] sm:$0xf]
        %v425 = vld [vmem:[%s1 + $0xb0] sm:$0xf]
        %v426 = vld [vmem:[%s1 + $0xb4] sm:$0xf]
        %v427 = vld [vmem:[%s1 + $0xb8] sm:$0xf]
        %v428 = vld [vmem:[%s1 + $0xbc] sm:$0xf]
        %v429 = vld [vmem:[%s1 + $0xc0] sm:$0xf]
        %v430 = vld [vmem:[%s1 + $0xc4] sm:$0xf]
        %v431 = vld [vmem:[%s1 + $0xc8] sm:$0xf]
        %v432 = vld [vmem:[%s1 + $0xcc] sm:$0xf]
        %v433 = vld [vmem:[%s1 + $0xd0] sm:$0xf]
        %v434 = vld [vmem:[%s1 + $0xd4] sm:$0xf]
        %v435 = vld [vmem:[%s1 + $0xd8] sm:$0xf]
        %v436 = vld [vmem:[%s1 + $0xdc] sm:$0xf]
        %v437 = vld [vmem:[%s1 + $0xe0] sm:$0xf]
        %v438 = vld [vmem:[%s1 + $0xe4] sm:$0xf]
        %v439 = vld [vmem:[%s1 + $0xe8] sm:$0xf]
        %v440 = vld [vmem:[%s1 + $0xec] sm:$0xf]
        %v441 = vld [vmem:[%s1 + $0xf0] sm:$0xf]
        %v442 = vld [vmem:[%s1 + $0xf4] sm:$0xf]
        %v443 = vld [vmem:[%s1 + $0xf8] sm:$0xf]
        %v444 = vld [vmem:[%s1 + $0xfc] sm:$0xf]
        %v509 = vunpack.c.l.b16 %v317
        %v510 = vunpack.c.h.b16 %v317
        %v511 = vunpack.c.l.b16 %v318
        %v512 = vunpack.c.h.b16 %v318
        %v513 = vunpack.c.l.b16 %v319
        %v514 = vunpack.c.h.b16 %v319
        %v515 = vunpack.c.l.b16 %v320
        %v516 = vunpack.c.h.b16 %v320
        %v517 = vunpack.c.l.b16 %v321
        %v518 = vunpack.c.h.b16 %v321
        %v519 = vunpack.c.l.b16 %v322
        %v520 = vunpack.c.h.b16 %v322
        %v521 = vunpack.c.l.b16 %v323
        %v522 = vunpack.c.h.b16 %v323
        %v523 = vunpack.c.l.b16 %v324
        %v524 = vunpack.c.h.b16 %v324
        %v525 = vunpack.c.l.b16 %v325
        %v526 = vunpack.c.h.b16 %v325
        %v527 = vunpack.c.l.b16 %v326
        %v528 = vunpack.c.h.b16 %v326
        %v529 = vunpack.c.l.b16 %v327
        %v530 = vunpack.c.h.b16 %v327
        %v531 = vunpack.c.l.b16 %v328
        %v532 = vunpack.c.h.b16 %v328
        %v533 = vunpack.c.l.b16 %v329
        %v534 = vunpack.c.h.b16 %v329
        %v535 = vunpack.c.l.b16 %v330
        %v536 = vunpack.c.h.b16 %v330
        %v537 = vunpack.c.l.b16 %v331
        %v538 = vunpack.c.h.b16 %v331
        %v539 = vunpack.c.l.b16 %v332
        %v540 = vunpack.c.h.b16 %v332
        %v541 = vunpack.c.l.b16 %v333
        %v542 = vunpack.c.h.b16 %v333
        %v543 = vunpack.c.l.b16 %v334
        %v544 = vunpack.c.h.b16 %v334
        %v545 = vunpack.c.l.b16 %v335
        %v546 = vunpack.c.h.b16 %v335
        %v547 = vunpack.c.l.b16 %v336
        %v548 = vunpack.c.h.b16 %v336
        %v549 = vunpack.c.l.b16 %v337
        %v550 = vunpack.c.h.b16 %v337
        %v551 = vunpack.c.l.b16 %v338
        %v552 = vunpack.c.h.b16 %v338
        %v553 = vunpack.c.l.b16 %v339
        %v554 = vunpack.c.h.b16 %v339
        %v555 = vunpack.c.l.b16 %v340
        %v556 = vunpack.c.h.b16 %v340
        %v557 = vunpack.c.l.b16 %v341
        %v558 = vunpack.c.h.b16 %v341
        %v559 = vunpack.c.l.b16 %v342
        %v560 = vunpack.c.h.b16 %v342
        %v561 = vunpack.c.l.b16 %v343
        %v562 = vunpack.c.h.b16 %v343
        %v563 = vunpack.c.l.b16 %v344
        %v564 = vunpack.c.h.b16 %v344
        %v565 = vunpack.c.l.b16 %v345
        %v566 = vunpack.c.h.b16 %v345
        %v567 = vunpack.c.l.b16 %v346
        %v568 = vunpack.c.h.b16 %v346
        %v569 = vunpack.c.l.b16 %v347
        %v570 = vunpack.c.h.b16 %v347
        %v571 = vunpack.c.l.b16 %v348
        %v572 = vunpack.c.h.b16 %v348
        %v573 = vunpack.c.l.b16 %v349
        %v574 = vunpack.c.h.b16 %v349
        %v575 = vunpack.c.l.b16 %v350
        %v576 = vunpack.c.h.b16 %v350
        %v577 = vunpack.c.l.b16 %v351
        %v578 = vunpack.c.h.b16 %v351
        %v579 = vunpack.c.l.b16 %v352
        %v580 = vunpack.c.h.b16 %v352
        %v581 = vunpack.c.l.b16 %v353
        %v582 = vunpack.c.h.b16 %v353
        %v583 = vunpack.c.l.b16 %v354
        %v584 = vunpack.c.h.b16 %v354
        %v585 = vunpack.c.l.b16 %v355
        %v586 = vunpack.c.h.b16 %v355
        %v587 = vunpack.c.l.b16 %v356
        %v588 = vunpack.c.h.b16 %v356
        %v589 = vunpack.c.l.b16 %v357
        %v590 = vunpack.c.h.b16 %v357
        %v591 = vunpack.c.l.b16 %v358
        %v592 = vunpack.c.h.b16 %v358
        %v593 = vunpack.c.l.b16 %v359
        %v594 = vunpack.c.h.b16 %v359
        %v595 = vunpack.c.l.b16 %v360
        %v596 = vunpack.c.h.b16 %v360
        %v597 = vunpack.c.l.b16 %v361
        %v598 = vunpack.c.h.b16 %v361
        %v599 = vunpack.c.l.b16 %v362
        %v600 = vunpack.c.h.b16 %v362
        %v601 = vunpack.c.l.b16 %v363
        %v602 = vunpack.c.h.b16 %v363
        %v603 = vunpack.c.l.b16 %v364
        %v604 = vunpack.c.h.b16 %v364
        %v605 = vunpack.c.l.b16 %v365
        %v606 = vunpack.c.h.b16 %v365
        %v607 = vunpack.c.l.b16 %v366
        %v608 = vunpack.c.h.b16 %v366
        %v609 = vunpack.c.l.b16 %v367
        %v610 = vunpack.c.h.b16 %v367
        %v611 = vunpack.c.l.b16 %v368
        %v612 = vunpack.c.h.b16 %v368
        %v613 = vunpack.c.l.b16 %v369
        %v614 = vunpack.c.h.b16 %v369
        %v615 = vunpack.c.l.b16 %v370
        %v616 = vunpack.c.h.b16 %v370
        %v617 = vunpack.c.l.b16 %v371
        %v618 = vunpack.c.h.b16 %v371
        %v619 = vunpack.c.l.b16 %v372
        %v620 = vunpack.c.h.b16 %v372
        %v621 = vunpack.c.l.b16 %v373
        %v622 = vunpack.c.h.b16 %v373
        %v623 = vunpack.c.l.b16 %v374
        %v624 = vunpack.c.h.b16 %v374
        %v625 = vunpack.c.l.b16 %v375
        %v626 = vunpack.c.h.b16 %v375
        %v627 = vunpack.c.l.b16 %v376
        %v628 = vunpack.c.h.b16 %v376
        %v629 = vunpack.c.l.b16 %v377
        %v630 = vunpack.c.h.b16 %v377
        %v631 = vunpack.c.l.b16 %v378
        %v632 = vunpack.c.h.b16 %v378
        %v633 = vunpack.c.l.b16 %v379
        %v634 = vunpack.c.h.b16 %v379
        %v635 = vunpack.c.l.b16 %v380
        %v636 = vunpack.c.h.b16 %v380
        %v637 = vpack.c.b16 %v513, %v509
        %v638 = vpack.c.b16 %v514, %v510
        %v639 = vpack.c.b16 %v515, %v511
        %v640 = vpack.c.b16 %v516, %v512
        %v641 = vpack.c.b16 %v521, %v517
        %v642 = vpack.c.b16 %v522, %v518
        %v643 = vpack.c.b16 %v523, %v519
        %v644 = vpack.c.b16 %v524, %v520
        %v645 = vpack.c.b16 %v529, %v525
        %v646 = vpack.c.b16 %v530, %v526
        %v647 = vpack.c.b16 %v531, %v527
        %v648 = vpack.c.b16 %v532, %v528
        %v649 = vpack.c.b16 %v537, %v533
        %v650 = vpack.c.b16 %v538, %v534
        %v651 = vpack.c.b16 %v539, %v535
        %v652 = vpack.c.b16 %v540, %v536
        %v653 = vpack.c.b16 %v545, %v541
        %v654 = vpack.c.b16 %v546, %v542
        %v655 = vpack.c.b16 %v547, %v543
        %v656 = vpack.c.b16 %v548, %v544
        %v657 = vpack.c.b16 %v553, %v549
        %v658 = vpack.c.b16 %v554, %v550
        %v659 = vpack.c.b16 %v555, %v551
        %v660 = vpack.c.b16 %v556, %v552
        %v661 = vpack.c.b16 %v561, %v557
        %v662 = vpack.c.b16 %v562, %v558
        %v663 = vpack.c.b16 %v563, %v559
        %v664 = vpack.c.b16 %v564, %v560
        %v665 = vpack.c.b16 %v569, %v565
        %v666 = vpack.c.b16 %v570, %v566
        %v667 = vpack.c.b16 %v571, %v567
        %v668 = vpack.c.b16 %v572, %v568
        %v669 = vpack.c.b16 %v577, %v573
        %v670 = vpack.c.b16 %v578, %v574
        %v671 = vpack.c.b16 %v579, %v575
        %v672 = vpack.c.b16 %v580, %v576
        %v673 = vpack.c.b16 %v585, %v581
        %v674 = vpack.c.b16 %v586, %v582
        %v675 = vpack.c.b16 %v587, %v583
        %v676 = vpack.c.b16 %v588, %v584
        %v677 = vpack.c.b16 %v593, %v589
        %v678 = vpack.c.b16 %v594, %v590
        %v679 = vpack.c.b16 %v595, %v591
        %v680 = vpack.c.b16 %v596, %v592
        %v681 = vpack.c.b16 %v601, %v597
        %v682 = vpack.c.b16 %v602, %v598
        %v683 = vpack.c.b16 %v603, %v599
        %v684 = vpack.c.b16 %v604, %v600
        %v685 = vpack.c.b16 %v609, %v605
        %v686 = vpack.c.b16 %v610, %v606
        %v687 = vpack.c.b16 %v611, %v607
        %v688 = vpack.c.b16 %v612, %v608
        %v689 = vpack.c.b16 %v617, %v613
        %v690 = vpack.c.b16 %v618, %v614
        %v691 = vpack.c.b16 %v619, %v615
        %v692 = vpack.c.b16 %v620, %v616
        %v693 = vpack.c.b16 %v625, %v621
        %v694 = vpack.c.b16 %v626, %v622
        %v695 = vpack.c.b16 %v627, %v623
        %v696 = vpack.c.b16 %v628, %v624
        %v697 = vpack.c.b16 %v633, %v629
        %v698 = vpack.c.b16 %v634, %v630
        %v699 = vpack.c.b16 %v635, %v631
        %v700 = vpack.c.b16 %v636, %v632
        %v829 = vunpack.c.l.b16 %v381
        %v830 = vunpack.c.l.b16 %v382
        %v831 = vunpack.c.l.b16 %v383
        %v832 = vunpack.c.l.b16 %v384
        %v833 = vunpack.c.l.b16 %v385
        %v834 = vunpack.c.l.b16 %v386
        %v835 = vunpack.c.l.b16 %v387
        %v836 = vunpack.c.l.b16 %v388
        %v837 = vunpack.c.l.b16 %v389
        %v838 = vunpack.c.l.b16 %v390
        %v839 = vunpack.c.l.b16 %v391
        %v840 = vunpack.c.l.b16 %v392
        %v841 = vunpack.c.l.b16 %v393
        %v842 = vunpack.c.l.b16 %v394
        %v843 = vunpack.c.l.b16 %v395
        %v844 = vunpack.c.l.b16 %v396
        %v845 = vunpack.c.l.b16 %v397
        %v846 = vunpack.c.l.b16 %v398
        %v847 = vunpack.c.l.b16 %v399
        %v848 = vunpack.c.l.b16 %v400
        %v849 = vunpack.c.l.b16 %v401
        %v850 = vunpack.c.l.b16 %v402
        %v851 = vunpack.c.l.b16 %v403
        %v852 = vunpack.c.l.b16 %v404
        %v853 = vunpack.c.l.b16 %v405
        %v854 = vunpack.c.l.b16 %v406
        %v855 = vunpack.c.l.b16 %v407
        %v856 = vunpack.c.l.b16 %v408
        %v857 = vunpack.c.l.b16 %v409
        %v858 = vunpack.c.l.b16 %v410
        %v859 = vunpack.c.l.b16 %v411
        %v860 = vunpack.c.l.b16 %v412
        %v861 = vunpack.c.l.b16 %v413
        %v862 = vunpack.c.l.b16 %v414
        %v863 = vunpack.c.l.b16 %v415
        %v864 = vunpack.c.l.b16 %v416
        %v865 = vunpack.c.l.b16 %v417
        %v866 = vunpack.c.l.b16 %v418
        %v867 = vunpack.c.l.b16 %v419
        %v868 = vunpack.c.l.b16 %v420
        %v869 = vunpack.c.l.b16 %v421
        %v870 = vunpack.c.l.b16 %v422
        %v871 = vunpack.c.l.b16 %v423
        %v872 = vunpack.c.l.b16 %v424
        %v873 = vunpack.c.l.b16 %v425
        %v874 = vunpack.c.l.b16 %v426
        %v875 = vunpack.c.l.b16 %v427
        %v876 = vunpack.c.l.b16 %v428
        %v877 = vunpack.c.l.b16 %v429
        %v878 = vunpack.c.l.b16 %v430
        %v879 = vunpack.c.l.b16 %v431
        %v880 = vunpack.c.l.b16 %v432
        %v881 = vunpack.c.l.b16 %v433
        %v882 = vunpack.c.l.b16 %v434
        %v883 = vunpack.c.l.b16 %v435
        %v884 = vunpack.c.l.b16 %v436
        %v885 = vunpack.c.l.b16 %v437
        %v886 = vunpack.c.l.b16 %v438
        %v887 = vunpack.c.l.b16 %v439
        %v888 = vunpack.c.l.b16 %v440
        %v889 = vunpack.c.l.b16 %v441
        %v890 = vunpack.c.l.b16 %v442
        %v891 = vunpack.c.l.b16 %v443
        %v892 = vunpack.c.l.b16 %v444
        %v893 = vpack.c.b16 %v830, %v829
        %v894 = vpack.c.b16 %v832, %v831
        %v895 = vpack.c.b16 %v834, %v833
        %v896 = vpack.c.b16 %v836, %v835
        %v897 = vpack.c.b16 %v838, %v837
        %v898 = vpack.c.b16 %v840, %v839
        %v899 = vpack.c.b16 %v842, %v841
        %v900 = vpack.c.b16 %v844, %v843
        %v901 = vpack.c.b16 %v846, %v845
        %v902 = vpack.c.b16 %v848, %v847
        %v903 = vpack.c.b16 %v850, %v849
        %v904 = vpack.c.b16 %v852, %v851
        %v905 = vpack.c.b16 %v854, %v853
        %v906 = vpack.c.b16 %v856, %v855
        %v907 = vpack.c.b16 %v858, %v857
        %v908 = vpack.c.b16 %v860, %v859
        %v909 = vpack.c.b16 %v862, %v861
        %v910 = vpack.c.b16 %v864, %v863
        %v911 = vpack.c.b16 %v866, %v865
        %v912 = vpack.c.b16 %v868, %v867
        %v913 = vpack.c.b16 %v870, %v869
        %v914 = vpack.c.b16 %v872, %v871
        %v915 = vpack.c.b16 %v874, %v873
        %v916 = vpack.c.b16 %v876, %v875
        %v917 = vpack.c.b16 %v878, %v877
        %v918 = vpack.c.b16 %v880, %v879
        %v919 = vpack.c.b16 %v882, %v881
        %v920 = vpack.c.b16 %v884, %v883
        %v921 = vpack.c.b16 %v886, %v885
        %v922 = vpack.c.b16 %v888, %v887
        %v923 = vpack.c.b16 %v890, %v889
        %v924 = vpack.c.b16 %v892, %v891
        %957 = vmatpush.bf16.msra.mxu0 %v900
        %958 = vmatpush.bf16.msra.mxu0 %v899
        %959 = vmatpush.bf16.msra.mxu0 %v898
        %960 = vmatpush.bf16.msra.mxu0 %v897
        %961 = vmatpush.bf16.msra.mxu0 %v896
        %962 = vmatpush.bf16.msra.mxu0 %v895
        %963 = vmatpush.bf16.msra.mxu0 %v894
        %964 = vmatpush.bf16.msra.mxu0 %v893
        %965 = vmatmul.bf16.gmra.mxu0 %v637
        %v966 = vpop.f32.mrf.mxu0
        %v967 = vadd.f32 0.0, %v966
        %v968 = vpop.f32.mrf.mxu0
        %v969 = vadd.f32 0.0, %v968
        %970 = vmatmul.bf16.gmra.mxu0 %v641
        %v971 = vpop.f32.mrf.mxu0
        %v972 = vadd.f32 0.0, %v971
        %v973 = vpop.f32.mrf.mxu0
        %v974 = vadd.f32 0.0, %v973
        %975 = vmatmul.bf16.gmra.mxu0 %v645
        %v976 = vpop.f32.mrf.mxu0
        %v977 = vadd.f32 0.0, %v976
        %v978 = vpop.f32.mrf.mxu0
        %v979 = vadd.f32 0.0, %v978
        %980 = vmatmul.bf16.gmra.mxu0 %v649
        %v981 = vpop.f32.mrf.mxu0
        %v982 = vadd.f32 0.0, %v981
        %v983 = vpop.f32.mrf.mxu0
        %v984 = vadd.f32 0.0, %v983
        %985 = vmatmul.bf16.gmra.mxu0 %v653
        %v986 = vpop.f32.mrf.mxu0
        %v987 = vadd.f32 0.0, %v986
        %v988 = vpop.f32.mrf.mxu0
        %v989 = vadd.f32 0.0, %v988
        %990 = vmatmul.bf16.gmra.mxu0 %v657
        %v991 = vpop.f32.mrf.mxu0
        %v992 = vadd.f32 0.0, %v991
        %v993 = vpop.f32.mrf.mxu0
        %v994 = vadd.f32 0.0, %v993
        %995 = vmatmul.bf16.gmra.mxu0 %v661
        %v996 = vpop.f32.mrf.mxu0
        %v997 = vadd.f32 0.0, %v996
        %v998 = vpop.f32.mrf.mxu0
        %v999 = vadd.f32 0.0, %v998
        %1000 = vmatmul.bf16.gmra.mxu0 %v665
        %v1001 = vpop.f32.mrf.mxu0
        %v1002 = vadd.f32 0.0, %v1001
        %v1003 = vpop.f32.mrf.mxu0
        %v1004 = vadd.f32 0.0, %v1003
        %1005 = vmatmul.bf16.gmra.mxu0 %v669
        %v1006 = vpop.f32.mrf.mxu0
        %v1007 = vadd.f32 0.0, %v1006
        %v1008 = vpop.f32.mrf.mxu0
        %v1009 = vadd.f32 0.0, %v1008
        %1010 = vmatmul.bf16.gmra.mxu0 %v673
        %v1011 = vpop.f32.mrf.mxu0
        %v1012 = vadd.f32 0.0, %v1011
        %v1013 = vpop.f32.mrf.mxu0
        %v1014 = vadd.f32 0.0, %v1013
        %1015 = vmatmul.bf16.gmra.mxu0 %v677
        %v1016 = vpop.f32.mrf.mxu0
        %v1017 = vadd.f32 0.0, %v1016
        %v1018 = vpop.f32.mrf.mxu0
        %v1019 = vadd.f32 0.0, %v1018
        %1020 = vmatmul.bf16.gmra.mxu0 %v681
        %v1021 = vpop.f32.mrf.mxu0
        %v1022 = vadd.f32 0.0, %v1021
        %v1023 = vpop.f32.mrf.mxu0
        %v1024 = vadd.f32 0.0, %v1023
        %1025 = vmatmul.bf16.gmra.mxu0 %v685
        %v1026 = vpop.f32.mrf.mxu0
        %v1027 = vadd.f32 0.0, %v1026
        %v1028 = vpop.f32.mrf.mxu0
        %v1029 = vadd.f32 0.0, %v1028
        %1030 = vmatmul.bf16.gmra.mxu0 %v689
        %v1031 = vpop.f32.mrf.mxu0
        %v1032 = vadd.f32 0.0, %v1031
        %v1033 = vpop.f32.mrf.mxu0
        %v1034 = vadd.f32 0.0, %v1033
        %1035 = vmatmul.bf16.gmra.mxu0 %v693
        %v1036 = vpop.f32.mrf.mxu0
        %v1037 = vadd.f32 0.0, %v1036
        %v1038 = vpop.f32.mrf.mxu0
        %v1039 = vadd.f32 0.0, %v1038
        %1040 = vmatmul.bf16.gmra.mxu0 %v697
        %v1041 = vpop.f32.mrf.mxu0
        %v1042 = vadd.f32 0.0, %v1041
        %v1043 = vpop.f32.mrf.mxu0
        %v1044 = vadd.f32 0.0, %v1043
        %1045 = vdwg.mxu0
        %1046 = vmatpush.bf16.msra.mxu0 %v908
        %1047 = vmatpush.bf16.msra.mxu0 %v907
        %1048 = vmatpush.bf16.msra.mxu0 %v906
        %1049 = vmatpush.bf16.msra.mxu0 %v905
        %1050 = vmatpush.bf16.msra.mxu0 %v904
        %1051 = vmatpush.bf16.msra.mxu0 %v903
        %1052 = vmatpush.bf16.msra.mxu0 %v902
        %1053 = vmatpush.bf16.msra.mxu0 %v901
        %1054 = vmatmul.bf16.gmra.mxu0 %v638
        %v1055 = vpop.f32.mrf.mxu0
        %v1056 = vadd.f32 %v967, %v1055
        %v1057 = vpop.f32.mrf.mxu0
        %v1058 = vadd.f32 %v969, %v1057
        %1059 = vmatmul.bf16.gmra.mxu0 %v642
        %v1060 = vpop.f32.mrf.mxu0
        %v1061 = vadd.f32 %v972, %v1060
        %v1062 = vpop.f32.mrf.mxu0
        %v1063 = vadd.f32 %v974, %v1062
        %1064 = vmatmul.bf16.gmra.mxu0 %v646
        %v1065 = vpop.f32.mrf.mxu0
        %v1066 = vadd.f32 %v977, %v1065
        %v1067 = vpop.f32.mrf.mxu0
        %v1068 = vadd.f32 %v979, %v1067
        %1069 = vmatmul.bf16.gmra.mxu0 %v650
        %v1070 = vpop.f32.mrf.mxu0
        %v1071 = vadd.f32 %v982, %v1070
        %v1072 = vpop.f32.mrf.mxu0
        %v1073 = vadd.f32 %v984, %v1072
        %1074 = vmatmul.bf16.gmra.mxu0 %v654
        %v1075 = vpop.f32.mrf.mxu0
        %v1076 = vadd.f32 %v987, %v1075
        %v1077 = vpop.f32.mrf.mxu0
        %v1078 = vadd.f32 %v989, %v1077
        %1079 = vmatmul.bf16.gmra.mxu0 %v658
        %v1080 = vpop.f32.mrf.mxu0
        %v1081 = vadd.f32 %v992, %v1080
        %v1082 = vpop.f32.mrf.mxu0
        %v1083 = vadd.f32 %v994, %v1082
        %1084 = vmatmul.bf16.gmra.mxu0 %v662
        %v1085 = vpop.f32.mrf.mxu0
        %v1086 = vadd.f32 %v997, %v1085
        %v1087 = vpop.f32.mrf.mxu0
        %v1088 = vadd.f32 %v999, %v1087
        %1089 = vmatmul.bf16.gmra.mxu0 %v666
        %v1090 = vpop.f32.mrf.mxu0
        %v1091 = vadd.f32 %v1002, %v1090
        %v1092 = vpop.f32.mrf.mxu0
        %v1093 = vadd.f32 %v1004, %v1092
        %1094 = vmatmul.bf16.gmra.mxu0 %v670
        %v1095 = vpop.f32.mrf.mxu0
        %v1096 = vadd.f32 %v1007, %v1095
        %v1097 = vpop.f32.mrf.mxu0
        %v1098 = vadd.f32 %v1009, %v1097
        %1099 = vmatmul.bf16.gmra.mxu0 %v674
        %v1100 = vpop.f32.mrf.mxu0
        %v1101 = vadd.f32 %v1012, %v1100
        %v1102 = vpop.f32.mrf.mxu0
        %v1103 = vadd.f32 %v1014, %v1102
        %1104 = vmatmul.bf16.gmra.mxu0 %v678
        %v1105 = vpop.f32.mrf.mxu0
        %v1106 = vadd.f32 %v1017, %v1105
        %v1107 = vpop.f32.mrf.mxu0
        %v1108 = vadd.f32 %v1019, %v1107
        %1109 = vmatmul.bf16.gmra.mxu0 %v682
        %v1110 = vpop.f32.mrf.mxu0
        %v1111 = vadd.f32 %v1022, %v1110
        %v1112 = vpop.f32.mrf.mxu0
        %v1113 = vadd.f32 %v1024, %v1112
        %1114 = vmatmul.bf16.gmra.mxu0 %v686
        %v1115 = vpop.f32.mrf.mxu0
        %v1116 = vadd.f32 %v1027, %v1115
        %v1117 = vpop.f32.mrf.mxu0
        %v1118 = vadd.f32 %v1029, %v1117
        %1119 = vmatmul.bf16.gmra.mxu0 %v690
        %v1120 = vpop.f32.mrf.mxu0
        %v1121 = vadd.f32 %v1032, %v1120
        %v1122 = vpop.f32.mrf.mxu0
        %v1123 = vadd.f32 %v1034, %v1122
        %1124 = vmatmul.bf16.gmra.mxu0 %v694
        %v1125 = vpop.f32.mrf.mxu0
        %v1126 = vadd.f32 %v1037, %v1125
        %v1127 = vpop.f32.mrf.mxu0
        %v1128 = vadd.f32 %v1039, %v1127
        %1129 = vmatmul.bf16.gmra.mxu0 %v698
        %v1130 = vpop.f32.mrf.mxu0
        %v1131 = vadd.f32 %v1042, %v1130
        %v1132 = vpop.f32.mrf.mxu0
        %v1133 = vadd.f32 %v1044, %v1132
        %1134 = vdwg.mxu0
        %1135 = vmatpush.bf16.msra.mxu0 %v916
        %1136 = vmatpush.bf16.msra.mxu0 %v915
        %1137 = vmatpush.bf16.msra.mxu0 %v914
        %1138 = vmatpush.bf16.msra.mxu0 %v913
        %1139 = vmatpush.bf16.msra.mxu0 %v912
        %1140 = vmatpush.bf16.msra.mxu0 %v911
        %1141 = vmatpush.bf16.msra.mxu0 %v910
        %1142 = vmatpush.bf16.msra.mxu0 %v909
        %1143 = vmatmul.bf16.gmra.mxu0 %v639
        %v1144 = vpop.f32.mrf.mxu0
        %v1145 = vadd.f32 %v1056, %v1144
        %v1146 = vpop.f32.mrf.mxu0
        %v1147 = vadd.f32 %v1058, %v1146
        %1148 = vmatmul.bf16.gmra.mxu0 %v643
        %v1149 = vpop.f32.mrf.mxu0
        %v1150 = vadd.f32 %v1061, %v1149
        %v1151 = vpop.f32.mrf.mxu0
        %v1152 = vadd.f32 %v1063, %v1151
        %1153 = vmatmul.bf16.gmra.mxu0 %v647
        %v1154 = vpop.f32.mrf.mxu0
        %v1155 = vadd.f32 %v1066, %v1154
        %v1156 = vpop.f32.mrf.mxu0
        %v1157 = vadd.f32 %v1068, %v1156
        %1158 = vmatmul.bf16.gmra.mxu0 %v651
        %v1159 = vpop.f32.mrf.mxu0
        %v1160 = vadd.f32 %v1071, %v1159
        %v1161 = vpop.f32.mrf.mxu0
        %v1162 = vadd.f32 %v1073, %v1161
        %1163 = vmatmul.bf16.gmra.mxu0 %v655
        %v1164 = vpop.f32.mrf.mxu0
        %v1165 = vadd.f32 %v1076, %v1164
        %v1166 = vpop.f32.mrf.mxu0
        %v1167 = vadd.f32 %v1078, %v1166
        %1168 = vmatmul.bf16.gmra.mxu0 %v659
        %v1169 = vpop.f32.mrf.mxu0
        %v1170 = vadd.f32 %v1081, %v1169
        %v1171 = vpop.f32.mrf.mxu0
        %v1172 = vadd.f32 %v1083, %v1171
        %1173 = vmatmul.bf16.gmra.mxu0 %v663
        %v1174 = vpop.f32.mrf.mxu0
        %v1175 = vadd.f32 %v1086, %v1174
        %v1176 = vpop.f32.mrf.mxu0
        %v1177 = vadd.f32 %v1088, %v1176
        %1178 = vmatmul.bf16.gmra.mxu0 %v667
        %v1179 = vpop.f32.mrf.mxu0
        %v1180 = vadd.f32 %v1091, %v1179
        %v1181 = vpop.f32.mrf.mxu0
        %v1182 = vadd.f32 %v1093, %v1181
        %1183 = vmatmul.bf16.gmra.mxu0 %v671
        %v1184 = vpop.f32.mrf.mxu0
        %v1185 = vadd.f32 %v1096, %v1184
        %v1186 = vpop.f32.mrf.mxu0
        %v1187 = vadd.f32 %v1098, %v1186
        %1188 = vmatmul.bf16.gmra.mxu0 %v675
        %v1189 = vpop.f32.mrf.mxu0
        %v1190 = vadd.f32 %v1101, %v1189
        %v1191 = vpop.f32.mrf.mxu0
        %v1192 = vadd.f32 %v1103, %v1191
        %1193 = vmatmul.bf16.gmra.mxu0 %v679
        %v1194 = vpop.f32.mrf.mxu0
        %v1195 = vadd.f32 %v1106, %v1194
        %v1196 = vpop.f32.mrf.mxu0
        %v1197 = vadd.f32 %v1108, %v1196
        %1198 = vmatmul.bf16.gmra.mxu0 %v683
        %v1199 = vpop.f32.mrf.mxu0
        %v1200 = vadd.f32 %v1111, %v1199
        %v1201 = vpop.f32.mrf.mxu0
        %v1202 = vadd.f32 %v1113, %v1201
        %1203 = vmatmul.bf16.gmra.mxu0 %v687
        %v1204 = vpop.f32.mrf.mxu0
        %v1205 = vadd.f32 %v1116, %v1204
        %v1206 = vpop.f32.mrf.mxu0
        %v1207 = vadd.f32 %v1118, %v1206
        %1208 = vmatmul.bf16.gmra.mxu0 %v691
        %v1209 = vpop.f32.mrf.mxu0
        %v1210 = vadd.f32 %v1121, %v1209
        %v1211 = vpop.f32.mrf.mxu0
        %v1212 = vadd.f32 %v1123, %v1211
        %1213 = vmatmul.bf16.gmra.mxu0 %v695
        %v1214 = vpop.f32.mrf.mxu0
        %v1215 = vadd.f32 %v1126, %v1214
        %v1216 = vpop.f32.mrf.mxu0
        %v1217 = vadd.f32 %v1128, %v1216
        %1218 = vmatmul.bf16.gmra.mxu0 %v699
        %v1219 = vpop.f32.mrf.mxu0
        %v1220 = vadd.f32 %v1131, %v1219
        %v1221 = vpop.f32.mrf.mxu0
        %v1222 = vadd.f32 %v1133, %v1221
        %1223 = vdwg.mxu0
        %1224 = vmatpush.bf16.msra.mxu0 %v924
        %1225 = vmatpush.bf16.msra.mxu0 %v923
        %1226 = vmatpush.bf16.msra.mxu0 %v922
        %1227 = vmatpush.bf16.msra.mxu0 %v921
        %1228 = vmatpush.bf16.msra.mxu0 %v920
        %1229 = vmatpush.bf16.msra.mxu0 %v919
        %1230 = vmatpush.bf16.msra.mxu0 %v918
        %1231 = vmatpush.bf16.msra.mxu0 %v917
        %1232 = vmatmul.bf16.gmra.mxu0 %v640
        %v1233 = vpop.f32.mrf.mxu0
        %v1234 = vadd.f32 %v1145, %v1233
        %v1235 = vpop.f32.mrf.mxu0
        %v1236 = vadd.f32 %v1147, %v1235
        %1237 = vmatmul.bf16.gmra.mxu0 %v644
        %v1238 = vpop.f32.mrf.mxu0
        %v1239 = vadd.f32 %v1150, %v1238
        %v1240 = vpop.f32.mrf.mxu0
        %v1241 = vadd.f32 %v1152, %v1240
        %1242 = vmatmul.bf16.gmra.mxu0 %v648
        %v1243 = vpop.f32.mrf.mxu0
        %v1244 = vadd.f32 %v1155, %v1243
        %v1245 = vpop.f32.mrf.mxu0
        %v1246 = vadd.f32 %v1157, %v1245
        %1247 = vmatmul.bf16.gmra.mxu0 %v652
        %v1248 = vpop.f32.mrf.mxu0
        %v1249 = vadd.f32 %v1160, %v1248
        %v1250 = vpop.f32.mrf.mxu0
        %v1251 = vadd.f32 %v1162, %v1250
        %1252 = vmatmul.bf16.gmra.mxu0 %v656
        %v1253 = vpop.f32.mrf.mxu0
        %v1254 = vadd.f32 %v1165, %v1253
        %v1255 = vpop.f32.mrf.mxu0
        %v1256 = vadd.f32 %v1167, %v1255
        %1257 = vmatmul.bf16.gmra.mxu0 %v660
        %v1258 = vpop.f32.mrf.mxu0
        %v1259 = vadd.f32 %v1170, %v1258
        %v1260 = vpop.f32.mrf.mxu0
        %v1261 = vadd.f32 %v1172, %v1260
        %1262 = vmatmul.bf16.gmra.mxu0 %v664
        %v1263 = vpop.f32.mrf.mxu0
        %v1264 = vadd.f32 %v1175, %v1263
        %v1265 = vpop.f32.mrf.mxu0
        %v1266 = vadd.f32 %v1177, %v1265
        %1267 = vmatmul.bf16.gmra.mxu0 %v668
        %v1268 = vpop.f32.mrf.mxu0
        %v1269 = vadd.f32 %v1180, %v1268
        %v1270 = vpop.f32.mrf.mxu0
        %v1271 = vadd.f32 %v1182, %v1270
        %1272 = vmatmul.bf16.gmra.mxu0 %v672
        %v1273 = vpop.f32.mrf.mxu0
        %v1274 = vadd.f32 %v1185, %v1273
        %v1275 = vpop.f32.mrf.mxu0
        %v1276 = vadd.f32 %v1187, %v1275
        %1277 = vmatmul.bf16.gmra.mxu0 %v676
        %v1278 = vpop.f32.mrf.mxu0
        %v1279 = vadd.f32 %v1190, %v1278
        %v1280 = vpop.f32.mrf.mxu0
        %v1281 = vadd.f32 %v1192, %v1280
        %1282 = vmatmul.bf16.gmra.mxu0 %v680
        %v1283 = vpop.f32.mrf.mxu0
        %v1284 = vadd.f32 %v1195, %v1283
        %v1285 = vpop.f32.mrf.mxu0
        %v1286 = vadd.f32 %v1197, %v1285
        %1287 = vmatmul.bf16.gmra.mxu0 %v684
        %v1288 = vpop.f32.mrf.mxu0
        %v1289 = vadd.f32 %v1200, %v1288
        %v1290 = vpop.f32.mrf.mxu0
        %v1291 = vadd.f32 %v1202, %v1290
        %1292 = vmatmul.bf16.gmra.mxu0 %v688
        %v1293 = vpop.f32.mrf.mxu0
        %v1294 = vadd.f32 %v1205, %v1293
        %v1295 = vpop.f32.mrf.mxu0
        %v1296 = vadd.f32 %v1207, %v1295
        %1297 = vmatmul.bf16.gmra.mxu0 %v692
        %v1298 = vpop.f32.mrf.mxu0
        %v1299 = vadd.f32 %v1210, %v1298
        %v1300 = vpop.f32.mrf.mxu0
        %v1301 = vadd.f32 %v1212, %v1300
        %1302 = vmatmul.bf16.gmra.mxu0 %v696
        %v1303 = vpop.f32.mrf.mxu0
        %v1304 = vadd.f32 %v1215, %v1303
        %v1305 = vpop.f32.mrf.mxu0
        %v1306 = vadd.f32 %v1217, %v1305
        %1307 = vmatmul.bf16.gmra.mxu0 %v700
        %v1308 = vpop.f32.mrf.mxu0
        %v1309 = vadd.f32 %v1220, %v1308
        %v1310 = vpop.f32.mrf.mxu0
        %v1311 = vadd.f32 %v1222, %v1310
        %1312 = vdwg.mxu0
        %v1313 = vld [vmem:[#allocation2] sm:$0x1]
        %v1315 = vperm.slane %v1313, 0
        %v1317 = vmul.f32 %v1234, %v1315
        %v1318 = vmul.f32 %v1236, %v1315
        %v1319 = vmul.f32 %v1239, %v1315
        %v1320 = vmul.f32 %v1241, %v1315
        %v1321 = vmul.f32 %v1244, %v1315
        %v1322 = vmul.f32 %v1246, %v1315
        %v1323 = vmul.f32 %v1249, %v1315
        %v1324 = vmul.f32 %v1251, %v1315
        %v1325 = vmul.f32 %v1254, %v1315
        %v1326 = vmul.f32 %v1256, %v1315
        %v1327 = vmul.f32 %v1259, %v1315
        %v1328 = vmul.f32 %v1261, %v1315
        %v1329 = vmul.f32 %v1264, %v1315
        %v1330 = vmul.f32 %v1266, %v1315
        %v1331 = vmul.f32 %v1269, %v1315
        %v1332 = vmul.f32 %v1271, %v1315
        %v1333 = vmul.f32 %v1274, %v1315
        %v1334 = vmul.f32 %v1276, %v1315
        %v1335 = vmul.f32 %v1279, %v1315
        %v1336 = vmul.f32 %v1281, %v1315
        %v1337 = vmul.f32 %v1284, %v1315
        %v1338 = vmul.f32 %v1286, %v1315
        %v1339 = vmul.f32 %v1289, %v1315
        %v1340 = vmul.f32 %v1291, %v1315
        %v1341 = vmul.f32 %v1294, %v1315
        %v1342 = vmul.f32 %v1296, %v1315
        %v1343 = vmul.f32 %v1299, %v1315
        %v1344 = vmul.f32 %v1301, %v1315
        %v1345 = vmul.f32 %v1304, %v1315
        %v1346 = vmul.f32 %v1306, %v1315
        %v1347 = vmul.f32 %v1309, %v1315
        %v1348 = vmul.f32 %v1311, %v1315
        %v1349 = vld [vmem:[#allocation4] sm:$0x1]
        %v1351 = vperm.slane %v1349, 0
        %v1353 = vadd.f32 %v1317, %v1351
        %v1354 = vadd.f32 %v1318, %v1351
        %v1355 = vadd.f32 %v1319, %v1351
        %v1356 = vadd.f32 %v1320, %v1351
        %v1357 = vadd.f32 %v1321, %v1351
        %v1358 = vadd.f32 %v1322, %v1351
        %v1359 = vadd.f32 %v1323, %v1351
        %v1360 = vadd.f32 %v1324, %v1351
        %v1361 = vadd.f32 %v1325, %v1351
        %v1362 = vadd.f32 %v1326, %v1351
        %v1363 = vadd.f32 %v1327, %v1351
        %v1364 = vadd.f32 %v1328, %v1351
        %v1365 = vadd.f32 %v1329, %v1351
        %v1366 = vadd.f32 %v1330, %v1351
        %v1367 = vadd.f32 %v1331, %v1351
        %v1368 = vadd.f32 %v1332, %v1351
        %v1369 = vadd.f32 %v1333, %v1351
        %v1370 = vadd.f32 %v1334, %v1351
        %v1371 = vadd.f32 %v1335, %v1351
        %v1372 = vadd.f32 %v1336, %v1351
        %v1373 = vadd.f32 %v1337, %v1351
        %v1374 = vadd.f32 %v1338, %v1351
        %v1375 = vadd.f32 %v1339, %v1351
        %v1376 = vadd.f32 %v1340, %v1351
        %v1377 = vadd.f32 %v1341, %v1351
        %v1378 = vadd.f32 %v1342, %v1351
        %v1379 = vadd.f32 %v1343, %v1351
        %v1380 = vadd.f32 %v1344, %v1351
        %v1381 = vadd.f32 %v1345, %v1351
        %v1382 = vadd.f32 %v1346, %v1351
        %v1383 = vadd.f32 %v1347, %v1351
        %v1384 = vadd.f32 %v1348, %v1351
        %v1385 = vmax.f32 %v1353, 0.0
        %v1386 = vmax.f32 %v1354, 0.0
        %v1387 = vmax.f32 %v1355, 0.0
        %v1388 = vmax.f32 %v1356, 0.0
        %v1389 = vmax.f32 %v1357, 0.0
        %v1390 = vmax.f32 %v1358, 0.0
        %v1391 = vmax.f32 %v1359, 0.0
        %v1392 = vmax.f32 %v1360, 0.0
        %v1393 = vmax.f32 %v1361, 0.0
        %v1394 = vmax.f32 %v1362, 0.0
        %v1395 = vmax.f32 %v1363, 0.0
        %v1396 = vmax.f32 %v1364, 0.0
        %v1397 = vmax.f32 %v1365, 0.0
        %v1398 = vmax.f32 %v1366, 0.0
        %v1399 = vmax.f32 %v1367, 0.0
        %v1400 = vmax.f32 %v1368, 0.0
        %v1401 = vmax.f32 %v1369, 0.0
        %v1402 = vmax.f32 %v1370, 0.0
        %v1403 = vmax.f32 %v1371, 0.0
        %v1404 = vmax.f32 %v1372, 0.0
        %v1405 = vmax.f32 %v1373, 0.0
        %v1406 = vmax.f32 %v1374, 0.0
        %v1407 = vmax.f32 %v1375, 0.0
        %v1408 = vmax.f32 %v1376, 0.0
        %v1409 = vmax.f32 %v1377, 0.0
        %v1410 = vmax.f32 %v1378, 0.0
        %v1411 = vmax.f32 %v1379, 0.0
        %v1412 = vmax.f32 %v1380, 0.0
        %v1413 = vmax.f32 %v1381, 0.0
        %v1414 = vmax.f32 %v1382, 0.0
        %v1415 = vmax.f32 %v1383, 0.0
        %v1416 = vmax.f32 %v1384, 0.0
        %v1417 = vld [vmem:[#allocation6] sm:$0x1]
        %v1419 = vperm.slane %v1417, 0
        %v1421 = vmul.f32 %v1385, %v1419
        %v1422 = vmul.f32 %v1386, %v1419
        %v1423 = vmul.f32 %v1387, %v1419
        %v1424 = vmul.f32 %v1388, %v1419
        %v1425 = vmul.f32 %v1389, %v1419
        %v1426 = vmul.f32 %v1390, %v1419
        %v1427 = vmul.f32 %v1391, %v1419
        %v1428 = vmul.f32 %v1392, %v1419
        %v1429 = vmul.f32 %v1393, %v1419
        %v1430 = vmul.f32 %v1394, %v1419
        %v1431 = vmul.f32 %v1395, %v1419
        %v1432 = vmul.f32 %v1396, %v1419
        %v1433 = vmul.f32 %v1397, %v1419
        %v1434 = vmul.f32 %v1398, %v1419
        %v1435 = vmul.f32 %v1399, %v1419
        %v1436 = vmul.f32 %v1400, %v1419
        %v1437 = vmul.f32 %v1401, %v1419
        %v1438 = vmul.f32 %v1402, %v1419
        %v1439 = vmul.f32 %v1403, %v1419
        %v1440 = vmul.f32 %v1404, %v1419
        %v1441 = vmul.f32 %v1405, %v1419
        %v1442 = vmul.f32 %v1406, %v1419
        %v1443 = vmul.f32 %v1407, %v1419
        %v1444 = vmul.f32 %v1408, %v1419
        %v1445 = vmul.f32 %v1409, %v1419
        %v1446 = vmul.f32 %v1410, %v1419
        %v1447 = vmul.f32 %v1411, %v1419
        %v1448 = vmul.f32 %v1412, %v1419
        %v1449 = vmul.f32 %v1413, %v1419
        %v1450 = vmul.f32 %v1414, %v1419
        %v1451 = vmul.f32 %v1415, %v1419
        %v1452 = vmul.f32 %v1416, %v1419
        %v1453 = vld [vmem:[#allocation7] sm:$0x1]
        %v1455 = vperm.slane %v1453, 0
        %v1457 = vadd.f32 %v1421, %v1455
        %v1458 = vadd.f32 %v1422, %v1455
        %v1459 = vadd.f32 %v1423, %v1455
        %v1460 = vadd.f32 %v1424, %v1455
        %v1461 = vadd.f32 %v1425, %v1455
        %v1462 = vadd.f32 %v1426, %v1455
        %v1463 = vadd.f32 %v1427, %v1455
        %v1464 = vadd.f32 %v1428, %v1455
        %v1465 = vadd.f32 %v1429, %v1455
        %v1466 = vadd.f32 %v1430, %v1455
        %v1467 = vadd.f32 %v1431, %v1455
        %v1468 = vadd.f32 %v1432, %v1455
        %v1469 = vadd.f32 %v1433, %v1455
        %v1470 = vadd.f32 %v1434, %v1455
        %v1471 = vadd.f32 %v1435, %v1455
        %v1472 = vadd.f32 %v1436, %v1455
        %v1473 = vadd.f32 %v1437, %v1455
        %v1474 = vadd.f32 %v1438, %v1455
        %v1475 = vadd.f32 %v1439, %v1455
        %v1476 = vadd.f32 %v1440, %v1455
        %v1477 = vadd.f32 %v1441, %v1455
        %v1478 = vadd.f32 %v1442, %v1455
        %v1479 = vadd.f32 %v1443, %v1455
        %v1480 = vadd.f32 %v1444, %v1455
        %v1481 = vadd.f32 %v1445, %v1455
        %v1482 = vadd.f32 %v1446, %v1455
        %v1483 = vadd.f32 %v1447, %v1455
        %v1484 = vadd.f32 %v1448, %v1455
        %v1485 = vadd.f32 %v1449, %v1455
        %v1486 = vadd.f32 %v1450, %v1455
        %v1487 = vadd.f32 %v1451, %v1455
        %v1488 = vadd.f32 %v1452, %v1455
        %v1489 = vmax.f32 %v1457, 0.0
        %v1490 = vmax.f32 %v1458, 0.0
        %v1491 = vmax.f32 %v1459, 0.0
        %v1492 = vmax.f32 %v1460, 0.0
        %v1493 = vmax.f32 %v1461, 0.0
        %v1494 = vmax.f32 %v1462, 0.0
        %v1495 = vmax.f32 %v1463, 0.0
        %v1496 = vmax.f32 %v1464, 0.0
        %v1497 = vmax.f32 %v1465, 0.0
        %v1498 = vmax.f32 %v1466, 0.0
        %v1499 = vmax.f32 %v1467, 0.0
        %v1500 = vmax.f32 %v1468, 0.0
        %v1501 = vmax.f32 %v1469, 0.0
        %v1502 = vmax.f32 %v1470, 0.0
        %v1503 = vmax.f32 %v1471, 0.0
        %v1504 = vmax.f32 %v1472, 0.0
        %v1505 = vmax.f32 %v1473, 0.0
        %v1506 = vmax.f32 %v1474, 0.0
        %v1507 = vmax.f32 %v1475, 0.0
        %v1508 = vmax.f32 %v1476, 0.0
        %v1509 = vmax.f32 %v1477, 0.0
        %v1510 = vmax.f32 %v1478, 0.0
        %v1511 = vmax.f32 %v1479, 0.0
        %v1512 = vmax.f32 %v1480, 0.0
        %v1513 = vmax.f32 %v1481, 0.0
        %v1514 = vmax.f32 %v1482, 0.0
        %v1515 = vmax.f32 %v1483, 0.0
        %v1516 = vmax.f32 %v1484, 0.0
        %v1517 = vmax.f32 %v1485, 0.0
        %v1518 = vmax.f32 %v1486, 0.0
        %v1519 = vmax.f32 %v1487, 0.0
        %v1520 = vmax.f32 %v1488, 0.0
        %v1521 = vpack.c.bf16 %v1489, %v1489
        %v1522 = vpack.c.bf16 %v1490, %v1490
        %v1523 = vpack.c.bf16 %v1491, %v1491
        %v1524 = vpack.c.bf16 %v1492, %v1492
        %v1525 = vpack.c.bf16 %v1493, %v1493
        %v1526 = vpack.c.bf16 %v1494, %v1494
        %v1527 = vpack.c.bf16 %v1495, %v1495
        %v1528 = vpack.c.bf16 %v1496, %v1496
        %v1529 = vpack.c.bf16 %v1497, %v1497
        %v1530 = vpack.c.bf16 %v1498, %v1498
        %v1531 = vpack.c.bf16 %v1499, %v1499
        %v1532 = vpack.c.bf16 %v1500, %v1500
        %v1533 = vpack.c.bf16 %v1501, %v1501
        %v1534 = vpack.c.bf16 %v1502, %v1502
        %v1535 = vpack.c.bf16 %v1503, %v1503
        %v1536 = vpack.c.bf16 %v1504, %v1504
        %v1537 = vpack.c.bf16 %v1505, %v1505
        %v1538 = vpack.c.bf16 %v1506, %v1506
        %v1539 = vpack.c.bf16 %v1507, %v1507
        %v1540 = vpack.c.bf16 %v1508, %v1508
        %v1541 = vpack.c.bf16 %v1509, %v1509
        %v1542 = vpack.c.bf16 %v1510, %v1510
        %v1543 = vpack.c.bf16 %v1511, %v1511
        %v1544 = vpack.c.bf16 %v1512, %v1512
        %v1545 = vpack.c.bf16 %v1513, %v1513
        %v1546 = vpack.c.bf16 %v1514, %v1514
        %v1547 = vpack.c.bf16 %v1515, %v1515
        %v1548 = vpack.c.bf16 %v1516, %v1516
        %v1549 = vpack.c.bf16 %v1517, %v1517
        %v1550 = vpack.c.bf16 %v1518, %v1518
        %v1551 = vpack.c.bf16 %v1519, %v1519
        %v1552 = vpack.c.bf16 %v1520, %v1520
        %vm1553 = vcmask 519168
        %1554 = vst.msk [vmem:[%s315] sm:$0xf] %vm1553, %v1521
        %1555 = vst.msk [vmem:[%s315 + $0x4] sm:$0xf] %vm1553, %v1522
        %1556 = vst.msk [vmem:[%s315 + $0x8] sm:$0xf] %vm1553, %v1523
        %1557 = vst.msk [vmem:[%s315 + $0xc] sm:$0xf] %vm1553, %v1524
        %1558 = vst.msk [vmem:[%s315 + $0x10] sm:$0xf] %vm1553, %v1525
        %1559 = vst.msk [vmem:[%s315 + $0x14] sm:$0xf] %vm1553, %v1526
        %1560 = vst.msk [vmem:[%s315 + $0x18] sm:$0xf] %vm1553, %v1527
        %1561 = vst.msk [vmem:[%s315 + $0x1c] sm:$0xf] %vm1553, %v1528
        %1562 = vst.msk [vmem:[%s315 + $0x20] sm:$0xf] %vm1553, %v1529
        %1563 = vst.msk [vmem:[%s315 + $0x24] sm:$0xf] %vm1553, %v1530
        %1564 = vst.msk [vmem:[%s315 + $0x28] sm:$0xf] %vm1553, %v1531
        %1565 = vst.msk [vmem:[%s315 + $0x2c] sm:$0xf] %vm1553, %v1532
        %1566 = vst.msk [vmem:[%s315 + $0x30] sm:$0xf] %vm1553, %v1533
        %1567 = vst.msk [vmem:[%s315 + $0x34] sm:$0xf] %vm1553, %v1534
        %1568 = vst.msk [vmem:[%s315 + $0x38] sm:$0xf] %vm1553, %v1535
        %1569 = vst.msk [vmem:[%s315 + $0x3c] sm:$0xf] %vm1553, %v1536
        %1570 = vst.msk [vmem:[%s315 + $0x40] sm:$0xf] %vm1553, %v1537
        %1571 = vst.msk [vmem:[%s315 + $0x44] sm:$0xf] %vm1553, %v1538
        %1572 = vst.msk [vmem:[%s315 + $0x48] sm:$0xf] %vm1553, %v1539
        %1573 = vst.msk [vmem:[%s315 + $0x4c] sm:$0xf] %vm1553, %v1540
        %1574 = vst.msk [vmem:[%s315 + $0x50] sm:$0xf] %vm1553, %v1541
        %1575 = vst.msk [vmem:[%s315 + $0x54] sm:$0xf] %vm1553, %v1542
        %1576 = vst.msk [vmem:[%s315 + $0x58] sm:$0xf] %vm1553, %v1543
        %1577 = vst.msk [vmem:[%s315 + $0x5c] sm:$0xf] %vm1553, %v1544
        %1578 = vst.msk [vmem:[%s315 + $0x60] sm:$0xf] %vm1553, %v1545
        %1579 = vst.msk [vmem:[%s315 + $0x64] sm:$0xf] %vm1553, %v1546
        %1580 = vst.msk [vmem:[%s315 + $0x68] sm:$0xf] %vm1553, %v1547
        %1581 = vst.msk [vmem:[%s315 + $0x6c] sm:$0xf] %vm1553, %v1548
        %1582 = vst.msk [vmem:[%s315 + $0x70] sm:$0xf] %vm1553, %v1549
        %1583 = vst.msk [vmem:[%s315 + $0x74] sm:$0xf] %vm1553, %v1550
        %1584 = vst.msk [vmem:[%s315 + $0x78] sm:$0xf] %vm1553, %v1551
        %1585 = vst.msk [vmem:[%s315 + $0x7c] sm:$0xf] %vm1553, %v1552
        %s1586 = smul.u32 32, %s20
        %p1587 = scmp.lt.s32.totalorder %s1586, 63
        %s1588 = scalar_select %p1587, %s1586, 63
        %s1589 = smul.addr %s1588, 4
        %s1590 = scalar_lea.vmem %s6, %s1589
        // Predicated region
        $region61: #{aspp_forward.2} parent=43 // pred_check
          %p1591 = pneg %p169
        $region62: #{aspp_forward.2} parent=43 // pred_check_branch
          %1593 = sbr.rel (%p1591) target = $region64
        $region63: #{aspp_forward.2} parent=43 // pred_region
          %s1594 = smul.u32 32, %s20
        $region64: #{aspp_forward.2} parent=43 // pred_fallthru
          _
      $region44: #{aspp_forward.2} parent=5 // pred_fallthru
        _
      %p1595 = scmp.le.s32.totalorder 2, %s15
      // Predicated region
      $region65: #{aspp_forward.2} parent=5 // pred_check
        %p1596 = pneg %p1595
      $region66: #{aspp_forward.2} parent=5 // pred_check_branch
        %1598 = sbr.rel (%p1596) target = $region68
      $region67: #{aspp_forward.2} parent=5 // pred_region
        %s1599 = ssub.s32 %s15, 2
        // Predicated region
        $region69: #{aspp_forward.2} parent=67 // pred_check
          %p1600 = pneg %p175
        $region70: #{aspp_forward.2} parent=67 // pred_check_branch
          %1602 = sbr.rel (%p1600) target = $region72
        $region71: #{aspp_forward.2} parent=67 // pred_region
          %s1603 = smul.u32 32, %s21
          %p1604 = scmp.lt.s32.totalorder %s1603, 63
          %s1605 = scalar_select %p1604, %s1603, 63
          %s1606 = smul.addr %s1605, 4
          %s1607 = scalar_lea.vmem %s6, %s1606
        $region72: #{aspp_forward.2} parent=67 // pred_fallthru
          _
      $region68: #{aspp_forward.2} parent=5 // pred_fallthru
        _
    $region6: #{aspp_forward.2} parent=1 // loop_footer
      %s19 = sadd.s32 1, %s15
    $region7: #{aspp_forward.2} parent=1 // loop_footer_branch
      %14 = sbr.rel target = $region3
    $region8: #{aspp_forward.2} parent=1 // loop_exit
      _
    %1608 = vsyncpa [#allocation3], 1
    %s1609 = scalar_lea.sflag [#allocation3], 1
    %1610 = vsyncpa %s1609, 1
    %1611 = vsyncpa [#allocation5], 1
    %1612 = vsyncpa [#allocation8], 1

// kernel: aspp_forward.3
$region0: #{aspp_forward.3}
  #allocation0 [shape = 'u32[]', space=smem, size = 0x4, offset = 0x4, fixed_abs, tag = 'smem constant byte address 0x4 - core index']
  #allocation1 [shape = 'u32[72,128]{1,0:T(1,128)}', space=vmem, size = 0x9000, scoped, tag = 'internal scratch']
  %s0 = inlined_call_operand.vmem [shape: bf16[512,64], index: 0, kind: input, shape index: {}, may-alias: {0,3}]
  %s1 = inlined_call_operand.vmem [shape: bf16[512,576], index: 1, kind: input, shape index: {}]
  %s2 = inlined_call_operand.vmem [shape: bf16[512,576], index: 2, kind: input, shape index: {}]
  %s3 = inlined_call_operand.vmem [shape: bf16[512,64], index: 3, kind: input, shape index: {}, may-alias: {0,3}]
  %s4 = inlined_call_operand.vmem [shape: bf16[512,256], index: 4, kind: input, shape index: {}]
  %s5 = inlined_call_operand.vmem [shape: bf16[64,256], index: 5, kind: input, shape index: {}]
  %s6 = inlined_call_operand.vmem [shape: bf16[576,256], index: 6, kind: input, shape index: {}]
  %s7 = inlined_call_operand.vmem [shape: bf16[576,256], index: 7, kind: input, shape index: {}]
  %s8 = inlined_call_operand.vmem [shape: bf16[64,256], index: 8, kind: input, shape index: {}]
  %s9 = inlined_call_operand.vmem [shape: bf16[256,256], index: 9, kind: input, shape index: {}]
  %s10 = inlined_call_operand.vmem [shape: bf16[256,256], index: 10, kind: input, shape index: {}]
  %s11 = inlined_call_operand.vmem [shape: bf16[256,256], index: 11, kind: input, shape index: {}]
  %s12 = inlined_call_operand.vmem [shape: bf16[256,256], index: 12, kind: input, shape index: {}]
  %s13 = inlined_call_operand.vmem [shape: bf16[256,256], index: 13, kind: input, shape index: {}]
  %s14 = inlined_call_operand.vmem [shape: f32[1,256], index: 14, kind: input, shape index: {}, may-alias: {14,16}]
  %s15 = inlined_call_operand.vmem [shape: f32[1,256], index: 15, kind: input, shape index: {}, may-alias: {15,17}]
  %s16 = inlined_call_operand.vmem [shape: f32[1,256], index: 16, kind: input, shape index: {}, may-alias: {14,16}]
  %s17 = inlined_call_operand.vmem [shape: f32[1,256], index: 17, kind: input, shape index: {}, may-alias: {15,17}]
  %s18 = inlined_call_operand.hbm [shape: f32[512,256], index: 18, kind: output, shape index: {}]
  %s19 = sld [smem:[#allocation0]]
  $region105: #{aspp_forward.3} parent=0
    _
  %s21 = ssub.s32 1, %s19
  %s22 = scalar_select 0, %s21, %s19
  $region1: #{aspp_forward.3} parent=0
    #allocation2 [shape = 'u8[524288]{0}', space=vmem, size = 0x80000, scoped, tag = 'output window, operand 0']
    #allocation3 [shape = 's32[2]{0}', space=sflag, size = 0x8, scoped, tag = 'scoped memory for aspp_forward.3']
    %23 = vsyncpa [#allocation3], 0
    %s24 = scalar_lea.sflag [#allocation3], 1
    %25 = vsyncpa %s24, 0
    loop: start=0, step=1, limit=4
    $region2: #{aspp_forward.3} parent=1 // loop_pre_header
      _
    $region3: #{aspp_forward.3} parent=1 // loop_header
      %s27 = sphi 0, %s31
      %p28 = scmp.ge.s32.totalorder %s27, 4
      %s37 = sphi 0, %s39
      %s40 = sphi 0, %s37
      %s41 = sphi 0, %s40
      %s57 = sphi 0, %s41
      %s63 = sphi 0, %s65
      %s66 = sphi 0, %s63
      %s67 = sphi 0, %s66
      %s83 = sphi 0, %s67
      %s89 = sphi 0, %s91
      %s92 = sphi 0, %s89
      %s93 = sphi 0, %s92
      %s109 = sphi 0, %s93
      %s115 = sphi 0, %s117
      %s118 = sphi 0, %s115
      %s119 = sphi 0, %s118
      %s135 = sphi 0, %s119
      %s141 = sphi 0, %s143
      %s144 = sphi 0, %s141
      %s145 = sphi 0, %s144
      %s161 = sphi 0, %s145
      %s165 = sphi 0, %s165
      %s167 = sphi 0, %s165
      %s168 = sphi 0, %s167
      %s182 = sphi 0, %s168
      %s186 = sphi 0, %s186
      %s188 = sphi 0, %s186
      %s189 = sphi 0, %s188
      %s203 = sphi 0, %s189
      %s207 = sphi 0, %s207
      %s209 = sphi 0, %s207
      %s210 = sphi 0, %s209
      %s224 = sphi 0, %s210
      %s228 = sphi 0, %s228
      %s230 = sphi 0, %s228
      %s231 = sphi 0, %s230
      %s245 = sphi 0, %s231
      %s249 = sphi 0, %s249
      %s251 = sphi 0, %s249
      %s252 = sphi 0, %s251
      %s266 = sphi 0, %s252
      %s270 = sphi 0, %s270
      %s272 = sphi 0, %s270
      %s273 = sphi 0, %s272
      %s287 = sphi 0, %s273
      %s291 = sphi 0, %s291
      %s293 = sphi 0, %s291
      %s294 = sphi 0, %s293
      %s308 = sphi 0, %s294
      %s312 = sphi 0, %s312
      %s314 = sphi 0, %s312
      %s315 = sphi 0, %s314
      %s329 = sphi 0, %s315
      %s333 = sphi 0, %s333
      %s335 = sphi 0, %s333
      %s336 = sphi 0, %s335
      %s350 = sphi 0, %s336
      %s354 = sphi 0, %s354
      %s356 = sphi 0, %s354
      %s357 = sphi 0, %s356
      %s371 = sphi 0, %s357
      %s375 = sphi 0, %s375
      %s377 = sphi 0, %s375
      %s378 = sphi 0, %s377
      %s392 = sphi 0, %s378
      %s396 = sphi 0, %s396
      %s398 = sphi 0, %s396
      %s399 = sphi 0, %s398
      %s413 = sphi 0, %s399
      %s417 = sphi 0, %s417
      %s419 = sphi 0, %s417
      %s420 = sphi 0, %s419
      %s434 = sphi 0, %s420
      %s440 = sphi 0, %s442
      %s443 = sphi 0, %s440
      %s444 = sphi 0, %s443
      %s460 = sphi 0, %s444
    $region4: #{aspp_forward.3} parent=1 // loop_header_branch
      %30 = sbr.rel (%p28) target = $region8
    $region5: #{aspp_forward.3} parent=1 // loop_body
      %s32 = ssub.s32 %s27, 1
      %s33 = ssub.s32 %s27, 2
      %s34 = sadd.s32 %s27, 1
      %s35 = ssub.s32 %s27, %s34
      %p36 = scmp.eq.s32.totalorder %s35, 0
      %s38 = sadd.s32 %s37, 1
      %s39 = scalar_select %p36, %s37, %s38
      %p42 = pneg %p36
      %p43 = scmp.eq.s32.totalorder %s27, 1
      %p44 = por %p42, %p43
      %p45 = scmp.ne.s32.totalorder %s37, %s40
      %p46 = scmp.eq.s32.totalorder %s27, 0
      %p47 = por %p45, %p46
      %p48 = scmp.ne.s32.totalorder %s37, %s40
      %p49 = scmp.eq.s32.totalorder %s32, 1
      %p50 = por %p48, %p49
      %p51 = scmp.ne.s32.totalorder %s40, %s41
      %p52 = scmp.eq.s32.totalorder %s32, 0
      %p53 = por %p51, %p52
      %p54 = scmp.ne.s32.totalorder %s40, %s41
      %p55 = scmp.eq.s32.totalorder %s33, 1
      %p56 = por %p54, %p55
      %p58 = scmp.ne.s32.totalorder %s41, %s57
      %p59 = scmp.eq.s32.totalorder %s33, 0
      %p60 = por %p58, %p59
      %s61 = ssub.s32 %s27, %s34
      %p62 = scmp.eq.s32.totalorder %s61, 0
      %s64 = sadd.s32 %s63, 1
      %s65 = scalar_select %p62, %s63, %s64
      %p68 = pneg %p62
      %p69 = scmp.eq.s32.totalorder %s27, 1
      %p70 = por %p68, %p69
      %p71 = scmp.ne.s32.totalorder %s63, %s66
      %p72 = scmp.eq.s32.totalorder %s27, 0
      %p73 = por %p71, %p72
      %p74 = scmp.ne.s32.totalorder %s63, %s66
      %p75 = scmp.eq.s32.totalorder %s32, 1
      %p76 = por %p74, %p75
      %p77 = scmp.ne.s32.totalorder %s66, %s67
      %p78 = scmp.eq.s32.totalorder %s32, 0
      %p79 = por %p77, %p78
      %p80 = scmp.ne.s32.totalorder %s66, %s67
      %p81 = scmp.eq.s32.totalorder %s33, 1
      %p82 = por %p80, %p81
      %p84 = scmp.ne.s32.totalorder %s67, %s83
      %p85 = scmp.eq.s32.totalorder %s33, 0
      %p86 = por %p84, %p85
      %s87 = ssub.s32 %s27, %s34
      %p88 = scmp.eq.s32.totalorder %s87, 0
      %s90 = sadd.s32 %s89, 1
      %s91 = scalar_select %p88, %s89, %s90
      %p94 = pneg %p88
      %p95 = scmp.eq.s32.totalorder %s27, 1
      %p96 = por %p94, %p95
      %p97 = scmp.ne.s32.totalorder %s89, %s92
      %p98 = scmp.eq.s32.totalorder %s27, 0
      %p99 = por %p97, %p98
      %p100 = scmp.ne.s32.totalorder %s89, %s92
      %p101 = scmp.eq.s32.totalorder %s32, 1
      %p102 = por %p100, %p101
      %p103 = scmp.ne.s32.totalorder %s92, %s93
      %p104 = scmp.eq.s32.totalorder %s32, 0
      %p105 = por %p103, %p104
      %p106 = scmp.ne.s32.totalorder %s92, %s93
      %p107 = scmp.eq.s32.totalorder %s33, 1
      %p108 = por %p106, %p107
      %p110 = scmp.ne.s32.totalorder %s93, %s109
      %p111 = scmp.eq.s32.totalorder %s33, 0
      %p112 = por %p110, %p111
      %s113 = ssub.s32 %s27, %s34
      %p114 = scmp.eq.s32.totalorder %s113, 0
      %s116 = sadd.s32 %s115, 1
      %s117 = scalar_select %p114, %s115, %s116
      %p120 = pneg %p114
      %p121 = scmp.eq.s32.totalorder %s27, 1
      %p122 = por %p120, %p121
      %p123 = scmp.ne.s32.totalorder %s115, %s118
      %p124 = scmp.eq.s32.totalorder %s27, 0
      %p125 = por %p123, %p124
      %p126 = scmp.ne.s32.totalorder %s115, %s118
      %p127 = scmp.eq.s32.totalorder %s32, 1
      %p128 = por %p126, %p127
      %p129 = scmp.ne.s32.totalorder %s118, %s119
      %p130 = scmp.eq.s32.totalorder %s32, 0
      %p131 = por %p129, %p130
      %p132 = scmp.ne.s32.totalorder %s118, %s119
      %p133 = scmp.eq.s32.totalorder %s33, 1
      %p134 = por %p132, %p133
      %p136 = scmp.ne.s32.totalorder %s119, %s135
      %p137 = scmp.eq.s32.totalorder %s33, 0
      %p138 = por %p136, %p137
      %s139 = ssub.s32 %s27, %s34
      %p140 = scmp.eq.s32.totalorder %s139, 0
      %s142 = sadd.s32 %s141, 1
      %s143 = scalar_select %p140, %s141, %s142
      %p146 = pneg %p140
      %p147 = scmp.eq.s32.totalorder %s27, 1
      %p148 = por %p146, %p147
      %p149 = scmp.ne.s32.totalorder %s141, %s144
      %p150 = scmp.eq.s32.totalorder %s27, 0
      %p151 = por %p149, %p150
      %p152 = scmp.ne.s32.totalorder %s141, %s144
      %p153 = scmp.eq.s32.totalorder %s32, 1
      %p154 = por %p152, %p153
      %p155 = scmp.ne.s32.totalorder %s144, %s145
      %p156 = scmp.eq.s32.totalorder %s32, 0
      %p157 = por %p155, %p156
      %p158 = scmp.ne.s32.totalorder %s144, %s145
      %p159 = scmp.eq.s32.totalorder %s33, 1
      %p160 = por %p158, %p159
      %p162 = scmp.ne.s32.totalorder %s145, %s161
      %p163 = scmp.eq.s32.totalorder %s33, 0
      %p164 = por %p162, %p163
      %s166 = sadd.s32 %s165, 1
      %p169 = scmp.eq.s32.totalorder %s27, 1
      %p170 = scmp.ne.s32.totalorder %s165, %s167
      %p171 = scmp.eq.s32.totalorder %s27, 0
      %p172 = por %p170, %p171
      %p173 = scmp.ne.s32.totalorder %s165, %s167
      %p174 = scmp.eq.s32.totalorder %s32, 1
      %p175 = por %p173, %p174
      %p176 = scmp.ne.s32.totalorder %s167, %s168
      %p177 = scmp.eq.s32.totalorder %s32, 0
      %p178 = por %p176, %p177
      %p179 = scmp.ne.s32.totalorder %s167, %s168
      %p180 = scmp.eq.s32.totalorder %s33, 1
      %p181 = por %p179, %p180
      %p183 = scmp.ne.s32.totalorder %s168, %s182
      %p184 = scmp.eq.s32.totalorder %s33, 0
      %p185 = por %p183, %p184
      %s187 = sadd.s32 %s186, 1
      %p190 = scmp.eq.s32.totalorder %s27, 1
      %p191 = scmp.ne.s32.totalorder %s186, %s188
      %p192 = scmp.eq.s32.totalorder %s27, 0
      %p193 = por %p191, %p192
      %p194 = scmp.ne.s32.totalorder %s186, %s188
      %p195 = scmp.eq.s32.totalorder %s32, 1
      %p196 = por %p194, %p195
      %p197 = scmp.ne.s32.totalorder %s188, %s189
      %p198 = scmp.eq.s32.totalorder %s32, 0
      %p199 = por %p197, %p198
      %p200 = scmp.ne.s32.totalorder %s188, %s189
      %p201 = scmp.eq.s32.totalorder %s33, 1
      %p202 = por %p200, %p201
      %p204 = scmp.ne.s32.totalorder %s189, %s203
      %p205 = scmp.eq.s32.totalorder %s33, 0
      %p206 = por %p204, %p205
      %s208 = sadd.s32 %s207, 1
      %p211 = scmp.eq.s32.totalorder %s27, 1
      %p212 = scmp.ne.s32.totalorder %s207, %s209
      %p213 = scmp.eq.s32.totalorder %s27, 0
      %p214 = por %p212, %p213
      %p215 = scmp.ne.s32.totalorder %s207, %s209
      %p216 = scmp.eq.s32.totalorder %s32, 1
      %p217 = por %p215, %p216
      %p218 = scmp.ne.s32.totalorder %s209, %s210
      %p219 = scmp.eq.s32.totalorder %s32, 0
      %p220 = por %p218, %p219
      %p221 = scmp.ne.s32.totalorder %s209, %s210
      %p222 = scmp.eq.s32.totalorder %s33, 1
      %p223 = por %p221, %p222
      %p225 = scmp.ne.s32.totalorder %s210, %s224
      %p226 = scmp.eq.s32.totalorder %s33, 0
      %p227 = por %p225, %p226
      %s229 = sadd.s32 %s228, 1
      %p232 = scmp.eq.s32.totalorder %s27, 1
      %p233 = scmp.ne.s32.totalorder %s228, %s230
      %p234 = scmp.eq.s32.totalorder %s27, 0
      %p235 = por %p233, %p234
      %p236 = scmp.ne.s32.totalorder %s228, %s230
      %p237 = scmp.eq.s32.totalorder %s32, 1
      %p238 = por %p236, %p237
      %p239 = scmp.ne.s32.totalorder %s230, %s231
      %p240 = scmp.eq.s32.totalorder %s32, 0
      %p241 = por %p239, %p240
      %p242 = scmp.ne.s32.totalorder %s230, %s231
      %p243 = scmp.eq.s32.totalorder %s33, 1
      %p244 = por %p242, %p243
      %p246 = scmp.ne.s32.totalorder %s231, %s245
      %p247 = scmp.eq.s32.totalorder %s33, 0
      %p248 = por %p246, %p247
      %s250 = sadd.s32 %s249, 1
      %p253 = scmp.eq.s32.totalorder %s27, 1
      %p254 = scmp.ne.s32.totalorder %s249, %s251
      %p255 = scmp.eq.s32.totalorder %s27, 0
      %p256 = por %p254, %p255
      %p257 = scmp.ne.s32.totalorder %s249, %s251
      %p258 = scmp.eq.s32.totalorder %s32, 1
      %p259 = por %p257, %p258
      %p260 = scmp.ne.s32.totalorder %s251, %s252
      %p261 = scmp.eq.s32.totalorder %s32, 0
      %p262 = por %p260, %p261
      %p263 = scmp.ne.s32.totalorder %s251, %s252
      %p264 = scmp.eq.s32.totalorder %s33, 1
      %p265 = por %p263, %p264
      %p267 = scmp.ne.s32.totalorder %s252, %s266
      %p268 = scmp.eq.s32.totalorder %s33, 0
      %p269 = por %p267, %p268
      %s271 = sadd.s32 %s270, 1
      %p274 = scmp.eq.s32.totalorder %s27, 1
      %p275 = scmp.ne.s32.totalorder %s270, %s272
      %p276 = scmp.eq.s32.totalorder %s27, 0
      %p277 = por %p275, %p276
      %p278 = scmp.ne.s32.totalorder %s270, %s272
      %p279 = scmp.eq.s32.totalorder %s32, 1
      %p280 = por %p278, %p279
      %p281 = scmp.ne.s32.totalorder %s272, %s273
      %p282 = scmp.eq.s32.totalorder %s32, 0
      %p283 = por %p281, %p282
      %p284 = scmp.ne.s32.totalorder %s272, %s273
      %p285 = scmp.eq.s32.totalorder %s33, 1
      %p286 = por %p284, %p285
      %p288 = scmp.ne.s32.totalorder %s273, %s287
      %p289 = scmp.eq.s32.totalorder %s33, 0
      %p290 = por %p288, %p289
      %s292 = sadd.s32 %s291, 1
      %p295 = scmp.eq.s32.totalorder %s27, 1
      %p296 = scmp.ne.s32.totalorder %s291, %s293
      %p297 = scmp.eq.s32.totalorder %s27, 0
      %p298 = por %p296, %p297
      %p299 = scmp.ne.s32.totalorder %s291, %s293
      %p300 = scmp.eq.s32.totalorder %s32, 1
      %p301 = por %p299, %p300
      %p302 = scmp.ne.s32.totalorder %s293, %s294
      %p303 = scmp.eq.s32.totalorder %s32, 0
      %p304 = por %p302, %p303
      %p305 = scmp.ne.s32.totalorder %s293, %s294
      %p306 = scmp.eq.s32.totalorder %s33, 1
      %p307 = por %p305, %p306
      %p309 = scmp.ne.s32.totalorder %s294, %s308
      %p310 = scmp.eq.s32.totalorder %s33, 0
      %p311 = por %p309, %p310
      %s313 = sadd.s32 %s312, 1
      %p316 = scmp.eq.s32.totalorder %s27, 1
      %p317 = scmp.ne.s32.totalorder %s312, %s314
      %p318 = scmp.eq.s32.totalorder %s27, 0
      %p319 = por %p317, %p318
      %p320 = scmp.ne.s32.totalorder %s312, %s314
      %p321 = scmp.eq.s32.totalorder %s32, 1
      %p322 = por %p320, %p321
      %p323 = scmp.ne.s32.totalorder %s314, %s315
      %p324 = scmp.eq.s32.totalorder %s32, 0
      %p325 = por %p323, %p324
      %p326 = scmp.ne.s32.totalorder %s314, %s315
      %p327 = scmp.eq.s32.totalorder %s33, 1
      %p328 = por %p326, %p327
      %p330 = scmp.ne.s32.totalorder %s315, %s329
      %p331 = scmp.eq.s32.totalorder %s33, 0
      %p332 = por %p330, %p331
      %s334 = sadd.s32 %s333, 1
      %p337 = scmp.eq.s32.totalorder %s27, 1
      %p338 = scmp.ne.s32.totalorder %s333, %s335
      %p339 = scmp.eq.s32.totalorder %s27, 0
      %p340 = por %p338, %p339
      %p341 = scmp.ne.s32.totalorder %s333, %s335
      %p342 = scmp.eq.s32.totalorder %s32, 1
      %p343 = por %p341, %p342
      %p344 = scmp.ne.s32.totalorder %s335, %s336
      %p345 = scmp.eq.s32.totalorder %s32, 0
      %p346 = por %p344, %p345
      %p347 = scmp.ne.s32.totalorder %s335, %s336
      %p348 = scmp.eq.s32.totalorder %s33, 1
      %p349 = por %p347, %p348
      %p351 = scmp.ne.s32.totalorder %s336, %s350
      %p352 = scmp.eq.s32.totalorder %s33, 0
      %p353 = por %p351, %p352
      %s355 = sadd.s32 %s354, 1
      %p358 = scmp.eq.s32.totalorder %s27, 1
      %p359 = scmp.ne.s32.totalorder %s354, %s356
      %p360 = scmp.eq.s32.totalorder %s27, 0
      %p361 = por %p359, %p360
      %p362 = scmp.ne.s32.totalorder %s354, %s356
      %p363 = scmp.eq.s32.totalorder %s32, 1
      %p364 = por %p362, %p363
      %p365 = scmp.ne.s32.totalorder %s356, %s357
      %p366 = scmp.eq.s32.totalorder %s32, 0
      %p367 = por %p365, %p366
      %p368 = scmp.ne.s32.totalorder %s356, %s357
      %p369 = scmp.eq.s32.totalorder %s33, 1
      %p370 = por %p368, %p369
      %p372 = scmp.ne.s32.totalorder %s357, %s371
      %p373 = scmp.eq.s32.totalorder %s33, 0
      %p374 = por %p372, %p373
      %s376 = sadd.s32 %s375, 1
      %p379 = scmp.eq.s32.totalorder %s27, 1
      %p380 = scmp.ne.s32.totalorder %s375, %s377
      %p381 = scmp.eq.s32.totalorder %s27, 0
      %p382 = por %p380, %p381
      %p383 = scmp.ne.s32.totalorder %s375, %s377
      %p384 = scmp.eq.s32.totalorder %s32, 1
      %p385 = por %p383, %p384
      %p386 = scmp.ne.s32.totalorder %s377, %s378
      %p387 = scmp.eq.s32.totalorder %s32, 0
      %p388 = por %p386, %p387
      %p389 = scmp.ne.s32.totalorder %s377, %s378
      %p390 = scmp.eq.s32.totalorder %s33, 1
      %p391 = por %p389, %p390
      %p393 = scmp.ne.s32.totalorder %s378, %s392
      %p394 = scmp.eq.s32.totalorder %s33, 0
      %p395 = por %p393, %p394
      %s397 = sadd.s32 %s396, 1
      %p400 = scmp.eq.s32.totalorder %s27, 1
      %p401 = scmp.ne.s32.totalorder %s396, %s398
      %p402 = scmp.eq.s32.totalorder %s27, 0
      %p403 = por %p401, %p402
      %p404 = scmp.ne.s32.totalorder %s396, %s398
      %p405 = scmp.eq.s32.totalorder %s32, 1
      %p406 = por %p404, %p405
      %p407 = scmp.ne.s32.totalorder %s398, %s399
      %p408 = scmp.eq.s32.totalorder %s32, 0
      %p409 = por %p407, %p408
      %p410 = scmp.ne.s32.totalorder %s398, %s399
      %p411 = scmp.eq.s32.totalorder %s33, 1
      %p412 = por %p410, %p411
      %p414 = scmp.ne.s32.totalorder %s399, %s413
      %p415 = scmp.eq.s32.totalorder %s33, 0
      %p416 = por %p414, %p415
      %s418 = sadd.s32 %s417, 1
      %p421 = scmp.eq.s32.totalorder %s27, 1
      %p422 = scmp.ne.s32.totalorder %s417, %s419
      %p423 = scmp.eq.s32.totalorder %s27, 0
      %p424 = por %p422, %p423
      %p425 = scmp.ne.s32.totalorder %s417, %s419
      %p426 = scmp.eq.s32.totalorder %s32, 1
      %p427 = por %p425, %p426
      %p428 = scmp.ne.s32.totalorder %s419, %s420
      %p429 = scmp.eq.s32.totalorder %s32, 0
      %p430 = por %p428, %p429
      %p431 = scmp.ne.s32.totalorder %s419, %s420
      %p432 = scmp.eq.s32.totalorder %s33, 1
      %p433 = por %p431, %p432
      %p435 = scmp.ne.s32.totalorder %s420, %s434
      %p436 = scmp.eq.s32.totalorder %s33, 0
      %p437 = por %p435, %p436
      %s438 = ssub.s32 %s27, %s34
      %p439 = scmp.eq.s32.totalorder %s438, 0
      %s441 = sadd.s32 %s440, 1
      %s442 = scalar_select %p439, %s440, %s441
      %p445 = pneg %p439
      %p446 = scmp.eq.s32.totalorder %s27, 1
      %p447 = por %p445, %p446
      %p448 = scmp.ne.s32.totalorder %s440, %s443
      %p449 = scmp.eq.s32.totalorder %s27, 0
      %p450 = por %p448, %p449
      %p451 = scmp.ne.s32.totalorder %s440, %s443
      %p452 = scmp.eq.s32.totalorder %s32, 1
      %p453 = por %p451, %p452
      %p454 = scmp.ne.s32.totalorder %s443, %s444
      %p455 = scmp.eq.s32.totalorder %s32, 0
      %p456 = por %p454, %p455
      %p457 = scmp.ne.s32.totalorder %s443, %s444
      %p458 = scmp.eq.s32.totalorder %s33, 1
      %p459 = por %p457, %p458
      %p461 = scmp.ne.s32.totalorder %s444, %s460
      %p462 = scmp.eq.s32.totalorder %s33, 0
      %p463 = por %p461, %p462
      %p464 = scmp.le.s32.totalorder 1, %s27
      %p465 = scmp.lt.s32.totalorder %s27, 3
      %p466 = pnand %p464, %p465
      %p467 = pneg %p466
      // Predicated region
      $region9: #{aspp_forward.3} parent=5 // pred_check
        _
      $region10: #{aspp_forward.3} parent=5 // pred_check_branch
        %469 = sbr.rel (%p466) target = $region12
      $region11: #{aspp_forward.3} parent=5 // pred_region
        %s470 = ssub.s32 %s27, 1
        // Predicated region
        $region13: #{aspp_forward.3} parent=11 // pred_check
          %p471 = pneg %p178
        $region14: #{aspp_forward.3} parent=11 // pred_check_branch
          %473 = sbr.rel (%p471) target = $region16
        $region15: #{aspp_forward.3} parent=11 // pred_region
          _
        $region16: #{aspp_forward.3} parent=11 // pred_fallthru
          _
        // Predicated region
        $region17: #{aspp_forward.3} parent=11 // pred_check
          %p474 = pneg %p199
        $region18: #{aspp_forward.3} parent=11 // pred_check_branch
          %476 = sbr.rel (%p474) target = $region20
        $region19: #{aspp_forward.3} parent=11 // pred_region
          _
        $region20: #{aspp_forward.3} parent=11 // pred_fallthru
          _
        // Predicated region
        $region21: #{aspp_forward.3} parent=11 // pred_check
          %p477 = pneg %p220
        $region22: #{aspp_forward.3} parent=11 // pred_check_branch
          %479 = sbr.rel (%p477) target = $region24
        $region23: #{aspp_forward.3} parent=11 // pred_region
          _
        $region24: #{aspp_forward.3} parent=11 // pred_fallthru
          _
        // Predicated region
        $region25: #{aspp_forward.3} parent=11 // pred_check
          %p480 = pneg %p241
        $region26: #{aspp_forward.3} parent=11 // pred_check_branch
          %482 = sbr.rel (%p480) target = $region28
        $region27: #{aspp_forward.3} parent=11 // pred_region
          _
        $region28: #{aspp_forward.3} parent=11 // pred_fallthru
          _
        // Predicated region
        $region29: #{aspp_forward.3} parent=11 // pred_check
          %p483 = pneg %p262
        $region30: #{aspp_forward.3} parent=11 // pred_check_branch
          %485 = sbr.rel (%p483) target = $region32
        $region31: #{aspp_forward.3} parent=11 // pred_region
          _
        $region32: #{aspp_forward.3} parent=11 // pred_fallthru
          _
        // Predicated region
        $region33: #{aspp_forward.3} parent=11 // pred_check
          %p486 = pneg %p283
        $region34: #{aspp_forward.3} parent=11 // pred_check_branch
          %488 = sbr.rel (%p486) target = $region36
        $region35: #{aspp_forward.3} parent=11 // pred_region
          _
        $region36: #{aspp_forward.3} parent=11 // pred_fallthru
          _
        // Predicated region
        $region37: #{aspp_forward.3} parent=11 // pred_check
          %p489 = pneg %p304
        $region38: #{aspp_forward.3} parent=11 // pred_check_branch
          %491 = sbr.rel (%p489) target = $region40
        $region39: #{aspp_forward.3} parent=11 // pred_region
          _
        $region40: #{aspp_forward.3} parent=11 // pred_fallthru
          _
        // Predicated region
        $region41: #{aspp_forward.3} parent=11 // pred_check
          %p492 = pneg %p325
        $region42: #{aspp_forward.3} parent=11 // pred_check_branch
          %494 = sbr.rel (%p492) target = $region44
        $region43: #{aspp_forward.3} parent=11 // pred_region
          _
        $region44: #{aspp_forward.3} parent=11 // pred_fallthru
          _
        // Predicated region
        $region45: #{aspp_forward.3} parent=11 // pred_check
          %p495 = pneg %p346
        $region46: #{aspp_forward.3} parent=11 // pred_check_branch
          %497 = sbr.rel (%p495) target = $region48
        $region47: #{aspp_forward.3} parent=11 // pred_region
          _
        $region48: #{aspp_forward.3} parent=11 // pred_fallthru
          _
        // Predicated region
        $region49: #{aspp_forward.3} parent=11 // pred_check
          %p498 = pneg %p367
        $region50: #{aspp_forward.3} parent=11 // pred_check_branch
          %500 = sbr.rel (%p498) target = $region52
        $region51: #{aspp_forward.3} parent=11 // pred_region
          _
        $region52: #{aspp_forward.3} parent=11 // pred_fallthru
          _
        // Predicated region
        $region53: #{aspp_forward.3} parent=11 // pred_check
          %p501 = pneg %p388
        $region54: #{aspp_forward.3} parent=11 // pred_check_branch
          %503 = sbr.rel (%p501) target = $region56
        $region55: #{aspp_forward.3} parent=11 // pred_region
          _
        $region56: #{aspp_forward.3} parent=11 // pred_fallthru
          _
        // Predicated region
        $region57: #{aspp_forward.3} parent=11 // pred_check
          %p504 = pneg %p409
        $region58: #{aspp_forward.3} parent=11 // pred_check_branch
          %506 = sbr.rel (%p504) target = $region60
        $region59: #{aspp_forward.3} parent=11 // pred_region
          _
        $region60: #{aspp_forward.3} parent=11 // pred_fallthru
          _
        // Predicated region
        $region61: #{aspp_forward.3} parent=11 // pred_check
          %p507 = pneg %p430
        $region62: #{aspp_forward.3} parent=11 // pred_check_branch
          %509 = sbr.rel (%p507) target = $region64
        $region63: #{aspp_forward.3} parent=11 // pred_region
          _
        $region64: #{aspp_forward.3} parent=11 // pred_fallthru
          _
      $region12: #{aspp_forward.3} parent=5 // pred_fallthru
        _
      %p510 = scmp.lt.s32.totalorder %s27, 2
      // Predicated region
      $region65: #{aspp_forward.3} parent=5 // pred_check
        %p511 = pneg %p510
      $region66: #{aspp_forward.3} parent=5 // pred_check_branch
        %513 = sbr.rel (%p511) target = $region68
      $region67: #{aspp_forward.3} parent=5 // pred_region
        // Predicated region
        $region69: #{aspp_forward.3} parent=67 // pred_check
          %p514 = pneg %p47
        $region70: #{aspp_forward.3} parent=67 // pred_check_branch
          %516 = sbr.rel (%p514) target = $region72
        $region71: #{aspp_forward.3} parent=67 // pred_region
          %s517 = smul.u32 32, %s27
          %p518 = scmp.lt.s32.totalorder %s517, 63
          %s519 = scalar_select %p518, %s517, 63
          %s520 = smul.addr %s519, 4
          %s521 = scalar_lea.vmem %s0, %s520
          %s522 = smul.u32 32, %s27
        $region72: #{aspp_forward.3} parent=67 // pred_fallthru
          _
        // Predicated region
        $region73: #{aspp_forward.3} parent=67 // pred_check
          %p523 = pneg %p73
        $region74: #{aspp_forward.3} parent=67 // pred_check_branch
          %525 = sbr.rel (%p523) target = $region76
        $region75: #{aspp_forward.3} parent=67 // pred_region
          %s526 = smul.u32 32, %s27
          %p527 = scmp.lt.s32.totalorder %s526, 63
          %s528 = scalar_select %p527, %s526, 63
          %s529 = smul.addr %s528, 5
          %s530 = smul.addr %s529, 4
          %s531 = scalar_lea.vmem %s1, %s530
          %s532 = smul.u32 32, %s27
        $region76: #{aspp_forward.3} parent=67 // pred_fallthru
          _
        // Predicated region
        $region77: #{aspp_forward.3} parent=67 // pred_check
          %p533 = pneg %p99
        $region78: #{aspp_forward.3} parent=67 // pred_check_branch
          %535 = sbr.rel (%p533) target = $region80
        $region79: #{aspp_forward.3} parent=67 // pred_region
          %s536 = smul.u32 32, %s27
          %p537 = scmp.lt.s32.totalorder %s536, 63
          %s538 = scalar_select %p537, %s536, 63
          %s539 = smul.addr %s538, 5
          %s540 = smul.addr %s539, 4
          %s541 = scalar_lea.vmem %s2, %s540
          %s542 = smul.u32 32, %s27
        $region80: #{aspp_forward.3} parent=67 // pred_fallthru
          _
        // Predicated region
        $region81: #{aspp_forward.3} parent=67 // pred_check
          %p543 = pneg %p125
        $region82: #{aspp_forward.3} parent=67 // pred_check_branch
          %545 = sbr.rel (%p543) target = $region84
        $region83: #{aspp_forward.3} parent=67 // pred_region
          %s546 = smul.u32 32, %s27
          %p547 = scmp.lt.s32.totalorder %s546, 63
          %s548 = scalar_select %p547, %s546, 63
          %s549 = smul.addr %s548, 4
          %s550 = scalar_lea.vmem %s3, %s549
          %s551 = smul.u32 32, %s27
        $region84: #{aspp_forward.3} parent=67 // pred_fallthru
          _
        // Predicated region
        $region85: #{aspp_forward.3} parent=67 // pred_check
          %p552 = pneg %p151
        $region86: #{aspp_forward.3} parent=67 // pred_check_branch
          %554 = sbr.rel (%p552) target = $region88
        $region87: #{aspp_forward.3} parent=67 // pred_region
          %s555 = smul.u32 32, %s27
          %p556 = scmp.lt.s32.totalorder %s555, 63
          %s557 = scalar_select %p556, %s555, 63
          %s558 = smul.addr %s557, 2
          %s559 = smul.addr %s558, 4
          %s560 = scalar_lea.vmem %s4, %s559
          %s561 = smul.u32 32, %s27
        $region88: #{aspp_forward.3} parent=67 // pred_fallthru
          _
      $region68: #{aspp_forward.3} parent=5 // pred_fallthru
        _
      %p562 = scmp.le.s32.totalorder 1, %s27
      %p563 = scmp.lt.s32.totalorder %s27, 3
      %p564 = pnand %p562, %p563
      %p565 = pneg %p564
      // Predicated region
      $region89: #{aspp_forward.3} parent=5 // pred_check
        _
      $region90: #{aspp_forward.3} parent=5 // pred_check_branch
        %567 = sbr.rel (%p564) target = $region92
      $region91: #{aspp_forward.3} parent=5 // pred_region
        %s568 = ssub.s32 %s27, 1
        %s569 = smul.u32 32, %s32
        %p570 = scmp.lt.s32.totalorder %s569, 63
        %s571 = scalar_select %p570, %s569, 63
        %s572 = smul.addr %s571, 4
        %s573 = scalar_lea.vmem %s0, %s572
        %p574 = pneg %p53
        %p575 = pneg %p50
        %s576 = smul.u32 32, %s32
        %p577 = scmp.lt.s32.totalorder %s576, 63
        %s578 = scalar_select %p577, %s576, 63
        %s579 = smul.addr %s578, 5
        %s580 = smul.addr %s579, 4
        %s581 = scalar_lea.vmem %s1, %s580
        %p582 = pneg %p79
        %p583 = pneg %p76
        %s584 = smul.u32 32, %s32
        %p585 = scmp.lt.s32.totalorder %s584, 63
        %s586 = scalar_select %p585, %s584, 63
        %s587 = smul.addr %s586, 5
        %s588 = smul.addr %s587, 4
        %s589 = scalar_lea.vmem %s2, %s588
        %p590 = pneg %p105
        %p591 = pneg %p102
        %s592 = smul.u32 32, %s32
        %p593 = scmp.lt.s32.totalorder %s592, 63
        %s594 = scalar_select %p593, %s592, 63
        %s595 = smul.addr %s594, 4
        %s596 = scalar_lea.vmem %s3, %s595
        %p597 = pneg %p131
        %p598 = pneg %p128
        %s599 = smul.u32 32, %s32
        %p600 = scmp.lt.s32.totalorder %s599, 63
        %s601 = scalar_select %p600, %s599, 63
        %s602 = smul.addr %s601, 2
        %s603 = smul.addr %s602, 4
        %s604 = scalar_lea.vmem %s4, %s603
        %p605 = pneg %p157
        %p606 = pneg %p154
        %p607 = pneg %p178
        %p608 = pneg %p175
        %p609 = pneg %p199
        %p610 = pneg %p196
        %p611 = pneg %p220
        %p612 = pneg %p217
        %p613 = pneg %p241
        %p614 = pneg %p238
        %p615 = pneg %p262
        %p616 = pneg %p259
        %p617 = pneg %p283
        %p618 = pneg %p280
        %p619 = pneg %p304
        %p620 = pneg %p301
        %p621 = pneg %p325
        %p622 = pneg %p322
        %p623 = pneg %p346
        %p624 = pneg %p343
        %p625 = pneg %p367
        %p626 = pneg %p364
        %p627 = pneg %p388
        %p628 = pneg %p385
        %p629 = pneg %p409
        %p630 = pneg %p406
        %p631 = pneg %p430
        %p632 = pneg %p427
        %p633 = pneg %p456
        %p634 = pneg %p453
        %s635 = sand.u32 %s443, 1
        %s636 = scalar_lea.sflag [#allocation3], %s635
        %s637 = sand.u32 %s443, 1
        %s638 = smul.addr %s637, 512
        %s639 = scalar_lea.vmem [#allocation2], %s638
        %s640 = smul.u32 32, %s32
        %p641 = scmp.lt.s32.totalorder %s640, 63
        %s642 = scalar_select %p641, %s640, 63
        %s643 = smul.addr %s642, 4
        %s644 = scalar_lea.vmem %s0, %s643
        %s645 = smul.u32 32, %s32
        %s646 = smul.u32 32, %s32
        %p647 = scmp.lt.s32.totalorder %s646, 63
        %s648 = scalar_select %p647, %s646, 63
        %s649 = smul.addr %s648, 5
        %s650 = smul.addr %s649, 4
        %s651 = scalar_lea.vmem %s1, %s650
        %s652 = smul.u32 32, %s32
        %s653 = smul.u32 32, %s32
        %p654 = scmp.lt.s32.totalorder %s653, 63
        %s655 = scalar_select %p654, %s653, 63
        %s656 = smul.addr %s655, 5
        %s657 = smul.addr %s656, 4
        %s658 = scalar_lea.vmem %s2, %s657
        %s659 = smul.u32 32, %s32
        %s660 = smul.u32 32, %s32
        %p661 = scmp.lt.s32.totalorder %s660, 63
        %s662 = scalar_select %p661, %s660, 63
        %s663 = smul.addr %s662, 4
        %s664 = scalar_lea.vmem %s3, %s663
        %s665 = smul.u32 32, %s32
        %s666 = smul.u32 32, %s32
        %p667 = scmp.lt.s32.totalorder %s666, 63
        %s668 = scalar_select %p667, %s666, 63
        %s669 = smul.addr %s668, 2
        %s670 = smul.addr %s669, 4
        %s671 = scalar_lea.vmem %s4, %s670
        %s672 = smul.u32 32, %s32
        %s673 = smul.u32 32, %s32
        %v675 = vld [vmem:[%s644] sm:$0xf]
        %v676 = vld [vmem:[%s644 + $0x4] sm:$0xf]
        %v677 = vld [vmem:[%s644 + $0x8] sm:$0xf]
        %v678 = vld [vmem:[%s644 + $0xc] sm:$0xf]
        %v679 = vld [vmem:[%s644 + $0x10] sm:$0xf]
        %v680 = vld [vmem:[%s644 + $0x14] sm:$0xf]
        %v681 = vld [vmem:[%s644 + $0x18] sm:$0xf]
        %v682 = vld [vmem:[%s644 + $0x1c] sm:$0xf]
        %v683 = vld [vmem:[%s644 + $0x20] sm:$0xf]
        %v684 = vld [vmem:[%s644 + $0x24] sm:$0xf]
        %v685 = vld [vmem:[%s644 + $0x28] sm:$0xf]
        %v686 = vld [vmem:[%s644 + $0x2c] sm:$0xf]
        %v687 = vld [vmem:[%s644 + $0x30] sm:$0xf]
        %v688 = vld [vmem:[%s644 + $0x34] sm:$0xf]
        %v689 = vld [vmem:[%s644 + $0x38] sm:$0xf]
        %v690 = vld [vmem:[%s644 + $0x3c] sm:$0xf]
        %v691 = vld [vmem:[%s644 + $0x40] sm:$0xf]
        %v692 = vld [vmem:[%s644 + $0x44] sm:$0xf]
        %v693 = vld [vmem:[%s644 + $0x48] sm:$0xf]
        %v694 = vld [vmem:[%s644 + $0x4c] sm:$0xf]
        %v695 = vld [vmem:[%s644 + $0x50] sm:$0xf]
        %v696 = vld [vmem:[%s644 + $0x54] sm:$0xf]
        %v697 = vld [vmem:[%s644 + $0x58] sm:$0xf]
        %v698 = vld [vmem:[%s644 + $0x5c] sm:$0xf]
        %v699 = vld [vmem:[%s644 + $0x60] sm:$0xf]
        %v700 = vld [vmem:[%s644 + $0x64] sm:$0xf]
        %v701 = vld [vmem:[%s644 + $0x68] sm:$0xf]
        %v702 = vld [vmem:[%s644 + $0x6c] sm:$0xf]
        %v703 = vld [vmem:[%s644 + $0x70] sm:$0xf]
        %v704 = vld [vmem:[%s644 + $0x74] sm:$0xf]
        %v705 = vld [vmem:[%s644 + $0x78] sm:$0xf]
        %v706 = vld [vmem:[%s644 + $0x7c] sm:$0xf]
        %v707 = vld [vmem:[%s5] sm:$0xff]
        %v708 = vld [vmem:[%s5 + $0x8] sm:$0xff]
        %v709 = vld [vmem:[%s5 + $0x10] sm:$0xff]
        %v710 = vld [vmem:[%s5 + $0x18] sm:$0xff]
        %v711 = vld [vmem:[%s5 + $0x20] sm:$0xff]
        %v712 = vld [vmem:[%s5 + $0x28] sm:$0xff]
        %v713 = vld [vmem:[%s5 + $0x30] sm:$0xff]
        %v714 = vld [vmem:[%s5 + $0x38] sm:$0xff]
        %v747 = vunpack.c.l.b16 %v675
        %v748 = vunpack.c.l.b16 %v676
        %v749 = vunpack.c.l.b16 %v677
        %v750 = vunpack.c.l.b16 %v678
        %v751 = vunpack.c.l.b16 %v679
        %v752 = vunpack.c.l.b16 %v680
        %v753 = vunpack.c.l.b16 %v681
        %v754 = vunpack.c.l.b16 %v682
        %v755 = vunpack.c.l.b16 %v683
        %v756 = vunpack.c.l.b16 %v684
        %v757 = vunpack.c.l.b16 %v685
        %v758 = vunpack.c.l.b16 %v686
        %v759 = vunpack.c.l.b16 %v687
        %v760 = vunpack.c.l.b16 %v688
        %v761 = vunpack.c.l.b16 %v689
        %v762 = vunpack.c.l.b16 %v690
        %v763 = vunpack.c.l.b16 %v691
        %v764 = vunpack.c.l.b16 %v692
        %v765 = vunpack.c.l.b16 %v693
        %v766 = vunpack.c.l.b16 %v694
        %v767 = vunpack.c.l.b16 %v695
        %v768 = vunpack.c.l.b16 %v696
        %v769 = vunpack.c.l.b16 %v697
        %v770 = vunpack.c.l.b16 %v698
        %v771 = vunpack.c.l.b16 %v699
        %v772 = vunpack.c.l.b16 %v700
        %v773 = vunpack.c.l.b16 %v701
        %v774 = vunpack.c.l.b16 %v702
        %v775 = vunpack.c.l.b16 %v703
        %v776 = vunpack.c.l.b16 %v704
        %v777 = vunpack.c.l.b16 %v705
        %v778 = vunpack.c.l.b16 %v706
        %v779 = vpack.c.b16 %v748, %v747
        %v780 = vpack.c.b16 %v750, %v749
        %v781 = vpack.c.b16 %v752, %v751
        %v782 = vpack.c.b16 %v754, %v753
        %v783 = vpack.c.b16 %v756, %v755
        %v784 = vpack.c.b16 %v758, %v757
        %v785 = vpack.c.b16 %v760, %v759
        %v786 = vpack.c.b16 %v762, %v761
        %v787 = vpack.c.b16 %v764, %v763
        %v788 = vpack.c.b16 %v766, %v765
        %v789 = vpack.c.b16 %v768, %v767
        %v790 = vpack.c.b16 %v770, %v769
        %v791 = vpack.c.b16 %v772, %v771
        %v792 = vpack.c.b16 %v774, %v773
        %v793 = vpack.c.b16 %v776, %v775
        %v794 = vpack.c.b16 %v778, %v777
        %v803 = vunpack.c.l.b16 %v707
        %v804 = vunpack.c.h.b16 %v707
        %v805 = vunpack.c.l.b16 %v708
        %v806 = vunpack.c.h.b16 %v708
        %v807 = vunpack.c.l.b16 %v709
        %v808 = vunpack.c.h.b16 %v709
        %v809 = vunpack.c.l.b16 %v710
        %v810 = vunpack.c.h.b16 %v710
        %v811 = vunpack.c.l.b16 %v711
        %v812 = vunpack.c.h.b16 %v711
        %v813 = vunpack.c.l.b16 %v712
        %v814 = vunpack.c.h.b16 %v712
        %v815 = vunpack.c.l.b16 %v713
        %v816 = vunpack.c.h.b16 %v713
        %v817 = vunpack.c.l.b16 %v714
        %v818 = vunpack.c.h.b16 %v714
        %v819 = vpack.c.b16 %v805, %v803
        %v820 = vpack.c.b16 %v806, %v804
        %v821 = vpack.c.b16 %v809, %v807
        %v822 = vpack.c.b16 %v810, %v808
        %v823 = vpack.c.b16 %v813, %v811
        %v824 = vpack.c.b16 %v814, %v812
        %v825 = vpack.c.b16 %v817, %v815
        %v826 = vpack.c.b16 %v818, %v816
        %vm835 = vcmask 523264
        %v837 = vsel %vm835, %v779, 0
        %v840 = vsel %vm835, %v780, 0
        %v843 = vsel %vm835, %v781, 0
        %v846 = vsel %vm835, %v782, 0
        %v849 = vsel %vm835, %v783, 0
        %v852 = vsel %vm835, %v784, 0
        %v855 = vsel %vm835, %v785, 0
        %v858 = vsel %vm835, %v786, 0
        %v861 = vsel %vm835, %v787, 0
        %v864 = vsel %vm835, %v788, 0
        %v867 = vsel %vm835, %v789, 0
        %v870 = vsel %vm835, %v790, 0
        %v873 = vsel %vm835, %v791, 0
        %v876 = vsel %vm835, %v792, 0
        %v879 = vsel %vm835, %v793, 0
        %v882 = vsel %vm835, %v794, 0
        %884 = vmatpush.bf16.msra.mxu0 0
        %885 = vmatpush.bf16.msra.mxu0 0
        %886 = vmatpush.bf16.msra.mxu0 0
        %887 = vmatpush.bf16.msra.mxu0 0
        %888 = vmatpush.bf16.msra.mxu0 %v825
        %889 = vmatpush.bf16.msra.mxu0 %v823
        %890 = vmatpush.bf16.msra.mxu0 %v821
        %891 = vmatpush.bf16.msra.mxu0 %v819
        %892 = vmatmul.bf16.gmra.mxu0 %v837
        %v893 = vpop.f32.mrf.mxu0
        %v894 = vadd.f32 0.0, %v893
        %v895 = vpop.f32.mrf.mxu0
        %v896 = vadd.f32 0.0, %v895
        %897 = vmatmul.bf16.gmra.mxu0 %v840
        %v898 = vpop.f32.mrf.mxu0
        %v899 = vadd.f32 0.0, %v898
        %v900 = vpop.f32.mrf.mxu0
        %v901 = vadd.f32 0.0, %v900
        %902 = vmatmul.bf16.gmra.mxu0 %v843
        %v903 = vpop.f32.mrf.mxu0
        %v904 = vadd.f32 0.0, %v903
        %v905 = vpop.f32.mrf.mxu0
        %v906 = vadd.f32 0.0, %v905
        %907 = vmatmul.bf16.gmra.mxu0 %v846
        %v908 = vpop.f32.mrf.mxu0
        %v909 = vadd.f32 0.0, %v908
        %v910 = vpop.f32.mrf.mxu0
        %v911 = vadd.f32 0.0, %v910
        %912 = vmatmul.bf16.gmra.mxu0 %v849
        %v913 = vpop.f32.mrf.mxu0
        %v914 = vadd.f32 0.0, %v913
        %v915 = vpop.f32.mrf.mxu0
        %v916 = vadd.f32 0.0, %v915
        %917 = vmatmul.bf16.gmra.mxu0 %v852
        %v918 = vpop.f32.mrf.mxu0
        %v919 = vadd.f32 0.0, %v918
        %v920 = vpop.f32.mrf.mxu0
        %v921 = vadd.f32 0.0, %v920
        %922 = vmatmul.bf16.gmra.mxu0 %v855
        %v923 = vpop.f32.mrf.mxu0
        %v924 = vadd.f32 0.0, %v923
        %v925 = vpop.f32.mrf.mxu0
        %v926 = vadd.f32 0.0, %v925
        %927 = vmatmul.bf16.gmra.mxu0 %v858
        %v928 = vpop.f32.mrf.mxu0
        %v929 = vadd.f32 0.0, %v928
        %v930 = vpop.f32.mrf.mxu0
        %v931 = vadd.f32 0.0, %v930
        %932 = vmatmul.bf16.gmra.mxu0 %v861
        %v933 = vpop.f32.mrf.mxu0
        %v934 = vadd.f32 0.0, %v933
        %v935 = vpop.f32.mrf.mxu0
        %v936 = vadd.f32 0.0, %v935
        %937 = vmatmul.bf16.gmra.mxu0 %v864
        %v938 = vpop.f32.mrf.mxu0
        %v939 = vadd.f32 0.0, %v938
        %v940 = vpop.f32.mrf.mxu0
        %v941 = vadd.f32 0.0, %v940
        %942 = vmatmul.bf16.gmra.mxu0 %v867
        %v943 = vpop.f32.mrf.mxu0
        %v944 = vadd.f32 0.0, %v943
        %v945 = vpop.f32.mrf.mxu0
        %v946 = vadd.f32 0.0, %v945
        %947 = vmatmul.bf16.gmra.mxu0 %v870
        %v948 = vpop.f32.mrf.mxu0
        %v949 = vadd.f32 0.0, %v948
        %v950 = vpop.f32.mrf.mxu0
        %v951 = vadd.f32 0.0, %v950
        %952 = vmatmul.bf16.gmra.mxu0 %v873
        %v953 = vpop.f32.mrf.mxu0
        %v954 = vadd.f32 0.0, %v953
        %v955 = vpop.f32.mrf.mxu0
        %v956 = vadd.f32 0.0, %v955
        %957 = vmatmul.bf16.gmra.mxu0 %v876
        %v958 = vpop.f32.mrf.mxu0
        %v959 = vadd.f32 0.0, %v958
        %v960 = vpop.f32.mrf.mxu0
        %v961 = vadd.f32 0.0, %v960
        %962 = vmatmul.bf16.gmra.mxu0 %v879
        %v963 = vpop.f32.mrf.mxu0
        %v964 = vadd.f32 0.0, %v963
        %v965 = vpop.f32.mrf.mxu0
        %v966 = vadd.f32 0.0, %v965
        %967 = vmatmul.bf16.gmra.mxu0 %v882
        %v968 = vpop.f32.mrf.mxu0
        %v969 = vadd.f32 0.0, %v968
        %v970 = vpop.f32.mrf.mxu0
        %v971 = vadd.f32 0.0, %v970
        %972 = vdwg.mxu0
        %973 = vmatpush.bf16.msra.mxu0 0
        %974 = vmatpush.bf16.msra.mxu0 0
        %975 = vmatpush.bf16.msra.mxu0 0
        %976 = vmatpush.bf16.msra.mxu0 0
        %977 = vmatpush.bf16.msra.mxu0 %v826
        %978 = vmatpush.bf16.msra.mxu0 %v824
        %979 = vmatpush.bf16.msra.mxu0 %v822
        %980 = vmatpush.bf16.msra.mxu0 %v820
        %981 = vmatmul.bf16.gmra.mxu0 %v837
        %v982 = vpop.f32.mrf.mxu0
        %v983 = vadd.f32 0.0, %v982
        %v984 = vpop.f32.mrf.mxu0
        %v985 = vadd.f32 0.0, %v984
        %986 = vmatmul.bf16.gmra.mxu0 %v840
        %v987 = vpop.f32.mrf.mxu0
        %v988 = vadd.f32 0.0, %v987
        %v989 = vpop.f32.mrf.mxu0
        %v990 = vadd.f32 0.0, %v989
        %991 = vmatmul.bf16.gmra.mxu0 %v843
        %v992 = vpop.f32.mrf.mxu0
        %v993 = vadd.f32 0.0, %v992
        %v994 = vpop.f32.mrf.mxu0
        %v995 = vadd.f32 0.0, %v994
        %996 = vmatmul.bf16.gmra.mxu0 %v846
        %v997 = vpop.f32.mrf.mxu0
        %v998 = vadd.f32 0.0, %v997
        %v999 = vpop.f32.mrf.mxu0
        %v1000 = vadd.f32 0.0, %v999
        %1001 = vmatmul.bf16.gmra.mxu0 %v849
        %v1002 = vpop.f32.mrf.mxu0
        %v1003 = vadd.f32 0.0, %v1002
        %v1004 = vpop.f32.mrf.mxu0
        %v1005 = vadd.f32 0.0, %v1004
        %1006 = vmatmul.bf16.gmra.mxu0 %v852
        %v1007 = vpop.f32.mrf.mxu0
        %v1008 = vadd.f32 0.0, %v1007
        %v1009 = vpop.f32.mrf.mxu0
        %v1010 = vadd.f32 0.0, %v1009
        %1011 = vmatmul.bf16.gmra.mxu0 %v855
        %v1012 = vpop.f32.mrf.mxu0
        %v1013 = vadd.f32 0.0, %v1012
        %v1014 = vpop.f32.mrf.mxu0
        %v1015 = vadd.f32 0.0, %v1014
        %1016 = vmatmul.bf16.gmra.mxu0 %v858
        %v1017 = vpop.f32.mrf.mxu0
        %v1018 = vadd.f32 0.0, %v1017
        %v1019 = vpop.f32.mrf.mxu0
        %v1020 = vadd.f32 0.0, %v1019
        %1021 = vmatmul.bf16.gmra.mxu0 %v861
        %v1022 = vpop.f32.mrf.mxu0
        %v1023 = vadd.f32 0.0, %v1022
        %v1024 = vpop.f32.mrf.mxu0
        %v1025 = vadd.f32 0.0, %v1024
        %1026 = vmatmul.bf16.gmra.mxu0 %v864
        %v1027 = vpop.f32.mrf.mxu0
        %v1028 = vadd.f32 0.0, %v1027
        %v1029 = vpop.f32.mrf.mxu0
        %v1030 = vadd.f32 0.0, %v1029
        %1031 = vmatmul.bf16.gmra.mxu0 %v867
        %v1032 = vpop.f32.mrf.mxu0
        %v1033 = vadd.f32 0.0, %v1032
        %v1034 = vpop.f32.mrf.mxu0
        %v1035 = vadd.f32 0.0, %v1034
        %1036 = vmatmul.bf16.gmra.mxu0 %v870
        %v1037 = vpop.f32.mrf.mxu0
        %v1038 = vadd.f32 0.0, %v1037
        %v1039 = vpop.f32.mrf.mxu0
        %v1040 = vadd.f32 0.0, %v1039
        %1041 = vmatmul.bf16.gmra.mxu0 %v873
        %v1042 = vpop.f32.mrf.mxu0
        %v1043 = vadd.f32 0.0, %v1042
        %v1044 = vpop.f32.mrf.mxu0
        %v1045 = vadd.f32 0.0, %v1044
        %1046 = vmatmul.bf16.gmra.mxu0 %v876
        %v1047 = vpop.f32.mrf.mxu0
        %v1048 = vadd.f32 0.0, %v1047
        %v1049 = vpop.f32.mrf.mxu0
        %v1050 = vadd.f32 0.0, %v1049
        %1051 = vmatmul.bf16.gmra.mxu0 %v879
        %v1052 = vpop.f32.mrf.mxu0
        %v1053 = vadd.f32 0.0, %v1052
        %v1054 = vpop.f32.mrf.mxu0
        %v1055 = vadd.f32 0.0, %v1054
        %1056 = vmatmul.bf16.gmra.mxu0 %v882
        %v1057 = vpop.f32.mrf.mxu0
        %v1058 = vadd.f32 0.0, %v1057
        %v1059 = vpop.f32.mrf.mxu0
        %v1060 = vadd.f32 0.0, %v1059
        %1061 = vdwg.mxu0
        %v1062 = vld [vmem:[%s14] sm:$0x3]
        %v1064 = vperm.slane %v1062, 0
        %v1065 = vperm.slane %v1062, 1
        %v1068 = vmul.f32 %v894, %v1064
        %v1069 = vmul.f32 %v983, %v1065
        %v1070 = vmul.f32 %v896, %v1064
        %v1071 = vmul.f32 %v985, %v1065
        %v1072 = vmul.f32 %v899, %v1064
        %v1073 = vmul.f32 %v988, %v1065
        %v1074 = vmul.f32 %v901, %v1064
        %v1075 = vmul.f32 %v990, %v1065
        %v1076 = vmul.f32 %v904, %v1064
        %v1077 = vmul.f32 %v993, %v1065
        %v1078 = vmul.f32 %v906, %v1064
        %v1079 = vmul.f32 %v995, %v1065
        %v1080 = vmul.f32 %v909, %v1064
        %v1081 = vmul.f32 %v998, %v1065
        %v1082 = vmul.f32 %v911, %v1064
        %v1083 = vmul.f32 %v1000, %v1065
        %v1084 = vmul.f32 %v914, %v1064
        %v1085 = vmul.f32 %v1003, %v1065
        %v1086 = vmul.f32 %v916, %v1064
        %v1087 = vmul.f32 %v1005, %v1065
        %v1088 = vmul.f32 %v919, %v1064
        %v1089 = vmul.f32 %v1008, %v1065
        %v1090 = vmul.f32 %v921, %v1064
        %v1091 = vmul.f32 %v1010, %v1065
        %v1092 = vmul.f32 %v924, %v1064
        %v1093 = vmul.f32 %v1013, %v1065
        %v1094 = vmul.f32 %v926, %v1064
        %v1095 = vmul.f32 %v1015, %v1065
        %v1096 = vmul.f32 %v929, %v1064
        %v1097 = vmul.f32 %v1018, %v1065
        %v1098 = vmul.f32 %v931, %v1064
        %v1099 = vmul.f32 %v1020, %v1065
        %v1100 = vmul.f32 %v934, %v1064
        %v1101 = vmul.f32 %v1023, %v1065
        %v1102 = vmul.f32 %v936, %v1064
        %v1103 = vmul.f32 %v1025, %v1065
        %v1104 = vmul.f32 %v939, %v1064
        %v1105 = vmul.f32 %v1028, %v1065
        %v1106 = vmul.f32 %v941, %v1064
        %v1107 = vmul.f32 %v1030, %v1065
        %v1108 = vmul.f32 %v944, %v1064
        %v1109 = vmul.f32 %v1033, %v1065
        %v1110 = vmul.f32 %v946, %v1064
        %v1111 = vmul.f32 %v1035, %v1065
        %v1112 = vmul.f32 %v949, %v1064
        %v1113 = vmul.f32 %v1038, %v1065
        %v1114 = vmul.f32 %v951, %v1064
        %v1115 = vmul.f32 %v1040, %v1065
        %v1116 = vmul.f32 %v954, %v1064
        %v1117 = vmul.f32 %v1043, %v1065
        %v1118 = vmul.f32 %v956, %v1064
        %v1119 = vmul.f32 %v1045, %v1065
        %v1120 = vmul.f32 %v959, %v1064
        %v1121 = vmul.f32 %v1048, %v1065
        %v1122 = vmul.f32 %v961, %v1064
        %v1123 = vmul.f32 %v1050, %v1065
        %v1124 = vmul.f32 %v964, %v1064
        %v1125 = vmul.f32 %v1053, %v1065
        %v1126 = vmul.f32 %v966, %v1064
        %v1127 = vmul.f32 %v1055, %v1065
        %v1128 = vmul.f32 %v969, %v1064
        %v1129 = vmul.f32 %v1058, %v1065
        %v1130 = vmul.f32 %v971, %v1064
        %v1131 = vmul.f32 %v1060, %v1065
        %v1132 = vld [vmem:[%s15] sm:$0x3]
        %v1134 = vperm.slane %v1132, 0
        %v1135 = vperm.slane %v1132, 1
        %v1138 = vadd.f32 %v1068, %v1134
        %v1139 = vadd.f32 %v1069, %v1135
        %v1140 = vadd.f32 %v1070, %v1134
        %v1141 = vadd.f32 %v1071, %v1135
        %v1142 = vadd.f32 %v1072, %v1134
        %v1143 = vadd.f32 %v1073, %v1135
        %v1144 = vadd.f32 %v1074, %v1134
        %v1145 = vadd.f32 %v1075, %v1135
        %v1146 = vadd.f32 %v1076, %v1134
        %v1147 = vadd.f32 %v1077, %v1135
        %v1148 = vadd.f32 %v1078, %v1134
        %v1149 = vadd.f32 %v1079, %v1135
        %v1150 = vadd.f32 %v1080, %v1134
        %v1151 = vadd.f32 %v1081, %v1135
        %v1152 = vadd.f32 %v1082, %v1134
        %v1153 = vadd.f32 %v1083, %v1135
        %v1154 = vadd.f32 %v1084, %v1134
        %v1155 = vadd.f32 %v1085, %v1135
        %v1156 = vadd.f32 %v1086, %v1134
        %v1157 = vadd.f32 %v1087, %v1135
        %v1158 = vadd.f32 %v1088, %v1134
        %v1159 = vadd.f32 %v1089, %v1135
        %v1160 = vadd.f32 %v1090, %v1134
        %v1161 = vadd.f32 %v1091, %v1135
        %v1162 = vadd.f32 %v1092, %v1134
        %v1163 = vadd.f32 %v1093, %v1135
        %v1164 = vadd.f32 %v1094, %v1134
        %v1165 = vadd.f32 %v1095, %v1135
        %v1166 = vadd.f32 %v1096, %v1134
        %v1167 = vadd.f32 %v1097, %v1135
        %v1168 = vadd.f32 %v1098, %v1134
        %v1169 = vadd.f32 %v1099, %v1135
        %v1170 = vadd.f32 %v1100, %v1134
        %v1171 = vadd.f32 %v1101, %v1135
        %v1172 = vadd.f32 %v1102, %v1134
        %v1173 = vadd.f32 %v1103, %v1135
        %v1174 = vadd.f32 %v1104, %v1134
        %v1175 = vadd.f32 %v1105, %v1135
        %v1176 = vadd.f32 %v1106, %v1134
        %v1177 = vadd.f32 %v1107, %v1135
        %v1178 = vadd.f32 %v1108, %v1134
        %v1179 = vadd.f32 %v1109, %v1135
        %v1180 = vadd.f32 %v1110, %v1134
        %v1181 = vadd.f32 %v1111, %v1135
        %v1182 = vadd.f32 %v1112, %v1134
        %v1183 = vadd.f32 %v1113, %v1135
        %v1184 = vadd.f32 %v1114, %v1134
        %v1185 = vadd.f32 %v1115, %v1135
        %v1186 = vadd.f32 %v1116, %v1134
        %v1187 = vadd.f32 %v1117, %v1135
        %v1188 = vadd.f32 %v1118, %v1134
        %v1189 = vadd.f32 %v1119, %v1135
        %v1190 = vadd.f32 %v1120, %v1134
        %v1191 = vadd.f32 %v1121, %v1135
        %v1192 = vadd.f32 %v1122, %v1134
        %v1193 = vadd.f32 %v1123, %v1135
        %v1194 = vadd.f32 %v1124, %v1134
        %v1195 = vadd.f32 %v1125, %v1135
        %v1196 = vadd.f32 %v1126, %v1134
        %v1197 = vadd.f32 %v1127, %v1135
        %v1198 = vadd.f32 %v1128, %v1134
        %v1199 = vadd.f32 %v1129, %v1135
        %v1200 = vadd.f32 %v1130, %v1134
        %v1201 = vadd.f32 %v1131, %v1135
        %v1202 = vmax.f32 %v1138, 0.0
        %v1203 = vmax.f32 %v1139, 0.0
        %v1204 = vmax.f32 %v1140, 0.0
        %v1205 = vmax.f32 %v1141, 0.0
        %v1206 = vmax.f32 %v1142, 0.0
        %v1207 = vmax.f32 %v1143, 0.0
        %v1208 = vmax.f32 %v1144, 0.0
        %v1209 = vmax.f32 %v1145, 0.0
        %v1210 = vmax.f32 %v1146, 0.0
        %v1211 = vmax.f32 %v1147, 0.0
        %v1212 = vmax.f32 %v1148, 0.0
        %v1213 = vmax.f32 %v1149, 0.0
        %v1214 = vmax.f32 %v1150, 0.0
        %v1215 = vmax.f32 %v1151, 0.0
        %v1216 = vmax.f32 %v1152, 0.0
        %v1217 = vmax.f32 %v1153, 0.0
        %v1218 = vmax.f32 %v1154, 0.0
        %v1219 = vmax.f32 %v1155, 0.0
        %v1220 = vmax.f32 %v1156, 0.0
        %v1221 = vmax.f32 %v1157, 0.0
        %v1222 = vmax.f32 %v1158, 0.0
        %v1223 = vmax.f32 %v1159, 0.0
        %v1224 = vmax.f32 %v1160, 0.0
        %v1225 = vmax.f32 %v1161, 0.0
        %v1226 = vmax.f32 %v1162, 0.0
        %v1227 = vmax.f32 %v1163, 0.0
        %v1228 = vmax.f32 %v1164, 0.0
        %v1229 = vmax.f32 %v1165, 0.0
        %v1230 = vmax.f32 %v1166, 0.0
        %v1231 = vmax.f32 %v1167, 0.0
        %v1232 = vmax.f32 %v1168, 0.0
        %v1233 = vmax.f32 %v1169, 0.0
        %v1234 = vmax.f32 %v1170, 0.0
        %v1235 = vmax.f32 %v1171, 0.0
        %v1236 = vmax.f32 %v1172, 0.0
        %v1237 = vmax.f32 %v1173, 0.0
        %v1238 = vmax.f32 %v1174, 0.0
        %v1239 = vmax.f32 %v1175, 0.0
        %v1240 = vmax.f32 %v1176, 0.0
        %v1241 = vmax.f32 %v1177, 0.0
        %v1242 = vmax.f32 %v1178, 0.0
        %v1243 = vmax.f32 %v1179, 0.0
        %v1244 = vmax.f32 %v1180, 0.0
        %v1245 = vmax.f32 %v1181, 0.0
        %v1246 = vmax.f32 %v1182, 0.0
        %v1247 = vmax.f32 %v1183, 0.0
        %v1248 = vmax.f32 %v1184, 0.0
        %v1249 = vmax.f32 %v1185, 0.0
        %v1250 = vmax.f32 %v1186, 0.0
        %v1251 = vmax.f32 %v1187, 0.0
        %v1252 = vmax.f32 %v1188, 0.0
        %v1253 = vmax.f32 %v1189, 0.0
        %v1254 = vmax.f32 %v1190, 0.0
        %v1255 = vmax.f32 %v1191, 0.0
        %v1256 = vmax.f32 %v1192, 0.0
        %v1257 = vmax.f32 %v1193, 0.0
        %v1258 = vmax.f32 %v1194, 0.0
        %v1259 = vmax.f32 %v1195, 0.0
        %v1260 = vmax.f32 %v1196, 0.0
        %v1261 = vmax.f32 %v1197, 0.0
        %v1262 = vmax.f32 %v1198, 0.0
        %v1263 = vmax.f32 %v1199, 0.0
        %v1264 = vmax.f32 %v1200, 0.0
        %v1265 = vmax.f32 %v1201, 0.0
        %v1266 = vpack.c.bf16 %v1204, %v1202
        %v1267 = vpack.c.bf16 %v1205, %v1203
        %v1268 = vpack.c.bf16 %v1208, %v1206
        %v1269 = vpack.c.bf16 %v1209, %v1207
        %v1270 = vpack.c.bf16 %v1212, %v1210
        %v1271 = vpack.c.bf16 %v1213, %v1211
        %v1272 = vpack.c.bf16 %v1216, %v1214
        %v1273 = vpack.c.bf16 %v1217, %v1215
        %v1274 = vpack.c.bf16 %v1220, %v1218
        %v1275 = vpack.c.bf16 %v1221, %v1219
        %v1276 = vpack.c.bf16 %v1224, %v1222
        %v1277 = vpack.c.bf16 %v1225, %v1223
        %v1278 = vpack.c.bf16 %v1228, %v1226
        %v1279 = vpack.c.bf16 %v1229, %v1227
        %v1280 = vpack.c.bf16 %v1232, %v1230
        %v1281 = vpack.c.bf16 %v1233, %v1231
        %v1282 = vpack.c.bf16 %v1236, %v1234
        %v1283 = vpack.c.bf16 %v1237, %v1235
        %v1284 = vpack.c.bf16 %v1240, %v1238
        %v1285 = vpack.c.bf16 %v1241, %v1239
        %v1286 = vpack.c.bf16 %v1244, %v1242
        %v1287 = vpack.c.bf16 %v1245, %v1243
        %v1288 = vpack.c.bf16 %v1248, %v1246
        %v1289 = vpack.c.bf16 %v1249, %v1247
        %v1290 = vpack.c.bf16 %v1252, %v1250
        %v1291 = vpack.c.bf16 %v1253, %v1251
        %v1292 = vpack.c.bf16 %v1256, %v1254
        %v1293 = vpack.c.bf16 %v1257, %v1255
        %v1294 = vpack.c.bf16 %v1260, %v1258
        %v1295 = vpack.c.bf16 %v1261, %v1259
        %v1296 = vpack.c.bf16 %v1264, %v1262
        %v1297 = vpack.c.bf16 %v1265, %v1263
        %v1298 = vld [vmem:[%s651] sm:$0xff]
        %v1299 = vld [vmem:[%s651 + $0x8] sm:$0xff]
        %v1300 = vld [vmem:[%s651 + $0x10] sm:$0xf]
        %v1301 = vld [vmem:[%s651 + $0x14] sm:$0xff]
        %v1302 = vld [vmem:[%s651 + $0x1c] sm:$0xff]
        %v1303 = vld [vmem:[%s651 + $0x24] sm:$0xf]
        %v1304 = vld [vmem:[%s651 + $0x28] sm:$0xff]
        %v1305 = vld [vmem:[%s651 + $0x30] sm:$0xff]
        %v1306 = vld [vmem:[%s651 + $0x38] sm:$0xf]
        %v1307 = vld [vmem:[%s651 + $0x3c] sm:$0xff]
        %v1308 = vld [vmem:[%s651 + $0x44] sm:$0xff]
        %v1309 = vld [vmem:[%s651 + $0x4c] sm:$0xf]
        %v1310 = vld [vmem:[%s651 + $0x50] sm:$0xff]
        %v1311 = vld [vmem:[%s651 + $0x58] sm:$0xff]
        %v1312 = vld [vmem:[%s651 + $0x60] sm:$0xf]
        %v1313 = vld [vmem:[%s651 + $0x64] sm:$0xff]
        %v1314 = vld [vmem:[%s651 + $0x6c] sm:$0xff]
        %v1315 = vld [vmem:[%s651 + $0x74] sm:$0xf]
        %v1316 = vld [vmem:[%s651 + $0x78] sm:$0xff]
        %v1317 = vld [vmem:[%s651 + $0x80] sm:$0xff]
        %v1318 = vld [vmem:[%s651 + $0x88] sm:$0xf]
        %v1319 = vld [vmem:[%s651 + $0x8c] sm:$0xff]
        %v1320 = vld [vmem:[%s651 + $0x94] sm:$0xff]
        %v1321 = vld [vmem:[%s651 + $0x9c] sm:$0xf]
        %v1322 = vld [vmem:[%s651 + $0xa0] sm:$0xff]
        %v1323 = vld [vmem:[%s651 + $0xa8] sm:$0xff]
        %v1324 = vld [vmem:[%s651 + $0xb0] sm:$0xf]
        %v1325 = vld [vmem:[%s651 + $0xb4] sm:$0xff]
        %v1326 = vld [vmem:[%s651 + $0xbc] sm:$0xff]
        %v1327 = vld [vmem:[%s651 + $0xc4] sm:$0xf]
        %v1328 = vld [vmem:[%s651 + $0xc8] sm:$0xff]
        %v1329 = vld [vmem:[%s651 + $0xd0] sm:$0xff]
        %v1330 = vld [vmem:[%s651 + $0xd8] sm:$0xf]
        %v1331 = vld [vmem:[%s651 + $0xdc] sm:$0xff]
        %v1332 = vld [vmem:[%s651 + $0xe4] sm:$0xff]
        %v1333 = vld [vmem:[%s651 + $0xec] sm:$0xf]
        %v1334 = vld [vmem:[%s651 + $0xf0] sm:$0xff]
        %v1335 = vld [vmem:[%s651 + $0xf8] sm:$0xff]
        %v1336 = vld [vmem:[%s651 + $0x100] sm:$0xf]
        %v1337 = vld [vmem:[%s651 + $0x104] sm:$0xff]
        %v1338 = vld [vmem:[%s651 + $0x10c] sm:$0xff]
        %v1339 = vld [vmem:[%s651 + $0x114] sm:$0xf]
        %v1340 = vld [vmem:[%s651 + $0x118] sm:$0xff]
        %v1341 = vld [vmem:[%s651 + $0x120] sm:$0xff]
        %v1342 = vld [vmem:[%s651 + $0x128] sm:$0xf]
        %v1343 = vld [vmem:[%s651 + $0x12c] sm:$0xff]
        %v1344 = vld [vmem:[%s651 + $0x134] sm:$0xff]
        %v1345 = vld [vmem:[%s651 + $0x13c] sm:$0xf]
        %v1346 = vld [vmem:[%s651 + $0x140] sm:$0xff]
        %v1347 = vld [vmem:[%s651 + $0x148] sm:$0xff]
        %v1348 = vld [vmem:[%s651 + $0x150] sm:$0xf]
        %v1349 = vld [vmem:[%s651 + $0x154] sm:$0xff]
        %v1350 = vld [vmem:[%s651 + $0x15c] sm:$0xff]
        %v1351 = vld [vmem:[%s651 + $0x164] sm:$0xf]
        %v1352 = vld [vmem:[%s651 + $0x168] sm:$0xff]
        %v1353 = vld [vmem:[%s651 + $0x170] sm:$0xff]
        %v1354 = vld [vmem:[%s651 + $0x178] sm:$0xf]
        %v1355 = vld [vmem:[%s651 + $0x17c] sm:$0xff]
        %v1356 = vld [vmem:[%s651 + $0x184] sm:$0xff]
        %v1357 = vld [vmem:[%s651 + $0x18c] sm:$0xf]
        %v1358 = vld [vmem:[%s651 + $0x190] sm:$0xff]
        %v1359 = vld [vmem:[%s651 + $0x198] sm:$0xff]
        %v1360 = vld [vmem:[%s651 + $0x1a0] sm:$0xf]
        %v1361 = vld [vmem:[%s651 + $0x1a4] sm:$0xff]
        %v1362 = vld [vmem:[%s651 + $0x1ac] sm:$0xff]
        %v1363 = vld [vmem:[%s651 + $0x1b4] sm:$0xf]
        %v1364 = vld [vmem:[%s651 + $0x1b8] sm:$0xff]
        %v1365 = vld [vmem:[%s651 + $0x1c0] sm:$0xff]
        %v1366 = vld [vmem:[%s651 + $0x1c8] sm:$0xf]
        %v1367 = vld [vmem:[%s651 + $0x1cc] sm:$0xff]
        %v1368 = vld [vmem:[%s651 + $0x1d4] sm:$0xff]
        %v1369 = vld [vmem:[%s651 + $0x1dc] sm:$0xf]
        %v1370 = vld [vmem:[%s651 + $0x1e0] sm:$0xff]
        %v1371 = vld [vmem:[%s651 + $0x1e8] sm:$0xff]
        %v1372 = vld [vmem:[%s651 + $0x1f0] sm:$0xf]
        %v1373 = vld [vmem:[%s651 + $0x1f4] sm:$0xff]
        %v1374 = vld [vmem:[%s651 + $0x1fc] sm:$0xff]
        %v1375 = vld [vmem:[%s651 + $0x204] sm:$0xf]
        %v1376 = vld [vmem:[%s651 + $0x208] sm:$0xff]
        %v1377 = vld [vmem:[%s651 + $0x210] sm:$0xff]
        %v1378 = vld [vmem:[%s651 + $0x218] sm:$0xf]
        %v1379 = vld [vmem:[%s651 + $0x21c] sm:$0xff]
        %v1380 = vld [vmem:[%s651 + $0x224] sm:$0xff]
        %v1381 = vld [vmem:[%s651 + $0x22c] sm:$0xf]
        %v1382 = vld [vmem:[%s651 + $0x230] sm:$0xff]
        %v1383 = vld [vmem:[%s651 + $0x238] sm:$0xff]
        %v1384 = vld [vmem:[%s651 + $0x240] sm:$0xf]
        %v1385 = vld [vmem:[%s651 + $0x244] sm:$0xff]
        %v1386 = vld [vmem:[%s651 + $0x24c] sm:$0xff]
        %v1387 = vld [vmem:[%s651 + $0x254] sm:$0xf]
        %v1388 = vld [vmem:[%s651 + $0x258] sm:$0xff]
        %v1389 = vld [vmem:[%s651 + $0x260] sm:$0xff]
        %v1390 = vld [vmem:[%s651 + $0x268] sm:$0xf]
        %v1391 = vld [vmem:[%s651 + $0x26c] sm:$0xff]
        %v1392 = vld [vmem:[%s651 + $0x274] sm:$0xff]
        %v1393 = vld [vmem:[%s651 + $0x27c] sm:$0xf]
        %v1394 = vld [vmem:[%s6] sm:$0xff]
        %v1395 = vld [vmem:[%s6 + $0x8] sm:$0xff]
        %v1396 = vld [vmem:[%s6 + $0x10] sm:$0xff]
        %v1397 = vld [vmem:[%s6 + $0x18] sm:$0xff]
        %v1398 = vld [vmem:[%s6 + $0x20] sm:$0xff]
        %v1399 = vld [vmem:[%s6 + $0x28] sm:$0xff]
        %v1400 = vld [vmem:[%s6 + $0x30] sm:$0xff]
        %v1401 = vld [vmem:[%s6 + $0x38] sm:$0xff]
        %v1402 = vld [vmem:[%s6 + $0x40] sm:$0xff]
        %v1403 = vld [vmem:[%s6 + $0x48] sm:$0xff]
        %v1404 = vld [vmem:[%s6 + $0x50] sm:$0xff]
        %v1405 = vld [vmem:[%s6 + $0x58] sm:$0xff]
        %v1406 = vld [vmem:[%s6 + $0x60] sm:$0xff]
        %v1407 = vld [vmem:[%s6 + $0x68] sm:$0xff]
        %v1408 = vld [vmem:[%s6 + $0x70] sm:$0xff]
        %v1409 = vld [vmem:[%s6 + $0x78] sm:$0xff]
        %v1410 = vld [vmem:[%s6 + $0x80] sm:$0xff]
        %v1411 = vld [vmem:[%s6 + $0x88] sm:$0xff]
        %v1412 = vld [vmem:[%s6 + $0x90] sm:$0xff]
        %v1413 = vld [vmem:[%s6 + $0x98] sm:$0xff]
        %v1414 = vld [vmem:[%s6 + $0xa0] sm:$0xff]
        %v1415 = vld [vmem:[%s6 + $0xa8] sm:$0xff]
        %v1416 = vld [vmem:[%s6 + $0xb0] sm:$0xff]
        %v1417 = vld [vmem:[%s6 + $0xb8] sm:$0xff]
        %v1418 = vld [vmem:[%s6 + $0xc0] sm:$0xff]
        %v1419 = vld [vmem:[%s6 + $0xc8] sm:$0xff]
        %v1420 = vld [vmem:[%s6 + $0xd0] sm:$0xff]
        %v1421 = vld [vmem:[%s6 + $0xd8] sm:$0xff]
        %v1422 = vld [vmem:[%s6 + $0xe0] sm:$0xff]
        %v1423 = vld [vmem:[%s6 + $0xe8] sm:$0xff]
        %v1424 = vld [vmem:[%s6 + $0xf0] sm:$0xff]
        %v1425 = vld [vmem:[%s6 + $0xf8] sm:$0xff]
        %v1426 = vld [vmem:[%s6 + $0x100] sm:$0xff]
        %v1427 = vld [vmem:[%s6 + $0x108] sm:$0xff]
        %v1428 = vld [vmem:[%s6 + $0x110] sm:$0xff]
        %v1429 = vld [vmem:[%s6 + $0x118] sm:$0xff]
        %v1430 = vld [vmem:[%s6 + $0x120] sm:$0xff]
        %v1431 = vld [vmem:[%s6 + $0x128] sm:$0xff]
        %v1432 = vld [vmem:[%s6 + $0x130] sm:$0xff]
        %v1433 = vld [vmem:[%s6 + $0x138] sm:$0xff]
        %v1434 = vld [vmem:[%s6 + $0x140] sm:$0xff]
        %v1435 = vld [vmem:[%s6 + $0x148] sm:$0xff]
        %v1436 = vld [vmem:[%s6 + $0x150] sm:$0xff]
        %v1437 = vld [vmem:[%s6 + $0x158] sm:$0xff]
        %v1438 = vld [vmem:[%s6 + $0x160] sm:$0xff]
        %v1439 = vld [vmem:[%s6 + $0x168] sm:$0xff]
        %v1440 = vld [vmem:[%s6 + $0x170] sm:$0xff]
        %v1441 = vld [vmem:[%s6 + $0x178] sm:$0xff]
        %v1442 = vld [vmem:[%s6 + $0x180] sm:$0xff]
        %v1443 = vld [vmem:[%s6 + $0x188] sm:$0xff]
        %v1444 = vld [vmem:[%s6 + $0x190] sm:$0xff]
        %v1445 = vld [vmem:[%s6 + $0x198] sm:$0xff]
        %v1446 = vld [vmem:[%s6 + $0x1a0] sm:$0xff]
        %v1447 = vld [vmem:[%s6 + $0x1a8] sm:$0xff]
        %v1448 = vld [vmem:[%s6 + $0x1b0] sm:$0xff]
        %v1449 = vld [vmem:[%s6 + $0x1b8] sm:$0xff]
        %v1450 = vld [vmem:[%s6 + $0x1c0] sm:$0xff]
        %v1451 = vld [vmem:[%s6 + $0x1c8] sm:$0xff]
        %v1452 = vld [vmem:[%s6 + $0x1d0] sm:$0xff]
        %v1453 = vld [vmem:[%s6 + $0x1d8] sm:$0xff]
        %v1454 = vld [vmem:[%s6 + $0x1e0] sm:$0xff]
        %v1455 = vld [vmem:[%s6 + $0x1e8] sm:$0xff]
        %v1456 = vld [vmem:[%s6 + $0x1f0] sm:$0xff]
        %v1457 = vld [vmem:[%s6 + $0x1f8] sm:$0xff]
        %v1458 = vld [vmem:[%s6 + $0x200] sm:$0xff]
        %v1459 = vld [vmem:[%s6 + $0x208] sm:$0xff]
        %v1460 = vld [vmem:[%s6 + $0x210] sm:$0xff]
        %v1461 = vld [vmem:[%s6 + $0x218] sm:$0xff]
        %v1462 = vld [vmem:[%s6 + $0x220] sm:$0xff]
        %v1463 = vld [vmem:[%s6 + $0x228] sm:$0xff]
        %v1464 = vld [vmem:[%s6 + $0x230] sm:$0xff]
        %v1465 = vld [vmem:[%s6 + $0x238] sm:$0xff]
        %v1562 = vunpack.c.l.b16 %v1298
        %v1563 = vunpack.c.h.b16 %v1298
        %v1564 = vunpack.c.l.b16 %v1299
        %v1565 = vunpack.c.h.b16 %v1299
        %v1566 = vunpack.c.l.b16 %v1300
        %v1567 = vunpack.c.l.b16 %v1301
        %v1568 = vunpack.c.h.b16 %v1301
        %v1569 = vunpack.c.l.b16 %v1302
        %v1570 = vunpack.c.h.b16 %v1302
        %v1571 = vunpack.c.l.b16 %v1303
        %v1572 = vunpack.c.l.b16 %v1304
        %v1573 = vunpack.c.h.b16 %v1304
        %v1574 = vunpack.c.l.b16 %v1305
        %v1575 = vunpack.c.h.b16 %v1305
        %v1576 = vunpack.c.l.b16 %v1306
        %v1577 = vunpack.c.l.b16 %v1307
        %v1578 = vunpack.c.h.b16 %v1307
        %v1579 = vunpack.c.l.b16 %v1308
        %v1580 = vunpack.c.h.b16 %v1308
        %v1581 = vunpack.c.l.b16 %v1309
        %v1582 = vunpack.c.l.b16 %v1310
        %v1583 = vunpack.c.h.b16 %v1310
        %v1584 = vunpack.c.l.b16 %v1311
        %v1585 = vunpack.c.h.b16 %v1311
        %v1586 = vunpack.c.l.b16 %v1312
        %v1587 = vunpack.c.l.b16 %v1313
        %v1588 = vunpack.c.h.b16 %v1313
        %v1589 = vunpack.c.l.b16 %v1314
        %v1590 = vunpack.c.h.b16 %v1314
        %v1591 = vunpack.c.l.b16 %v1315
        %v1592 = vunpack.c.l.b16 %v1316
        %v1593 = vunpack.c.h.b16 %v1316
        %v1594 = vunpack.c.l.b16 %v1317
        %v1595 = vunpack.c.h.b16 %v1317
        %v1596 = vunpack.c.l.b16 %v1318
        %v1597 = vunpack.c.l.b16 %v1319
        %v1598 = vunpack.c.h.b16 %v1319
        %v1599 = vunpack.c.l.b16 %v1320
        %v1600 = vunpack.c.h.b16 %v1320
        %v1601 = vunpack.c.l.b16 %v1321
        %v1602 = vunpack.c.l.b16 %v1322
        %v1603 = vunpack.c.h.b16 %v1322
        %v1604 = vunpack.c.l.b16 %v1323
        %v1605 = vunpack.c.h.b16 %v1323
        %v1606 = vunpack.c.l.b16 %v1324
        %v1607 = vunpack.c.l.b16 %v1325
        %v1608 = vunpack.c.h.b16 %v1325
        %v1609 = vunpack.c.l.b16 %v1326
        %v1610 = vunpack.c.h.b16 %v1326
        %v1611 = vunpack.c.l.b16 %v1327
        %v1612 = vunpack.c.l.b16 %v1328
        %v1613 = vunpack.c.h.b16 %v1328
        %v1614 = vunpack.c.l.b16 %v1329
        %v1615 = vunpack.c.h.b16 %v1329
        %v1616 = vunpack.c.l.b16 %v1330
        %v1617 = vunpack.c.l.b16 %v1331
        %v1618 = vunpack.c.h.b16 %v1331
        %v1619 = vunpack.c.l.b16 %v1332
        %v1620 = vunpack.c.h.b16 %v1332
        %v1621 = vunpack.c.l.b16 %v1333
        %v1622 = vunpack.c.l.b16 %v1334
        %v1623 = vunpack.c.h.b16 %v1334
        %v1624 = vunpack.c.l.b16 %v1335
        %v1625 = vunpack.c.h.b16 %v1335
        %v1626 = vunpack.c.l.b16 %v1336
        %v1627 = vunpack.c.l.b16 %v1337
        %v1628 = vunpack.c.h.b16 %v1337
        %v1629 = vunpack.c.l.b16 %v1338
        %v1630 = vunpack.c.h.b16 %v1338
        %v1631 = vunpack.c.l.b16 %v1339
        %v1632 = vunpack.c.l.b16 %v1340
        %v1633 = vunpack.c.h.b16 %v1340
        %v1634 = vunpack.c.l.b16 %v1341
        %v1635 = vunpack.c.h.b16 %v1341
        %v1636 = vunpack.c.l.b16 %v1342
        %v1637 = vunpack.c.l.b16 %v1343
        %v1638 = vunpack.c.h.b16 %v1343
        %v1639 = vunpack.c.l.b16 %v1344
        %v1640 = vunpack.c.h.b16 %v1344
        %v1641 = vunpack.c.l.b16 %v1345
        %v1642 = vunpack.c.l.b16 %v1346
        %v1643 = vunpack.c.h.b16 %v1346
        %v1644 = vunpack.c.l.b16 %v1347
        %v1645 = vunpack.c.h.b16 %v1347
        %v1646 = vunpack.c.l.b16 %v1348
        %v1647 = vunpack.c.l.b16 %v1349
        %v1648 = vunpack.c.h.b16 %v1349
        %v1649 = vunpack.c.l.b16 %v1350
        %v1650 = vunpack.c.h.b16 %v1350
        %v1651 = vunpack.c.l.b16 %v1351
        %v1652 = vunpack.c.l.b16 %v1352
        %v1653 = vunpack.c.h.b16 %v1352
        %v1654 = vunpack.c.l.b16 %v1353
        %v1655 = vunpack.c.h.b16 %v1353
        %v1656 = vunpack.c.l.b16 %v1354
        %v1657 = vunpack.c.l.b16 %v1355
        %v1658 = vunpack.c.h.b16 %v1355
        %v1659 = vunpack.c.l.b16 %v1356
        %v1660 = vunpack.c.h.b16 %v1356
        %v1661 = vunpack.c.l.b16 %v1357
        %v1662 = vunpack.c.l.b16 %v1358
        %v1663 = vunpack.c.h.b16 %v1358
        %v1664 = vunpack.c.l.b16 %v1359
        %v1665 = vunpack.c.h.b16 %v1359
        %v1666 = vunpack.c.l.b16 %v1360
        %v1667 = vunpack.c.l.b16 %v1361
        %v1668 = vunpack.c.h.b16 %v1361
        %v1669 = vunpack.c.l.b16 %v1362
        %v1670 = vunpack.c.h.b16 %v1362
        %v1671 = vunpack.c.l.b16 %v1363
        %v1672 = vunpack.c.l.b16 %v1364
        %v1673 = vunpack.c.h.b16 %v1364
        %v1674 = vunpack.c.l.b16 %v1365
        %v1675 = vunpack.c.h.b16 %v1365
        %v1676 = vunpack.c.l.b16 %v1366
        %v1677 = vunpack.c.l.b16 %v1367
        %v1678 = vunpack.c.h.b16 %v1367
        %v1679 = vunpack.c.l.b16 %v1368
        %v1680 = vunpack.c.h.b16 %v1368
        %v1681 = vunpack.c.l.b16 %v1369
        %v1682 = vunpack.c.l.b16 %v1370
        %v1683 = vunpack.c.h.b16 %v1370
        %v1684 = vunpack.c.l.b16 %v1371
        %v1685 = vunpack.c.h.b16 %v1371
        %v1686 = vunpack.c.l.b16 %v1372
        %v1687 = vunpack.c.l.b16 %v1373
        %v1688 = vunpack.c.h.b16 %v1373
        %v1689 = vunpack.c.l.b16 %v1374
        %v1690 = vunpack.c.h.b16 %v1374
        %v1691 = vunpack.c.l.b16 %v1375
        %v1692 = vunpack.c.l.b16 %v1376
        %v1693 = vunpack.c.h.b16 %v1376
        %v1694 = vunpack.c.l.b16 %v1377
        %v1695 = vunpack.c.h.b16 %v1377
        %v1696 = vunpack.c.l.b16 %v1378
        %v1697 = vunpack.c.l.b16 %v1379
        %v1698 = vunpack.c.h.b16 %v1379
        %v1699 = vunpack.c.l.b16 %v1380
        %v1700 = vunpack.c.h.b16 %v1380
        %v1701 = vunpack.c.l.b16 %v1381
        %v1702 = vunpack.c.l.b16 %v1382
        %v1703 = vunpack.c.h.b16 %v1382
        %v1704 = vunpack.c.l.b16 %v1383
        %v1705 = vunpack.c.h.b16 %v1383
        %v1706 = vunpack.c.l.b16 %v1384
        %v1707 = vunpack.c.l.b16 %v1385
        %v1708 = vunpack.c.h.b16 %v1385
        %v1709 = vunpack.c.l.b16 %v1386
        %v1710 = vunpack.c.h.b16 %v1386
        %v1711 = vunpack.c.l.b16 %v1387
        %v1712 = vunpack.c.l.b16 %v1388
        %v1713 = vunpack.c.h.b16 %v1388
        %v1714 = vunpack.c.l.b16 %v1389
        %v1715 = vunpack.c.h.b16 %v1389
        %v1716 = vunpack.c.l.b16 %v1390
        %v1717 = vunpack.c.l.b16 %v1391
        %v1718 = vunpack.c.h.b16 %v1391
        %v1719 = vunpack.c.l.b16 %v1392
        %v1720 = vunpack.c.h.b16 %v1392
        %v1721 = vunpack.c.l.b16 %v1393
        %v1722 = vpack.c.b16 %v1567, %v1562
        %v1723 = vpack.c.b16 %v1568, %v1563
        %v1724 = vpack.c.b16 %v1569, %v1564
        %v1725 = vpack.c.b16 %v1570, %v1565
        %v1726 = vpack.c.b16 %v1571, %v1566
        %v1727 = vpack.c.b16 %v1577, %v1572
        %v1728 = vpack.c.b16 %v1578, %v1573
        %v1729 = vpack.c.b16 %v1579, %v1574
        %v1730 = vpack.c.b16 %v1580, %v1575
        %v1731 = vpack.c.b16 %v1581, %v1576
        %v1732 = vpack.c.b16 %v1587, %v1582
        %v1733 = vpack.c.b16 %v1588, %v1583
        %v1734 = vpack.c.b16 %v1589, %v1584
        %v1735 = vpack.c.b16 %v1590, %v1585
        %v1736 = vpack.c.b16 %v1591, %v1586
        %v1737 = vpack.c.b16 %v1597, %v1592
        %v1738 = vpack.c.b16 %v1598, %v1593
        %v1739 = vpack.c.b16 %v1599, %v1594
        %v1740 = vpack.c.b16 %v1600, %v1595
        %v1741 = vpack.c.b16 %v1601, %v1596
        %v1742 = vpack.c.b16 %v1607, %v1602
        %v1743 = vpack.c.b16 %v1608, %v1603
        %v1744 = vpack.c.b16 %v1609, %v1604
        %v1745 = vpack.c.b16 %v1610, %v1605
        %v1746 = vpack.c.b16 %v1611, %v1606
        %v1747 = vpack.c.b16 %v1617, %v1612
        %v1748 = vpack.c.b16 %v1618, %v1613
        %v1749 = vpack.c.b16 %v1619, %v1614
        %v1750 = vpack.c.b16 %v1620, %v1615
        %v1751 = vpack.c.b16 %v1621, %v1616
        %v1752 = vpack.c.b16 %v1627, %v1622
        %v1753 = vpack.c.b16 %v1628, %v1623
        %v1754 = vpack.c.b16 %v1629, %v1624
        %v1755 = vpack.c.b16 %v1630, %v1625
        %v1756 = vpack.c.b16 %v1631, %v1626
        %v1757 = vpack.c.b16 %v1637, %v1632
        %v1758 = vpack.c.b16 %v1638, %v1633
        %v1759 = vpack.c.b16 %v1639, %v1634
        %v1760 = vpack.c.b16 %v1640, %v1635
        %v1761 = vpack.c.b16 %v1641, %v1636
        %v1762 = vpack.c.b16 %v1647, %v1642
        %v1763 = vpack.c.b16 %v1648, %v1643
        %v1764 = vpack.c.b16 %v1649, %v1644
        %v1765 = vpack.c.b16 %v1650, %v1645
        %v1766 = vpack.c.b16 %v1651, %v1646
        %v1767 = vpack.c.b16 %v1657, %v1652
        %v1768 = vpack.c.b16 %v1658, %v1653
        %v1769 = vpack.c.b16 %v1659, %v1654
        %v1770 = vpack.c.b16 %v1660, %v1655
        %v1771 = vpack.c.b16 %v1661, %v1656
        %v1772 = vpack.c.b16 %v1667, %v1662
        %v1773 = vpack.c.b16 %v1668, %v1663
        %v1774 = vpack.c.b16 %v1669, %v1664
        %v1775 = vpack.c.b16 %v1670, %v1665
        %v1776 = vpack.c.b16 %v1671, %v1666
        %v1777 = vpack.c.b16 %v1677, %v1672
        %v1778 = vpack.c.b16 %v1678, %v1673
        %v1779 = vpack.c.b16 %v1679, %v1674
        %v1780 = vpack.c.b16 %v1680, %v1675
        %v1781 = vpack.c.b16 %v1681, %v1676
        %v1782 = vpack.c.b16 %v1687, %v1682
        %v1783 = vpack.c.b16 %v1688, %v1683
        %v1784 = vpack.c.b16 %v1689, %v1684
        %v1785 = vpack.c.b16 %v1690, %v1685
        %v1786 = vpack.c.b16 %v1691, %v1686
        %v1787 = vpack.c.b16 %v1697, %v1692
        %v1788 = vpack.c.b16 %v1698, %v1693
        %v1789 = vpack.c.b16 %v1699, %v1694
        %v1790 = vpack.c.b16 %v1700, %v1695
        %v1791 = vpack.c.b16 %v1701, %v1696
        %v1792 = vpack.c.b16 %v1707, %v1702
        %v1793 = vpack.c.b16 %v1708, %v1703
        %v1794 = vpack.c.b16 %v1709, %v1704
        %v1795 = vpack.c.b16 %v1710, %v1705
        %v1796 = vpack.c.b16 %v1711, %v1706
        %v1797 = vpack.c.b16 %v1717, %v1712
        %v1798 = vpack.c.b16 %v1718, %v1713
        %v1799 = vpack.c.b16 %v1719, %v1714
        %v1800 = vpack.c.b16 %v1720, %v1715
        %v1801 = vpack.c.b16 %v1721, %v1716
        %v1938 = vunpack.c.l.b16 %v1394
        %v1939 = vunpack.c.h.b16 %v1394
        %v1940 = vunpack.c.l.b16 %v1395
        %v1941 = vunpack.c.h.b16 %v1395
        %v1942 = vunpack.c.l.b16 %v1396
        %v1943 = vunpack.c.h.b16 %v1396
        %v1944 = vunpack.c.l.b16 %v1397
        %v1945 = vunpack.c.h.b16 %v1397
        %v1946 = vunpack.c.l.b16 %v1398
        %v1947 = vunpack.c.h.b16 %v1398
        %v1948 = vunpack.c.l.b16 %v1399
        %v1949 = vunpack.c.h.b16 %v1399
        %v1950 = vunpack.c.l.b16 %v1400
        %v1951 = vunpack.c.h.b16 %v1400
        %v1952 = vunpack.c.l.b16 %v1401
        %v1953 = vunpack.c.h.b16 %v1401
        %v1954 = vunpack.c.l.b16 %v1402
        %v1955 = vunpack.c.h.b16 %v1402
        %v1956 = vunpack.c.l.b16 %v1403
        %v1957 = vunpack.c.h.b16 %v1403
        %v1958 = vunpack.c.l.b16 %v1404
        %v1959 = vunpack.c.h.b16 %v1404
        %v1960 = vunpack.c.l.b16 %v1405
        %v1961 = vunpack.c.h.b16 %v1405
        %v1962 = vunpack.c.l.b16 %v1406
        %v1963 = vunpack.c.h.b16 %v1406
        %v1964 = vunpack.c.l.b16 %v1407
        %v1965 = vunpack.c.h.b16 %v1407
        %v1966 = vunpack.c.l.b16 %v1408
        %v1967 = vunpack.c.h.b16 %v1408
        %v1968 = vunpack.c.l.b16 %v1409
        %v1969 = vunpack.c.h.b16 %v1409
        %v1970 = vunpack.c.l.b16 %v1410
        %v1971 = vunpack.c.h.b16 %v1410
        %v1972 = vunpack.c.l.b16 %v1411
        %v1973 = vunpack.c.h.b16 %v1411
        %v1974 = vunpack.c.l.b16 %v1412
        %v1975 = vunpack.c.h.b16 %v1412
        %v1976 = vunpack.c.l.b16 %v1413
        %v1977 = vunpack.c.h.b16 %v1413
        %v1978 = vunpack.c.l.b16 %v1414
        %v1979 = vunpack.c.h.b16 %v1414
        %v1980 = vunpack.c.l.b16 %v1415
        %v1981 = vunpack.c.h.b16 %v1415
        %v1982 = vunpack.c.l.b16 %v1416
        %v1983 = vunpack.c.h.b16 %v1416
        %v1984 = vunpack.c.l.b16 %v1417
        %v1985 = vunpack.c.h.b16 %v1417
        %v1986 = vunpack.c.l.b16 %v1418
        %v1987 = vunpack.c.h.b16 %v1418
        %v1988 = vunpack.c.l.b16 %v1419
        %v1989 = vunpack.c.h.b16 %v1419
        %v1990 = vunpack.c.l.b16 %v1420
        %v1991 = vunpack.c.h.b16 %v1420
        %v1992 = vunpack.c.l.b16 %v1421
        %v1993 = vunpack.c.h.b16 %v1421
        %v1994 = vunpack.c.l.b16 %v1422
        %v1995 = vunpack.c.h.b16 %v1422
        %v1996 = vunpack.c.l.b16 %v1423
        %v1997 = vunpack.c.h.b16 %v1423
        %v1998 = vunpack.c.l.b16 %v1424
        %v1999 = vunpack.c.h.b16 %v1424
        %v2000 = vunpack.c.l.b16 %v1425
        %v2001 = vunpack.c.h.b16 %v1425
        %v2002 = vunpack.c.l.b16 %v1426
        %v2003 = vunpack.c.h.b16 %v1426
        %v2004 = vunpack.c.l.b16 %v1427
        %v2005 = vunpack.c.h.b16 %v1427
        %v2006 = vunpack.c.l.b16 %v1428
        %v2007 = vunpack.c.h.b16 %v1428
        %v2008 = vunpack.c.l.b16 %v1429
        %v2009 = vunpack.c.h.b16 %v1429
        %v2010 = vunpack.c.l.b16 %v1430
        %v2011 = vunpack.c.h.b16 %v1430
        %v2012 = vunpack.c.l.b16 %v1431
        %v2013 = vunpack.c.h.b16 %v1431
        %v2014 = vunpack.c.l.b16 %v1432
        %v2015 = vunpack.c.h.b16 %v1432
        %v2016 = vunpack.c.l.b16 %v1433
        %v2017 = vunpack.c.h.b16 %v1433
        %v2018 = vunpack.c.l.b16 %v1434
        %v2019 = vunpack.c.h.b16 %v1434
        %v2020 = vunpack.c.l.b16 %v1435
        %v2021 = vunpack.c.h.b16 %v1435
        %v2022 = vunpack.c.l.b16 %v1436
        %v2023 = vunpack.c.h.b16 %v1436
        %v2024 = vunpack.c.l.b16 %v1437
        %v2025 = vunpack.c.h.b16 %v1437
        %v2026 = vunpack.c.l.b16 %v1438
        %v2027 = vunpack.c.h.b16 %v1438
        %v2028 = vunpack.c.l.b16 %v1439
        %v2029 = vunpack.c.h.b16 %v1439
        %v2030 = vunpack.c.l.b16 %v1440
        %v2031 = vunpack.c.h.b16 %v1440
        %v2032 = vunpack.c.l.b16 %v1441
        %v2033 = vunpack.c.h.b16 %v1441
        %v2034 = vunpack.c.l.b16 %v1442
        %v2035 = vunpack.c.h.b16 %v1442
        %v2036 = vunpack.c.l.b16 %v1443
        %v2037 = vunpack.c.h.b16 %v1443
        %v2038 = vunpack.c.l.b16 %v1444
        %v2039 = vunpack.c.h.b16 %v1444
        %v2040 = vunpack.c.l.b16 %v1445
        %v2041 = vunpack.c.h.b16 %v1445
        %v2042 = vunpack.c.l.b16 %v1446
        %v2043 = vunpack.c.h.b16 %v1446
        %v2044 = vunpack.c.l.b16 %v1447
        %v2045 = vunpack.c.h.b16 %v1447
        %v2046 = vunpack.c.l.b16 %v1448
        %v2047 = vunpack.c.h.b16 %v1448
        %v2048 = vunpack.c.l.b16 %v1449
        %v2049 = vunpack.c.h.b16 %v1449
        %v2050 = vunpack.c.l.b16 %v1450
        %v2051 = vunpack.c.h.b16 %v1450
        %v2052 = vunpack.c.l.b16 %v1451
        %v2053 = vunpack.c.h.b16 %v1451
        %v2054 = vunpack.c.l.b16 %v1452
        %v2055 = vunpack.c.h.b16 %v1452
        %v2056 = vunpack.c.l.b16 %v1453
        %v2057 = vunpack.c.h.b16 %v1453
        %v2058 = vunpack.c.l.b16 %v1454
        %v2059 = vunpack.c.h.b16 %v1454
        %v2060 = vunpack.c.l.b16 %v1455
        %v2061 = vunpack.c.h.b16 %v1455
        %v2062 = vunpack.c.l.b16 %v1456
        %v2063 = vunpack.c.h.b16 %v1456
        %v2064 = vunpack.c.l.b16 %v1457
        %v2065 = vunpack.c.h.b16 %v1457
        %v2066 = vunpack.c.l.b16 %v1458
        %v2067 = vunpack.c.h.b16 %v1458
        %v2068 = vunpack.c.l.b16 %v1459
        %v2069 = vunpack.c.h.b16 %v1459
        %v2070 = vunpack.c.l.b16 %v1460
        %v2071 = vunpack.c.h.b16 %v1460
        %v2072 = vunpack.c.l.b16 %v1461
        %v2073 = vunpack.c.h.b16 %v1461
        %v2074 = vunpack.c.l.b16 %v1462
        %v2075 = vunpack.c.h.b16 %v1462
        %v2076 = vunpack.c.l.b16 %v1463
        %v2077 = vunpack.c.h.b16 %v1463
        %v2078 = vunpack.c.l.b16 %v1464
        %v2079 = vunpack.c.h.b16 %v1464
        %v2080 = vunpack.c.l.b16 %v1465
        %v2081 = vunpack.c.h.b16 %v1465
        %v2082 = vpack.c.b16 %v1940, %v1938
        %v2083 = vpack.c.b16 %v1941, %v1939
        %v2084 = vpack.c.b16 %v1944, %v1942
        %v2085 = vpack.c.b16 %v1945, %v1943
        %v2086 = vpack.c.b16 %v1948, %v1946
        %v2087 = vpack.c.b16 %v1949, %v1947
        %v2088 = vpack.c.b16 %v1952, %v1950
        %v2089 = vpack.c.b16 %v1953, %v1951
        %v2090 = vpack.c.b16 %v1956, %v1954
        %v2091 = vpack.c.b16 %v1957, %v1955
        %v2092 = vpack.c.b16 %v1960, %v1958
        %v2093 = vpack.c.b16 %v1961, %v1959
        %v2094 = vpack.c.b16 %v1964, %v1962
        %v2095 = vpack.c.b16 %v1965, %v1963
        %v2096 = vpack.c.b16 %v1968, %v1966
        %v2097 = vpack.c.b16 %v1969, %v1967
        %v2098 = vpack.c.b16 %v1972, %v1970
        %v2099 = vpack.c.b16 %v1973, %v1971
        %v2100 = vpack.c.b16 %v1976, %v1974
        %v2101 = vpack.c.b16 %v1977, %v1975
        %v2102 = vpack.c.b16 %v1980, %v1978
        %v2103 = vpack.c.b16 %v1981, %v1979
        %v2104 = vpack.c.b16 %v1984, %v1982
        %v2105 = vpack.c.b16 %v1985, %v1983
        %v2106 = vpack.c.b16 %v1988, %v1986
        %v2107 = vpack.c.b16 %v1989, %v1987
        %v2108 = vpack.c.b16 %v1992, %v1990
        %v2109 = vpack.c.b16 %v1993, %v1991
        %v2110 = vpack.c.b16 %v1996, %v1994
        %v2111 = vpack.c.b16 %v1997, %v1995
        %v2112 = vpack.c.b16 %v2000, %v1998
        %v2113 = vpack.c.b16 %v2001, %v1999
        %v2114 = vpack.c.b16 %v2004, %v2002
        %v2115 = vpack.c.b16 %v2005, %v2003
        %v2116 = vpack.c.b16 %v2008, %v2006
        %v2117 = vpack.c.b16 %v2009, %v2007
        %v2118 = vpack.c.b16 %v2012, %v2010
        %v2119 = vpack.c.b16 %v2013, %v2011
        %v2120 = vpack.c.b16 %v2016, %v2014
        %v2121 = vpack.c.b16 %v2017, %v2015
        %v2122 = vpack.c.b16 %v2020, %v2018
        %v2123 = vpack.c.b16 %v2021, %v2019
        %v2124 = vpack.c.b16 %v2024, %v2022
        %v2125 = vpack.c.b16 %v2025, %v2023
        %v2126 = vpack.c.b16 %v2028, %v2026
        %v2127 = vpack.c.b16 %v2029, %v2027
        %v2128 = vpack.c.b16 %v2032, %v2030
        %v2129 = vpack.c.b16 %v2033, %v2031
        %v2130 = vpack.c.b16 %v2036, %v2034
        %v2131 = vpack.c.b16 %v2037, %v2035
        %v2132 = vpack.c.b16 %v2040, %v2038
        %v2133 = vpack.c.b16 %v2041, %v2039
        %v2134 = vpack.c.b16 %v2044, %v2042
        %v2135 = vpack.c.b16 %v2045, %v2043
        %v2136 = vpack.c.b16 %v2048, %v2046
        %v2137 = vpack.c.b16 %v2049, %v2047
        %v2138 = vpack.c.b16 %v2052, %v2050
        %v2139 = vpack.c.b16 %v2053, %v2051
        %v2140 = vpack.c.b16 %v2056, %v2054
        %v2141 = vpack.c.b16 %v2057, %v2055
        %v2142 = vpack.c.b16 %v2060, %v2058
        %v2143 = vpack.c.b16 %v2061, %v2059
        %v2144 = vpack.c.b16 %v2064, %v2062
        %v2145 = vpack.c.b16 %v2065, %v2063
        %v2146 = vpack.c.b16 %v2068, %v2066
        %v2147 = vpack.c.b16 %v2069, %v2067
        %v2148 = vpack.c.b16 %v2072, %v2070
        %v2149 = vpack.c.b16 %v2073, %v2071
        %v2150 = vpack.c.b16 %v2076, %v2074
        %v2151 = vpack.c.b16 %v2077, %v2075
        %v2152 = vpack.c.b16 %v2080, %v2078
        %v2153 = vpack.c.b16 %v2081, %v2079
        %v2227 = vsel %vm835, %v1726, 0
        %v2230 = vsel %vm835, %v1731, 0
        %v2233 = vsel %vm835, %v1736, 0
        %v2236 = vsel %vm835, %v1741, 0
        %v2239 = vsel %vm835, %v1746, 0
        %v2242 = vsel %vm835, %v1751, 0
        %v2245 = vsel %vm835, %v1756, 0
        %v2248 = vsel %vm835, %v1761, 0
        %v2251 = vsel %vm835, %v1766, 0
        %v2254 = vsel %vm835, %v1771, 0
        %v2257 = vsel %vm835, %v1776, 0
        %v2260 = vsel %vm835, %v1781, 0
        %v2263 = vsel %vm835, %v1786, 0
        %v2266 = vsel %vm835, %v1791, 0
        %v2269 = vsel %vm835, %v1796, 0
        %v2272 = vsel %vm835, %v1801, 0
        %2274 = vmatpush.bf16.msra.mxu0 %v2096
        %2275 = vmatpush.bf16.msra.mxu0 %v2094
        %2276 = vmatpush.bf16.msra.mxu0 %v2092
        %2277 = vmatpush.bf16.msra.mxu0 %v2090
        %2278 = vmatpush.bf16.msra.mxu0 %v2088
        %2279 = vmatpush.bf16.msra.mxu0 %v2086
        %2280 = vmatpush.bf16.msra.mxu0 %v2084
        %2281 = vmatpush.bf16.msra.mxu0 %v2082
        %2282 = vmatmul.bf16.gmra.mxu0 %v1722
        %v2283 = vpop.f32.mrf.mxu0
        %v2284 = vadd.f32 0.0, %v2283
        %v2285 = vpop.f32.mrf.mxu0
        %v2286 = vadd.f32 0.0, %v2285
        %2287 = vmatmul.bf16.gmra.mxu0 %v1727
        %v2288 = vpop.f32.mrf.mxu0
        %v2289 = vadd.f32 0.0, %v2288
        %v2290 = vpop.f32.mrf.mxu0
        %v2291 = vadd.f32 0.0, %v2290
        %2292 = vmatmul.bf16.gmra.mxu0 %v1732
        %v2293 = vpop.f32.mrf.mxu0
        %v2294 = vadd.f32 0.0, %v2293
        %v2295 = vpop.f32.mrf.mxu0
        %v2296 = vadd.f32 0.0, %v2295
        %2297 = vmatmul.bf16.gmra.mxu0 %v1737
        %v2298 = vpop.f32.mrf.mxu0
        %v2299 = vadd.f32 0.0, %v2298
        %v2300 = vpop.f32.mrf.mxu0
        %v2301 = vadd.f32 0.0, %v2300
        %2302 = vmatmul.bf16.gmra.mxu0 %v1742
        %v2303 = vpop.f32.mrf.mxu0
        %v2304 = vadd.f32 0.0, %v2303
        %v2305 = vpop.f32.mrf.mxu0
        %v2306 = vadd.f32 0.0, %v2305
        %2307 = vmatmul.bf16.gmra.mxu0 %v1747
        %v2308 = vpop.f32.mrf.mxu0
        %v2309 = vadd.f32 0.0, %v2308
        %v2310 = vpop.f32.mrf.mxu0
        %v2311 = vadd.f32 0.0, %v2310
        %2312 = vmatmul.bf16.gmra.mxu0 %v1752
        %v2313 = vpop.f32.mrf.mxu0
        %v2314 = vadd.f32 0.0, %v2313
        %v2315 = vpop.f32.mrf.mxu0
        %v2316 = vadd.f32 0.0, %v2315
        %2317 = vmatmul.bf16.gmra.mxu0 %v1757
        %v2318 = vpop.f32.mrf.mxu0
        %v2319 = vadd.f32 0.0, %v2318
        %v2320 = vpop.f32.mrf.mxu0
        %v2321 = vadd.f32 0.0, %v2320
        %2322 = vmatmul.bf16.gmra.mxu0 %v1762
        %v2323 = vpop.f32.mrf.mxu0
        %v2324 = vadd.f32 0.0, %v2323
        %v2325 = vpop.f32.mrf.mxu0
        %v2326 = vadd.f32 0.0, %v2325
        %2327 = vmatmul.bf16.gmra.mxu0 %v1767
        %v2328 = vpop.f32.mrf.mxu0
        %v2329 = vadd.f32 0.0, %v2328
        %v2330 = vpop.f32.mrf.mxu0
        %v2331 = vadd.f32 0.0, %v2330
        %2332 = vmatmul.bf16.gmra.mxu0 %v1772
        %v2333 = vpop.f32.mrf.mxu0
        %v2334 = vadd.f32 0.0, %v2333
        %v2335 = vpop.f32.mrf.mxu0
        %v2336 = vadd.f32 0.0, %v2335
        %2337 = vmatmul.bf16.gmra.mxu0 %v1777
        %v2338 = vpop.f32.mrf.mxu0
        %v2339 = vadd.f32 0.0, %v2338
        %v2340 = vpop.f32.mrf.mxu0
        %v2341 = vadd.f32 0.0, %v2340
        %2342 = vmatmul.bf16.gmra.mxu0 %v1782
        %v2343 = vpop.f32.mrf.mxu0
        %v2344 = vadd.f32 0.0, %v2343
        %v2345 = vpop.f32.mrf.mxu0
        %v2346 = vadd.f32 0.0, %v2345
        %2347 = vmatmul.bf16.gmra.mxu0 %v1787
        %v2348 = vpop.f32.mrf.mxu0
        %v2349 = vadd.f32 0.0, %v2348
        %v2350 = vpop.f32.mrf.mxu0
        %v2351 = vadd.f32 0.0, %v2350
        %2352 = vmatmul.bf16.gmra.mxu0 %v1792
        %v2353 = vpop.f32.mrf.mxu0
        %v2354 = vadd.f32 0.0, %v2353
        %v2355 = vpop.f32.mrf.mxu0
        %v2356 = vadd.f32 0.0, %v2355
        %2357 = vmatmul.bf16.gmra.mxu0 %v1797
        %v2358 = vpop.f32.mrf.mxu0
        %v2359 = vadd.f32 0.0, %v2358
        %v2360 = vpop.f32.mrf.mxu0
        %v2361 = vadd.f32 0.0, %v2360
        %2362 = vdwg.mxu0
        %2363 = vmatpush.bf16.msra.mxu0 %v2112
        %2364 = vmatpush.bf16.msra.mxu0 %v2110
        %2365 = vmatpush.bf16.msra.mxu0 %v2108
        %2366 = vmatpush.bf16.msra.mxu0 %v2106
        %2367 = vmatpush.bf16.msra.mxu0 %v2104
        %2368 = vmatpush.bf16.msra.mxu0 %v2102
        %2369 = vmatpush.bf16.msra.mxu0 %v2100
        %2370 = vmatpush.bf16.msra.mxu0 %v2098
        %2371 = vmatmul.bf16.gmra.mxu0 %v1723
        %v2372 = vpop.f32.mrf.mxu0
        %v2373 = vadd.f32 %v2284, %v2372
        %v2374 = vpop.f32.mrf.mxu0
        %v2375 = vadd.f32 %v2286, %v2374
        %2376 = vmatmul.bf16.gmra.mxu0 %v1728
        %v2377 = vpop.f32.mrf.mxu0
        %v2378 = vadd.f32 %v2289, %v2377
        %v2379 = vpop.f32.mrf.mxu0
        %v2380 = vadd.f32 %v2291, %v2379
        %2381 = vmatmul.bf16.gmra.mxu0 %v1733
        %v2382 = vpop.f32.mrf.mxu0
        %v2383 = vadd.f32 %v2294, %v2382
        %v2384 = vpop.f32.mrf.mxu0
        %v2385 = vadd.f32 %v2296, %v2384
        %2386 = vmatmul.bf16.gmra.mxu0 %v1738
        %v2387 = vpop.f32.mrf.mxu0
        %v2388 = vadd.f32 %v2299, %v2387
        %v2389 = vpop.f32.mrf.mxu0
        %v2390 = vadd.f32 %v2301, %v2389
        %2391 = vmatmul.bf16.gmra.mxu0 %v1743
        %v2392 = vpop.f32.mrf.mxu0
        %v2393 = vadd.f32 %v2304, %v2392
        %v2394 = vpop.f32.mrf.mxu0
        %v2395 = vadd.f32 %v2306, %v2394
        %2396 = vmatmul.bf16.gmra.mxu0 %v1748
        %v2397 = vpop.f32.mrf.mxu0
        %v2398 = vadd.f32 %v2309, %v2397
        %v2399 = vpop.f32.mrf.mxu0
        %v2400 = vadd.f32 %v2311, %v2399
        %2401 = vmatmul.bf16.gmra.mxu0 %v1753
        %v2402 = vpop.f32.mrf.mxu0
        %v2403 = vadd.f32 %v2314, %v2402
        %v2404 = vpop.f32.mrf.mxu0
        %v2405 = vadd.f32 %v2316, %v2404
        %2406 = vmatmul.bf16.gmra.mxu0 %v1758
        %v2407 = vpop.f32.mrf.mxu0
        %v2408 = vadd.f32 %v2319, %v2407
        %v2409 = vpop.f32.mrf.mxu0
        %v2410 = vadd.f32 %v2321, %v2409
        %2411 = vmatmul.bf16.gmra.mxu0 %v1763
        %v2412 = vpop.f32.mrf.mxu0
        %v2413 = vadd.f32 %v2324, %v2412
        %v2414 = vpop.f32.mrf.mxu0
        %v2415 = vadd.f32 %v2326, %v2414
        %2416 = vmatmul.bf16.gmra.mxu0 %v1768
        %v2417 = vpop.f32.mrf.mxu0
        %v2418 = vadd.f32 %v2329, %v2417
        %v2419 = vpop.f32.mrf.mxu0
        %v2420 = vadd.f32 %v2331, %v2419
        %2421 = vmatmul.bf16.gmra.mxu0 %v1773
        %v2422 = vpop.f32.mrf.mxu0
        %v2423 = vadd.f32 %v2334, %v2422
        %v2424 = vpop.f32.mrf.mxu0
        %v2425 = vadd.f32 %v2336, %v2424
        %2426 = vmatmul.bf16.gmra.mxu0 %v1778
        %v2427 = vpop.f32.mrf.mxu0
        %v2428 = vadd.f32 %v2339, %v2427
        %v2429 = vpop.f32.mrf.mxu0
        %v2430 = vadd.f32 %v2341, %v2429
        %2431 = vmatmul.bf16.gmra.mxu0 %v1783
        %v2432 = vpop.f32.mrf.mxu0
        %v2433 = vadd.f32 %v2344, %v2432
        %v2434 = vpop.f32.mrf.mxu0
        %v2435 = vadd.f32 %v2346, %v2434
        %2436 = vmatmul.bf16.gmra.mxu0 %v1788
        %v2437 = vpop.f32.mrf.mxu0
        %v2438 = vadd.f32 %v2349, %v2437
        %v2439 = vpop.f32.mrf.mxu0
        %v2440 = vadd.f32 %v2351, %v2439
        %2441 = vmatmul.bf16.gmra.mxu0 %v1793
        %v2442 = vpop.f32.mrf.mxu0
        %v2443 = vadd.f32 %v2354, %v2442
        %v2444 = vpop.f32.mrf.mxu0
        %v2445 = vadd.f32 %v2356, %v2444
        %2446 = vmatmul.bf16.gmra.mxu0 %v1798
        %v2447 = vpop.f32.mrf.mxu0
        %v2448 = vadd.f32 %v2359, %v2447
        %v2449 = vpop.f32.mrf.mxu0
        %v2450 = vadd.f32 %v2361, %v2449
        %2451 = vdwg.mxu0
        %2452 = vmatpush.bf16.msra.mxu0 %v2128
        %2453 = vmatpush.bf16.msra.mxu0 %v2126
        %2454 = vmatpush.bf16.msra.mxu0 %v2124
        %2455 = vmatpush.bf16.msra.mxu0 %v2122
        %2456 = vmatpush.bf16.msra.mxu0 %v2120
        %2457 = vmatpush.bf16.msra.mxu0 %v2118
        %2458 = vmatpush.bf16.msra.mxu0 %v2116
        %2459 = vmatpush.bf16.msra.mxu0 %v2114
        %2460 = vmatmul.bf16.gmra.mxu0 %v1724
        %v2461 = vpop.f32.mrf.mxu0
        %v2462 = vadd.f32 %v2373, %v2461
        %v2463 = vpop.f32.mrf.mxu0
        %v2464 = vadd.f32 %v2375, %v2463
        %2465 = vmatmul.bf16.gmra.mxu0 %v1729
        %v2466 = vpop.f32.mrf.mxu0
        %v2467 = vadd.f32 %v2378, %v2466
        %v2468 = vpop.f32.mrf.mxu0
        %v2469 = vadd.f32 %v2380, %v2468
        %2470 = vmatmul.bf16.gmra.mxu0 %v1734
        %v2471 = vpop.f32.mrf.mxu0
        %v2472 = vadd.f32 %v2383, %v2471
        %v2473 = vpop.f32.mrf.mxu0
        %v2474 = vadd.f32 %v2385, %v2473
        %2475 = vmatmul.bf16.gmra.mxu0 %v1739
        %v2476 = vpop.f32.mrf.mxu0
        %v2477 = vadd.f32 %v2388, %v2476
        %v2478 = vpop.f32.mrf.mxu0
        %v2479 = vadd.f32 %v2390, %v2478
        %2480 = vmatmul.bf16.gmra.mxu0 %v1744
        %v2481 = vpop.f32.mrf.mxu0
        %v2482 = vadd.f32 %v2393, %v2481
        %v2483 = vpop.f32.mrf.mxu0
        %v2484 = vadd.f32 %v2395, %v2483
        %2485 = vmatmul.bf16.gmra.mxu0 %v1749
        %v2486 = vpop.f32.mrf.mxu0
        %v2487 = vadd.f32 %v2398, %v2486
        %v2488 = vpop.f32.mrf.mxu0
        %v2489 = vadd.f32 %v2400, %v2488
        %2490 = vmatmul.bf16.gmra.mxu0 %v1754
        %v2491 = vpop.f32.mrf.mxu0
        %v2492 = vadd.f32 %v2403, %v2491
        %v2493 = vpop.f32.mrf.mxu0
        %v2494 = vadd.f32 %v2405, %v2493
        %2495 = vmatmul.bf16.gmra.mxu0 %v1759
        %v2496 = vpop.f32.mrf.mxu0
        %v2497 = vadd.f32 %v2408, %v2496
        %v2498 = vpop.f32.mrf.mxu0
        %v2499 = vadd.f32 %v2410, %v2498
        %2500 = vmatmul.bf16.gmra.mxu0 %v1764
        %v2501 = vpop.f32.mrf.mxu0
        %v2502 = vadd.f32 %v2413, %v2501
        %v2503 = vpop.f32.mrf.mxu0
        %v2504 = vadd.f32 %v2415, %v2503
        %2505 = vmatmul.bf16.gmra.mxu0 %v1769
        %v2506 = vpop.f32.mrf.mxu0
        %v2507 = vadd.f32 %v2418, %v2506
        %v2508 = vpop.f32.mrf.mxu0
        %v2509 = vadd.f32 %v2420, %v2508
        %2510 = vmatmul.bf16.gmra.mxu0 %v1774
        %v2511 = vpop.f32.mrf.mxu0
        %v2512 = vadd.f32 %v2423, %v2511
        %v2513 = vpop.f32.mrf.mxu0
        %v2514 = vadd.f32 %v2425, %v2513
        %2515 = vmatmul.bf16.gmra.mxu0 %v1779
        %v2516 = vpop.f32.mrf.mxu0
        %v2517 = vadd.f32 %v2428, %v2516
        %v2518 = vpop.f32.mrf.mxu0
        %v2519 = vadd.f32 %v2430, %v2518
        %2520 = vmatmul.bf16.gmra.mxu0 %v1784
        %v2521 = vpop.f32.mrf.mxu0
        %v2522 = vadd.f32 %v2433, %v2521
        %v2523 = vpop.f32.mrf.mxu0
        %v2524 = vadd.f32 %v2435, %v2523
        %2525 = vmatmul.bf16.gmra.mxu0 %v1789
        %v2526 = vpop.f32.mrf.mxu0
        %v2527 = vadd.f32 %v2438, %v2526
        %v2528 = vpop.f32.mrf.mxu0
        %v2529 = vadd.f32 %v2440, %v2528
        %2530 = vmatmul.bf16.gmra.mxu0 %v1794
        %v2531 = vpop.f32.mrf.mxu0
        %v2532 = vadd.f32 %v2443, %v2531
        %v2533 = vpop.f32.mrf.mxu0
        %v2534 = vadd.f32 %v2445, %v2533
        %2535 = vmatmul.bf16.gmra.mxu0 %v1799
        %v2536 = vpop.f32.mrf.mxu0
        %v2537 = vadd.f32 %v2448, %v2536
        %v2538 = vpop.f32.mrf.mxu0
        %v2539 = vadd.f32 %v2450, %v2538
        %2540 = vdwg.mxu0
        %2541 = vmatpush.bf16.msra.mxu0 %v2144
        %2542 = vmatpush.bf16.msra.mxu0 %v2142
        %2543 = vmatpush.bf16.msra.mxu0 %v2140
        %2544 = vmatpush.bf16.msra.mxu0 %v2138
        %2545 = vmatpush.bf16.msra.mxu0 %v2136
        %2546 = vmatpush.bf16.msra.mxu0 %v2134
        %2547 = vmatpush.bf16.msra.mxu0 %v2132
        %2548 = vmatpush.bf16.msra.mxu0 %v2130
        %2549 = vmatmul.bf16.gmra.mxu0 %v1725
        %v2550 = vpop.f32.mrf.mxu0
        %v2551 = vadd.f32 %v2462, %v2550
        %v2552 = vpop.f32.mrf.mxu0
        %v2553 = vadd.f32 %v2464, %v2552
        %2554 = vmatmul.bf16.gmra.mxu0 %v1730
        %v2555 = vpop.f32.mrf.mxu0
        %v2556 = vadd.f32 %v2467, %v2555
        %v2557 = vpop.f32.mrf.mxu0
        %v2558 = vadd.f32 %v2469, %v2557
        %2559 = vmatmul.bf16.gmra.mxu0 %v1735
        %v2560 = vpop.f32.mrf.mxu0
        %v2561 = vadd.f32 %v2472, %v2560
        %v2562 = vpop.f32.mrf.mxu0
        %v2563 = vadd.f32 %v2474, %v2562
        %2564 = vmatmul.bf16.gmra.mxu0 %v1740
        %v2565 = vpop.f32.mrf.mxu0
        %v2566 = vadd.f32 %v2477, %v2565
        %v2567 = vpop.f32.mrf.mxu0
        %v2568 = vadd.f32 %v2479, %v2567
        %2569 = vmatmul.bf16.gmra.mxu0 %v1745
        %v2570 = vpop.f32.mrf.mxu0
        %v2571 = vadd.f32 %v2482, %v2570
        %v2572 = vpop.f32.mrf.mxu0
        %v2573 = vadd.f32 %v2484, %v2572
        %2574 = vmatmul.bf16.gmra.mxu0 %v1750
        %v2575 = vpop.f32.mrf.mxu0
        %v2576 = vadd.f32 %v2487, %v2575
        %v2577 = vpop.f32.mrf.mxu0
        %v2578 = vadd.f32 %v2489, %v2577
        %2579 = vmatmul.bf16.gmra.mxu0 %v1755
        %v2580 = vpop.f32.mrf.mxu0
        %v2581 = vadd.f32 %v2492, %v2580
        %v2582 = vpop.f32.mrf.mxu0
        %v2583 = vadd.f32 %v2494, %v2582
        %2584 = vmatmul.bf16.gmra.mxu0 %v1760
        %v2585 = vpop.f32.mrf.mxu0
        %v2586 = vadd.f32 %v2497, %v2585
        %v2587 = vpop.f32.mrf.mxu0
        %v2588 = vadd.f32 %v2499, %v2587
        %2589 = vmatmul.bf16.gmra.mxu0 %v1765
        %v2590 = vpop.f32.mrf.mxu0
        %v2591 = vadd.f32 %v2502, %v2590
        %v2592 = vpop.f32.mrf.mxu0
        %v2593 = vadd.f32 %v2504, %v2592
        %2594 = vmatmul.bf16.gmra.mxu0 %v1770
        %v2595 = vpop.f32.mrf.mxu0
        %v2596 = vadd.f32 %v2507, %v2595
        %v2597 = vpop.f32.mrf.mxu0
        %v2598 = vadd.f32 %v2509, %v2597
        %2599 = vmatmul.bf16.gmra.mxu0 %v1775
        %v2600 = vpop.f32.mrf.mxu0
        %v2601 = vadd.f32 %v2512, %v2600
        %v2602 = vpop.f32.mrf.mxu0
        %v2603 = vadd.f32 %v2514, %v2602
        %2604 = vmatmul.bf16.gmra.mxu0 %v1780
        %v2605 = vpop.f32.mrf.mxu0
        %v2606 = vadd.f32 %v2517, %v2605
        %v2607 = vpop.f32.mrf.mxu0
        %v2608 = vadd.f32 %v2519, %v2607
        %2609 = vmatmul.bf16.gmra.mxu0 %v1785
        %v2610 = vpop.f32.mrf.mxu0
        %v2611 = vadd.f32 %v2522, %v2610
        %v2612 = vpop.f32.mrf.mxu0
        %v2613 = vadd.f32 %v2524, %v2612
        %2614 = vmatmul.bf16.gmra.mxu0 %v1790
        %v2615 = vpop.f32.mrf.mxu0
        %v2616 = vadd.f32 %v2527, %v2615
        %v2617 = vpop.f32.mrf.mxu0
        %v2618 = vadd.f32 %v2529, %v2617
        %2619 = vmatmul.bf16.gmra.mxu0 %v1795
        %v2620 = vpop.f32.mrf.mxu0
        %v2621 = vadd.f32 %v2532, %v2620
        %v2622 = vpop.f32.mrf.mxu0
        %v2623 = vadd.f32 %v2534, %v2622
        %2624 = vmatmul.bf16.gmra.mxu0 %v1800
        %v2625 = vpop.f32.mrf.mxu0
        %v2626 = vadd.f32 %v2537, %v2625
        %v2627 = vpop.f32.mrf.mxu0
        %v2628 = vadd.f32 %v2539, %v2627
        %2629 = vdwg.mxu0
        %2630 = vmatpush.bf16.msra.mxu0 0
        %2631 = vmatpush.bf16.msra.mxu0 0
        %2632 = vmatpush.bf16.msra.mxu0 0
        %2633 = vmatpush.bf16.msra.mxu0 0
        %2634 = vmatpush.bf16.msra.mxu0 %v2152
        %2635 = vmatpush.bf16.msra.mxu0 %v2150
        %2636 = vmatpush.bf16.msra.mxu0 %v2148
        %2637 = vmatpush.bf16.msra.mxu0 %v2146
        %2638 = vmatmul.bf16.gmra.mxu0 %v2227
        %v2639 = vpop.f32.mrf.mxu0
        %v2640 = vadd.f32 %v2551, %v2639
        %v2641 = vpop.f32.mrf.mxu0
        %v2642 = vadd.f32 %v2553, %v2641
        %2643 = vmatmul.bf16.gmra.mxu0 %v2230
        %v2644 = vpop.f32.mrf.mxu0
        %v2645 = vadd.f32 %v2556, %v2644
        %v2646 = vpop.f32.mrf.mxu0
        %v2647 = vadd.f32 %v2558, %v2646
        %2648 = vmatmul.bf16.gmra.mxu0 %v2233
        %v2649 = vpop.f32.mrf.mxu0
        %v2650 = vadd.f32 %v2561, %v2649
        %v2651 = vpop.f32.mrf.mxu0
        %v2652 = vadd.f32 %v2563, %v2651
        %2653 = vmatmul.bf16.gmra.mxu0 %v2236
        %v2654 = vpop.f32.mrf.mxu0
        %v2655 = vadd.f32 %v2566, %v2654
        %v2656 = vpop.f32.mrf.mxu0
        %v2657 = vadd.f32 %v2568, %v2656
        %2658 = vmatmul.bf16.gmra.mxu0 %v2239
        %v2659 = vpop.f32.mrf.mxu0
        %v2660 = vadd.f32 %v2571, %v2659
        %v2661 = vpop.f32.mrf.mxu0
        %v2662 = vadd.f32 %v2573, %v2661
        %2663 = vmatmul.bf16.gmra.mxu0 %v2242
        %v2664 = vpop.f32.mrf.mxu0
        %v2665 = vadd.f32 %v2576, %v2664
        %v2666 = vpop.f32.mrf.mxu0
        %v2667 = vadd.f32 %v2578, %v2666
        %2668 = vmatmul.bf16.gmra.mxu0 %v2245
        %v2669 = vpop.f32.mrf.mxu0
        %v2670 = vadd.f32 %v2581, %v2669
        %v2671 = vpop.f32.mrf.mxu0
        %v2672 = vadd.f32 %v2583, %v2671
        %2673 = vmatmul.bf16.gmra.mxu0 %v2248
        %v2674 = vpop.f32.mrf.mxu0
        %v2675 = vadd.f32 %v2586, %v2674
        %v2676 = vpop.f32.mrf.mxu0
        %v2677 = vadd.f32 %v2588, %v2676
        %2678 = vmatmul.bf16.gmra.mxu0 %v2251
        %v2679 = vpop.f32.mrf.mxu0
        %v2680 = vadd.f32 %v2591, %v2679
        %v2681 = vpop.f32.mrf.mxu0
        %v2682 = vadd.f32 %v2593, %v2681
        %2683 = vmatmul.bf16.gmra.mxu0 %v2254
        %v2684 = vpop.f32.mrf.mxu0
        %v2685 = vadd.f32 %v2596, %v2684
        %v2686 = vpop.f32.mrf.mxu0
        %v2687 = vadd.f32 %v2598, %v2686
        %2688 = vmatmul.bf16.gmra.mxu0 %v2257
        %v2689 = vpop.f32.mrf.mxu0
        %v2690 = vadd.f32 %v2601, %v2689
        %v2691 = vpop.f32.mrf.mxu0
        %v2692 = vadd.f32 %v2603, %v2691
        %2693 = vmatmul.bf16.gmra.mxu0 %v2260
        %v2694 = vpop.f32.mrf.mxu0
        %v2695 = vadd.f32 %v2606, %v2694
        %v2696 = vpop.f32.mrf.mxu0
        %v2697 = vadd.f32 %v2608, %v2696
        %2698 = vmatmul.bf16.gmra.mxu0 %v2263
        %v2699 = vpop.f32.mrf.mxu0
        %v2700 = vadd.f32 %v2611, %v2699
        %v2701 = vpop.f32.mrf.mxu0
        %v2702 = vadd.f32 %v2613, %v2701
        %2703 = vmatmul.bf16.gmra.mxu0 %v2266
        %v2704 = vpop.f32.mrf.mxu0
        %v2705 = vadd.f32 %v2616, %v2704
        %v2706 = vpop.f32.mrf.mxu0
        %v2707 = vadd.f32 %v2618, %v2706
        %2708 = vmatmul.bf16.gmra.mxu0 %v2269
        %v2709 = vpop.f32.mrf.mxu0
        %v2710 = vadd.f32 %v2621, %v2709
        %v2711 = vpop.f32.mrf.mxu0
        %v2712 = vadd.f32 %v2623, %v2711
        %2713 = vmatmul.bf16.gmra.mxu0 %v2272
        %v2714 = vpop.f32.mrf.mxu0
        %v2715 = vadd.f32 %v2626, %v2714
        %v2716 = vpop.f32.mrf.mxu0
        %v2717 = vadd.f32 %v2628, %v2716
        %2718 = vdwg.mxu0
        %2719 = vmatpush.bf16.msra.mxu0 %v2097
        %2720 = vmatpush.bf16.msra.mxu0 %v2095
        %2721 = vmatpush.bf16.msra.mxu0 %v2093
        %2722 = vmatpush.bf16.msra.mxu0 %v2091
        %2723 = vmatpush.bf16.msra.mxu0 %v2089
        %2724 = vmatpush.bf16.msra.mxu0 %v2087
        %2725 = vmatpush.bf16.msra.mxu0 %v2085
        %2726 = vmatpush.bf16.msra.mxu0 %v2083
        %2727 = vmatmul.bf16.gmra.mxu0 %v1722
        %v2728 = vpop.f32.mrf.mxu0
        %v2729 = vadd.f32 0.0, %v2728
        %v2730 = vpop.f32.mrf.mxu0
        %v2731 = vadd.f32 0.0, %v2730
        %2732 = vmatmul.bf16.gmra.mxu0 %v1727
        %v2733 = vpop.f32.mrf.mxu0
        %v2734 = vadd.f32 0.0, %v2733
        %v2735 = vpop.f32.mrf.mxu0
        %v2736 = vadd.f32 0.0, %v2735
        %2737 = vmatmul.bf16.gmra.mxu0 %v1732
        %v2738 = vpop.f32.mrf.mxu0
        %v2739 = vadd.f32 0.0, %v2738
        %v2740 = vpop.f32.mrf.mxu0
        %v2741 = vadd.f32 0.0, %v2740
        %2742 = vmatmul.bf16.gmra.mxu0 %v1737
        %v2743 = vpop.f32.mrf.mxu0
        %v2744 = vadd.f32 0.0, %v2743
        %v2745 = vpop.f32.mrf.mxu0
        %v2746 = vadd.f32 0.0, %v2745
        %2747 = vmatmul.bf16.gmra.mxu0 %v1742
        %v2748 = vpop.f32.mrf.mxu0
        %v2749 = vadd.f32 0.0, %v2748
        %v2750 = vpop.f32.mrf.mxu0
        %v2751 = vadd.f32 0.0, %v2750
        %2752 = vmatmul.bf16.gmra.mxu0 %v1747
        %v2753 = vpop.f32.mrf.mxu0
        %v2754 = vadd.f32 0.0, %v2753
        %v2755 = vpop.f32.mrf.mxu0
        %v2756 = vadd.f32 0.0, %v2755
        %2757 = vmatmul.bf16.gmra.mxu0 %v1752
        %v2758 = vpop.f32.mrf.mxu0
        %v2759 = vadd.f32 0.0, %v2758
        %v2760 = vpop.f32.mrf.mxu0
        %v2761 = vadd.f32 0.0, %v2760
        %2762 = vmatmul.bf16.gmra.mxu0 %v1757
        %v2763 = vpop.f32.mrf.mxu0
        %v2764 = vadd.f32 0.0, %v2763
        %v2765 = vpop.f32.mrf.mxu0
        %v2766 = vadd.f32 0.0, %v2765
        %2767 = vmatmul.bf16.gmra.mxu0 %v1762
        %v2768 = vpop.f32.mrf.mxu0
        %v2769 = vadd.f32 0.0, %v2768
        %v2770 = vpop.f32.mrf.mxu0
        %v2771 = vadd.f32 0.0, %v2770
        %2772 = vmatmul.bf16.gmra.mxu0 %v1767
        %v2773 = vpop.f32.mrf.mxu0
        %v2774 = vadd.f32 0.0, %v2773
        %v2775 = vpop.f32.mrf.mxu0
        %v2776 = vadd.f32 0.0, %v2775
        %2777 = vmatmul.bf16.gmra.mxu0 %v1772
        %v2778 = vpop.f32.mrf.mxu0
        %v2779 = vadd.f32 0.0, %v2778
        %v2780 = vpop.f32.mrf.mxu0
        %v2781 = vadd.f32 0.0, %v2780
        %2782 = vmatmul.bf16.gmra.mxu0 %v1777
        %v2783 = vpop.f32.mrf.mxu0
        %v2784 = vadd.f32 0.0, %v2783
        %v2785 = vpop.f32.mrf.mxu0
        %v2786 = vadd.f32 0.0, %v2785
        %2787 = vmatmul.bf16.gmra.mxu0 %v1782
        %v2788 = vpop.f32.mrf.mxu0
        %v2789 = vadd.f32 0.0, %v2788
        %v2790 = vpop.f32.mrf.mxu0
        %v2791 = vadd.f32 0.0, %v2790
        %2792 = vmatmul.bf16.gmra.mxu0 %v1787
        %v2793 = vpop.f32.mrf.mxu0
        %v2794 = vadd.f32 0.0, %v2793
        %v2795 = vpop.f32.mrf.mxu0
        %v2796 = vadd.f32 0.0, %v2795
        %2797 = vmatmul.bf16.gmra.mxu0 %v1792
        %v2798 = vpop.f32.mrf.mxu0
        %v2799 = vadd.f32 0.0, %v2798
        %v2800 = vpop.f32.mrf.mxu0
        %v2801 = vadd.f32 0.0, %v2800
        %2802 = vmatmul.bf16.gmra.mxu0 %v1797
        %v2803 = vpop.f32.mrf.mxu0
        %v2804 = vadd.f32 0.0, %v2803
        %v2805 = vpop.f32.mrf.mxu0
        %v2806 = vadd.f32 0.0, %v2805
        %2807 = vdwg.mxu0
        %2808 = vmatpush.bf16.msra.mxu0 %v2113
        %2809 = vmatpush.bf16.msra.mxu0 %v2111
        %2810 = vmatpush.bf16.msra.mxu0 %v2109
        %2811 = vmatpush.bf16.msra.mxu0 %v2107
        %2812 = vmatpush.bf16.msra.mxu0 %v2105
        %2813 = vmatpush.bf16.msra.mxu0 %v2103
        %2814 = vmatpush.bf16.msra.mxu0 %v2101
        %2815 = vmatpush.bf16.msra.mxu0 %v2099
        %2816 = vmatmul.bf16.gmra.mxu0 %v1723
        %v2817 = vpop.f32.mrf.mxu0
        %v2818 = vadd.f32 %v2729, %v2817
        %v2819 = vpop.f32.mrf.mxu0
        %v2820 = vadd.f32 %v2731, %v2819
        %2821 = vmatmul.bf16.gmra.mxu0 %v1728
        %v2822 = vpop.f32.mrf.mxu0
        %v2823 = vadd.f32 %v2734, %v2822
        %v2824 = vpop.f32.mrf.mxu0
        %v2825 = vadd.f32 %v2736, %v2824
        %2826 = vmatmul.bf16.gmra.mxu0 %v1733
        %v2827 = vpop.f32.mrf.mxu0
        %v2828 = vadd.f32 %v2739, %v2827
        %v2829 = vpop.f32.mrf.mxu0
        %v2830 = vadd.f32 %v2741, %v2829
        %2831 = vmatmul.bf16.gmra.mxu0 %v1738
        %v2832 = vpop.f32.mrf.mxu0
        %v2833 = vadd.f32 %v2744, %v2832
        %v2834 = vpop.f32.mrf.mxu0
        %v2835 = vadd.f32 %v2746, %v2834
        %2836 = vmatmul.bf16.gmra.mxu0 %v1743
        %v2837 = vpop.f32.mrf.mxu0
        %v2838 = vadd.f32 %v2749, %v2837
        %v2839 = vpop.f32.mrf.mxu0
        %v2840 = vadd.f32 %v2751, %v2839
        %2841 = vmatmul.bf16.gmra.mxu0 %v1748
        %v2842 = vpop.f32.mrf.mxu0
        %v2843 = vadd.f32 %v2754, %v2842
        %v2844 = vpop.f32.mrf.mxu0
        %v2845 = vadd.f32 %v2756, %v2844
        %2846 = vmatmul.bf16.gmra.mxu0 %v1753
        %v2847 = vpop.f32.mrf.mxu0
        %v2848 = vadd.f32 %v2759, %v2847
        %v2849 = vpop.f32.mrf.mxu0
        %v2850 = vadd.f32 %v2761, %v2849
        %2851 = vmatmul.bf16.gmra.mxu0 %v1758
        %v2852 = vpop.f32.mrf.mxu0
        %v2853 = vadd.f32 %v2764, %v2852
        %v2854 = vpop.f32.mrf.mxu0
        %v2855 = vadd.f32 %v2766, %v2854
        %2856 = vmatmul.bf16.gmra.mxu0 %v1763
        %v2857 = vpop.f32.mrf.mxu0
        %v2858 = vadd.f32 %v2769, %v2857
        %v2859 = vpop.f32.mrf.mxu0
        %v2860 = vadd.f32 %v2771, %v2859
        %2861 = vmatmul.bf16.gmra.mxu0 %v1768
        %v2862 = vpop.f32.mrf.mxu0
        %v2863 = vadd.f32 %v2774, %v2862
        %v2864 = vpop.f32.mrf.mxu0
        %v2865 = vadd.f32 %v2776, %v2864
        %2866 = vmatmul.bf16.gmra.mxu0 %v1773
        %v2867 = vpop.f32.mrf.mxu0
        %v2868 = vadd.f32 %v2779, %v2867
        %v2869 = vpop.f32.mrf.mxu0
        %v2870 = vadd.f32 %v2781, %v2869
        %2871 = vmatmul.bf16.gmra.mxu0 %v1778
        %v2872 = vpop.f32.mrf.mxu0
        %v2873 = vadd.f32 %v2784, %v2872
        %v2874 = vpop.f32.mrf.mxu0
        %v2875 = vadd.f32 %v2786, %v2874
        %2876 = vmatmul.bf16.gmra.mxu0 %v1783
        %v2877 = vpop.f32.mrf.mxu0
        %v2878 = vadd.f32 %v2789, %v2877
        %v2879 = vpop.f32.mrf.mxu0
        %v2880 = vadd.f32 %v2791, %v2879
        %2881 = vmatmul.bf16.gmra.mxu0 %v1788
        %v2882 = vpop.f32.mrf.mxu0
        %v2883 = vadd.f32 %v2794, %v2882
        %v2884 = vpop.f32.mrf.mxu0
        %v2885 = vadd.f32 %v2796, %v2884
        %2886 = vmatmul.bf16.gmra.mxu0 %v1793
        %v2887 = vpop.f32.mrf.mxu0
        %v2888 = vadd.f32 %v2799, %v2887
        %v2889 = vpop.f32.mrf.mxu0
        %v2890 = vadd.f32 %v2801, %v2889
        %2891 = vmatmul.bf16.gmra.mxu0 %v1798
        %v2892 = vpop.f32.mrf.mxu0
        %v2893 = vadd.f32 %v2804, %v2892
        %v2894 = vpop.f32.mrf.mxu0
        %v2895 = vadd.f32 %v2806, %v2894
        %2896 = vdwg.mxu0
        %2897 = vmatpush.bf16.msra.mxu0 %v2129
        %2898 = vmatpush.bf16.msra.mxu0 %v2127
        %2899 = vmatpush.bf16.msra.mxu0 %v2125
        %2900 = vmatpush.bf16.msra.mxu0 %v2123
        %2901 = vmatpush.bf16.msra.mxu0 %v2121
        %2902 = vmatpush.bf16.msra.mxu0 %v2119
        %2903 = vmatpush.bf16.msra.mxu0 %v2117
        %2904 = vmatpush.bf16.msra.mxu0 %v2115
        %2905 = vmatmul.bf16.gmra.mxu0 %v1724
        %v2906 = vpop.f32.mrf.mxu0
        %v2907 = vadd.f32 %v2818, %v2906
        %v2908 = vpop.f32.mrf.mxu0
        %v2909 = vadd.f32 %v2820, %v2908
        %2910 = vmatmul.bf16.gmra.mxu0 %v1729
        %v2911 = vpop.f32.mrf.mxu0
        %v2912 = vadd.f32 %v2823, %v2911
        %v2913 = vpop.f32.mrf.mxu0
        %v2914 = vadd.f32 %v2825, %v2913
        %2915 = vmatmul.bf16.gmra.mxu0 %v1734
        %v2916 = vpop.f32.mrf.mxu0
        %v2917 = vadd.f32 %v2828, %v2916
        %v2918 = vpop.f32.mrf.mxu0
        %v2919 = vadd.f32 %v2830, %v2918
        %2920 = vmatmul.bf16.gmra.mxu0 %v1739
        %v2921 = vpop.f32.mrf.mxu0
        %v2922 = vadd.f32 %v2833, %v2921
        %v2923 = vpop.f32.mrf.mxu0
        %v2924 = vadd.f32 %v2835, %v2923
        %2925 = vmatmul.bf16.gmra.mxu0 %v1744
        %v2926 = vpop.f32.mrf.mxu0
        %v2927 = vadd.f32 %v2838, %v2926
        %v2928 = vpop.f32.mrf.mxu0
        %v2929 = vadd.f32 %v2840, %v2928
        %2930 = vmatmul.bf16.gmra.mxu0 %v1749
        %v2931 = vpop.f32.mrf.mxu0
        %v2932 = vadd.f32 %v2843, %v2931
        %v2933 = vpop.f32.mrf.mxu0
        %v2934 = vadd.f32 %v2845, %v2933
        %2935 = vmatmul.bf16.gmra.mxu0 %v1754
        %v2936 = vpop.f32.mrf.mxu0
        %v2937 = vadd.f32 %v2848, %v2936
        %v2938 = vpop.f32.mrf.mxu0
        %v2939 = vadd.f32 %v2850, %v2938
        %2940 = vmatmul.bf16.gmra.mxu0 %v1759
        %v2941 = vpop.f32.mrf.mxu0
        %v2942 = vadd.f32 %v2853, %v2941
        %v2943 = vpop.f32.mrf.mxu0
        %v2944 = vadd.f32 %v2855, %v2943
        %2945 = vmatmul.bf16.gmra.mxu0 %v1764
        %v2946 = vpop.f32.mrf.mxu0
        %v2947 = vadd.f32 %v2858, %v2946
        %v2948 = vpop.f32.mrf.mxu0
        %v2949 = vadd.f32 %v2860, %v2948
        %2950 = vmatmul.bf16.gmra.mxu0 %v1769
        %v2951 = vpop.f32.mrf.mxu0
        %v2952 = vadd.f32 %v2863, %v2951
        %v2953 = vpop.f32.mrf.mxu0
        %v2954 = vadd.f32 %v2865, %v2953
        %2955 = vmatmul.bf16.gmra.mxu0 %v1774
        %v2956 = vpop.f32.mrf.mxu0
        %v2957 = vadd.f32 %v2868, %v2956
        %v2958 = vpop.f32.mrf.mxu0
        %v2959 = vadd.f32 %v2870, %v2958
        %2960 = vmatmul.bf16.gmra.mxu0 %v1779
        %v2961 = vpop.f32.mrf.mxu0
        %v2962 = vadd.f32 %v2873, %v2961
        %v2963 = vpop.f32.mrf.mxu0
        %v2964 = vadd.f32 %v2875, %v2963
        %2965 = vmatmul.bf16.gmra.mxu0 %v1784
        %v2966 = vpop.f32.mrf.mxu0
        %v2967 = vadd.f32 %v2878, %v2966
        %v2968 = vpop.f32.mrf.mxu0
        %v2969 = vadd.f32 %v2880, %v2968
        %2970 = vmatmul.bf16.gmra.mxu0 %v1789
        %v2971 = vpop.f32.mrf.mxu0
        %v2972 = vadd.f32 %v2883, %v2971
        %v2973 = vpop.f32.mrf.mxu0
        %v2974 = vadd.f32 %v2885, %v2973
        %2975 = vmatmul.bf16.gmra.mxu0 %v1794
        %v2976 = vpop.f32.mrf.mxu0
        %v2977 = vadd.f32 %v2888, %v2976
        %v2978 = vpop.f32.mrf.mxu0
        %v2979 = vadd.f32 %v2890, %v2978
        %2980 = vmatmul.bf16.gmra.mxu0 %v1799
        %v2981 = vpop.f32.mrf.mxu0
        %v2982 = vadd.f32 %v2893, %v2981
        %v2983 = vpop.f32.mrf.mxu0
        %v2984 = vadd.f32 %v2895, %v2983
        %2985 = vdwg.mxu0
        %2986 = vmatpush.bf16.msra.mxu0 %v2145
        %2987 = vmatpush.bf16.msra.mxu0 %v2143
        %2988 = vmatpush.bf16.msra.mxu0 %v2141
        %2989 = vmatpush.bf16.msra.mxu0 %v2139
        %2990 = vmatpush.bf16.msra.mxu0 %v2137
        %2991 = vmatpush.bf16.msra.mxu0 %v2135
        %2992 = vmatpush.bf16.msra.mxu0 %v2133
        %2993 = vmatpush.bf16.msra.mxu0 %v2131
        %2994 = vmatmul.bf16.gmra.mxu0 %v1725
        %v2995 = vpop.f32.mrf.mxu0
        %v2996 = vadd.f32 %v2907, %v2995
        %v2997 = vpop.f32.mrf.mxu0
        %v2998 = vadd.f32 %v2909, %v2997
        %2999 = vmatmul.bf16.gmra.mxu0 %v1730
        %v3000 = vpop.f32.mrf.mxu0
        %v3001 = vadd.f32 %v2912, %v3000
        %v3002 = vpop.f32.mrf.mxu0
        %v3003 = vadd.f32 %v2914, %v3002
        %3004 = vmatmul.bf16.gmra.mxu0 %v1735
        %v3005 = vpop.f32.mrf.mxu0
        %v3006 = vadd.f32 %v2917, %v3005
        %v3007 = vpop.f32.mrf.mxu0
        %v3008 = vadd.f32 %v2919, %v3007
        %3009 = vmatmul.bf16.gmra.mxu0 %v1740
        %v3010 = vpop.f32.mrf.mxu0
        %v3011 = vadd.f32 %v2922, %v3010
        %v3012 = vpop.f32.mrf.mxu0
        %v3013 = vadd.f32 %v2924, %v3012
        %3014 = vmatmul.bf16.gmra.mxu0 %v1745
        %v3015 = vpop.f32.mrf.mxu0
        %v3016 = vadd.f32 %v2927, %v3015
        %v3017 = vpop.f32.mrf.mxu0
        %v3018 = vadd.f32 %v2929, %v3017
        %3019 = vmatmul.bf16.gmra.mxu0 %v1750
        %v3020 = vpop.f32.mrf.mxu0
        %v3021 = vadd.f32 %v2932, %v3020
        %v3022 = vpop.f32.mrf.mxu0
        %v3023 = vadd.f32 %v2934, %v3022
        %3024 = vmatmul.bf16.gmra.mxu0 %v1755
        %v3025 = vpop.f32.mrf.mxu0
        %v3026 = vadd.f32 %v2937, %v3025
        %v3027 = vpop.f32.mrf.mxu0
        %v3028 = vadd.f32 %v2939, %v3027
        %3029 = vmatmul.bf16.gmra.mxu0 %v1760
        %v3030 = vpop.f32.mrf.mxu0
        %v3031 = vadd.f32 %v2942, %v3030
        %v3032 = vpop.f32.mrf.mxu0
        %v3033 = vadd.f32 %v2944, %v3032
        %3034 = vmatmul.bf16.gmra.mxu0 %v1765
        %v3035 = vpop.f32.mrf.mxu0
        %v3036 = vadd.f32 %v2947, %v3035
        %v3037 = vpop.f32.mrf.mxu0
        %v3038 = vadd.f32 %v2949, %v3037
        %3039 = vmatmul.bf16.gmra.mxu0 %v1770
        %v3040 = vpop.f32.mrf.mxu0
        %v3041 = vadd.f32 %v2952, %v3040
        %v3042 = vpop.f32.mrf.mxu0
        %v3043 = vadd.f32 %v2954, %v3042
        %3044 = vmatmul.bf16.gmra.mxu0 %v1775
        %v3045 = vpop.f32.mrf.mxu0
        %v3046 = vadd.f32 %v2957, %v3045
        %v3047 = vpop.f32.mrf.mxu0
        %v3048 = vadd.f32 %v2959, %v3047
        %3049 = vmatmul.bf16.gmra.mxu0 %v1780
        %v3050 = vpop.f32.mrf.mxu0
        %v3051 = vadd.f32 %v2962, %v3050
        %v3052 = vpop.f32.mrf.mxu0
        %v3053 = vadd.f32 %v2964, %v3052
        %3054 = vmatmul.bf16.gmra.mxu0 %v1785
        %v3055 = vpop.f32.mrf.mxu0
        %v3056 = vadd.f32 %v2967, %v3055
        %v3057 = vpop.f32.mrf.mxu0
        %v3058 = vadd.f32 %v2969, %v3057
        %3059 = vmatmul.bf16.gmra.mxu0 %v1790
        %v3060 = vpop.f32.mrf.mxu0
        %v3061 = vadd.f32 %v2972, %v3060
        %v3062 = vpop.f32.mrf.mxu0
        %v3063 = vadd.f32 %v2974, %v3062
        %3064 = vmatmul.bf16.gmra.mxu0 %v1795
        %v3065 = vpop.f32.mrf.mxu0
        %v3066 = vadd.f32 %v2977, %v3065
        %v3067 = vpop.f32.mrf.mxu0
        %v3068 = vadd.f32 %v2979, %v3067
        %3069 = vmatmul.bf16.gmra.mxu0 %v1800
        %v3070 = vpop.f32.mrf.mxu0
        %v3071 = vadd.f32 %v2982, %v3070
        %v3072 = vpop.f32.mrf.mxu0
        %v3073 = vadd.f32 %v2984, %v3072
        %3074 = vdwg.mxu0
        %3075 = vmatpush.bf16.msra.mxu0 0
        %3076 = vmatpush.bf16.msra.mxu0 0
        %3077 = vmatpush.bf16.msra.mxu0 0
        %3078 = vmatpush.bf16.msra.mxu0 0
        %3079 = vmatpush.bf16.msra.mxu0 %v2153
        %3080 = vmatpush.bf16.msra.mxu0 %v2151
        %3081 = vmatpush.bf16.msra.mxu0 %v2149
        %3082 = vmatpush.bf16.msra.mxu0 %v2147
        %3083 = vmatmul.bf16.gmra.mxu0 %v2227
        %v3084 = vpop.f32.mrf.mxu0
        %v3085 = vadd.f32 %v2996, %v3084
        %v3086 = vpop.f32.mrf.mxu0
        %v3087 = vadd.f32 %v2998, %v3086
        %3088 = vmatmul.bf16.gmra.mxu0 %v2230
        %v3089 = vpop.f32.mrf.mxu0
        %v3090 = vadd.f32 %v3001, %v3089
        %v3091 = vpop.f32.mrf.mxu0
        %v3092 = vadd.f32 %v3003, %v3091
        %3093 = vmatmul.bf16.gmra.mxu0 %v2233
        %v3094 = vpop.f32.mrf.mxu0
        %v3095 = vadd.f32 %v3006, %v3094
        %v3096 = vpop.f32.mrf.mxu0
        %v3097 = vadd.f32 %v3008, %v3096
        %3098 = vmatmul.bf16.gmra.mxu0 %v2236
        %v3099 = vpop.f32.mrf.mxu0
        %v3100 = vadd.f32 %v3011, %v3099
        %v3101 = vpop.f32.mrf.mxu0
        %v3102 = vadd.f32 %v3013, %v3101
        %3103 = vmatmul.bf16.gmra.mxu0 %v2239
        %v3104 = vpop.f32.mrf.mxu0
        %v3105 = vadd.f32 %v3016, %v3104
        %v3106 = vpop.f32.mrf.mxu0
        %v3107 = vadd.f32 %v3018, %v3106
        %3108 = vmatmul.bf16.gmra.mxu0 %v2242
        %v3109 = vpop.f32.mrf.mxu0
        %v3110 = vadd.f32 %v3021, %v3109
        %v3111 = vpop.f32.mrf.mxu0
        %v3112 = vadd.f32 %v3023, %v3111
        %3113 = vmatmul.bf16.gmra.mxu0 %v2245
        %v3114 = vpop.f32.mrf.mxu0
        %v3115 = vadd.f32 %v3026, %v3114
        %v3116 = vpop.f32.mrf.mxu0
        %v3117 = vadd.f32 %v3028, %v3116
        %3118 = vmatmul.bf16.gmra.mxu0 %v2248
        %v3119 = vpop.f32.mrf.mxu0
        %v3120 = vadd.f32 %v3031, %v3119
        %v3121 = vpop.f32.mrf.mxu0
        %v3122 = vadd.f32 %v3033, %v3121
        %3123 = vmatmul.bf16.gmra.mxu0 %v2251
        %v3124 = vpop.f32.mrf.mxu0
        %v3125 = vadd.f32 %v3036, %v3124
        %v3126 = vpop.f32.mrf.mxu0
        %v3127 = vadd.f32 %v3038, %v3126
        %3128 = vmatmul.bf16.gmra.mxu0 %v2254
        %v3129 = vpop.f32.mrf.mxu0
        %v3130 = vadd.f32 %v3041, %v3129
        %v3131 = vpop.f32.mrf.mxu0
        %v3132 = vadd.f32 %v3043, %v3131
        %3133 = vmatmul.bf16.gmra.mxu0 %v2257
        %v3134 = vpop.f32.mrf.mxu0
        %v3135 = vadd.f32 %v3046, %v3134
        %v3136 = vpop.f32.mrf.mxu0
        %v3137 = vadd.f32 %v3048, %v3136
        %3138 = vmatmul.bf16.gmra.mxu0 %v2260
        %v3139 = vpop.f32.mrf.mxu0
        %v3140 = vadd.f32 %v3051, %v3139
        %v3141 = vpop.f32.mrf.mxu0
        %v3142 = vadd.f32 %v3053, %v3141
        %3143 = vmatmul.bf16.gmra.mxu0 %v2263
        %v3144 = vpop.f32.mrf.mxu0
        %v3145 = vadd.f32 %v3056, %v3144
        %v3146 = vpop.f32.mrf.mxu0
        %v3147 = vadd.f32 %v3058, %v3146
        %3148 = vmatmul.bf16.gmra.mxu0 %v2266
        %v3149 = vpop.f32.mrf.mxu0
        %v3150 = vadd.f32 %v3061, %v3149
        %v3151 = vpop.f32.mrf.mxu0
        %v3152 = vadd.f32 %v3063, %v3151
        %3153 = vmatmul.bf16.gmra.mxu0 %v2269
        %v3154 = vpop.f32.mrf.mxu0
        %v3155 = vadd.f32 %v3066, %v3154
        %v3156 = vpop.f32.mrf.mxu0
        %v3157 = vadd.f32 %v3068, %v3156
        %3158 = vmatmul.bf16.gmra.mxu0 %v2272
        %v3159 = vpop.f32.mrf.mxu0
        %v3160 = vadd.f32 %v3071, %v3159
        %v3161 = vpop.f32.mrf.mxu0
        %v3162 = vadd.f32 %v3073, %v3161
        %3163 = vdwg.mxu0
        %v3164 = vmul.f32 %v2640, %v1064
        %v3165 = vmul.f32 %v3085, %v1065
        %v3166 = vmul.f32 %v2642, %v1064
        %v3167 = vmul.f32 %v3087, %v1065
        %v3168 = vmul.f32 %v2645, %v1064
        %v3169 = vmul.f32 %v3090, %v1065
        %v3170 = vmul.f32 %v2647, %v1064
        %v3171 = vmul.f32 %v3092, %v1065
        %v3172 = vmul.f32 %v2650, %v1064
        %v3173 = vmul.f32 %v3095, %v1065
        %v3174 = vmul.f32 %v2652, %v1064
        %v3175 = vmul.f32 %v3097, %v1065
        %v3176 = vmul.f32 %v2655, %v1064
        %v3177 = vmul.f32 %v3100, %v1065
        %v3178 = vmul.f32 %v2657, %v1064
        %v3179 = vmul.f32 %v3102, %v1065
        %v3180 = vmul.f32 %v2660, %v1064
        %v3181 = vmul.f32 %v3105, %v1065
        %v3182 = vmul.f32 %v2662, %v1064
        %v3183 = vmul.f32 %v3107, %v1065
        %v3184 = vmul.f32 %v2665, %v1064
        %v3185 = vmul.f32 %v3110, %v1065
        %v3186 = vmul.f32 %v2667, %v1064
        %v3187 = vmul.f32 %v3112, %v1065
        %v3188 = vmul.f32 %v2670, %v1064
        %v3189 = vmul.f32 %v3115, %v1065
        %v3190 = vmul.f32 %v2672, %v1064
        %v3191 = vmul.f32 %v3117, %v1065
        %v3192 = vmul.f32 %v2675, %v1064
        %v3193 = vmul.f32 %v3120, %v1065
        %v3194 = vmul.f32 %v2677, %v1064
        %v3195 = vmul.f32 %v3122, %v1065
        %v3196 = vmul.f32 %v2680, %v1064
        %v3197 = vmul.f32 %v3125, %v1065
        %v3198 = vmul.f32 %v2682, %v1064
        %v3199 = vmul.f32 %v3127, %v1065
        %v3200 = vmul.f32 %v2685, %v1064
        %v3201 = vmul.f32 %v3130, %v1065
        %v3202 = vmul.f32 %v2687, %v1064
        %v3203 = vmul.f32 %v3132, %v1065
        %v3204 = vmul.f32 %v2690, %v1064
        %v3205 = vmul.f32 %v3135, %v1065
        %v3206 = vmul.f32 %v2692, %v1064
        %v3207 = vmul.f32 %v3137, %v1065
        %v3208 = vmul.f32 %v2695, %v1064
        %v3209 = vmul.f32 %v3140, %v1065
        %v3210 = vmul.f32 %v2697, %v1064
        %v3211 = vmul.f32 %v3142, %v1065
        %v3212 = vmul.f32 %v2700, %v1064
        %v3213 = vmul.f32 %v3145, %v1065
        %v3214 = vmul.f32 %v2702, %v1064
        %v3215 = vmul.f32 %v3147, %v1065
        %v3216 = vmul.f32 %v2705, %v1064
        %v3217 = vmul.f32 %v3150, %v1065
        %v3218 = vmul.f32 %v2707, %v1064
        %v3219 = vmul.f32 %v3152, %v1065
        %v3220 = vmul.f32 %v2710, %v1064
        %v3221 = vmul.f32 %v3155, %v1065
        %v3222 = vmul.f32 %v2712, %v1064
        %v3223 = vmul.f32 %v3157, %v1065
        %v3224 = vmul.f32 %v2715, %v1064
        %v3225 = vmul.f32 %v3160, %v1065
        %v3226 = vmul.f32 %v2717, %v1064
        %v3227 = vmul.f32 %v3162, %v1065
        %v3228 = vadd.f32 %v3164, %v1134
        %v3229 = vadd.f32 %v3165, %v1135
        %v3230 = vadd.f32 %v3166, %v1134
        %v3231 = vadd.f32 %v3167, %v1135
        %v3232 = vadd.f32 %v3168, %v1134
        %v3233 = vadd.f32 %v3169, %v1135
        %v3234 = vadd.f32 %v3170, %v1134
        %v3235 = vadd.f32 %v3171, %v1135
        %v3236 = vadd.f32 %v3172, %v1134
        %v3237 = vadd.f32 %v3173, %v1135
        %v3238 = vadd.f32 %v3174, %v1134
        %v3239 = vadd.f32 %v3175, %v1135
        %v3240 = vadd.f32 %v3176, %v1134
        %v3241 = vadd.f32 %v3177, %v1135
        %v3242 = vadd.f32 %v3178, %v1134
        %v3243 = vadd.f32 %v3179, %v1135
        %v3244 = vadd.f32 %v3180, %v1134
        %v3245 = vadd.f32 %v3181, %v1135
        %v3246 = vadd.f32 %v3182, %v1134
        %v3247 = vadd.f32 %v3183, %v1135
        %v3248 = vadd.f32 %v3184, %v1134
        %v3249 = vadd.f32 %v3185, %v1135
        %v3250 = vadd.f32 %v3186, %v1134
        %v3251 = vadd.f32 %v3187, %v1135
        %v3252 = vadd.f32 %v3188, %v1134
        %v3253 = vadd.f32 %v3189, %v1135
        %v3254 = vadd.f32 %v3190, %v1134
        %v3255 = vadd.f32 %v3191, %v1135
        %v3256 = vadd.f32 %v3192, %v1134
        %v3257 = vadd.f32 %v3193, %v1135
        %v3258 = vadd.f32 %v3194, %v1134
        %v3259 = vadd.f32 %v3195, %v1135
        %v3260 = vadd.f32 %v3196, %v1134
        %v3261 = vadd.f32 %v3197, %v1135
        %v3262 = vadd.f32 %v3198, %v1134
        %v3263 = vadd.f32 %v3199, %v1135
        %v3264 = vadd.f32 %v3200, %v1134
        %v3265 = vadd.f32 %v3201, %v1135
        %v3266 = vadd.f32 %v3202, %v1134
        %v3267 = vadd.f32 %v3203, %v1135
        %v3268 = vadd.f32 %v3204, %v1134
        %v3269 = vadd.f32 %v3205, %v1135
        %v3270 = vadd.f32 %v3206, %v1134
        %v3271 = vadd.f32 %v3207, %v1135
        %v3272 = vadd.f32 %v3208, %v1134
        %v3273 = vadd.f32 %v3209, %v1135
        %v3274 = vadd.f32 %v3210, %v1134
        %v3275 = vadd.f32 %v3211, %v1135
        %v3276 = vadd.f32 %v3212, %v1134
        %v3277 = vadd.f32 %v3213, %v1135
        %v3278 = vadd.f32 %v3214, %v1134
        %v3279 = vadd.f32 %v3215, %v1135
        %v3280 = vadd.f32 %v3216, %v1134
        %v3281 = vadd.f32 %v3217, %v1135
        %v3282 = vadd.f32 %v3218, %v1134
        %v3283 = vadd.f32 %v3219, %v1135
        %v3284 = vadd.f32 %v3220, %v1134
        %v3285 = vadd.f32 %v3221, %v1135
        %v3286 = vadd.f32 %v3222, %v1134
        %v3287 = vadd.f32 %v3223, %v1135
        %v3288 = vadd.f32 %v3224, %v1134
        %v3289 = vadd.f32 %v3225, %v1135
        %v3290 = vadd.f32 %v3226, %v1134
        %v3291 = vadd.f32 %v3227, %v1135
        %v3292 = vmax.f32 %v3228, 0.0
        %v3293 = vmax.f32 %v3229, 0.0
        %v3294 = vmax.f32 %v3230, 0.0
        %v3295 = vmax.f32 %v3231, 0.0
        %v3296 = vmax.f32 %v3232, 0.0
        %v3297 = vmax.f32 %v3233, 0.0
        %v3298 = vmax.f32 %v3234, 0.0
        %v3299 = vmax.f32 %v3235, 0.0
        %v3300 = vmax.f32 %v3236, 0.0
        %v3301 = vmax.f32 %v3237, 0.0
        %v3302 = vmax.f32 %v3238, 0.0
        %v3303 = vmax.f32 %v3239, 0.0
        %v3304 = vmax.f32 %v3240, 0.0
        %v3305 = vmax.f32 %v3241, 0.0
        %v3306 = vmax.f32 %v3242, 0.0
        %v3307 = vmax.f32 %v3243, 0.0
        %v3308 = vmax.f32 %v3244, 0.0
        %v3309 = vmax.f32 %v3245, 0.0
        %v3310 = vmax.f32 %v3246, 0.0
        %v3311 = vmax.f32 %v3247, 0.0
        %v3312 = vmax.f32 %v3248, 0.0
        %v3313 = vmax.f32 %v3249, 0.0
        %v3314 = vmax.f32 %v3250, 0.0
        %v3315 = vmax.f32 %v3251, 0.0
        %v3316 = vmax.f32 %v3252, 0.0
        %v3317 = vmax.f32 %v3253, 0.0
        %v3318 = vmax.f32 %v3254, 0.0
        %v3319 = vmax.f32 %v3255, 0.0
        %v3320 = vmax.f32 %v3256, 0.0
        %v3321 = vmax.f32 %v3257, 0.0
        %v3322 = vmax.f32 %v3258, 0.0
        %v3323 = vmax.f32 %v3259, 0.0
        %v3324 = vmax.f32 %v3260, 0.0
        %v3325 = vmax.f32 %v3261, 0.0
        %v3326 = vmax.f32 %v3262, 0.0
        %v3327 = vmax.f32 %v3263, 0.0
        %v3328 = vmax.f32 %v3264, 0.0
        %v3329 = vmax.f32 %v3265, 0.0
        %v3330 = vmax.f32 %v3266, 0.0
        %v3331 = vmax.f32 %v3267, 0.0
        %v3332 = vmax.f32 %v3268, 0.0
        %v3333 = vmax.f32 %v3269, 0.0
        %v3334 = vmax.f32 %v3270, 0.0
        %v3335 = vmax.f32 %v3271, 0.0
        %v3336 = vmax.f32 %v3272, 0.0
        %v3337 = vmax.f32 %v3273, 0.0
        %v3338 = vmax.f32 %v3274, 0.0
        %v3339 = vmax.f32 %v3275, 0.0
        %v3340 = vmax.f32 %v3276, 0.0
        %v3341 = vmax.f32 %v3277, 0.0
        %v3342 = vmax.f32 %v3278, 0.0
        %v3343 = vmax.f32 %v3279, 0.0
        %v3344 = vmax.f32 %v3280, 0.0
        %v3345 = vmax.f32 %v3281, 0.0
        %v3346 = vmax.f32 %v3282, 0.0
        %v3347 = vmax.f32 %v3283, 0.0
        %v3348 = vmax.f32 %v3284, 0.0
        %v3349 = vmax.f32 %v3285, 0.0
        %v3350 = vmax.f32 %v3286, 0.0
        %v3351 = vmax.f32 %v3287, 0.0
        %v3352 = vmax.f32 %v3288, 0.0
        %v3353 = vmax.f32 %v3289, 0.0
        %v3354 = vmax.f32 %v3290, 0.0
        %v3355 = vmax.f32 %v3291, 0.0
        %v3356 = vpack.c.bf16 %v3294, %v3292
        %v3357 = vpack.c.bf16 %v3295, %v3293
        %v3358 = vpack.c.bf16 %v3298, %v3296
        %v3359 = vpack.c.bf16 %v3299, %v3297
        %v3360 = vpack.c.bf16 %v3302, %v3300
        %v3361 = vpack.c.bf16 %v3303, %v3301
        %v3362 = vpack.c.bf16 %v3306, %v3304
        %v3363 = vpack.c.bf16 %v3307, %v3305
        %v3364 = vpack.c.bf16 %v3310, %v3308
        %v3365 = vpack.c.bf16 %v3311, %v3309
        %v3366 = vpack.c.bf16 %v3314, %v3312
        %v3367 = vpack.c.bf16 %v3315, %v3313
        %v3368 = vpack.c.bf16 %v3318, %v3316
        %v3369 = vpack.c.bf16 %v3319, %v3317
        %v3370 = vpack.c.bf16 %v3322, %v3320
        %v3371 = vpack.c.bf16 %v3323, %v3321
        %v3372 = vpack.c.bf16 %v3326, %v3324
        %v3373 = vpack.c.bf16 %v3327, %v3325
        %v3374 = vpack.c.bf16 %v3330, %v3328
        %v3375 = vpack.c.bf16 %v3331, %v3329
        %v3376 = vpack.c.bf16 %v3334, %v3332
        %v3377 = vpack.c.bf16 %v3335, %v3333
        %v3378 = vpack.c.bf16 %v3338, %v3336
        %v3379 = vpack.c.bf16 %v3339, %v3337
        %v3380 = vpack.c.bf16 %v3342, %v3340
        %v3381 = vpack.c.bf16 %v3343, %v3341
        %v3382 = vpack.c.bf16 %v3346, %v3344
        %v3383 = vpack.c.bf16 %v3347, %v3345
        %v3384 = vpack.c.bf16 %v3350, %v3348
        %v3385 = vpack.c.bf16 %v3351, %v3349
        %v3386 = vpack.c.bf16 %v3354, %v3352
        %v3387 = vpack.c.bf16 %v3355, %v3353
        %v3388 = vld [vmem:[%s658] sm:$0xff]
        %v3389 = vld [vmem:[%s658 + $0x8] sm:$0xff]
        %v3390 = vld [vmem:[%s658 + $0x10] sm:$0xf]
        %v3391 = vld [vmem:[%s658 + $0x14] sm:$0xff]
        %v3392 = vld [vmem:[%s658 + $0x1c] sm:$0xff]
        %v3393 = vld [vmem:[%s658 + $0x24] sm:$0xf]
        %v3394 = vld [vmem:[%s658 + $0x28] sm:$0xff]
        %v3395 = vld [vmem:[%s658 + $0x30] sm:$0xff]
        %v3396 = vld [vmem:[%s658 + $0x38] sm:$0xf]
        %v3397 = vld [vmem:[%s658 + $0x3c] sm:$0xff]
        %v3398 = vld [vmem:[%s658 + $0x44] sm:$0xff]
        %v3399 = vld [vmem:[%s658 + $0x4c] sm:$0xf]
        %v3400 = vld [vmem:[%s658 + $0x50] sm:$0xff]
        %v3401 = vld [vmem:[%s658 + $0x58] sm:$0xff]
        %v3402 = vld [vmem:[%s658 + $0x60] sm:$0xf]
        %v3403 = vld [vmem:[%s658 + $0x64] sm:$0xff]
        %v3404 = vld [vmem:[%s658 + $0x6c] sm:$0xff]
        %v3405 = vld [vmem:[%s658 + $0x74] sm:$0xf]
        %v3406 = vld [vmem:[%s658 + $0x78] sm:$0xff]
        %v3407 = vld [vmem:[%s658 + $0x80] sm:$0xff]
        %v3408 = vld [vmem:[%s658 + $0x88] sm:$0xf]
        %v3409 = vld [vmem:[%s658 + $0x8c] sm:$0xff]
        %v3410 = vld [vmem:[%s658 + $0x94] sm:$0xff]
        %v3411 = vld [vmem:[%s658 + $0x9c] sm:$0xf]
        %v3412 = vld [vmem:[%s658 + $0xa0] sm:$0xff]
        %v3413 = vld [vmem:[%s658 + $0xa8] sm:$0xff]
        %v3414 = vld [vmem:[%s658 + $0xb0] sm:$0xf]
        %v3415 = vld [vmem:[%s658 + $0xb4] sm:$0xff]
        %v3416 = vld [vmem:[%s658 + $0xbc] sm:$0xff]
        %v3417 = vld [vmem:[%s658 + $0xc4] sm:$0xf]
        %v3418 = vld [vmem:[%s658 + $0xc8] sm:$0xff]
        %v3419 = vld [vmem:[%s658 + $0xd0] sm:$0xff]
        %v3420 = vld [vmem:[%s658 + $0xd8] sm:$0xf]
        %v3421 = vld [vmem:[%s658 + $0xdc] sm:$0xff]
        %v3422 = vld [vmem:[%s658 + $0xe4] sm:$0xff]
        %v3423 = vld [vmem:[%s658 + $0xec] sm:$0xf]
        %v3424 = vld [vmem:[%s658 + $0xf0] sm:$0xff]
        %v3425 = vld [vmem:[%s658 + $0xf8] sm:$0xff]
        %v3426 = vld [vmem:[%s658 + $0x100] sm:$0xf]
        %v3427 = vld [vmem:[%s658 + $0x104] sm:$0xff]
        %v3428 = vld [vmem:[%s658 + $0x10c] sm:$0xff]
        %v3429 = vld [vmem:[%s658 + $0x114] sm:$0xf]
        %v3430 = vld [vmem:[%s658 + $0x118] sm:$0xff]
        %v3431 = vld [vmem:[%s658 + $0x120] sm:$0xff]
        %v3432 = vld [vmem:[%s658 + $0x128] sm:$0xf]
        %v3433 = vld [vmem:[%s658 + $0x12c] sm:$0xff]
        %v3434 = vld [vmem:[%s658 + $0x134] sm:$0xff]
        %v3435 = vld [vmem:[%s658 + $0x13c] sm:$0xf]
        %v3436 = vld [vmem:[%s658 + $0x140] sm:$0xff]
        %v3437 = vld [vmem:[%s658 + $0x148] sm:$0xff]
        %v3438 = vld [vmem:[%s658 + $0x150] sm:$0xf]
        %v3439 = vld [vmem:[%s658 + $0x154] sm:$0xff]
        %v3440 = vld [vmem:[%s658 + $0x15c] sm:$0xff]
        %v3441 = vld [vmem:[%s658 + $0x164] sm:$0xf]
        %v3442 = vld [vmem:[%s658 + $0x168] sm:$0xff]
        %v3443 = vld [vmem:[%s658 + $0x170] sm:$0xff]
        %v3444 = vld [vmem:[%s658 + $0x178] sm:$0xf]
        %v3445 = vld [vmem:[%s658 + $0x17c] sm:$0xff]
        %v3446 = vld [vmem:[%s658 + $0x184] sm:$0xff]
        %v3447 = vld [vmem:[%s658 + $0x18c] sm:$0xf]
        %v3448 = vld [vmem:[%s658 + $0x190] sm:$0xff]
        %v3449 = vld [vmem:[%s658 + $0x198] sm:$0xff]
        %v3450 = vld [vmem:[%s658 + $0x1a0] sm:$0xf]
        %v3451 = vld [vmem:[%s658 + $0x1a4] sm:$0xff]
        %v3452 = vld [vmem:[%s658 + $0x1ac] sm:$0xff]
        %v3453 = vld [vmem:[%s658 + $0x1b4] sm:$0xf]
        %v3454 = vld [vmem:[%s658 + $0x1b8] sm:$0xff]
        %v3455 = vld [vmem:[%s658 + $0x1c0] sm:$0xff]
        %v3456 = vld [vmem:[%s658 + $0x1c8] sm:$0xf]
        %v3457 = vld [vmem:[%s658 + $0x1cc] sm:$0xff]
        %v3458 = vld [vmem:[%s658 + $0x1d4] sm:$0xff]
        %v3459 = vld [vmem:[%s658 + $0x1dc] sm:$0xf]
        %v3460 = vld [vmem:[%s658 + $0x1e0] sm:$0xff]
        %v3461 = vld [vmem:[%s658 + $0x1e8] sm:$0xff]
        %v3462 = vld [vmem:[%s658 + $0x1f0] sm:$0xf]
        %v3463 = vld [vmem:[%s658 + $0x1f4] sm:$0xff]
        %v3464 = vld [vmem:[%s658 + $0x1fc] sm:$0xff]
        %v3465 = vld [vmem:[%s658 + $0x204] sm:$0xf]
        %v3466 = vld [vmem:[%s658 + $0x208] sm:$0xff]
        %v3467 = vld [vmem:[%s658 + $0x210] sm:$0xff]
        %v3468 = vld [vmem:[%s658 + $0x218] sm:$0xf]
        %v3469 = vld [vmem:[%s658 + $0x21c] sm:$0xff]
        %v3470 = vld [vmem:[%s658 + $0x224] sm:$0xff]
        %v3471 = vld [vmem:[%s658 + $0x22c] sm:$0xf]
        %v3472 = vld [vmem:[%s658 + $0x230] sm:$0xff]
        %v3473 = vld [vmem:[%s658 + $0x238] sm:$0xff]
        %v3474 = vld [vmem:[%s658 + $0x240] sm:$0xf]
        %v3475 = vld [vmem:[%s658 + $0x244] sm:$0xff]
        %v3476 = vld [vmem:[%s658 + $0x24c] sm:$0xff]
        %v3477 = vld [vmem:[%s658 + $0x254] sm:$0xf]
        %v3478 = vld [vmem:[%s658 + $0x258] sm:$0xff]
        %v3479 = vld [vmem:[%s658 + $0x260] sm:$0xff]
        %v3480 = vld [vmem:[%s658 + $0x268] sm:$0xf]
        %v3481 = vld [vmem:[%s658 + $0x26c] sm:$0xff]
        %v3482 = vld [vmem:[%s658 + $0x274] sm:$0xff]
        %v3483 = vld [vmem:[%s658 + $0x27c] sm:$0xf]
        %v3484 = vld [vmem:[%s7] sm:$0xff]
        %v3485 = vld [vmem:[%s7 + $0x8] sm:$0xff]
        %v3486 = vld [vmem:[%s7 + $0x10] sm:$0xff]
        %v3487 = vld [vmem:[%s7 + $0x18] sm:$0xff]
        %v3488 = vld [vmem:[%s7 + $0x20] sm:$0xff]
        %v3489 = vld [vmem:[%s7 + $0x28] sm:$0xff]
        %v3490 = vld [vmem:[%s7 + $0x30] sm:$0xff]
        %v3491 = vld [vmem:[%s7 + $0x38] sm:$0xff]
        %v3492 = vld [vmem:[%s7 + $0x40] sm:$0xff]
        %v3493 = vld [vmem:[%s7 + $0x48] sm:$0xff]
        %v3494 = vld [vmem:[%s7 + $0x50] sm:$0xff]
        %v3495 = vld [vmem:[%s7 + $0x58] sm:$0xff]
        %v3496 = vld [vmem:[%s7 + $0x60] sm:$0xff]
        %v3497 = vld [vmem:[%s7 + $0x68] sm:$0xff]
        %v3498 = vld [vmem:[%s7 + $0x70] sm:$0xff]
        %v3499 = vld [vmem:[%s7 + $0x78] sm:$0xff]
        %v3500 = vld [vmem:[%s7 + $0x80] sm:$0xff]
        %v3501 = vld [vmem:[%s7 + $0x88] sm:$0xff]
        %v3502 = vld [vmem:[%s7 + $0x90] sm:$0xff]
        %v3503 = vld [vmem:[%s7 + $0x98] sm:$0xff]
        %v3504 = vld [vmem:[%s7 + $0xa0] sm:$0xff]
        %v3505 = vld [vmem:[%s7 + $0xa8] sm:$0xff]
        %v3506 = vld [vmem:[%s7 + $0xb0] sm:$0xff]
        %v3507 = vld [vmem:[%s7 + $0xb8] sm:$0xff]
        %v3508 = vld [vmem:[%s7 + $0xc0] sm:$0xff]
        %v3509 = vld [vmem:[%s7 + $0xc8] sm:$0xff]
        %v3510 = vld [vmem:[%s7 + $0xd0] sm:$0xff]
        %v3511 = vld [vmem:[%s7 + $0xd8] sm:$0xff]
        %v3512 = vld [vmem:[%s7 + $0xe0] sm:$0xff]
        %v3513 = vld [vmem:[%s7 + $0xe8] sm:$0xff]
        %v3514 = vld [vmem:[%s7 + $0xf0] sm:$0xff]
        %v3515 = vld [vmem:[%s7 + $0xf8] sm:$0xff]
        %v3516 = vld [vmem:[%s7 + $0x100] sm:$0xff]
        %v3517 = vld [vmem:[%s7 + $0x108] sm:$0xff]
        %v3518 = vld [vmem:[%s7 + $0x110] sm:$0xff]
        %v3519 = vld [vmem:[%s7 + $0x118] sm:$0xff]
        %v3520 = vld [vmem:[%s7 + $0x120] sm:$0xff]
        %v3521 = vld [vmem:[%s7 + $0x128] sm:$0xff]
        %v3522 = vld [vmem:[%s7 + $0x130] sm:$0xff]
        %v3523 = vld [vmem:[%s7 + $0x138] sm:$0xff]
        %v3524 = vld [vmem:[%s7 + $0x140] sm:$0xff]
        %v3525 = vld [vmem:[%s7 + $0x148] sm:$0xff]
        %v3526 = vld [vmem:[%s7 + $0x150] sm:$0xff]
        %v3527 = vld [vmem:[%s7 + $0x158] sm:$0xff]
        %v3528 = vld [vmem:[%s7 + $0x160] sm:$0xff]
        %v3529 = vld [vmem:[%s7 + $0x168] sm:$0xff]
        %v3530 = vld [vmem:[%s7 + $0x170] sm:$0xff]
        %v3531 = vld [vmem:[%s7 + $0x178] sm:$0xff]
        %v3532 = vld [vmem:[%s7 + $0x180] sm:$0xff]
        %v3533 = vld [vmem:[%s7 + $0x188] sm:$0xff]
        %v3534 = vld [vmem:[%s7 + $0x190] sm:$0xff]
        %v3535 = vld [vmem:[%s7 + $0x198] sm:$0xff]
        %v3536 = vld [vmem:[%s7 + $0x1a0] sm:$0xff]
        %v3537 = vld [vmem:[%s7 + $0x1a8] sm:$0xff]
        %v3538 = vld [vmem:[%s7 + $0x1b0] sm:$0xff]
        %v3539 = vld [vmem:[%s7 + $0x1b8] sm:$0xff]
        %v3540 = vld [vmem:[%s7 + $0x1c0] sm:$0xff]
        %v3541 = vld [vmem:[%s7 + $0x1c8] sm:$0xff]
        %v3542 = vld [vmem:[%s7 + $0x1d0] sm:$0xff]
        %v3543 = vld [vmem:[%s7 + $0x1d8] sm:$0xff]
        %v3544 = vld [vmem:[%s7 + $0x1e0] sm:$0xff]
        %v3545 = vld [vmem:[%s7 + $0x1e8] sm:$0xff]
        %v3546 = vld [vmem:[%s7 + $0x1f0] sm:$0xff]
        %v3547 = vld [vmem:[%s7 + $0x1f8] sm:$0xff]
        %v3548 = vld [vmem:[%s7 + $0x200] sm:$0xff]
        %v3549 = vld [vmem:[%s7 + $0x208] sm:$0xff]
        %v3550 = vld [vmem:[%s7 + $0x210] sm:$0xff]
        %v3551 = vld [vmem:[%s7 + $0x218] sm:$0xff]
        %v3552 = vld [vmem:[%s7 + $0x220] sm:$0xff]
        %v3553 = vld [vmem:[%s7 + $0x228] sm:$0xff]
        %v3554 = vld [vmem:[%s7 + $0x230] sm:$0xff]
        %v3555 = vld [vmem:[%s7 + $0x238] sm:$0xff]
        %v3652 = vunpack.c.l.b16 %v3388
        %v3653 = vunpack.c.h.b16 %v3388
        %v3654 = vunpack.c.l.b16 %v3389
        %v3655 = vunpack.c.h.b16 %v3389
        %v3656 = vunpack.c.l.b16 %v3390
        %v3657 = vunpack.c.l.b16 %v3391
        %v3658 = vunpack.c.h.b16 %v3391
        %v3659 = vunpack.c.l.b16 %v3392
        %v3660 = vunpack.c.h.b16 %v3392
        %v3661 = vunpack.c.l.b16 %v3393
        %v3662 = vunpack.c.l.b16 %v3394
        %v3663 = vunpack.c.h.b16 %v3394
        %v3664 = vunpack.c.l.b16 %v3395
        %v3665 = vunpack.c.h.b16 %v3395
        %v3666 = vunpack.c.l.b16 %v3396
        %v3667 = vunpack.c.l.b16 %v3397
        %v3668 = vunpack.c.h.b16 %v3397
        %v3669 = vunpack.c.l.b16 %v3398
        %v3670 = vunpack.c.h.b16 %v3398
        %v3671 = vunpack.c.l.b16 %v3399
        %v3672 = vunpack.c.l.b16 %v3400
        %v3673 = vunpack.c.h.b16 %v3400
        %v3674 = vunpack.c.l.b16 %v3401
        %v3675 = vunpack.c.h.b16 %v3401
        %v3676 = vunpack.c.l.b16 %v3402
        %v3677 = vunpack.c.l.b16 %v3403
        %v3678 = vunpack.c.h.b16 %v3403
        %v3679 = vunpack.c.l.b16 %v3404
        %v3680 = vunpack.c.h.b16 %v3404
        %v3681 = vunpack.c.l.b16 %v3405
        %v3682 = vunpack.c.l.b16 %v3406
        %v3683 = vunpack.c.h.b16 %v3406
        %v3684 = vunpack.c.l.b16 %v3407
        %v3685 = vunpack.c.h.b16 %v3407
        %v3686 = vunpack.c.l.b16 %v3408
        %v3687 = vunpack.c.l.b16 %v3409
        %v3688 = vunpack.c.h.b16 %v3409
        %v3689 = vunpack.c.l.b16 %v3410
        %v3690 = vunpack.c.h.b16 %v3410
        %v3691 = vunpack.c.l.b16 %v3411
        %v3692 = vunpack.c.l.b16 %v3412
        %v3693 = vunpack.c.h.b16 %v3412
        %v3694 = vunpack.c.l.b16 %v3413
        %v3695 = vunpack.c.h.b16 %v3413
        %v3696 = vunpack.c.l.b16 %v3414
        %v3697 = vunpack.c.l.b16 %v3415
        %v3698 = vunpack.c.h.b16 %v3415
        %v3699 = vunpack.c.l.b16 %v3416
        %v3700 = vunpack.c.h.b16 %v3416
        %v3701 = vunpack.c.l.b16 %v3417
        %v3702 = vunpack.c.l.b16 %v3418
        %v3703 = vunpack.c.h.b16 %v3418
        %v3704 = vunpack.c.l.b16 %v3419
        %v3705 = vunpack.c.h.b16 %v3419
        %v3706 = vunpack.c.l.b16 %v3420
        %v3707 = vunpack.c.l.b16 %v3421
        %v3708 = vunpack.c.h.b16 %v3421
        %v3709 = vunpack.c.l.b16 %v3422
        %v3710 = vunpack.c.h.b16 %v3422
        %v3711 = vunpack.c.l.b16 %v3423
        %v3712 = vunpack.c.l.b16 %v3424
        %v3713 = vunpack.c.h.b16 %v3424
        %v3714 = vunpack.c.l.b16 %v3425
        %v3715 = vunpack.c.h.b16 %v3425
        %v3716 = vunpack.c.l.b16 %v3426
        %v3717 = vunpack.c.l.b16 %v3427
        %v3718 = vunpack.c.h.b16 %v3427
        %v3719 = vunpack.c.l.b16 %v3428
        %v3720 = vunpack.c.h.b16 %v3428
        %v3721 = vunpack.c.l.b16 %v3429
        %v3722 = vunpack.c.l.b16 %v3430
        %v3723 = vunpack.c.h.b16 %v3430
        %v3724 = vunpack.c.l.b16 %v3431
        %v3725 = vunpack.c.h.b16 %v3431
        %v3726 = vunpack.c.l.b16 %v3432
        %v3727 = vunpack.c.l.b16 %v3433
        %v3728 = vunpack.c.h.b16 %v3433
        %v3729 = vunpack.c.l.b16 %v3434
        %v3730 = vunpack.c.h.b16 %v3434
        %v3731 = vunpack.c.l.b16 %v3435
        %v3732 = vunpack.c.l.b16 %v3436
        %v3733 = vunpack.c.h.b16 %v3436
        %v3734 = vunpack.c.l.b16 %v3437
        %v3735 = vunpack.c.h.b16 %v3437
        %v3736 = vunpack.c.l.b16 %v3438
        %v3737 = vunpack.c.l.b16 %v3439
        %v3738 = vunpack.c.h.b16 %v3439
        %v3739 = vunpack.c.l.b16 %v3440
        %v3740 = vunpack.c.h.b16 %v3440
        %v3741 = vunpack.c.l.b16 %v3441
        %v3742 = vunpack.c.l.b16 %v3442
        %v3743 = vunpack.c.h.b16 %v3442
        %v3744 = vunpack.c.l.b16 %v3443
        %v3745 = vunpack.c.h.b16 %v3443
        %v3746 = vunpack.c.l.b16 %v3444
        %v3747 = vunpack.c.l.b16 %v3445
        %v3748 = vunpack.c.h.b16 %v3445
        %v3749 = vunpack.c.l.b16 %v3446
        %v3750 = vunpack.c.h.b16 %v3446
        %v3751 = vunpack.c.l.b16 %v3447
        %v3752 = vunpack.c.l.b16 %v3448
        %v3753 = vunpack.c.h.b16 %v3448
        %v3754 = vunpack.c.l.b16 %v3449
        %v3755 = vunpack.c.h.b16 %v3449
        %v3756 = vunpack.c.l.b16 %v3450
        %v3757 = vunpack.c.l.b16 %v3451
        %v3758 = vunpack.c.h.b16 %v3451
        %v3759 = vunpack.c.l.b16 %v3452
        %v3760 = vunpack.c.h.b16 %v3452
        %v3761 = vunpack.c.l.b16 %v3453
        %v3762 = vunpack.c.l.b16 %v3454
        %v3763 = vunpack.c.h.b16 %v3454
        %v3764 = vunpack.c.l.b16 %v3455
        %v3765 = vunpack.c.h.b16 %v3455
        %v3766 = vunpack.c.l.b16 %v3456
        %v3767 = vunpack.c.l.b16 %v3457
        %v3768 = vunpack.c.h.b16 %v3457
        %v3769 = vunpack.c.l.b16 %v3458
        %v3770 = vunpack.c.h.b16 %v3458
        %v3771 = vunpack.c.l.b16 %v3459
        %v3772 = vunpack.c.l.b16 %v3460
        %v3773 = vunpack.c.h.b16 %v3460
        %v3774 = vunpack.c.l.b16 %v3461
        %v3775 = vunpack.c.h.b16 %v3461
        %v3776 = vunpack.c.l.b16 %v3462
        %v3777 = vunpack.c.l.b16 %v3463
        %v3778 = vunpack.c.h.b16 %v3463
        %v3779 = vunpack.c.l.b16 %v3464
        %v3780 = vunpack.c.h.b16 %v3464
        %v3781 = vunpack.c.l.b16 %v3465
        %v3782 = vunpack.c.l.b16 %v3466
        %v3783 = vunpack.c.h.b16 %v3466
        %v3784 = vunpack.c.l.b16 %v3467
        %v3785 = vunpack.c.h.b16 %v3467
        %v3786 = vunpack.c.l.b16 %v3468
        %v3787 = vunpack.c.l.b16 %v3469
        %v3788 = vunpack.c.h.b16 %v3469
        %v3789 = vunpack.c.l.b16 %v3470
        %v3790 = vunpack.c.h.b16 %v3470
        %v3791 = vunpack.c.l.b16 %v3471
        %v3792 = vunpack.c.l.b16 %v3472
        %v3793 = vunpack.c.h.b16 %v3472
        %v3794 = vunpack.c.l.b16 %v3473
        %v3795 = vunpack.c.h.b16 %v3473
        %v3796 = vunpack.c.l.b16 %v3474
        %v3797 = vunpack.c.l.b16 %v3475
        %v3798 = vunpack.c.h.b16 %v3475
        %v3799 = vunpack.c.l.b16 %v3476
        %v3800 = vunpack.c.h.b16 %v3476
        %v3801 = vunpack.c.l.b16 %v3477
        %v3802 = vunpack.c.l.b16 %v3478
        %v3803 = vunpack.c.h.b16 %v3478
        %v3804 = vunpack.c.l.b16 %v3479
        %v3805 = vunpack.c.h.b16 %v3479
        %v3806 = vunpack.c.l.b16 %v3480
        %v3807 = vunpack.c.l.b16 %v3481
        %v3808 = vunpack.c.h.b16 %v3481
        %v3809 = vunpack.c.l.b16 %v3482
        %v3810 = vunpack.c.h.b16 %v3482
        %v3811 = vunpack.c.l.b16 %v3483
        %v3812 = vpack.c.b16 %v3657, %v3652
        %v3813 = vpack.c.b16 %v3658, %v3653
        %v3814 = vpack.c.b16 %v3659, %v3654
        %v3815 = vpack.c.b16 %v3660, %v3655
        %v3816 = vpack.c.b16 %v3661, %v3656
        %v3817 = vpack.c.b16 %v3667, %v3662
        %v3818 = vpack.c.b16 %v3668, %v3663
        %v3819 = vpack.c.b16 %v3669, %v3664
        %v3820 = vpack.c.b16 %v3670, %v3665
        %v3821 = vpack.c.b16 %v3671, %v3666
        %v3822 = vpack.c.b16 %v3677, %v3672
        %v3823 = vpack.c.b16 %v3678, %v3673
        %v3824 = vpack.c.b16 %v3679, %v3674
        %v3825 = vpack.c.b16 %v3680, %v3675
        %v3826 = vpack.c.b16 %v3681, %v3676
        %v3827 = vpack.c.b16 %v3687, %v3682
        %v3828 = vpack.c.b16 %v3688, %v3683
        %v3829 = vpack.c.b16 %v3689, %v3684
        %v3830 = vpack.c.b16 %v3690, %v3685
        %v3831 = vpack.c.b16 %v3691, %v3686
        %v3832 = vpack.c.b16 %v3697, %v3692
        %v3833 = vpack.c.b16 %v3698, %v3693
        %v3834 = vpack.c.b16 %v3699, %v3694
        %v3835 = vpack.c.b16 %v3700, %v3695
        %v3836 = vpack.c.b16 %v3701, %v3696
        %v3837 = vpack.c.b16 %v3707, %v3702
        %v3838 = vpack.c.b16 %v3708, %v3703
        %v3839 = vpack.c.b16 %v3709, %v3704
        %v3840 = vpack.c.b16 %v3710, %v3705
        %v3841 = vpack.c.b16 %v3711, %v3706
        %v3842 = vpack.c.b16 %v3717, %v3712
        %v3843 = vpack.c.b16 %v3718, %v3713
        %v3844 = vpack.c.b16 %v3719, %v3714
        %v3845 = vpack.c.b16 %v3720, %v3715
        %v3846 = vpack.c.b16 %v3721, %v3716
        %v3847 = vpack.c.b16 %v3727, %v3722
        %v3848 = vpack.c.b16 %v3728, %v3723
        %v3849 = vpack.c.b16 %v3729, %v3724
        %v3850 = vpack.c.b16 %v3730, %v3725
        %v3851 = vpack.c.b16 %v3731, %v3726
        %v3852 = vpack.c.b16 %v3737, %v3732
        %v3853 = vpack.c.b16 %v3738, %v3733
        %v3854 = vpack.c.b16 %v3739, %v3734
        %v3855 = vpack.c.b16 %v3740, %v3735
        %v3856 = vpack.c.b16 %v3741, %v3736
        %v3857 = vpack.c.b16 %v3747, %v3742
        %v3858 = vpack.c.b16 %v3748, %v3743
        %v3859 = vpack.c.b16 %v3749, %v3744
        %v3860 = vpack.c.b16 %v3750, %v3745
        %v3861 = vpack.c.b16 %v3751, %v3746
        %v3862 = vpack.c.b16 %v3757, %v3752
        %v3863 = vpack.c.b16 %v3758, %v3753
        %v3864 = vpack.c.b16 %v3759, %v3754
        %v3865 = vpack.c.b16 %v3760, %v3755
        %v3866 = vpack.c.b16 %v3761, %v3756
        %v3867 = vpack.c.b16 %v3767, %v3762
        %v3868 = vpack.c.b16 %v3768, %v3763
        %v3869 = vpack.c.b16 %v3769, %v3764
        %v3870 = vpack.c.b16 %v3770, %v3765
        %v3871 = vpack.c.b16 %v3771, %v3766
        %v3872 = vpack.c.b16 %v3777, %v3772
        %v3873 = vpack.c.b16 %v3778, %v3773
        %v3874 = vpack.c.b16 %v3779, %v3774
        %v3875 = vpack.c.b16 %v3780, %v3775
        %v3876 = vpack.c.b16 %v3781, %v3776
        %v3877 = vpack.c.b16 %v3787, %v3782
        %v3878 = vpack.c.b16 %v3788, %v3783
        %v3879 = vpack.c.b16 %v3789, %v3784
        %v3880 = vpack.c.b16 %v3790, %v3785
        %v3881 = vpack.c.b16 %v3791, %v3786
        %v3882 = vpack.c.b16 %v3797, %v3792
        %v3883 = vpack.c.b16 %v3798, %v3793
        %v3884 = vpack.c.b16 %v3799, %v3794
        %v3885 = vpack.c.b16 %v3800, %v3795
        %v3886 = vpack.c.b16 %v3801, %v3796
        %v3887 = vpack.c.b16 %v3807, %v3802
        %v3888 = vpack.c.b16 %v3808, %v3803
        %v3889 = vpack.c.b16 %v3809, %v3804
        %v3890 = vpack.c.b16 %v3810, %v3805
        %v3891 = vpack.c.b16 %v3811, %v3806
        %v4028 = vunpack.c.l.b16 %v3484
        %v4029 = vunpack.c.h.b16 %v3484
        %v4030 = vunpack.c.l.b16 %v3485
        %v4031 = vunpack.c.h.b16 %v3485
        %v4032 = vunpack.c.l.b16 %v3486
        %v4033 = vunpack.c.h.b16 %v3486
        %v4034 = vunpack.c.l.b16 %v3487
        %v4035 = vunpack.c.h.b16 %v3487
        %v4036 = vunpack.c.l.b16 %v3488
        %v4037 = vunpack.c.h.b16 %v3488
        %v4038 = vunpack.c.l.b16 %v3489
        %v4039 = vunpack.c.h.b16 %v3489
        %v4040 = vunpack.c.l.b16 %v3490
        %v4041 = vunpack.c.h.b16 %v3490
        %v4042 = vunpack.c.l.b16 %v3491
        %v4043 = vunpack.c.h.b16 %v3491
        %v4044 = vunpack.c.l.b16 %v3492
        %v4045 = vunpack.c.h.b16 %v3492
        %v4046 = vunpack.c.l.b16 %v3493
        %v4047 = vunpack.c.h.b16 %v3493
        %v4048 = vunpack.c.l.b16 %v3494
        %v4049 = vunpack.c.h.b16 %v3494
        %v4050 = vunpack.c.l.b16 %v3495
        %v4051 = vunpack.c.h.b16 %v3495
        %v4052 = vunpack.c.l.b16 %v3496
        %v4053 = vunpack.c.h.b16 %v3496
        %v4054 = vunpack.c.l.b16 %v3497
        %v4055 = vunpack.c.h.b16 %v3497
        %v4056 = vunpack.c.l.b16 %v3498
        %v4057 = vunpack.c.h.b16 %v3498
        %v4058 = vunpack.c.l.b16 %v3499
        %v4059 = vunpack.c.h.b16 %v3499
        %v4060 = vunpack.c.l.b16 %v3500
        %v4061 = vunpack.c.h.b16 %v3500
        %v4062 = vunpack.c.l.b16 %v3501
        %v4063 = vunpack.c.h.b16 %v3501
        %v4064 = vunpack.c.l.b16 %v3502
        %v4065 = vunpack.c.h.b16 %v3502
        %v4066 = vunpack.c.l.b16 %v3503
        %v4067 = vunpack.c.h.b16 %v3503
        %v4068 = vunpack.c.l.b16 %v3504
        %v4069 = vunpack.c.h.b16 %v3504
        %v4070 = vunpack.c.l.b16 %v3505
        %v4071 = vunpack.c.h.b16 %v3505
        %v4072 = vunpack.c.l.b16 %v3506
        %v4073 = vunpack.c.h.b16 %v3506
        %v4074 = vunpack.c.l.b16 %v3507
        %v4075 = vunpack.c.h.b16 %v3507
        %v4076 = vunpack.c.l.b16 %v3508
        %v4077 = vunpack.c.h.b16 %v3508
        %v4078 = vunpack.c.l.b16 %v3509
        %v4079 = vunpack.c.h.b16 %v3509
        %v4080 = vunpack.c.l.b16 %v3510
        %v4081 = vunpack.c.h.b16 %v3510
        %v4082 = vunpack.c.l.b16 %v3511
        %v4083 = vunpack.c.h.b16 %v3511
        %v4084 = vunpack.c.l.b16 %v3512
        %v4085 = vunpack.c.h.b16 %v3512
        %v4086 = vunpack.c.l.b16 %v3513
        %v4087 = vunpack.c.h.b16 %v3513
        %v4088 = vunpack.c.l.b16 %v3514
        %v4089 = vunpack.c.h.b16 %v3514
        %v4090 = vunpack.c.l.b16 %v3515
        %v4091 = vunpack.c.h.b16 %v3515
        %v4092 = vunpack.c.l.b16 %v3516
        %v4093 = vunpack.c.h.b16 %v3516
        %v4094 = vunpack.c.l.b16 %v3517
        %v4095 = vunpack.c.h.b16 %v3517
        %v4096 = vunpack.c.l.b16 %v3518
        %v4097 = vunpack.c.h.b16 %v3518
        %v4098 = vunpack.c.l.b16 %v3519
        %v4099 = vunpack.c.h.b16 %v3519
        %v4100 = vunpack.c.l.b16 %v3520
        %v4101 = vunpack.c.h.b16 %v3520
        %v4102 = vunpack.c.l.b16 %v3521
        %v4103 = vunpack.c.h.b16 %v3521
        %v4104 = vunpack.c.l.b16 %v3522
        %v4105 = vunpack.c.h.b16 %v3522
        %v4106 = vunpack.c.l.b16 %v3523
        %v4107 = vunpack.c.h.b16 %v3523
        %v4108 = vunpack.c.l.b16 %v3524
        %v4109 = vunpack.c.h.b16 %v3524
        %v4110 = vunpack.c.l.b16 %v3525
        %v4111 = vunpack.c.h.b16 %v3525
        %v4112 = vunpack.c.l.b16 %v3526
        %v4113 = vunpack.c.h.b16 %v3526
        %v4114 = vunpack.c.l.b16 %v3527
        %v4115 = vunpack.c.h.b16 %v3527
        %v4116 = vunpack.c.l.b16 %v3528
        %v4117 = vunpack.c.h.b16 %v3528
        %v4118 = vunpack.c.l.b16 %v3529
        %v4119 = vunpack.c.h.b16 %v3529
        %v4120 = vunpack.c.l.b16 %v3530
        %v4121 = vunpack.c.h.b16 %v3530
        %v4122 = vunpack.c.l.b16 %v3531
        %v4123 = vunpack.c.h.b16 %v3531
        %v4124 = vunpack.c.l.b16 %v3532
        %v4125 = vunpack.c.h.b16 %v3532
        %v4126 = vunpack.c.l.b16 %v3533
        %v4127 = vunpack.c.h.b16 %v3533
        %v4128 = vunpack.c.l.b16 %v3534
        %v4129 = vunpack.c.h.b16 %v3534
        %v4130 = vunpack.c.l.b16 %v3535
        %v4131 = vunpack.c.h.b16 %v3535
        %v4132 = vunpack.c.l.b16 %v3536
        %v4133 = vunpack.c.h.b16 %v3536
        %v4134 = vunpack.c.l.b16 %v3537
        %v4135 = vunpack.c.h.b16 %v3537
        %v4136 = vunpack.c.l.b16 %v3538
        %v4137 = vunpack.c.h.b16 %v3538
        %v4138 = vunpack.c.l.b16 %v3539
        %v4139 = vunpack.c.h.b16 %v3539
        %v4140 = vunpack.c.l.b16 %v3540
        %v4141 = vunpack.c.h.b16 %v3540
        %v4142 = vunpack.c.l.b16 %v3541
        %v4143 = vunpack.c.h.b16 %v3541
        %v4144 = vunpack.c.l.b16 %v3542
        %v4145 = vunpack.c.h.b16 %v3542
        %v4146 = vunpack.c.l.b16 %v3543
        %v4147 = vunpack.c.h.b16 %v3543
        %v4148 = vunpack.c.l.b16 %v3544
        %v4149 = vunpack.c.h.b16 %v3544
        %v4150 = vunpack.c.l.b16 %v3545
        %v4151 = vunpack.c.h.b16 %v3545
        %v4152 = vunpack.c.l.b16 %v3546
        %v4153 = vunpack.c.h.b16 %v3546
        %v4154 = vunpack.c.l.b16 %v3547
        %v4155 = vunpack.c.h.b16 %v3547
        %v4156 = vunpack.c.l.b16 %v3548
        %v4157 = vunpack.c.h.b16 %v3548
        %v4158 = vunpack.c.l.b16 %v3549
        %v4159 = vunpack.c.h.b16 %v3549
        %v4160 = vunpack.c.l.b16 %v3550
        %v4161 = vunpack.c.h.b16 %v3550
        %v4162 = vunpack.c.l.b16 %v3551
        %v4163 = vunpack.c.h.b16 %v3551
        %v4164 = vunpack.c.l.b16 %v3552
        %v4165 = vunpack.c.h.b16 %v3552
        %v4166 = vunpack.c.l.b16 %v3553
        %v4167 = vunpack.c.h.b16 %v3553
        %v4168 = vunpack.c.l.b16 %v3554
        %v4169 = vunpack.c.h.b16 %v3554
        %v4170 = vunpack.c.l.b16 %v3555
        %v4171 = vunpack.c.h.b16 %v3555
        %v4172 = vpack.c.b16 %v4030, %v4028
        %v4173 = vpack.c.b16 %v4031, %v4029
        %v4174 = vpack.c.b16 %v4034, %v4032
        %v4175 = vpack.c.b16 %v4035, %v4033
        %v4176 = vpack.c.b16 %v4038, %v4036
        %v4177 = vpack.c.b16 %v4039, %v4037
        %v4178 = vpack.c.b16 %v4042, %v4040
        %v4179 = vpack.c.b16 %v4043, %v4041
        %v4180 = vpack.c.b16 %v4046, %v4044
        %v4181 = vpack.c.b16 %v4047, %v4045
        %v4182 = vpack.c.b16 %v4050, %v4048
        %v4183 = vpack.c.b16 %v4051, %v4049
        %v4184 = vpack.c.b16 %v4054, %v4052
        %v4185 = vpack.c.b16 %v4055, %v4053
        %v4186 = vpack.c.b16 %v4058, %v4056
        %v4187 = vpack.c.b16 %v4059, %v4057
        %v4188 = vpack.c.b16 %v4062, %v4060
        %v4189 = vpack.c.b16 %v4063, %v4061
        %v4190 = vpack.c.b16 %v4066, %v4064
        %v4191 = vpack.c.b16 %v4067, %v4065
        %v4192 = vpack.c.b16 %v4070, %v4068
        %v4193 = vpack.c.b16 %v4071, %v4069
        %v4194 = vpack.c.b16 %v4074, %v4072
        %v4195 = vpack.c.b16 %v4075, %v4073
        %v4196 = vpack.c.b16 %v4078, %v4076
        %v4197 = vpack.c.b16 %v4079, %v4077
        %v4198 = vpack.c.b16 %v4082, %v4080
        %v4199 = vpack.c.b16 %v4083, %v4081
        %v4200 = vpack.c.b16 %v4086, %v4084
        %v4201 = vpack.c.b16 %v4087, %v4085
        %v4202 = vpack.c.b16 %v4090, %v4088
        %v4203 = vpack.c.b16 %v4091, %v4089
        %v4204 = vpack.c.b16 %v4094, %v4092
        %v4205 = vpack.c.b16 %v4095, %v4093
        %v4206 = vpack.c.b16 %v4098, %v4096
        %v4207 = vpack.c.b16 %v4099, %v4097
        %v4208 = vpack.c.b16 %v4102, %v4100
        %v4209 = vpack.c.b16 %v4103, %v4101
        %v4210 = vpack.c.b16 %v4106, %v4104
        %v4211 = vpack.c.b16 %v4107, %v4105
        %v4212 = vpack.c.b16 %v4110, %v4108
        %v4213 = vpack.c.b16 %v4111, %v4109
        %v4214 = vpack.c.b16 %v4114, %v4112
        %v4215 = vpack.c.b16 %v4115, %v4113
        %v4216 = vpack.c.b16 %v4118, %v4116
        %v4217 = vpack.c.b16 %v4119, %v4117
        %v4218 = vpack.c.b16 %v4122, %v4120
        %v4219 = vpack.c.b16 %v4123, %v4121
        %v4220 = vpack.c.b16 %v4126, %v4124
        %v4221 = vpack.c.b16 %v4127, %v4125
        %v4222 = vpack.c.b16 %v4130, %v4128
        %v4223 = vpack.c.b16 %v4131, %v4129
        %v4224 = vpack.c.b16 %v4134, %v4132
        %v4225 = vpack.c.b16 %v4135, %v4133
        %v4226 = vpack.c.b16 %v4138, %v4136
        %v4227 = vpack.c.b16 %v4139, %v4137
        %v4228 = vpack.c.b16 %v4142, %v4140
        %v4229 = vpack.c.b16 %v4143, %v4141
        %v4230 = vpack.c.b16 %v4146, %v4144
        %v4231 = vpack.c.b16 %v4147, %v4145
        %v4232 = vpack.c.b16 %v4150, %v4148
        %v4233 = vpack.c.b16 %v4151, %v4149
        %v4234 = vpack.c.b16 %v4154, %v4152
        %v4235 = vpack.c.b16 %v4155, %v4153
        %v4236 = vpack.c.b16 %v4158, %v4156
        %v4237 = vpack.c.b16 %v4159, %v4157
        %v4238 = vpack.c.b16 %v4162, %v4160
        %v4239 = vpack.c.b16 %v4163, %v4161
        %v4240 = vpack.c.b16 %v4166, %v4164
        %v4241 = vpack.c.b16 %v4167, %v4165
        %v4242 = vpack.c.b16 %v4170, %v4168
        %v4243 = vpack.c.b16 %v4171, %v4169
        %v4317 = vsel %vm835, %v3816, 0
        %v4320 = vsel %vm835, %v3821, 0
        %v4323 = vsel %vm835, %v3826, 0
        %v4326 = vsel %vm835, %v3831, 0
        %v4329 = vsel %vm835, %v3836, 0
        %v4332 = vsel %vm835, %v3841, 0
        %v4335 = vsel %vm835, %v3846, 0
        %v4338 = vsel %vm835, %v3851, 0
        %v4341 = vsel %vm835, %v3856, 0
        %v4344 = vsel %vm835, %v3861, 0
        %v4347 = vsel %vm835, %v3866, 0
        %v4350 = vsel %vm835, %v3871, 0
        %v4353 = vsel %vm835, %v3876, 0
        %v4356 = vsel %vm835, %v3881, 0
        %v4359 = vsel %vm835, %v3886, 0
        %v4362 = vsel %vm835, %v3891, 0
        %4364 = vmatpush.bf16.msra.mxu0 %v4186
        %4365 = vmatpush.bf16.msra.mxu0 %v4184
        %4366 = vmatpush.bf16.msra.mxu0 %v4182
        %4367 = vmatpush.bf16.msra.mxu0 %v4180
        %4368 = vmatpush.bf16.msra.mxu0 %v4178
        %4369 = vmatpush.bf16.msra.mxu0 %v4176
        %4370 = vmatpush.bf16.msra.mxu0 %v4174
        %4371 = vmatpush.bf16.msra.mxu0 %v4172
        %4372 = vmatmul.bf16.gmra.mxu0 %v3812
        %v4373 = vpop.f32.mrf.mxu0
        %v4374 = vadd.f32 0.0, %v4373
        %v4375 = vpop.f32.mrf.mxu0
        %v4376 = vadd.f32 0.0, %v4375
        %4377 = vmatmul.bf16.gmra.mxu0 %v3817
        %v4378 = vpop.f32.mrf.mxu0
        %v4379 = vadd.f32 0.0, %v4378
        %v4380 = vpop.f32.mrf.mxu0
        %v4381 = vadd.f32 0.0, %v4380
        %4382 = vmatmul.bf16.gmra.mxu0 %v3822
        %v4383 = vpop.f32.mrf.mxu0
        %v4384 = vadd.f32 0.0, %v4383
        %v4385 = vpop.f32.mrf.mxu0
        %v4386 = vadd.f32 0.0, %v4385
        %4387 = vmatmul.bf16.gmra.mxu0 %v3827
        %v4388 = vpop.f32.mrf.mxu0
        %v4389 = vadd.f32 0.0, %v4388
        %v4390 = vpop.f32.mrf.mxu0
        %v4391 = vadd.f32 0.0, %v4390
        %4392 = vmatmul.bf16.gmra.mxu0 %v3832
        %v4393 = vpop.f32.mrf.mxu0
        %v4394 = vadd.f32 0.0, %v4393
        %v4395 = vpop.f32.mrf.mxu0
        %v4396 = vadd.f32 0.0, %v4395
        %4397 = vmatmul.bf16.gmra.mxu0 %v3837
        %v4398 = vpop.f32.mrf.mxu0
        %v4399 = vadd.f32 0.0, %v4398
        %v4400 = vpop.f32.mrf.mxu0
        %v4401 = vadd.f32 0.0, %v4400
        %4402 = vmatmul.bf16.gmra.mxu0 %v3842
        %v4403 = vpop.f32.mrf.mxu0
        %v4404 = vadd.f32 0.0, %v4403
        %v4405 = vpop.f32.mrf.mxu0
        %v4406 = vadd.f32 0.0, %v4405
        %4407 = vmatmul.bf16.gmra.mxu0 %v3847
        %v4408 = vpop.f32.mrf.mxu0
        %v4409 = vadd.f32 0.0, %v4408
        %v4410 = vpop.f32.mrf.mxu0
        %v4411 = vadd.f32 0.0, %v4410
        %4412 = vmatmul.bf16.gmra.mxu0 %v3852
        %v4413 = vpop.f32.mrf.mxu0
        %v4414 = vadd.f32 0.0, %v4413
        %v4415 = vpop.f32.mrf.mxu0
        %v4416 = vadd.f32 0.0, %v4415
        %4417 = vmatmul.bf16.gmra.mxu0 %v3857
        %v4418 = vpop.f32.mrf.mxu0
        %v4419 = vadd.f32 0.0, %v4418
        %v4420 = vpop.f32.mrf.mxu0
        %v4421 = vadd.f32 0.0, %v4420
        %4422 = vmatmul.bf16.gmra.mxu0 %v3862
        %v4423 = vpop.f32.mrf.mxu0
        %v4424 = vadd.f32 0.0, %v4423
        %v4425 = vpop.f32.mrf.mxu0
        %v4426 = vadd.f32 0.0, %v4425
        %4427 = vmatmul.bf16.gmra.mxu0 %v3867
        %v4428 = vpop.f32.mrf.mxu0
        %v4429 = vadd.f32 0.0, %v4428
        %v4430 = vpop.f32.mrf.mxu0
        %v4431 = vadd.f32 0.0, %v4430
        %4432 = vmatmul.bf16.gmra.mxu0 %v3872
        %v4433 = vpop.f32.mrf.mxu0
        %v4434 = vadd.f32 0.0, %v4433
        %v4435 = vpop.f32.mrf.mxu0
        %v4436 = vadd.f32 0.0, %v4435
        %4437 = vmatmul.bf16.gmra.mxu0 %v3877
        %v4438 = vpop.f32.mrf.mxu0
        %v4439 = vadd.f32 0.0, %v4438
        %v4440 = vpop.f32.mrf.mxu0
        %v4441 = vadd.f32 0.0, %v4440
        %4442 = vmatmul.bf16.gmra.mxu0 %v3882
        %v4443 = vpop.f32.mrf.mxu0
        %v4444 = vadd.f32 0.0, %v4443
        %v4445 = vpop.f32.mrf.mxu0
        %v4446 = vadd.f32 0.0, %v4445
        %4447 = vmatmul.bf16.gmra.mxu0 %v3887
        %v4448 = vpop.f32.mrf.mxu0
        %v4449 = vadd.f32 0.0, %v4448
        %v4450 = vpop.f32.mrf.mxu0
        %v4451 = vadd.f32 0.0, %v4450
        %4452 = vdwg.mxu0
        %4453 = vmatpush.bf16.msra.mxu0 %v4202
        %4454 = vmatpush.bf16.msra.mxu0 %v4200
        %4455 = vmatpush.bf16.msra.mxu0 %v4198
        %4456 = vmatpush.bf16.msra.mxu0 %v4196
        %4457 = vmatpush.bf16.msra.mxu0 %v4194
        %4458 = vmatpush.bf16.msra.mxu0 %v4192
        %4459 = vmatpush.bf16.msra.mxu0 %v4190
        %4460 = vmatpush.bf16.msra.mxu0 %v4188
        %4461 = vmatmul.bf16.gmra.mxu0 %v3813
        %v4462 = vpop.f32.mrf.mxu0
        %v4463 = vadd.f32 %v4374, %v4462
        %v4464 = vpop.f32.mrf.mxu0
        %v4465 = vadd.f32 %v4376, %v4464
        %4466 = vmatmul.bf16.gmra.mxu0 %v3818
        %v4467 = vpop.f32.mrf.mxu0
        %v4468 = vadd.f32 %v4379, %v4467
        %v4469 = vpop.f32.mrf.mxu0
        %v4470 = vadd.f32 %v4381, %v4469
        %4471 = vmatmul.bf16.gmra.mxu0 %v3823
        %v4472 = vpop.f32.mrf.mxu0
        %v4473 = vadd.f32 %v4384, %v4472
        %v4474 = vpop.f32.mrf.mxu0
        %v4475 = vadd.f32 %v4386, %v4474
        %4476 = vmatmul.bf16.gmra.mxu0 %v3828
        %v4477 = vpop.f32.mrf.mxu0
        %v4478 = vadd.f32 %v4389, %v4477
        %v4479 = vpop.f32.mrf.mxu0
        %v4480 = vadd.f32 %v4391, %v4479
        %4481 = vmatmul.bf16.gmra.mxu0 %v3833
        %v4482 = vpop.f32.mrf.mxu0
        %v4483 = vadd.f32 %v4394, %v4482
        %v4484 = vpop.f32.mrf.mxu0
        %v4485 = vadd.f32 %v4396, %v4484
        %4486 = vmatmul.bf16.gmra.mxu0 %v3838
        %v4487 = vpop.f32.mrf.mxu0
        %v4488 = vadd.f32 %v4399, %v4487
        %v4489 = vpop.f32.mrf.mxu0
        %v4490 = vadd.f32 %v4401, %v4489
        %4491 = vmatmul.bf16.gmra.mxu0 %v3843
        %v4492 = vpop.f32.mrf.mxu0
        %v4493 = vadd.f32 %v4404, %v4492
        %v4494 = vpop.f32.mrf.mxu0
        %v4495 = vadd.f32 %v4406, %v4494
        %4496 = vmatmul.bf16.gmra.mxu0 %v3848
        %v4497 = vpop.f32.mrf.mxu0
        %v4498 = vadd.f32 %v4409, %v4497
        %v4499 = vpop.f32.mrf.mxu0
        %v4500 = vadd.f32 %v4411, %v4499
        %4501 = vmatmul.bf16.gmra.mxu0 %v3853
        %v4502 = vpop.f32.mrf.mxu0
        %v4503 = vadd.f32 %v4414, %v4502
        %v4504 = vpop.f32.mrf.mxu0
        %v4505 = vadd.f32 %v4416, %v4504
        %4506 = vmatmul.bf16.gmra.mxu0 %v3858
        %v4507 = vpop.f32.mrf.mxu0
        %v4508 = vadd.f32 %v4419, %v4507
        %v4509 = vpop.f32.mrf.mxu0
        %v4510 = vadd.f32 %v4421, %v4509
        %4511 = vmatmul.bf16.gmra.mxu0 %v3863
        %v4512 = vpop.f32.mrf.mxu0
        %v4513 = vadd.f32 %v4424, %v4512
        %v4514 = vpop.f32.mrf.mxu0
        %v4515 = vadd.f32 %v4426, %v4514
        %4516 = vmatmul.bf16.gmra.mxu0 %v3868
        %v4517 = vpop.f32.mrf.mxu0
        %v4518 = vadd.f32 %v4429, %v4517
        %v4519 = vpop.f32.mrf.mxu0
        %v4520 = vadd.f32 %v4431, %v4519
        %4521 = vmatmul.bf16.gmra.mxu0 %v3873
        %v4522 = vpop.f32.mrf.mxu0
        %v4523 = vadd.f32 %v4434, %v4522
        %v4524 = vpop.f32.mrf.mxu0
        %v4525 = vadd.f32 %v4436, %v4524
        %4526 = vmatmul.bf16.gmra.mxu0 %v3878
        %v4527 = vpop.f32.mrf.mxu0
        %v4528 = vadd.f32 %v4439, %v4527
        %v4529 = vpop.f32.mrf.mxu0
        %v4530 = vadd.f32 %v4441, %v4529
        %4531 = vmatmul.bf16.gmra.mxu0 %v3883
        %v4532 = vpop.f32.mrf.mxu0
        %v4533 = vadd.f32 %v4444, %v4532
        %v4534 = vpop.f32.mrf.mxu0
        %v4535 = vadd.f32 %v4446, %v4534
        %4536 = vmatmul.bf16.gmra.mxu0 %v3888
        %v4537 = vpop.f32.mrf.mxu0
        %v4538 = vadd.f32 %v4449, %v4537
        %v4539 = vpop.f32.mrf.mxu0
        %v4540 = vadd.f32 %v4451, %v4539
        %4541 = vdwg.mxu0
        %4542 = vmatpush.bf16.msra.mxu0 %v4218
        %4543 = vmatpush.bf16.msra.mxu0 %v4216
        %4544 = vmatpush.bf16.msra.mxu0 %v4214
        %4545 = vmatpush.bf16.msra.mxu0 %v4212
        %4546 = vmatpush.bf16.msra.mxu0 %v4210
        %4547 = vmatpush.bf16.msra.mxu0 %v4208
        %4548 = vmatpush.bf16.msra.mxu0 %v4206
        %4549 = vmatpush.bf16.msra.mxu0 %v4204
        %4550 = vmatmul.bf16.gmra.mxu0 %v3814
        %v4551 = vpop.f32.mrf.mxu0
        %v4552 = vadd.f32 %v4463, %v4551
        %v4553 = vpop.f32.mrf.mxu0
        %v4554 = vadd.f32 %v4465, %v4553
        %4555 = vmatmul.bf16.gmra.mxu0 %v3819
        %v4556 = vpop.f32.mrf.mxu0
        %v4557 = vadd.f32 %v4468, %v4556
        %v4558 = vpop.f32.mrf.mxu0
        %v4559 = vadd.f32 %v4470, %v4558
        %4560 = vmatmul.bf16.gmra.mxu0 %v3824
        %v4561 = vpop.f32.mrf.mxu0
        %v4562 = vadd.f32 %v4473, %v4561
        %v4563 = vpop.f32.mrf.mxu0
        %v4564 = vadd.f32 %v4475, %v4563
        %4565 = vmatmul.bf16.gmra.mxu0 %v3829
        %v4566 = vpop.f32.mrf.mxu0
        %v4567 = vadd.f32 %v4478, %v4566
        %v4568 = vpop.f32.mrf.mxu0
        %v4569 = vadd.f32 %v4480, %v4568
        %4570 = vmatmul.bf16.gmra.mxu0 %v3834
        %v4571 = vpop.f32.mrf.mxu0
        %v4572 = vadd.f32 %v4483, %v4571
        %v4573 = vpop.f32.mrf.mxu0
        %v4574 = vadd.f32 %v4485, %v4573
        %4575 = vmatmul.bf16.gmra.mxu0 %v3839
        %v4576 = vpop.f32.mrf.mxu0
        %v4577 = vadd.f32 %v4488, %v4576
        %v4578 = vpop.f32.mrf.mxu0
        %v4579 = vadd.f32 %v4490, %v4578
        %4580 = vmatmul.bf16.gmra.mxu0 %v3844
        %v4581 = vpop.f32.mrf.mxu0
        %v4582 = vadd.f32 %v4493, %v4581
        %v4583 = vpop.f32.mrf.mxu0
        %v4584 = vadd.f32 %v4495, %v4583
        %4585 = vmatmul.bf16.gmra.mxu0 %v3849
        %v4586 = vpop.f32.mrf.mxu0
        %v4587 = vadd.f32 %v4498, %v4586
        %v4588 = vpop.f32.mrf.mxu0
        %v4589 = vadd.f32 %v4500, %v4588
        %4590 = vmatmul.bf16.gmra.mxu0 %v3854
        %v4591 = vpop.f32.mrf.mxu0
        %v4592 = vadd.f32 %v4503, %v4591
        %v4593 = vpop.f32.mrf.mxu0
        %v4594 = vadd.f32 %v4505, %v4593
        %4595 = vmatmul.bf16.gmra.mxu0 %v3859
        %v4596 = vpop.f32.mrf.mxu0
        %v4597 = vadd.f32 %v4508, %v4596
        %v4598 = vpop.f32.mrf.mxu0
        %v4599 = vadd.f32 %v4510, %v4598
        %4600 = vmatmul.bf16.gmra.mxu0 %v3864
        %v4601 = vpop.f32.mrf.mxu0
        %v4602 = vadd.f32 %v4513, %v4601
        %v4603 = vpop.f32.mrf.mxu0
        %v4604 = vadd.f32 %v4515, %v4603
        %4605 = vmatmul.bf16.gmra.mxu0 %v3869
        %v4606 = vpop.f32.mrf.mxu0
        %v4607 = vadd.f32 %v4518, %v4606
        %v4608 = vpop.f32.mrf.mxu0
        %v4609 = vadd.f32 %v4520, %v4608
        %4610 = vmatmul.bf16.gmra.mxu0 %v3874
        %v4611 = vpop.f32.mrf.mxu0
        %v4612 = vadd.f32 %v4523, %v4611
        %v4613 = vpop.f32.mrf.mxu0
        %v4614 = vadd.f32 %v4525, %v4613
        %4615 = vmatmul.bf16.gmra.mxu0 %v3879
        %v4616 = vpop.f32.mrf.mxu0
        %v4617 = vadd.f32 %v4528, %v4616
        %v4618 = vpop.f32.mrf.mxu0
        %v4619 = vadd.f32 %v4530, %v4618
        %4620 = vmatmul.bf16.gmra.mxu0 %v3884
        %v4621 = vpop.f32.mrf.mxu0
        %v4622 = vadd.f32 %v4533, %v4621
        %v4623 = vpop.f32.mrf.mxu0
        %v4624 = vadd.f32 %v4535, %v4623
        %4625 = vmatmul.bf16.gmra.mxu0 %v3889
        %v4626 = vpop.f32.mrf.mxu0
        %v4627 = vadd.f32 %v4538, %v4626
        %v4628 = vpop.f32.mrf.mxu0
        %v4629 = vadd.f32 %v4540, %v4628
        %4630 = vdwg.mxu0
        %4631 = vmatpush.bf16.msra.mxu0 %v4234
        %4632 = vmatpush.bf16.msra.mxu0 %v4232
        %4633 = vmatpush.bf16.msra.mxu0 %v4230
        %4634 = vmatpush.bf16.msra.mxu0 %v4228
        %4635 = vmatpush.bf16.msra.mxu0 %v4226
        %4636 = vmatpush.bf16.msra.mxu0 %v4224
        %4637 = vmatpush.bf16.msra.mxu0 %v4222
        %4638 = vmatpush.bf16.msra.mxu0 %v4220
        %4639 = vmatmul.bf16.gmra.mxu0 %v3815
        %v4640 = vpop.f32.mrf.mxu0
        %v4641 = vadd.f32 %v4552, %v4640
        %v4642 = vpop.f32.mrf.mxu0
        %v4643 = vadd.f32 %v4554, %v4642
        %4644 = vmatmul.bf16.gmra.mxu0 %v3820
        %v4645 = vpop.f32.mrf.mxu0
        %v4646 = vadd.f32 %v4557, %v4645
        %v4647 = vpop.f32.mrf.mxu0
        %v4648 = vadd.f32 %v4559, %v4647
        %4649 = vmatmul.bf16.gmra.mxu0 %v3825
        %v4650 = vpop.f32.mrf.mxu0
        %v4651 = vadd.f32 %v4562, %v4650
        %v4652 = vpop.f32.mrf.mxu0
        %v4653 = vadd.f32 %v4564, %v4652
        %4654 = vmatmul.bf16.gmra.mxu0 %v3830
        %v4655 = vpop.f32.mrf.mxu0
        %v4656 = vadd.f32 %v4567, %v4655
        %v4657 = vpop.f32.mrf.mxu0
        %v4658 = vadd.f32 %v4569, %v4657
        %4659 = vmatmul.bf16.gmra.mxu0 %v3835
        %v4660 = vpop.f32.mrf.mxu0
        %v4661 = vadd.f32 %v4572, %v4660
        %v4662 = vpop.f32.mrf.mxu0
        %v4663 = vadd.f32 %v4574, %v4662
        %4664 = vmatmul.bf16.gmra.mxu0 %v3840
        %v4665 = vpop.f32.mrf.mxu0
        %v4666 = vadd.f32 %v4577, %v4665
        %v4667 = vpop.f32.mrf.mxu0
        %v4668 = vadd.f32 %v4579, %v4667
        %4669 = vmatmul.bf16.gmra.mxu0 %v3845
        %v4670 = vpop.f32.mrf.mxu0
        %v4671 = vadd.f32 %v4582, %v4670
        %v4672 = vpop.f32.mrf.mxu0
        %v4673 = vadd.f32 %v4584, %v4672
        %4674 = vmatmul.bf16.gmra.mxu0 %v3850
        %v4675 = vpop.f32.mrf.mxu0
        %v4676 = vadd.f32 %v4587, %v4675
        %v4677 = vpop.f32.mrf.mxu0
        %v4678 = vadd.f32 %v4589, %v4677
        %4679 = vmatmul.bf16.gmra.mxu0 %v3855
        %v4680 = vpop.f32.mrf.mxu0
        %v4681 = vadd.f32 %v4592, %v4680
        %v4682 = vpop.f32.mrf.mxu0
        %v4683 = vadd.f32 %v4594, %v4682
        %4684 = vmatmul.bf16.gmra.mxu0 %v3860
        %v4685 = vpop.f32.mrf.mxu0
        %v4686 = vadd.f32 %v4597, %v4685
        %v4687 = vpop.f32.mrf.mxu0
        %v4688 = vadd.f32 %v4599, %v4687
        %4689 = vmatmul.bf16.gmra.mxu0 %v3865
        %v4690 = vpop.f32.mrf.mxu0
        %v4691 = vadd.f32 %v4602, %v4690
        %v4692 = vpop.f32.mrf.mxu0
        %v4693 = vadd.f32 %v4604, %v4692
        %4694 = vmatmul.bf16.gmra.mxu0 %v3870
        %v4695 = vpop.f32.mrf.mxu0
        %v4696 = vadd.f32 %v4607, %v4695
        %v4697 = vpop.f32.mrf.mxu0
        %v4698 = vadd.f32 %v4609, %v4697
        %4699 = vmatmul.bf16.gmra.mxu0 %v3875
        %v4700 = vpop.f32.mrf.mxu0
        %v4701 = vadd.f32 %v4612, %v4700
        %v4702 = vpop.f32.mrf.mxu0
        %v4703 = vadd.f32 %v4614, %v4702
        %4704 = vmatmul.bf16.gmra.mxu0 %v3880
        %v4705 = vpop.f32.mrf.mxu0
        %v4706 = vadd.f32 %v4617, %v4705
        %v4707 = vpop.f32.mrf.mxu0
        %v4708 = vadd.f32 %v4619, %v4707
        %4709 = vmatmul.bf16.gmra.mxu0 %v3885
        %v4710 = vpop.f32.mrf.mxu0
        %v4711 = vadd.f32 %v4622, %v4710
        %v4712 = vpop.f32.mrf.mxu0
        %v4713 = vadd.f32 %v4624, %v4712
        %4714 = vmatmul.bf16.gmra.mxu0 %v3890
        %v4715 = vpop.f32.mrf.mxu0
        %v4716 = vadd.f32 %v4627, %v4715
        %v4717 = vpop.f32.mrf.mxu0
        %v4718 = vadd.f32 %v4629, %v4717
        %4719 = vdwg.mxu0
        %4720 = vmatpush.bf16.msra.mxu0 0
        %4721 = vmatpush.bf16.msra.mxu0 0
        %4722 = vmatpush.bf16.msra.mxu0 0
        %4723 = vmatpush.bf16.msra.mxu0 0
        %4724 = vmatpush.bf16.msra.mxu0 %v4242
        %4725 = vmatpush.bf16.msra.mxu0 %v4240
        %4726 = vmatpush.bf16.msra.mxu0 %v4238
        %4727 = vmatpush.bf16.msra.mxu0 %v4236
        %4728 = vmatmul.bf16.gmra.mxu0 %v4317
        %v4729 = vpop.f32.mrf.mxu0
        %v4730 = vadd.f32 %v4641, %v4729
        %v4731 = vpop.f32.mrf.mxu0
        %v4732 = vadd.f32 %v4643, %v4731
        %4733 = vmatmul.bf16.gmra.mxu0 %v4320
        %v4734 = vpop.f32.mrf.mxu0
        %v4735 = vadd.f32 %v4646, %v4734
        %v4736 = vpop.f32.mrf.mxu0
        %v4737 = vadd.f32 %v4648, %v4736
        %4738 = vmatmul.bf16.gmra.mxu0 %v4323
        %v4739 = vpop.f32.mrf.mxu0
        %v4740 = vadd.f32 %v4651, %v4739
        %v4741 = vpop.f32.mrf.mxu0
        %v4742 = vadd.f32 %v4653, %v4741
        %4743 = vmatmul.bf16.gmra.mxu0 %v4326
        %v4744 = vpop.f32.mrf.mxu0
        %v4745 = vadd.f32 %v4656, %v4744
        %v4746 = vpop.f32.mrf.mxu0
        %v4747 = vadd.f32 %v4658, %v4746
        %4748 = vmatmul.bf16.gmra.mxu0 %v4329
        %v4749 = vpop.f32.mrf.mxu0
        %v4750 = vadd.f32 %v4661, %v4749
        %v4751 = vpop.f32.mrf.mxu0
        %v4752 = vadd.f32 %v4663, %v4751
        %4753 = vmatmul.bf16.gmra.mxu0 %v4332
        %v4754 = vpop.f32.mrf.mxu0
        %v4755 = vadd.f32 %v4666, %v4754
        %v4756 = vpop.f32.mrf.mxu0
        %v4757 = vadd.f32 %v4668, %v4756
        %4758 = vmatmul.bf16.gmra.mxu0 %v4335
        %v4759 = vpop.f32.mrf.mxu0
        %v4760 = vadd.f32 %v4671, %v4759
        %v4761 = vpop.f32.mrf.mxu0
        %v4762 = vadd.f32 %v4673, %v4761
        %4763 = vmatmul.bf16.gmra.mxu0 %v4338
        %v4764 = vpop.f32.mrf.mxu0
        %v4765 = vadd.f32 %v4676, %v4764
        %v4766 = vpop.f32.mrf.mxu0
        %v4767 = vadd.f32 %v4678, %v4766
        %4768 = vmatmul.bf16.gmra.mxu0 %v4341
        %v4769 = vpop.f32.mrf.mxu0
        %v4770 = vadd.f32 %v4681, %v4769
        %v4771 = vpop.f32.mrf.mxu0
        %v4772 = vadd.f32 %v4683, %v4771
        %4773 = vmatmul.bf16.gmra.mxu0 %v4344
        %v4774 = vpop.f32.mrf.mxu0
        %v4775 = vadd.f32 %v4686, %v4774
        %v4776 = vpop.f32.mrf.mxu0
        %v4777 = vadd.f32 %v4688, %v4776
        %4778 = vmatmul.bf16.gmra.mxu0 %v4347
        %v4779 = vpop.f32.mrf.mxu0
        %v4780 = vadd.f32 %v4691, %v4779
        %v4781 = vpop.f32.mrf.mxu0
        %v4782 = vadd.f32 %v4693, %v4781
        %4783 = vmatmul.bf16.gmra.mxu0 %v4350
        %v4784 = vpop.f32.mrf.mxu0
        %v4785 = vadd.f32 %v4696, %v4784
        %v4786 = vpop.f32.mrf.mxu0
        %v4787 = vadd.f32 %v4698, %v4786
        %4788 = vmatmul.bf16.gmra.mxu0 %v4353
        %v4789 = vpop.f32.mrf.mxu0
        %v4790 = vadd.f32 %v4701, %v4789
        %v4791 = vpop.f32.mrf.mxu0
        %v4792 = vadd.f32 %v4703, %v4791
        %4793 = vmatmul.bf16.gmra.mxu0 %v4356
        %v4794 = vpop.f32.mrf.mxu0
        %v4795 = vadd.f32 %v4706, %v4794
        %v4796 = vpop.f32.mrf.mxu0
        %v4797 = vadd.f32 %v4708, %v4796
        %4798 = vmatmul.bf16.gmra.mxu0 %v4359
        %v4799 = vpop.f32.mrf.mxu0
        %v4800 = vadd.f32 %v4711, %v4799
        %v4801 = vpop.f32.mrf.mxu0
        %v4802 = vadd.f32 %v4713, %v4801
        %4803 = vmatmul.bf16.gmra.mxu0 %v4362
        %v4804 = vpop.f32.mrf.mxu0
        %v4805 = vadd.f32 %v4716, %v4804
        %v4806 = vpop.f32.mrf.mxu0
        %v4807 = vadd.f32 %v4718, %v4806
        %4808 = vdwg.mxu0
        %4809 = vmatpush.bf16.msra.mxu0 %v4187
        %4810 = vmatpush.bf16.msra.mxu0 %v4185
        %4811 = vmatpush.bf16.msra.mxu0 %v4183
        %4812 = vmatpush.bf16.msra.mxu0 %v4181
        %4813 = vmatpush.bf16.msra.mxu0 %v4179
        %4814 = vmatpush.bf16.msra.mxu0 %v4177
        %4815 = vmatpush.bf16.msra.mxu0 %v4175
        %4816 = vmatpush.bf16.msra.mxu0 %v4173
        %4817 = vmatmul.bf16.gmra.mxu0 %v3812
        %v4818 = vpop.f32.mrf.mxu0
        %v4819 = vadd.f32 0.0, %v4818
        %v4820 = vpop.f32.mrf.mxu0
        %v4821 = vadd.f32 0.0, %v4820
        %4822 = vmatmul.bf16.gmra.mxu0 %v3817
        %v4823 = vpop.f32.mrf.mxu0
        %v4824 = vadd.f32 0.0, %v4823
        %v4825 = vpop.f32.mrf.mxu0
        %v4826 = vadd.f32 0.0, %v4825
        %4827 = vmatmul.bf16.gmra.mxu0 %v3822
        %v4828 = vpop.f32.mrf.mxu0
        %v4829 = vadd.f32 0.0, %v4828
        %v4830 = vpop.f32.mrf.mxu0
        %v4831 = vadd.f32 0.0, %v4830
        %4832 = vmatmul.bf16.gmra.mxu0 %v3827
        %v4833 = vpop.f32.mrf.mxu0
        %v4834 = vadd.f32 0.0, %v4833
        %v4835 = vpop.f32.mrf.mxu0
        %v4836 = vadd.f32 0.0, %v4835
        %4837 = vmatmul.bf16.gmra.mxu0 %v3832
        %v4838 = vpop.f32.mrf.mxu0
        %v4839 = vadd.f32 0.0, %v4838
        %v4840 = vpop.f32.mrf.mxu0
        %v4841 = vadd.f32 0.0, %v4840
        %4842 = vmatmul.bf16.gmra.mxu0 %v3837
        %v4843 = vpop.f32.mrf.mxu0
        %v4844 = vadd.f32 0.0, %v4843
        %v4845 = vpop.f32.mrf.mxu0
        %v4846 = vadd.f32 0.0, %v4845
        %4847 = vmatmul.bf16.gmra.mxu0 %v3842
        %v4848 = vpop.f32.mrf.mxu0
        %v4849 = vadd.f32 0.0, %v4848
        %v4850 = vpop.f32.mrf.mxu0
        %v4851 = vadd.f32 0.0, %v4850
        %4852 = vmatmul.bf16.gmra.mxu0 %v3847
        %v4853 = vpop.f32.mrf.mxu0
        %v4854 = vadd.f32 0.0, %v4853
        %v4855 = vpop.f32.mrf.mxu0
        %v4856 = vadd.f32 0.0, %v4855
        %4857 = vmatmul.bf16.gmra.mxu0 %v3852
        %v4858 = vpop.f32.mrf.mxu0
        %v4859 = vadd.f32 0.0, %v4858
        %v4860 = vpop.f32.mrf.mxu0
        %v4861 = vadd.f32 0.0, %v4860
        %4862 = vmatmul.bf16.gmra.mxu0 %v3857
        %v4863 = vpop.f32.mrf.mxu0
        %v4864 = vadd.f32 0.0, %v4863
        %v4865 = vpop.f32.mrf.mxu0
        %v4866 = vadd.f32 0.0, %v4865
        %4867 = vmatmul.bf16.gmra.mxu0 %v3862
        %v4868 = vpop.f32.mrf.mxu0
        %v4869 = vadd.f32 0.0, %v4868
        %v4870 = vpop.f32.mrf.mxu0
        %v4871 = vadd.f32 0.0, %v4870
        %4872 = vmatmul.bf16.gmra.mxu0 %v3867
        %v4873 = vpop.f32.mrf.mxu0
        %v4874 = vadd.f32 0.0, %v4873
        %v4875 = vpop.f32.mrf.mxu0
        %v4876 = vadd.f32 0.0, %v4875
        %4877 = vmatmul.bf16.gmra.mxu0 %v3872
        %v4878 = vpop.f32.mrf.mxu0
        %v4879 = vadd.f32 0.0, %v4878
        %v4880 = vpop.f32.mrf.mxu0
        %v4881 = vadd.f32 0.0, %v4880
        %4882 = vmatmul.bf16.gmra.mxu0 %v3877
        %v4883 = vpop.f32.mrf.mxu0
        %v4884 = vadd.f32 0.0, %v4883
        %v4885 = vpop.f32.mrf.mxu0
        %v4886 = vadd.f32 0.0, %v4885
        %4887 = vmatmul.bf16.gmra.mxu0 %v3882
        %v4888 = vpop.f32.mrf.mxu0
        %v4889 = vadd.f32 0.0, %v4888
        %v4890 = vpop.f32.mrf.mxu0
        %v4891 = vadd.f32 0.0, %v4890
        %4892 = vmatmul.bf16.gmra.mxu0 %v3887
        %v4893 = vpop.f32.mrf.mxu0
        %v4894 = vadd.f32 0.0, %v4893
        %v4895 = vpop.f32.mrf.mxu0
        %v4896 = vadd.f32 0.0, %v4895
        %4897 = vdwg.mxu0
        %4898 = vmatpush.bf16.msra.mxu0 %v4203
        %4899 = vmatpush.bf16.msra.mxu0 %v4201
        %4900 = vmatpush.bf16.msra.mxu0 %v4199
        %4901 = vmatpush.bf16.msra.mxu0 %v4197
        %4902 = vmatpush.bf16.msra.mxu0 %v4195
        %4903 = vmatpush.bf16.msra.mxu0 %v4193
        %4904 = vmatpush.bf16.msra.mxu0 %v4191
        %4905 = vmatpush.bf16.msra.mxu0 %v4189
        %4906 = vmatmul.bf16.gmra.mxu0 %v3813
        %v4907 = vpop.f32.mrf.mxu0
        %v4908 = vadd.f32 %v4819, %v4907
        %v4909 = vpop.f32.mrf.mxu0
        %v4910 = vadd.f32 %v4821, %v4909
        %4911 = vmatmul.bf16.gmra.mxu0 %v3818
        %v4912 = vpop.f32.mrf.mxu0
        %v4913 = vadd.f32 %v4824, %v4912
        %v4914 = vpop.f32.mrf.mxu0
        %v4915 = vadd.f32 %v4826, %v4914
        %4916 = vmatmul.bf16.gmra.mxu0 %v3823
        %v4917 = vpop.f32.mrf.mxu0
        %v4918 = vadd.f32 %v4829, %v4917
        %v4919 = vpop.f32.mrf.mxu0
        %v4920 = vadd.f32 %v4831, %v4919
        %4921 = vmatmul.bf16.gmra.mxu0 %v3828
        %v4922 = vpop.f32.mrf.mxu0
        %v4923 = vadd.f32 %v4834, %v4922
        %v4924 = vpop.f32.mrf.mxu0
        %v4925 = vadd.f32 %v4836, %v4924
        %4926 = vmatmul.bf16.gmra.mxu0 %v3833
        %v4927 = vpop.f32.mrf.mxu0
        %v4928 = vadd.f32 %v4839, %v4927
        %v4929 = vpop.f32.mrf.mxu0
        %v4930 = vadd.f32 %v4841, %v4929
        %4931 = vmatmul.bf16.gmra.mxu0 %v3838
        %v4932 = vpop.f32.mrf.mxu0
        %v4933 = vadd.f32 %v4844, %v4932
        %v4934 = vpop.f32.mrf.mxu0
        %v4935 = vadd.f32 %v4846, %v4934
        %4936 = vmatmul.bf16.gmra.mxu0 %v3843
        %v4937 = vpop.f32.mrf.mxu0
        %v4938 = vadd.f32 %v4849, %v4937
        %v4939 = vpop.f32.mrf.mxu0
        %v4940 = vadd.f32 %v4851, %v4939
        %4941 = vmatmul.bf16.gmra.mxu0 %v3848
        %v4942 = vpop.f32.mrf.mxu0
        %v4943 = vadd.f32 %v4854, %v4942
        %v4944 = vpop.f32.mrf.mxu0
        %v4945 = vadd.f32 %v4856, %v4944
        %4946 = vmatmul.bf16.gmra.mxu0 %v3853
        %v4947 = vpop.f32.mrf.mxu0
        %v4948 = vadd.f32 %v4859, %v4947
        %v4949 = vpop.f32.mrf.mxu0
        %v4950 = vadd.f32 %v4861, %v4949
        %4951 = vmatmul.bf16.gmra.mxu0 %v3858
        %v4952 = vpop.f32.mrf.mxu0
        %v4953 = vadd.f32 %v4864, %v4952
        %v4954 = vpop.f32.mrf.mxu0
        %v4955 = vadd.f32 %v4866, %v4954
        %4956 = vmatmul.bf16.gmra.mxu0 %v3863
        %v4957 = vpop.f32.mrf.mxu0
        %v4958 = vadd.f32 %v4869, %v4957
        %v4959 = vpop.f32.mrf.mxu0
        %v4960 = vadd.f32 %v4871, %v4959
        %4961 = vmatmul.bf16.gmra.mxu0 %v3868
        %v4962 = vpop.f32.mrf.mxu0
        %v4963 = vadd.f32 %v4874, %v4962
        %v4964 = vpop.f32.mrf.mxu0
        %v4965 = vadd.f32 %v4876, %v4964
        %4966 = vmatmul.bf16.gmra.mxu0 %v3873
        %v4967 = vpop.f32.mrf.mxu0
        %v4968 = vadd.f32 %v4879, %v4967
        %v4969 = vpop.f32.mrf.mxu0
        %v4970 = vadd.f32 %v4881, %v4969
        %4971 = vmatmul.bf16.gmra.mxu0 %v3878
        %v4972 = vpop.f32.mrf.mxu0
        %v4973 = vadd.f32 %v4884, %v4972
        %v4974 = vpop.f32.mrf.mxu0
        %v4975 = vadd.f32 %v4886, %v4974
        %4976 = vmatmul.bf16.gmra.mxu0 %v3883
        %v4977 = vpop.f32.mrf.mxu0
        %v4978 = vadd.f32 %v4889, %v4977
        %v4979 = vpop.f32.mrf.mxu0
        %v4980 = vadd.f32 %v4891, %v4979
        %4981 = vmatmul.bf16.gmra.mxu0 %v3888
        %v4982 = vpop.f32.mrf.mxu0
        %v4983 = vadd.f32 %v4894, %v4982
        %v4984 = vpop.f32.mrf.mxu0
        %v4985 = vadd.f32 %v4896, %v4984
        %4986 = vdwg.mxu0
        %4987 = vmatpush.bf16.msra.mxu0 %v4219
        %4988 = vmatpush.bf16.msra.mxu0 %v4217
        %4989 = vmatpush.bf16.msra.mxu0 %v4215
        %4990 = vmatpush.bf16.msra.mxu0 %v4213
        %4991 = vmatpush.bf16.msra.mxu0 %v4211
        %4992 = vmatpush.bf16.msra.mxu0 %v4209
        %4993 = vmatpush.bf16.msra.mxu0 %v4207
        %4994 = vmatpush.bf16.msra.mxu0 %v4205
        %4995 = vmatmul.bf16.gmra.mxu0 %v3814
        %v4996 = vpop.f32.mrf.mxu0
        %v4997 = vadd.f32 %v4908, %v4996
        %v4998 = vpop.f32.mrf.mxu0
        %v4999 = vadd.f32 %v4910, %v4998
        %5000 = vmatmul.bf16.gmra.mxu0 %v3819
        %v5001 = vpop.f32.mrf.mxu0
        %v5002 = vadd.f32 %v4913, %v5001
        %v5003 = vpop.f32.mrf.mxu0
        %v5004 = vadd.f32 %v4915, %v5003
        %5005 = vmatmul.bf16.gmra.mxu0 %v3824
        %v5006 = vpop.f32.mrf.mxu0
        %v5007 = vadd.f32 %v4918, %v5006
        %v5008 = vpop.f32.mrf.mxu0
        %v5009 = vadd.f32 %v4920, %v5008
        %5010 = vmatmul.bf16.gmra.mxu0 %v3829
        %v5011 = vpop.f32.mrf.mxu0
        %v5012 = vadd.f32 %v4923, %v5011
        %v5013 = vpop.f32.mrf.mxu0
        %v5014 = vadd.f32 %v4925, %v5013
        %5015 = vmatmul.bf16.gmra.mxu0 %v3834
        %v5016 = vpop.f32.mrf.mxu0
        %v5017 = vadd.f32 %v4928, %v5016
        %v5018 = vpop.f32.mrf.mxu0
        %v5019 = vadd.f32 %v4930, %v5018
        %5020 = vmatmul.bf16.gmra.mxu0 %v3839
        %v5021 = vpop.f32.mrf.mxu0
        %v5022 = vadd.f32 %v4933, %v5021
        %v5023 = vpop.f32.mrf.mxu0
        %v5024 = vadd.f32 %v4935, %v5023
        %5025 = vmatmul.bf16.gmra.mxu0 %v3844
        %v5026 = vpop.f32.mrf.mxu0
        %v5027 = vadd.f32 %v4938, %v5026
        %v5028 = vpop.f32.mrf.mxu0
        %v5029 = vadd.f32 %v4940, %v5028
        %5030 = vmatmul.bf16.gmra.mxu0 %v3849
        %v5031 = vpop.f32.mrf.mxu0
        %v5032 = vadd.f32 %v4943, %v5031
        %v5033 = vpop.f32.mrf.mxu0
        %v5034 = vadd.f32 %v4945, %v5033
        %5035 = vmatmul.bf16.gmra.mxu0 %v3854
        %v5036 = vpop.f32.mrf.mxu0
        %v5037 = vadd.f32 %v4948, %v5036
        %v5038 = vpop.f32.mrf.mxu0
        %v5039 = vadd.f32 %v4950, %v5038
        %5040 = vmatmul.bf16.gmra.mxu0 %v3859
        %v5041 = vpop.f32.mrf.mxu0
        %v5042 = vadd.f32 %v4953, %v5041
        %v5043 = vpop.f32.mrf.mxu0
        %v5044 = vadd.f32 %v4955, %v5043
        %5045 = vmatmul.bf16.gmra.mxu0 %v3864
        %v5046 = vpop.f32.mrf.mxu0
        %v5047 = vadd.f32 %v4958, %v5046
        %v5048 = vpop.f32.mrf.mxu0
        %v5049 = vadd.f32 %v4960, %v5048
        %5050 = vmatmul.bf16.gmra.mxu0 %v3869
        %v5051 = vpop.f32.mrf.mxu0
        %v5052 = vadd.f32 %v4963, %v5051
        %v5053 = vpop.f32.mrf.mxu0
        %v5054 = vadd.f32 %v4965, %v5053
        %5055 = vmatmul.bf16.gmra.mxu0 %v3874
        %v5056 = vpop.f32.mrf.mxu0
        %v5057 = vadd.f32 %v4968, %v5056
        %v5058 = vpop.f32.mrf.mxu0
        %v5059 = vadd.f32 %v4970, %v5058
        %5060 = vmatmul.bf16.gmra.mxu0 %v3879
        %v5061 = vpop.f32.mrf.mxu0
        %v5062 = vadd.f32 %v4973, %v5061
        %v5063 = vpop.f32.mrf.mxu0
        %v5064 = vadd.f32 %v4975, %v5063
        %5065 = vmatmul.bf16.gmra.mxu0 %v3884
        %v5066 = vpop.f32.mrf.mxu0
        %v5067 = vadd.f32 %v4978, %v5066
        %v5068 = vpop.f32.mrf.mxu0
        %v5069 = vadd.f32 %v4980, %v5068
        %5070 = vmatmul.bf16.gmra.mxu0 %v3889
        %v5071 = vpop.f32.mrf.mxu0
        %v5072 = vadd.f32 %v4983, %v5071
        %v5073 = vpop.f32.mrf.mxu0
        %v5074 = vadd.f32 %v4985, %v5073
        %5075 = vdwg.mxu0
        %5076 = vmatpush.bf16.msra.mxu0 %v4235
        %5077 = vmatpush.bf16.msra.mxu0 %v4233
        %5078 = vmatpush.bf16.msra.mxu0 %v4231
        %5079 = vmatpush.bf16.msra.mxu0 %v4229
        %5080 = vmatpush.bf16.msra.mxu0 %v4227
        %5081 = vmatpush.bf16.msra.mxu0 %v4225
        %5082 = vmatpush.bf16.msra.mxu0 %v4223
        %5083 = vmatpush.bf16.msra.mxu0 %v4221
        %5084 = vmatmul.bf16.gmra.mxu0 %v3815
        %v5085 = vpop.f32.mrf.mxu0
        %v5086 = vadd.f32 %v4997, %v5085
        %v5087 = vpop.f32.mrf.mxu0
        %v5088 = vadd.f32 %v4999, %v5087
        %5089 = vmatmul.bf16.gmra.mxu0 %v3820
        %v5090 = vpop.f32.mrf.mxu0
        %v5091 = vadd.f32 %v5002, %v5090
        %v5092 = vpop.f32.mrf.mxu0
        %v5093 = vadd.f32 %v5004, %v5092
        %5094 = vmatmul.bf16.gmra.mxu0 %v3825
        %v5095 = vpop.f32.mrf.mxu0
        %v5096 = vadd.f32 %v5007, %v5095
        %v5097 = vpop.f32.mrf.mxu0
        %v5098 = vadd.f32 %v5009, %v5097
        %5099 = vmatmul.bf16.gmra.mxu0 %v3830
        %v5100 = vpop.f32.mrf.mxu0
        %v5101 = vadd.f32 %v5012, %v5100
        %v5102 = vpop.f32.mrf.mxu0
        %v5103 = vadd.f32 %v5014, %v5102
        %5104 = vmatmul.bf16.gmra.mxu0 %v3835
        %v5105 = vpop.f32.mrf.mxu0
        %v5106 = vadd.f32 %v5017, %v5105
        %v5107 = vpop.f32.mrf.mxu0
        %v5108 = vadd.f32 %v5019, %v5107
        %5109 = vmatmul.bf16.gmra.mxu0 %v3840
        %v5110 = vpop.f32.mrf.mxu0
        %v5111 = vadd.f32 %v5022, %v5110
        %v5112 = vpop.f32.mrf.mxu0
        %v5113 = vadd.f32 %v5024, %v5112
        %5114 = vmatmul.bf16.gmra.mxu0 %v3845
        %v5115 = vpop.f32.mrf.mxu0
        %v5116 = vadd.f32 %v5027, %v5115
        %v5117 = vpop.f32.mrf.mxu0
        %v5118 = vadd.f32 %v5029, %v5117
        %5119 = vmatmul.bf16.gmra.mxu0 %v3850
        %v5120 = vpop.f32.mrf.mxu0
        %v5121 = vadd.f32 %v5032, %v5120
        %v5122 = vpop.f32.mrf.mxu0
        %v5123 = vadd.f32 %v5034, %v5122
        %5124 = vmatmul.bf16.gmra.mxu0 %v3855
        %v5125 = vpop.f32.mrf.mxu0
        %v5126 = vadd.f32 %v5037, %v5125
        %v5127 = vpop.f32.mrf.mxu0
        %v5128 = vadd.f32 %v5039, %v5127
        %5129 = vmatmul.bf16.gmra.mxu0 %v3860
        %v5130 = vpop.f32.mrf.mxu0
        %v5131 = vadd.f32 %v5042, %v5130
        %v5132 = vpop.f32.mrf.mxu0
        %v5133 = vadd.f32 %v5044, %v5132
        %5134 = vmatmul.bf16.gmra.mxu0 %v3865
        %v5135 = vpop.f32.mrf.mxu0
        %v5136 = vadd.f32 %v5047, %v5135
        %v5137 = vpop.f32.mrf.mxu0
        %v5138 = vadd.f32 %v5049, %v5137
        %5139 = vmatmul.bf16.gmra.mxu0 %v3870
        %v5140 = vpop.f32.mrf.mxu0
        %v5141 = vadd.f32 %v5052, %v5140
        %v5142 = vpop.f32.mrf.mxu0
        %v5143 = vadd.f32 %v5054, %v5142
        %5144 = vmatmul.bf16.gmra.mxu0 %v3875
        %v5145 = vpop.f32.mrf.mxu0
        %v5146 = vadd.f32 %v5057, %v5145
        %v5147 = vpop.f32.mrf.mxu0
        %v5148 = vadd.f32 %v5059, %v5147
        %5149 = vmatmul.bf16.gmra.mxu0 %v3880
        %v5150 = vpop.f32.mrf.mxu0
        %v5151 = vadd.f32 %v5062, %v5150
        %v5152 = vpop.f32.mrf.mxu0
        %v5153 = vadd.f32 %v5064, %v5152
        %5154 = vmatmul.bf16.gmra.mxu0 %v3885
        %v5155 = vpop.f32.mrf.mxu0
        %v5156 = vadd.f32 %v5067, %v5155
        %v5157 = vpop.f32.mrf.mxu0
        %v5158 = vadd.f32 %v5069, %v5157
        %5159 = vmatmul.bf16.gmra.mxu0 %v3890
        %v5160 = vpop.f32.mrf.mxu0
        %v5161 = vadd.f32 %v5072, %v5160
        %v5162 = vpop.f32.mrf.mxu0
        %v5163 = vadd.f32 %v5074, %v5162
        %5164 = vdwg.mxu0
        %5165 = vmatpush.bf16.msra.mxu0 0
        %5166 = vmatpush.bf16.msra.mxu0 0
        %5167 = vmatpush.bf16.msra.mxu0 0
        %5168 = vmatpush.bf16.msra.mxu0 0
        %5169 = vmatpush.bf16.msra.mxu0 %v4243
        %5170 = vmatpush.bf16.msra.mxu0 %v4241
        %5171 = vmatpush.bf16.msra.mxu0 %v4239
        %5172 = vmatpush.bf16.msra.mxu0 %v4237
        %5173 = vmatmul.bf16.gmra.mxu0 %v4317
        %v5174 = vpop.f32.mrf.mxu0
        %v5175 = vadd.f32 %v5086, %v5174
        %v5176 = vpop.f32.mrf.mxu0
        %v5177 = vadd.f32 %v5088, %v5176
        %5178 = vmatmul.bf16.gmra.mxu0 %v4320
        %v5179 = vpop.f32.mrf.mxu0
        %v5180 = vadd.f32 %v5091, %v5179
        %v5181 = vpop.f32.mrf.mxu0
        %v5182 = vadd.f32 %v5093, %v5181
        %5183 = vmatmul.bf16.gmra.mxu0 %v4323
        %v5184 = vpop.f32.mrf.mxu0
        %v5185 = vadd.f32 %v5096, %v5184
        %v5186 = vpop.f32.mrf.mxu0
        %v5187 = vadd.f32 %v5098, %v5186
        %5188 = vmatmul.bf16.gmra.mxu0 %v4326
        %v5189 = vpop.f32.mrf.mxu0
        %v5190 = vadd.f32 %v5101, %v5189
        %v5191 = vpop.f32.mrf.mxu0
        %v5192 = vadd.f32 %v5103, %v5191
        %5193 = vmatmul.bf16.gmra.mxu0 %v4329
        %v5194 = vpop.f32.mrf.mxu0
        %v5195 = vadd.f32 %v5106, %v5194
        %v5196 = vpop.f32.mrf.mxu0
        %v5197 = vadd.f32 %v5108, %v5196
        %5198 = vmatmul.bf16.gmra.mxu0 %v4332
        %v5199 = vpop.f32.mrf.mxu0
        %v5200 = vadd.f32 %v5111, %v5199
        %v5201 = vpop.f32.mrf.mxu0
        %v5202 = vadd.f32 %v5113, %v5201
        %5203 = vmatmul.bf16.gmra.mxu0 %v4335
        %v5204 = vpop.f32.mrf.mxu0
        %v5205 = vadd.f32 %v5116, %v5204
        %v5206 = vpop.f32.mrf.mxu0
        %v5207 = vadd.f32 %v5118, %v5206
        %5208 = vmatmul.bf16.gmra.mxu0 %v4338
        %v5209 = vpop.f32.mrf.mxu0
        %v5210 = vadd.f32 %v5121, %v5209
        %v5211 = vpop.f32.mrf.mxu0
        %v5212 = vadd.f32 %v5123, %v5211
        %5213 = vmatmul.bf16.gmra.mxu0 %v4341
        %v5214 = vpop.f32.mrf.mxu0
        %v5215 = vadd.f32 %v5126, %v5214
        %v5216 = vpop.f32.mrf.mxu0
        %v5217 = vadd.f32 %v5128, %v5216
        %5218 = vmatmul.bf16.gmra.mxu0 %v4344
        %v5219 = vpop.f32.mrf.mxu0
        %v5220 = vadd.f32 %v5131, %v5219
        %v5221 = vpop.f32.mrf.mxu0
        %v5222 = vadd.f32 %v5133, %v5221
        %5223 = vmatmul.bf16.gmra.mxu0 %v4347
        %v5224 = vpop.f32.mrf.mxu0
        %v5225 = vadd.f32 %v5136, %v5224
        %v5226 = vpop.f32.mrf.mxu0
        %v5227 = vadd.f32 %v5138, %v5226
        %5228 = vmatmul.bf16.gmra.mxu0 %v4350
        %v5229 = vpop.f32.mrf.mxu0
        %v5230 = vadd.f32 %v5141, %v5229
        %v5231 = vpop.f32.mrf.mxu0
        %v5232 = vadd.f32 %v5143, %v5231
        %5233 = vmatmul.bf16.gmra.mxu0 %v4353
        %v5234 = vpop.f32.mrf.mxu0
        %v5235 = vadd.f32 %v5146, %v5234
        %v5236 = vpop.f32.mrf.mxu0
        %v5237 = vadd.f32 %v5148, %v5236
        %5238 = vmatmul.bf16.gmra.mxu0 %v4356
        %v5239 = vpop.f32.mrf.mxu0
        %v5240 = vadd.f32 %v5151, %v5239
        %v5241 = vpop.f32.mrf.mxu0
        %v5242 = vadd.f32 %v5153, %v5241
        %5243 = vmatmul.bf16.gmra.mxu0 %v4359
        %v5244 = vpop.f32.mrf.mxu0
        %v5245 = vadd.f32 %v5156, %v5244
        %v5246 = vpop.f32.mrf.mxu0
        %v5247 = vadd.f32 %v5158, %v5246
        %5248 = vmatmul.bf16.gmra.mxu0 %v4362
        %v5249 = vpop.f32.mrf.mxu0
        %v5250 = vadd.f32 %v5161, %v5249
        %v5251 = vpop.f32.mrf.mxu0
        %v5252 = vadd.f32 %v5163, %v5251
        %5253 = vdwg.mxu0
        %v5254 = vmul.f32 %v4730, %v1064
        %v5255 = vmul.f32 %v5175, %v1065
        %v5256 = vmul.f32 %v4732, %v1064
        %v5257 = vmul.f32 %v5177, %v1065
        %v5258 = vmul.f32 %v4735, %v1064
        %v5259 = vmul.f32 %v5180, %v1065
        %v5260 = vmul.f32 %v4737, %v1064
        %v5261 = vmul.f32 %v5182, %v1065
        %v5262 = vmul.f32 %v4740, %v1064
        %v5263 = vmul.f32 %v5185, %v1065
        %v5264 = vmul.f32 %v4742, %v1064
        %v5265 = vmul.f32 %v5187, %v1065
        %v5266 = vmul.f32 %v4745, %v1064
        %v5267 = vmul.f32 %v5190, %v1065
        %v5268 = vmul.f32 %v4747, %v1064
        %v5269 = vmul.f32 %v5192, %v1065
        %v5270 = vmul.f32 %v4750, %v1064
        %v5271 = vmul.f32 %v5195, %v1065
        %v5272 = vmul.f32 %v4752, %v1064
        %v5273 = vmul.f32 %v5197, %v1065
        %v5274 = vmul.f32 %v4755, %v1064
        %v5275 = vmul.f32 %v5200, %v1065
        %v5276 = vmul.f32 %v4757, %v1064
        %v5277 = vmul.f32 %v5202, %v1065
        %v5278 = vmul.f32 %v4760, %v1064
        %v5279 = vmul.f32 %v5205, %v1065
        %v5280 = vmul.f32 %v4762, %v1064
        %v5281 = vmul.f32 %v5207, %v1065
        %v5282 = vmul.f32 %v4765, %v1064
        %v5283 = vmul.f32 %v5210, %v1065
        %v5284 = vmul.f32 %v4767, %v1064
        %v5285 = vmul.f32 %v5212, %v1065
        %v5286 = vmul.f32 %v4770, %v1064
        %v5287 = vmul.f32 %v5215, %v1065
        %v5288 = vmul.f32 %v4772, %v1064
        %v5289 = vmul.f32 %v5217, %v1065
        %v5290 = vmul.f32 %v4775, %v1064
        %v5291 = vmul.f32 %v5220, %v1065
        %v5292 = vmul.f32 %v4777, %v1064
        %v5293 = vmul.f32 %v5222, %v1065
        %v5294 = vmul.f32 %v4780, %v1064
        %v5295 = vmul.f32 %v5225, %v1065
        %v5296 = vmul.f32 %v4782, %v1064
        %v5297 = vmul.f32 %v5227, %v1065
        %v5298 = vmul.f32 %v4785, %v1064
        %v5299 = vmul.f32 %v5230, %v1065
        %v5300 = vmul.f32 %v4787, %v1064
        %v5301 = vmul.f32 %v5232, %v1065
        %v5302 = vmul.f32 %v4790, %v1064
        %v5303 = vmul.f32 %v5235, %v1065
        %v5304 = vmul.f32 %v4792, %v1064
        %v5305 = vmul.f32 %v5237, %v1065
        %v5306 = vmul.f32 %v4795, %v1064
        %v5307 = vmul.f32 %v5240, %v1065
        %v5308 = vmul.f32 %v4797, %v1064
        %v5309 = vmul.f32 %v5242, %v1065
        %v5310 = vmul.f32 %v4800, %v1064
        %v5311 = vmul.f32 %v5245, %v1065
        %v5312 = vmul.f32 %v4802, %v1064
        %v5313 = vmul.f32 %v5247, %v1065
        %v5314 = vmul.f32 %v4805, %v1064
        %v5315 = vmul.f32 %v5250, %v1065
        %v5316 = vmul.f32 %v4807, %v1064
        %v5317 = vmul.f32 %v5252, %v1065
        %v5318 = vadd.f32 %v5254, %v1134
        %v5319 = vadd.f32 %v5255, %v1135
        %v5320 = vadd.f32 %v5256, %v1134
        %v5321 = vadd.f32 %v5257, %v1135
        %v5322 = vadd.f32 %v5258, %v1134
        %v5323 = vadd.f32 %v5259, %v1135
        %v5324 = vadd.f32 %v5260, %v1134
        %v5325 = vadd.f32 %v5261, %v1135
        %v5326 = vadd.f32 %v5262, %v1134
        %v5327 = vadd.f32 %v5263, %v1135
        %v5328 = vadd.f32 %v5264, %v1134
        %v5329 = vadd.f32 %v5265, %v1135
        %v5330 = vadd.f32 %v5266, %v1134
        %v5331 = vadd.f32 %v5267, %v1135
        %v5332 = vadd.f32 %v5268, %v1134
        %v5333 = vadd.f32 %v5269, %v1135
        %v5334 = vadd.f32 %v5270, %v1134
        %v5335 = vadd.f32 %v5271, %v1135
        %v5336 = vadd.f32 %v5272, %v1134
        %v5337 = vadd.f32 %v5273, %v1135
        %v5338 = vadd.f32 %v5274, %v1134
        %v5339 = vadd.f32 %v5275, %v1135
        %v5340 = vadd.f32 %v5276, %v1134
        %v5341 = vadd.f32 %v5277, %v1135
        %v5342 = vadd.f32 %v5278, %v1134
        %v5343 = vadd.f32 %v5279, %v1135
        %v5344 = vadd.f32 %v5280, %v1134
        %v5345 = vadd.f32 %v5281, %v1135
        %v5346 = vadd.f32 %v5282, %v1134
        %v5347 = vadd.f32 %v5283, %v1135
        %v5348 = vadd.f32 %v5284, %v1134
        %v5349 = vadd.f32 %v5285, %v1135
        %v5350 = vadd.f32 %v5286, %v1134
        %v5351 = vadd.f32 %v5287, %v1135
        %v5352 = vadd.f32 %v5288, %v1134
        %v5353 = vadd.f32 %v5289, %v1135
        %v5354 = vadd.f32 %v5290, %v1134
        %v5355 = vadd.f32 %v5291, %v1135
        %v5356 = vadd.f32 %v5292, %v1134
        %v5357 = vadd.f32 %v5293, %v1135
        %v5358 = vadd.f32 %v5294, %v1134
        %v5359 = vadd.f32 %v5295, %v1135
        %v5360 = vadd.f32 %v5296, %v1134
        %v5361 = vadd.f32 %v5297, %v1135
        %v5362 = vadd.f32 %v5298, %v1134
        %v5363 = vadd.f32 %v5299, %v1135
        %v5364 = vadd.f32 %v5300, %v1134
        %v5365 = vadd.f32 %v5301, %v1135
        %v5366 = vadd.f32 %v5302, %v1134
        %v5367 = vadd.f32 %v5303, %v1135
        %v5368 = vadd.f32 %v5304, %v1134
        %v5369 = vadd.f32 %v5305, %v1135
        %v5370 = vadd.f32 %v5306, %v1134
        %v5371 = vadd.f32 %v5307, %v1135
        %v5372 = vadd.f32 %v5308, %v1134
        %v5373 = vadd.f32 %v5309, %v1135
        %v5374 = vadd.f32 %v5310, %v1134
        %v5375 = vadd.f32 %v5311, %v1135
        %v5376 = vadd.f32 %v5312, %v1134
        %v5377 = vadd.f32 %v5313, %v1135
        %v5378 = vadd.f32 %v5314, %v1134
        %v5379 = vadd.f32 %v5315, %v1135
        %v5380 = vadd.f32 %v5316, %v1134
        %v5381 = vadd.f32 %v5317, %v1135
        %v5382 = vmax.f32 %v5318, 0.0
        %v5383 = vmax.f32 %v5319, 0.0
        %v5384 = vmax.f32 %v5320, 0.0
        %v5385 = vmax.f32 %v5321, 0.0
        %v5386 = vmax.f32 %v5322, 0.0
        %v5387 = vmax.f32 %v5323, 0.0
        %v5388 = vmax.f32 %v5324, 0.0
        %v5389 = vmax.f32 %v5325, 0.0
        %v5390 = vmax.f32 %v5326, 0.0
        %v5391 = vmax.f32 %v5327, 0.0
        %v5392 = vmax.f32 %v5328, 0.0
        %v5393 = vmax.f32 %v5329, 0.0
        %v5394 = vmax.f32 %v5330, 0.0
        %v5395 = vmax.f32 %v5331, 0.0
        %v5396 = vmax.f32 %v5332, 0.0
        %v5397 = vmax.f32 %v5333, 0.0
        %v5398 = vmax.f32 %v5334, 0.0
        %v5399 = vmax.f32 %v5335, 0.0
        %v5400 = vmax.f32 %v5336, 0.0
        %v5401 = vmax.f32 %v5337, 0.0
        %v5402 = vmax.f32 %v5338, 0.0
        %v5403 = vmax.f32 %v5339, 0.0
        %v5404 = vmax.f32 %v5340, 0.0
        %v5405 = vmax.f32 %v5341, 0.0
        %v5406 = vmax.f32 %v5342, 0.0
        %v5407 = vmax.f32 %v5343, 0.0
        %v5408 = vmax.f32 %v5344, 0.0
        %v5409 = vmax.f32 %v5345, 0.0
        %v5410 = vmax.f32 %v5346, 0.0
        %v5411 = vmax.f32 %v5347, 0.0
        %v5412 = vmax.f32 %v5348, 0.0
        %v5413 = vmax.f32 %v5349, 0.0
        %v5414 = vmax.f32 %v5350, 0.0
        %v5415 = vmax.f32 %v5351, 0.0
        %v5416 = vmax.f32 %v5352, 0.0
        %v5417 = vmax.f32 %v5353, 0.0
        %v5418 = vmax.f32 %v5354, 0.0
        %v5419 = vmax.f32 %v5355, 0.0
        %v5420 = vmax.f32 %v5356, 0.0
        %v5421 = vmax.f32 %v5357, 0.0
        %v5422 = vmax.f32 %v5358, 0.0
        %v5423 = vmax.f32 %v5359, 0.0
        %v5424 = vmax.f32 %v5360, 0.0
        %v5425 = vmax.f32 %v5361, 0.0
        %v5426 = vmax.f32 %v5362, 0.0
        %v5427 = vmax.f32 %v5363, 0.0
        %v5428 = vmax.f32 %v5364, 0.0
        %v5429 = vmax.f32 %v5365, 0.0
        %v5430 = vmax.f32 %v5366, 0.0
        %v5431 = vmax.f32 %v5367, 0.0
        %v5432 = vmax.f32 %v5368, 0.0
        %v5433 = vmax.f32 %v5369, 0.0
        %v5434 = vmax.f32 %v5370, 0.0
        %v5435 = vmax.f32 %v5371, 0.0
        %v5436 = vmax.f32 %v5372, 0.0
        %v5437 = vmax.f32 %v5373, 0.0
        %v5438 = vmax.f32 %v5374, 0.0
        %v5439 = vmax.f32 %v5375, 0.0
        %v5440 = vmax.f32 %v5376, 0.0
        %v5441 = vmax.f32 %v5377, 0.0
        %v5442 = vmax.f32 %v5378, 0.0
        %v5443 = vmax.f32 %v5379, 0.0
        %v5444 = vmax.f32 %v5380, 0.0
        %v5445 = vmax.f32 %v5381, 0.0
        %v5446 = vpack.c.bf16 %v5384, %v5382
        %v5447 = vpack.c.bf16 %v5385, %v5383
        %v5448 = vpack.c.bf16 %v5388, %v5386
        %v5449 = vpack.c.bf16 %v5389, %v5387
        %v5450 = vpack.c.bf16 %v5392, %v5390
        %v5451 = vpack.c.bf16 %v5393, %v5391
        %v5452 = vpack.c.bf16 %v5396, %v5394
        %v5453 = vpack.c.bf16 %v5397, %v5395
        %v5454 = vpack.c.bf16 %v5400, %v5398
        %v5455 = vpack.c.bf16 %v5401, %v5399
        %v5456 = vpack.c.bf16 %v5404, %v5402
        %v5457 = vpack.c.bf16 %v5405, %v5403
        %v5458 = vpack.c.bf16 %v5408, %v5406
        %v5459 = vpack.c.bf16 %v5409, %v5407
        %v5460 = vpack.c.bf16 %v5412, %v5410
        %v5461 = vpack.c.bf16 %v5413, %v5411
        %v5462 = vpack.c.bf16 %v5416, %v5414
        %v5463 = vpack.c.bf16 %v5417, %v5415
        %v5464 = vpack.c.bf16 %v5420, %v5418
        %v5465 = vpack.c.bf16 %v5421, %v5419
        %v5466 = vpack.c.bf16 %v5424, %v5422
        %v5467 = vpack.c.bf16 %v5425, %v5423
        %v5468 = vpack.c.bf16 %v5428, %v5426
        %v5469 = vpack.c.bf16 %v5429, %v5427
        %v5470 = vpack.c.bf16 %v5432, %v5430
        %v5471 = vpack.c.bf16 %v5433, %v5431
        %v5472 = vpack.c.bf16 %v5436, %v5434
        %v5473 = vpack.c.bf16 %v5437, %v5435
        %v5474 = vpack.c.bf16 %v5440, %v5438
        %v5475 = vpack.c.bf16 %v5441, %v5439
        %v5476 = vpack.c.bf16 %v5444, %v5442
        %v5477 = vpack.c.bf16 %v5445, %v5443
        %v5478 = vld [vmem:[%s664] sm:$0xf]
        %v5479 = vld [vmem:[%s664 + $0x4] sm:$0xf]
        %v5480 = vld [vmem:[%s664 + $0x8] sm:$0xf]
        %v5481 = vld [vmem:[%s664 + $0xc] sm:$0xf]
        %v5482 = vld [vmem:[%s664 + $0x10] sm:$0xf]
        %v5483 = vld [vmem:[%s664 + $0x14] sm:$0xf]
        %v5484 = vld [vmem:[%s664 + $0x18] sm:$0xf]
        %v5485 = vld [vmem:[%s664 + $0x1c] sm:$0xf]
        %v5486 = vld [vmem:[%s664 + $0x20] sm:$0xf]
        %v5487 = vld [vmem:[%s664 + $0x24] sm:$0xf]
        %v5488 = vld [vmem:[%s664 + $0x28] sm:$0xf]
        %v5489 = vld [vmem:[%s664 + $0x2c] sm:$0xf]
        %v5490 = vld [vmem:[%s664 + $0x30] sm:$0xf]
        %v5491 = vld [vmem:[%s664 + $0x34] sm:$0xf]
        %v5492 = vld [vmem:[%s664 + $0x38] sm:$0xf]
        %v5493 = vld [vmem:[%s664 + $0x3c] sm:$0xf]
        %v5494 = vld [vmem:[%s664 + $0x40] sm:$0xf]
        %v5495 = vld [vmem:[%s664 + $0x44] sm:$0xf]
        %v5496 = vld [vmem:[%s664 + $0x48] sm:$0xf]
        %v5497 = vld [vmem:[%s664 + $0x4c] sm:$0xf]
        %v5498 = vld [vmem:[%s664 + $0x50] sm:$0xf]
        %v5499 = vld [vmem:[%s664 + $0x54] sm:$0xf]
        %v5500 = vld [vmem:[%s664 + $0x58] sm:$0xf]
        %v5501 = vld [vmem:[%s664 + $0x5c] sm:$0xf]
        %v5502 = vld [vmem:[%s664 + $0x60] sm:$0xf]
        %v5503 = vld [vmem:[%s664 + $0x64] sm:$0xf]
        %v5504 = vld [vmem:[%s664 + $0x68] sm:$0xf]
        %v5505 = vld [vmem:[%s664 + $0x6c] sm:$0xf]
        %v5506 = vld [vmem:[%s664 + $0x70] sm:$0xf]
        %v5507 = vld [vmem:[%s664 + $0x74] sm:$0xf]
        %v5508 = vld [vmem:[%s664 + $0x78] sm:$0xf]
        %v5509 = vld [vmem:[%s664 + $0x7c] sm:$0xf]
        %v5510 = vld [vmem:[%s8] sm:$0xff]
        %v5511 = vld [vmem:[%s8 + $0x8] sm:$0xff]
        %v5512 = vld [vmem:[%s8 + $0x10] sm:$0xff]
        %v5513 = vld [vmem:[%s8 + $0x18] sm:$0xff]
        %v5514 = vld [vmem:[%s8 + $0x20] sm:$0xff]
        %v5515 = vld [vmem:[%s8 + $0x28] sm:$0xff]
        %v5516 = vld [vmem:[%s8 + $0x30] sm:$0xff]
        %v5517 = vld [vmem:[%s8 + $0x38] sm:$0xff]
        %v5550 = vunpack.c.l.b16 %v5478
        %v5551 = vunpack.c.l.b16 %v5479
        %v5552 = vunpack.c.l.b16 %v5480
        %v5553 = vunpack.c.l.b16 %v5481
        %v5554 = vunpack.c.l.b16 %v5482
        %v5555 = vunpack.c.l.b16 %v5483
        %v5556 = vunpack.c.l.b16 %v5484
        %v5557 = vunpack.c.l.b16 %v5485
        %v5558 = vunpack.c.l.b16 %v5486
        %v5559 = vunpack.c.l.b16 %v5487
        %v5560 = vunpack.c.l.b16 %v5488
        %v5561 = vunpack.c.l.b16 %v5489
        %v5562 = vunpack.c.l.b16 %v5490
        %v5563 = vunpack.c.l.b16 %v5491
        %v5564 = vunpack.c.l.b16 %v5492
        %v5565 = vunpack.c.l.b16 %v5493
        %v5566 = vunpack.c.l.b16 %v5494
        %v5567 = vunpack.c.l.b16 %v5495
        %v5568 = vunpack.c.l.b16 %v5496
        %v5569 = vunpack.c.l.b16 %v5497
        %v5570 = vunpack.c.l.b16 %v5498
        %v5571 = vunpack.c.l.b16 %v5499
        %v5572 = vunpack.c.l.b16 %v5500
        %v5573 = vunpack.c.l.b16 %v5501
        %v5574 = vunpack.c.l.b16 %v5502
        %v5575 = vunpack.c.l.b16 %v5503
        %v5576 = vunpack.c.l.b16 %v5504
        %v5577 = vunpack.c.l.b16 %v5505
        %v5578 = vunpack.c.l.b16 %v5506
        %v5579 = vunpack.c.l.b16 %v5507
        %v5580 = vunpack.c.l.b16 %v5508
        %v5581 = vunpack.c.l.b16 %v5509
        %v5582 = vpack.c.b16 %v5551, %v5550
        %v5583 = vpack.c.b16 %v5553, %v5552
        %v5584 = vpack.c.b16 %v5555, %v5554
        %v5585 = vpack.c.b16 %v5557, %v5556
        %v5586 = vpack.c.b16 %v5559, %v5558
        %v5587 = vpack.c.b16 %v5561, %v5560
        %v5588 = vpack.c.b16 %v5563, %v5562
        %v5589 = vpack.c.b16 %v5565, %v5564
        %v5590 = vpack.c.b16 %v5567, %v5566
        %v5591 = vpack.c.b16 %v5569, %v5568
        %v5592 = vpack.c.b16 %v5571, %v5570
        %v5593 = vpack.c.b16 %v5573, %v5572
        %v5594 = vpack.c.b16 %v5575, %v5574
        %v5595 = vpack.c.b16 %v5577, %v5576
        %v5596 = vpack.c.b16 %v5579, %v5578
        %v5597 = vpack.c.b16 %v5581, %v5580
        %v5606 = vunpack.c.l.b16 %v5510
        %v5607 = vunpack.c.h.b16 %v5510
        %v5608 = vunpack.c.l.b16 %v5511
        %v5609 = vunpack.c.h.b16 %v5511
        %v5610 = vunpack.c.l.b16 %v5512
        %v5611 = vunpack.c.h.b16 %v5512
        %v5612 = vunpack.c.l.b16 %v5513
        %v5613 = vunpack.c.h.b16 %v5513
        %v5614 = vunpack.c.l.b16 %v5514
        %v5615 = vunpack.c.h.b16 %v5514
        %v5616 = vunpack.c.l.b16 %v5515
        %v5617 = vunpack.c.h.b16 %v5515
        %v5618 = vunpack.c.l.b16 %v5516
        %v5619 = vunpack.c.h.b16 %v5516
        %v5620 = vunpack.c.l.b16 %v5517
        %v5621 = vunpack.c.h.b16 %v5517
        %v5622 = vpack.c.b16 %v5608, %v5606
        %v5623 = vpack.c.b16 %v5609, %v5607
        %v5624 = vpack.c.b16 %v5612, %v5610
        %v5625 = vpack.c.b16 %v5613, %v5611
        %v5626 = vpack.c.b16 %v5616, %v5614
        %v5627 = vpack.c.b16 %v5617, %v5615
        %v5628 = vpack.c.b16 %v5620, %v5618
        %v5629 = vpack.c.b16 %v5621, %v5619
        %v5639 = vsel %vm835, %v5582, 0
        %v5642 = vsel %vm835, %v5583, 0
        %v5645 = vsel %vm835, %v5584, 0
        %v5648 = vsel %vm835, %v5585, 0
        %v5651 = vsel %vm835, %v5586, 0
        %v5654 = vsel %vm835, %v5587, 0
        %v5657 = vsel %vm835, %v5588, 0
        %v5660 = vsel %vm835, %v5589, 0
        %v5663 = vsel %vm835, %v5590, 0
        %v5666 = vsel %vm835, %v5591, 0
        %v5669 = vsel %vm835, %v5592, 0
        %v5672 = vsel %vm835, %v5593, 0
        %v5675 = vsel %vm835, %v5594, 0
        %v5678 = vsel %vm835, %v5595, 0
        %v5681 = vsel %vm835, %v5596, 0
        %v5684 = vsel %vm835, %v5597, 0
        %5686 = vmatpush.bf16.msra.mxu0 0
        %5687 = vmatpush.bf16.msra.mxu0 0
        %5688 = vmatpush.bf16.msra.mxu0 0
        %5689 = vmatpush.bf16.msra.mxu0 0
        %5690 = vmatpush.bf16.msra.mxu0 %v5628
        %5691 = vmatpush.bf16.msra.mxu0 %v5626
        %5692 = vmatpush.bf16.msra.mxu0 %v5624
        %5693 = vmatpush.bf16.msra.mxu0 %v5622
        %5694 = vmatmul.bf16.gmra.mxu0 %v5639
        %v5695 = vpop.f32.mrf.mxu0
        %v5696 = vadd.f32 0.0, %v5695
        %v5697 = vpop.f32.mrf.mxu0
        %v5698 = vadd.f32 0.0, %v5697
        %5699 = vmatmul.bf16.gmra.mxu0 %v5642
        %v5700 = vpop.f32.mrf.mxu0
        %v5701 = vadd.f32 0.0, %v5700
        %v5702 = vpop.f32.mrf.mxu0
        %v5703 = vadd.f32 0.0, %v5702
        %5704 = vmatmul.bf16.gmra.mxu0 %v5645
        %v5705 = vpop.f32.mrf.mxu0
        %v5706 = vadd.f32 0.0, %v5705
        %v5707 = vpop.f32.mrf.mxu0
        %v5708 = vadd.f32 0.0, %v5707
        %5709 = vmatmul.bf16.gmra.mxu0 %v5648
        %v5710 = vpop.f32.mrf.mxu0
        %v5711 = vadd.f32 0.0, %v5710
        %v5712 = vpop.f32.mrf.mxu0
        %v5713 = vadd.f32 0.0, %v5712
        %5714 = vmatmul.bf16.gmra.mxu0 %v5651
        %v5715 = vpop.f32.mrf.mxu0
        %v5716 = vadd.f32 0.0, %v5715
        %v5717 = vpop.f32.mrf.mxu0
        %v5718 = vadd.f32 0.0, %v5717
        %5719 = vmatmul.bf16.gmra.mxu0 %v5654
        %v5720 = vpop.f32.mrf.mxu0
        %v5721 = vadd.f32 0.0, %v5720
        %v5722 = vpop.f32.mrf.mxu0
        %v5723 = vadd.f32 0.0, %v5722
        %5724 = vmatmul.bf16.gmra.mxu0 %v5657
        %v5725 = vpop.f32.mrf.mxu0
        %v5726 = vadd.f32 0.0, %v5725
        %v5727 = vpop.f32.mrf.mxu0
        %v5728 = vadd.f32 0.0, %v5727
        %5729 = vmatmul.bf16.gmra.mxu0 %v5660
        %v5730 = vpop.f32.mrf.mxu0
        %v5731 = vadd.f32 0.0, %v5730
        %v5732 = vpop.f32.mrf.mxu0
        %v5733 = vadd.f32 0.0, %v5732
        %5734 = vmatmul.bf16.gmra.mxu0 %v5663
        %v5735 = vpop.f32.mrf.mxu0
        %v5736 = vadd.f32 0.0, %v5735
        %v5737 = vpop.f32.mrf.mxu0
        %v5738 = vadd.f32 0.0, %v5737
        %5739 = vmatmul.bf16.gmra.mxu0 %v5666
        %v5740 = vpop.f32.mrf.mxu0
        %v5741 = vadd.f32 0.0, %v5740
        %v5742 = vpop.f32.mrf.mxu0
        %v5743 = vadd.f32 0.0, %v5742
        %5744 = vmatmul.bf16.gmra.mxu0 %v5669
        %v5745 = vpop.f32.mrf.mxu0
        %v5746 = vadd.f32 0.0, %v5745
        %v5747 = vpop.f32.mrf.mxu0
        %v5748 = vadd.f32 0.0, %v5747
        %5749 = vmatmul.bf16.gmra.mxu0 %v5672
        %v5750 = vpop.f32.mrf.mxu0
        %v5751 = vadd.f32 0.0, %v5750
        %v5752 = vpop.f32.mrf.mxu0
        %v5753 = vadd.f32 0.0, %v5752
        %5754 = vmatmul.bf16.gmra.mxu0 %v5675
        %v5755 = vpop.f32.mrf.mxu0
        %v5756 = vadd.f32 0.0, %v5755
        %v5757 = vpop.f32.mrf.mxu0
        %v5758 = vadd.f32 0.0, %v5757
        %5759 = vmatmul.bf16.gmra.mxu0 %v5678
        %v5760 = vpop.f32.mrf.mxu0
        %v5761 = vadd.f32 0.0, %v5760
        %v5762 = vpop.f32.mrf.mxu0
        %v5763 = vadd.f32 0.0, %v5762
        %5764 = vmatmul.bf16.gmra.mxu0 %v5681
        %v5765 = vpop.f32.mrf.mxu0
        %v5766 = vadd.f32 0.0, %v5765
        %v5767 = vpop.f32.mrf.mxu0
        %v5768 = vadd.f32 0.0, %v5767
        %5769 = vmatmul.bf16.gmra.mxu0 %v5684
        %v5770 = vpop.f32.mrf.mxu0
        %v5771 = vadd.f32 0.0, %v5770
        %v5772 = vpop.f32.mrf.mxu0
        %v5773 = vadd.f32 0.0, %v5772
        %5774 = vdwg.mxu0
        %5775 = vmatpush.bf16.msra.mxu0 0
        %5776 = vmatpush.bf16.msra.mxu0 0
        %5777 = vmatpush.bf16.msra.mxu0 0
        %5778 = vmatpush.bf16.msra.mxu0 0
        %5779 = vmatpush.bf16.msra.mxu0 %v5629
        %5780 = vmatpush.bf16.msra.mxu0 %v5627
        %5781 = vmatpush.bf16.msra.mxu0 %v5625
        %5782 = vmatpush.bf16.msra.mxu0 %v5623
        %5783 = vmatmul.bf16.gmra.mxu0 %v5639
        %v5784 = vpop.f32.mrf.mxu0
        %v5785 = vadd.f32 0.0, %v5784
        %v5786 = vpop.f32.mrf.mxu0
        %v5787 = vadd.f32 0.0, %v5786
        %5788 = vmatmul.bf16.gmra.mxu0 %v5642
        %v5789 = vpop.f32.mrf.mxu0
        %v5790 = vadd.f32 0.0, %v5789
        %v5791 = vpop.f32.mrf.mxu0
        %v5792 = vadd.f32 0.0, %v5791
        %5793 = vmatmul.bf16.gmra.mxu0 %v5645
        %v5794 = vpop.f32.mrf.mxu0
        %v5795 = vadd.f32 0.0, %v5794
        %v5796 = vpop.f32.mrf.mxu0
        %v5797 = vadd.f32 0.0, %v5796
        %5798 = vmatmul.bf16.gmra.mxu0 %v5648
        %v5799 = vpop.f32.mrf.mxu0
        %v5800 = vadd.f32 0.0, %v5799
        %v5801 = vpop.f32.mrf.mxu0
        %v5802 = vadd.f32 0.0, %v5801
        %5803 = vmatmul.bf16.gmra.mxu0 %v5651
        %v5804 = vpop.f32.mrf.mxu0
        %v5805 = vadd.f32 0.0, %v5804
        %v5806 = vpop.f32.mrf.mxu0
        %v5807 = vadd.f32 0.0, %v5806
        %5808 = vmatmul.bf16.gmra.mxu0 %v5654
        %v5809 = vpop.f32.mrf.mxu0
        %v5810 = vadd.f32 0.0, %v5809
        %v5811 = vpop.f32.mrf.mxu0
        %v5812 = vadd.f32 0.0, %v5811
        %5813 = vmatmul.bf16.gmra.mxu0 %v5657
        %v5814 = vpop.f32.mrf.mxu0
        %v5815 = vadd.f32 0.0, %v5814
        %v5816 = vpop.f32.mrf.mxu0
        %v5817 = vadd.f32 0.0, %v5816
        %5818 = vmatmul.bf16.gmra.mxu0 %v5660
        %v5819 = vpop.f32.mrf.mxu0
        %v5820 = vadd.f32 0.0, %v5819
        %v5821 = vpop.f32.mrf.mxu0
        %v5822 = vadd.f32 0.0, %v5821
        %5823 = vmatmul.bf16.gmra.mxu0 %v5663
        %v5824 = vpop.f32.mrf.mxu0
        %v5825 = vadd.f32 0.0, %v5824
        %v5826 = vpop.f32.mrf.mxu0
        %v5827 = vadd.f32 0.0, %v5826
        %5828 = vmatmul.bf16.gmra.mxu0 %v5666
        %v5829 = vpop.f32.mrf.mxu0
        %v5830 = vadd.f32 0.0, %v5829
        %v5831 = vpop.f32.mrf.mxu0
        %v5832 = vadd.f32 0.0, %v5831
        %5833 = vmatmul.bf16.gmra.mxu0 %v5669
        %v5834 = vpop.f32.mrf.mxu0
        %v5835 = vadd.f32 0.0, %v5834
        %v5836 = vpop.f32.mrf.mxu0
        %v5837 = vadd.f32 0.0, %v5836
        %5838 = vmatmul.bf16.gmra.mxu0 %v5672
        %v5839 = vpop.f32.mrf.mxu0
        %v5840 = vadd.f32 0.0, %v5839
        %v5841 = vpop.f32.mrf.mxu0
        %v5842 = vadd.f32 0.0, %v5841
        %5843 = vmatmul.bf16.gmra.mxu0 %v5675
        %v5844 = vpop.f32.mrf.mxu0
        %v5845 = vadd.f32 0.0, %v5844
        %v5846 = vpop.f32.mrf.mxu0
        %v5847 = vadd.f32 0.0, %v5846
        %5848 = vmatmul.bf16.gmra.mxu0 %v5678
        %v5849 = vpop.f32.mrf.mxu0
        %v5850 = vadd.f32 0.0, %v5849
        %v5851 = vpop.f32.mrf.mxu0
        %v5852 = vadd.f32 0.0, %v5851
        %5853 = vmatmul.bf16.gmra.mxu0 %v5681
        %v5854 = vpop.f32.mrf.mxu0
        %v5855 = vadd.f32 0.0, %v5854
        %v5856 = vpop.f32.mrf.mxu0
        %v5857 = vadd.f32 0.0, %v5856
        %5858 = vmatmul.bf16.gmra.mxu0 %v5684
        %v5859 = vpop.f32.mrf.mxu0
        %v5860 = vadd.f32 0.0, %v5859
        %v5861 = vpop.f32.mrf.mxu0
        %v5862 = vadd.f32 0.0, %v5861
        %5863 = vdwg.mxu0
        %v5864 = vmul.f32 %v5696, %v1064
        %v5865 = vmul.f32 %v5785, %v1065
        %v5866 = vmul.f32 %v5698, %v1064
        %v5867 = vmul.f32 %v5787, %v1065
        %v5868 = vmul.f32 %v5701, %v1064
        %v5869 = vmul.f32 %v5790, %v1065
        %v5870 = vmul.f32 %v5703, %v1064
        %v5871 = vmul.f32 %v5792, %v1065
        %v5872 = vmul.f32 %v5706, %v1064
        %v5873 = vmul.f32 %v5795, %v1065
        %v5874 = vmul.f32 %v5708, %v1064
        %v5875 = vmul.f32 %v5797, %v1065
        %v5876 = vmul.f32 %v5711, %v1064
        %v5877 = vmul.f32 %v5800, %v1065
        %v5878 = vmul.f32 %v5713, %v1064
        %v5879 = vmul.f32 %v5802, %v1065
        %v5880 = vmul.f32 %v5716, %v1064
        %v5881 = vmul.f32 %v5805, %v1065
        %v5882 = vmul.f32 %v5718, %v1064
        %v5883 = vmul.f32 %v5807, %v1065
        %v5884 = vmul.f32 %v5721, %v1064
        %v5885 = vmul.f32 %v5810, %v1065
        %v5886 = vmul.f32 %v5723, %v1064
        %v5887 = vmul.f32 %v5812, %v1065
        %v5888 = vmul.f32 %v5726, %v1064
        %v5889 = vmul.f32 %v5815, %v1065
        %v5890 = vmul.f32 %v5728, %v1064
        %v5891 = vmul.f32 %v5817, %v1065
        %v5892 = vmul.f32 %v5731, %v1064
        %v5893 = vmul.f32 %v5820, %v1065
        %v5894 = vmul.f32 %v5733, %v1064
        %v5895 = vmul.f32 %v5822, %v1065
        %v5896 = vmul.f32 %v5736, %v1064
        %v5897 = vmul.f32 %v5825, %v1065
        %v5898 = vmul.f32 %v5738, %v1064
        %v5899 = vmul.f32 %v5827, %v1065
        %v5900 = vmul.f32 %v5741, %v1064
        %v5901 = vmul.f32 %v5830, %v1065
        %v5902 = vmul.f32 %v5743, %v1064
        %v5903 = vmul.f32 %v5832, %v1065
        %v5904 = vmul.f32 %v5746, %v1064
        %v5905 = vmul.f32 %v5835, %v1065
        %v5906 = vmul.f32 %v5748, %v1064
        %v5907 = vmul.f32 %v5837, %v1065
        %v5908 = vmul.f32 %v5751, %v1064
        %v5909 = vmul.f32 %v5840, %v1065
        %v5910 = vmul.f32 %v5753, %v1064
        %v5911 = vmul.f32 %v5842, %v1065
        %v5912 = vmul.f32 %v5756, %v1064
        %v5913 = vmul.f32 %v5845, %v1065
        %v5914 = vmul.f32 %v5758, %v1064
        %v5915 = vmul.f32 %v5847, %v1065
        %v5916 = vmul.f32 %v5761, %v1064
        %v5917 = vmul.f32 %v5850, %v1065
        %v5918 = vmul.f32 %v5763, %v1064
        %v5919 = vmul.f32 %v5852, %v1065
        %v5920 = vmul.f32 %v5766, %v1064
        %v5921 = vmul.f32 %v5855, %v1065
        %v5922 = vmul.f32 %v5768, %v1064
        %v5923 = vmul.f32 %v5857, %v1065
        %v5924 = vmul.f32 %v5771, %v1064
        %v5925 = vmul.f32 %v5860, %v1065
        %v5926 = vmul.f32 %v5773, %v1064
        %v5927 = vmul.f32 %v5862, %v1065
        %v5928 = vadd.f32 %v5864, %v1134
        %v5929 = vadd.f32 %v5865, %v1135
        %v5930 = vadd.f32 %v5866, %v1134
        %v5931 = vadd.f32 %v5867, %v1135
        %v5932 = vadd.f32 %v5868, %v1134
        %v5933 = vadd.f32 %v5869, %v1135
        %v5934 = vadd.f32 %v5870, %v1134
        %v5935 = vadd.f32 %v5871, %v1135
        %v5936 = vadd.f32 %v5872, %v1134
        %v5937 = vadd.f32 %v5873, %v1135
        %v5938 = vadd.f32 %v5874, %v1134
        %v5939 = vadd.f32 %v5875, %v1135
        %v5940 = vadd.f32 %v5876, %v1134
        %v5941 = vadd.f32 %v5877, %v1135
        %v5942 = vadd.f32 %v5878, %v1134
        %v5943 = vadd.f32 %v5879, %v1135
        %v5944 = vadd.f32 %v5880, %v1134
        %v5945 = vadd.f32 %v5881, %v1135
        %v5946 = vadd.f32 %v5882, %v1134
        %v5947 = vadd.f32 %v5883, %v1135
        %v5948 = vadd.f32 %v5884, %v1134
        %v5949 = vadd.f32 %v5885, %v1135
        %v5950 = vadd.f32 %v5886, %v1134
        %v5951 = vadd.f32 %v5887, %v1135
        %v5952 = vadd.f32 %v5888, %v1134
        %v5953 = vadd.f32 %v5889, %v1135
        %v5954 = vadd.f32 %v5890, %v1134
        %v5955 = vadd.f32 %v5891, %v1135
        %v5956 = vadd.f32 %v5892, %v1134
        %v5957 = vadd.f32 %v5893, %v1135
        %v5958 = vadd.f32 %v5894, %v1134
        %v5959 = vadd.f32 %v5895, %v1135
        %v5960 = vadd.f32 %v5896, %v1134
        %v5961 = vadd.f32 %v5897, %v1135
        %v5962 = vadd.f32 %v5898, %v1134
        %v5963 = vadd.f32 %v5899, %v1135
        %v5964 = vadd.f32 %v5900, %v1134
        %v5965 = vadd.f32 %v5901, %v1135
        %v5966 = vadd.f32 %v5902, %v1134
        %v5967 = vadd.f32 %v5903, %v1135
        %v5968 = vadd.f32 %v5904, %v1134
        %v5969 = vadd.f32 %v5905, %v1135
        %v5970 = vadd.f32 %v5906, %v1134
        %v5971 = vadd.f32 %v5907, %v1135
        %v5972 = vadd.f32 %v5908, %v1134
        %v5973 = vadd.f32 %v5909, %v1135
        %v5974 = vadd.f32 %v5910, %v1134
        %v5975 = vadd.f32 %v5911, %v1135
        %v5976 = vadd.f32 %v5912, %v1134
        %v5977 = vadd.f32 %v5913, %v1135
        %v5978 = vadd.f32 %v5914, %v1134
        %v5979 = vadd.f32 %v5915, %v1135
        %v5980 = vadd.f32 %v5916, %v1134
        %v5981 = vadd.f32 %v5917, %v1135
        %v5982 = vadd.f32 %v5918, %v1134
        %v5983 = vadd.f32 %v5919, %v1135
        %v5984 = vadd.f32 %v5920, %v1134
        %v5985 = vadd.f32 %v5921, %v1135
        %v5986 = vadd.f32 %v5922, %v1134
        %v5987 = vadd.f32 %v5923, %v1135
        %v5988 = vadd.f32 %v5924, %v1134
        %v5989 = vadd.f32 %v5925, %v1135
        %v5990 = vadd.f32 %v5926, %v1134
        %v5991 = vadd.f32 %v5927, %v1135
        %v5992 = vmax.f32 %v5928, 0.0
        %v5993 = vmax.f32 %v5929, 0.0
        %v5994 = vmax.f32 %v5930, 0.0
        %v5995 = vmax.f32 %v5931, 0.0
        %v5996 = vmax.f32 %v5932, 0.0
        %v5997 = vmax.f32 %v5933, 0.0
        %v5998 = vmax.f32 %v5934, 0.0
        %v5999 = vmax.f32 %v5935, 0.0
        %v6000 = vmax.f32 %v5936, 0.0
        %v6001 = vmax.f32 %v5937, 0.0
        %v6002 = vmax.f32 %v5938, 0.0
        %v6003 = vmax.f32 %v5939, 0.0
        %v6004 = vmax.f32 %v5940, 0.0
        %v6005 = vmax.f32 %v5941, 0.0
        %v6006 = vmax.f32 %v5942, 0.0
        %v6007 = vmax.f32 %v5943, 0.0
        %v6008 = vmax.f32 %v5944, 0.0
        %v6009 = vmax.f32 %v5945, 0.0
        %v6010 = vmax.f32 %v5946, 0.0
        %v6011 = vmax.f32 %v5947, 0.0
        %v6012 = vmax.f32 %v5948, 0.0
        %v6013 = vmax.f32 %v5949, 0.0
        %v6014 = vmax.f32 %v5950, 0.0
        %v6015 = vmax.f32 %v5951, 0.0
        %v6016 = vmax.f32 %v5952, 0.0
        %v6017 = vmax.f32 %v5953, 0.0
        %v6018 = vmax.f32 %v5954, 0.0
        %v6019 = vmax.f32 %v5955, 0.0
        %v6020 = vmax.f32 %v5956, 0.0
        %v6021 = vmax.f32 %v5957, 0.0
        %v6022 = vmax.f32 %v5958, 0.0
        %v6023 = vmax.f32 %v5959, 0.0
        %v6024 = vmax.f32 %v5960, 0.0
        %v6025 = vmax.f32 %v5961, 0.0
        %v6026 = vmax.f32 %v5962, 0.0
        %v6027 = vmax.f32 %v5963, 0.0
        %v6028 = vmax.f32 %v5964, 0.0
        %v6029 = vmax.f32 %v5965, 0.0
        %v6030 = vmax.f32 %v5966, 0.0
        %v6031 = vmax.f32 %v5967, 0.0
        %v6032 = vmax.f32 %v5968, 0.0
        %v6033 = vmax.f32 %v5969, 0.0
        %v6034 = vmax.f32 %v5970, 0.0
        %v6035 = vmax.f32 %v5971, 0.0
        %v6036 = vmax.f32 %v5972, 0.0
        %v6037 = vmax.f32 %v5973, 0.0
        %v6038 = vmax.f32 %v5974, 0.0
        %v6039 = vmax.f32 %v5975, 0.0
        %v6040 = vmax.f32 %v5976, 0.0
        %v6041 = vmax.f32 %v5977, 0.0
        %v6042 = vmax.f32 %v5978, 0.0
        %v6043 = vmax.f32 %v5979, 0.0
        %v6044 = vmax.f32 %v5980, 0.0
        %v6045 = vmax.f32 %v5981, 0.0
        %v6046 = vmax.f32 %v5982, 0.0
        %v6047 = vmax.f32 %v5983, 0.0
        %v6048 = vmax.f32 %v5984, 0.0
        %v6049 = vmax.f32 %v5985, 0.0
        %v6050 = vmax.f32 %v5986, 0.0
        %v6051 = vmax.f32 %v5987, 0.0
        %v6052 = vmax.f32 %v5988, 0.0
        %v6053 = vmax.f32 %v5989, 0.0
        %v6054 = vmax.f32 %v5990, 0.0
        %v6055 = vmax.f32 %v5991, 0.0
        %v6056 = vpack.c.bf16 %v5994, %v5992
        %v6057 = vpack.c.bf16 %v5995, %v5993
        %v6058 = vpack.c.bf16 %v5998, %v5996
        %v6059 = vpack.c.bf16 %v5999, %v5997
        %v6060 = vpack.c.bf16 %v6002, %v6000
        %v6061 = vpack.c.bf16 %v6003, %v6001
        %v6062 = vpack.c.bf16 %v6006, %v6004
        %v6063 = vpack.c.bf16 %v6007, %v6005
        %v6064 = vpack.c.bf16 %v6010, %v6008
        %v6065 = vpack.c.bf16 %v6011, %v6009
        %v6066 = vpack.c.bf16 %v6014, %v6012
        %v6067 = vpack.c.bf16 %v6015, %v6013
        %v6068 = vpack.c.bf16 %v6018, %v6016
        %v6069 = vpack.c.bf16 %v6019, %v6017
        %v6070 = vpack.c.bf16 %v6022, %v6020
        %v6071 = vpack.c.bf16 %v6023, %v6021
        %v6072 = vpack.c.bf16 %v6026, %v6024
        %v6073 = vpack.c.bf16 %v6027, %v6025
        %v6074 = vpack.c.bf16 %v6030, %v6028
        %v6075 = vpack.c.bf16 %v6031, %v6029
        %v6076 = vpack.c.bf16 %v6034, %v6032
        %v6077 = vpack.c.bf16 %v6035, %v6033
        %v6078 = vpack.c.bf16 %v6038, %v6036
        %v6079 = vpack.c.bf16 %v6039, %v6037
        %v6080 = vpack.c.bf16 %v6042, %v6040
        %v6081 = vpack.c.bf16 %v6043, %v6041
        %v6082 = vpack.c.bf16 %v6046, %v6044
        %v6083 = vpack.c.bf16 %v6047, %v6045
        %v6084 = vpack.c.bf16 %v6050, %v6048
        %v6085 = vpack.c.bf16 %v6051, %v6049
        %v6086 = vpack.c.bf16 %v6054, %v6052
        %v6087 = vpack.c.bf16 %v6055, %v6053
        %v6088 = vld [vmem:[%s9] sm:$0xff]
        %v6089 = vld [vmem:[%s9 + $0x8] sm:$0xff]
        %v6090 = vld [vmem:[%s9 + $0x10] sm:$0xff]
        %v6091 = vld [vmem:[%s9 + $0x18] sm:$0xff]
        %v6092 = vld [vmem:[%s9 + $0x20] sm:$0xff]
        %v6093 = vld [vmem:[%s9 + $0x28] sm:$0xff]
        %v6094 = vld [vmem:[%s9 + $0x30] sm:$0xff]
        %v6095 = vld [vmem:[%s9 + $0x38] sm:$0xff]
        %v6096 = vld [vmem:[%s9 + $0x40] sm:$0xff]
        %v6097 = vld [vmem:[%s9 + $0x48] sm:$0xff]
        %v6098 = vld [vmem:[%s9 + $0x50] sm:$0xff]
        %v6099 = vld [vmem:[%s9 + $0x58] sm:$0xff]
        %v6100 = vld [vmem:[%s9 + $0x60] sm:$0xff]
        %v6101 = vld [vmem:[%s9 + $0x68] sm:$0xff]
        %v6102 = vld [vmem:[%s9 + $0x70] sm:$0xff]
        %v6103 = vld [vmem:[%s9 + $0x78] sm:$0xff]
        %v6104 = vld [vmem:[%s9 + $0x80] sm:$0xff]
        %v6105 = vld [vmem:[%s9 + $0x88] sm:$0xff]
        %v6106 = vld [vmem:[%s9 + $0x90] sm:$0xff]
        %v6107 = vld [vmem:[%s9 + $0x98] sm:$0xff]
        %v6108 = vld [vmem:[%s9 + $0xa0] sm:$0xff]
        %v6109 = vld [vmem:[%s9 + $0xa8] sm:$0xff]
        %v6110 = vld [vmem:[%s9 + $0xb0] sm:$0xff]
        %v6111 = vld [vmem:[%s9 + $0xb8] sm:$0xff]
        %v6112 = vld [vmem:[%s9 + $0xc0] sm:$0xff]
        %v6113 = vld [vmem:[%s9 + $0xc8] sm:$0xff]
        %v6114 = vld [vmem:[%s9 + $0xd0] sm:$0xff]
        %v6115 = vld [vmem:[%s9 + $0xd8] sm:$0xff]
        %v6116 = vld [vmem:[%s9 + $0xe0] sm:$0xff]
        %v6117 = vld [vmem:[%s9 + $0xe8] sm:$0xff]
        %v6118 = vld [vmem:[%s9 + $0xf0] sm:$0xff]
        %v6119 = vld [vmem:[%s9 + $0xf8] sm:$0xff]
        %v6120 = vld [vmem:[%s10] sm:$0xff]
        %v6121 = vld [vmem:[%s10 + $0x8] sm:$0xff]
        %v6122 = vld [vmem:[%s10 + $0x10] sm:$0xff]
        %v6123 = vld [vmem:[%s10 + $0x18] sm:$0xff]
        %v6124 = vld [vmem:[%s10 + $0x20] sm:$0xff]
        %v6125 = vld [vmem:[%s10 + $0x28] sm:$0xff]
        %v6126 = vld [vmem:[%s10 + $0x30] sm:$0xff]
        %v6127 = vld [vmem:[%s10 + $0x38] sm:$0xff]
        %v6128 = vld [vmem:[%s10 + $0x40] sm:$0xff]
        %v6129 = vld [vmem:[%s10 + $0x48] sm:$0xff]
        %v6130 = vld [vmem:[%s10 + $0x50] sm:$0xff]
        %v6131 = vld [vmem:[%s10 + $0x58] sm:$0xff]
        %v6132 = vld [vmem:[%s10 + $0x60] sm:$0xff]
        %v6133 = vld [vmem:[%s10 + $0x68] sm:$0xff]
        %v6134 = vld [vmem:[%s10 + $0x70] sm:$0xff]
        %v6135 = vld [vmem:[%s10 + $0x78] sm:$0xff]
        %v6136 = vld [vmem:[%s10 + $0x80] sm:$0xff]
        %v6137 = vld [vmem:[%s10 + $0x88] sm:$0xff]
        %v6138 = vld [vmem:[%s10 + $0x90] sm:$0xff]
        %v6139 = vld [vmem:[%s10 + $0x98] sm:$0xff]
        %v6140 = vld [vmem:[%s10 + $0xa0] sm:$0xff]
        %v6141 = vld [vmem:[%s10 + $0xa8] sm:$0xff]
        %v6142 = vld [vmem:[%s10 + $0xb0] sm:$0xff]
        %v6143 = vld [vmem:[%s10 + $0xb8] sm:$0xff]
        %v6144 = vld [vmem:[%s10 + $0xc0] sm:$0xff]
        %v6145 = vld [vmem:[%s10 + $0xc8] sm:$0xff]
        %v6146 = vld [vmem:[%s10 + $0xd0] sm:$0xff]
        %v6147 = vld [vmem:[%s10 + $0xd8] sm:$0xff]
        %v6148 = vld [vmem:[%s10 + $0xe0] sm:$0xff]
        %v6149 = vld [vmem:[%s10 + $0xe8] sm:$0xff]
        %v6150 = vld [vmem:[%s10 + $0xf0] sm:$0xff]
        %v6151 = vld [vmem:[%s10 + $0xf8] sm:$0xff]
        %v6184 = vunpack.c.l.b16 %v6120
        %v6185 = vunpack.c.h.b16 %v6120
        %v6186 = vunpack.c.l.b16 %v6121
        %v6187 = vunpack.c.h.b16 %v6121
        %v6188 = vunpack.c.l.b16 %v6122
        %v6189 = vunpack.c.h.b16 %v6122
        %v6190 = vunpack.c.l.b16 %v6123
        %v6191 = vunpack.c.h.b16 %v6123
        %v6192 = vunpack.c.l.b16 %v6124
        %v6193 = vunpack.c.h.b16 %v6124
        %v6194 = vunpack.c.l.b16 %v6125
        %v6195 = vunpack.c.h.b16 %v6125
        %v6196 = vunpack.c.l.b16 %v6126
        %v6197 = vunpack.c.h.b16 %v6126
        %v6198 = vunpack.c.l.b16 %v6127
        %v6199 = vunpack.c.h.b16 %v6127
        %v6200 = vunpack.c.l.b16 %v6128
        %v6201 = vunpack.c.h.b16 %v6128
        %v6202 = vunpack.c.l.b16 %v6129
        %v6203 = vunpack.c.h.b16 %v6129
        %v6204 = vunpack.c.l.b16 %v6130
        %v6205 = vunpack.c.h.b16 %v6130
        %v6206 = vunpack.c.l.b16 %v6131
        %v6207 = vunpack.c.h.b16 %v6131
        %v6208 = vunpack.c.l.b16 %v6132
        %v6209 = vunpack.c.h.b16 %v6132
        %v6210 = vunpack.c.l.b16 %v6133
        %v6211 = vunpack.c.h.b16 %v6133
        %v6212 = vunpack.c.l.b16 %v6134
        %v6213 = vunpack.c.h.b16 %v6134
        %v6214 = vunpack.c.l.b16 %v6135
        %v6215 = vunpack.c.h.b16 %v6135
        %v6216 = vunpack.c.l.b16 %v6136
        %v6217 = vunpack.c.h.b16 %v6136
        %v6218 = vunpack.c.l.b16 %v6137
        %v6219 = vunpack.c.h.b16 %v6137
        %v6220 = vunpack.c.l.b16 %v6138
        %v6221 = vunpack.c.h.b16 %v6138
        %v6222 = vunpack.c.l.b16 %v6139
        %v6223 = vunpack.c.h.b16 %v6139
        %v6224 = vunpack.c.l.b16 %v6140
        %v6225 = vunpack.c.h.b16 %v6140
        %v6226 = vunpack.c.l.b16 %v6141
        %v6227 = vunpack.c.h.b16 %v6141
        %v6228 = vunpack.c.l.b16 %v6142
        %v6229 = vunpack.c.h.b16 %v6142
        %v6230 = vunpack.c.l.b16 %v6143
        %v6231 = vunpack.c.h.b16 %v6143
        %v6232 = vunpack.c.l.b16 %v6144
        %v6233 = vunpack.c.h.b16 %v6144
        %v6234 = vunpack.c.l.b16 %v6145
        %v6235 = vunpack.c.h.b16 %v6145
        %v6236 = vunpack.c.l.b16 %v6146
        %v6237 = vunpack.c.h.b16 %v6146
        %v6238 = vunpack.c.l.b16 %v6147
        %v6239 = vunpack.c.h.b16 %v6147
        %v6240 = vunpack.c.l.b16 %v6148
        %v6241 = vunpack.c.h.b16 %v6148
        %v6242 = vunpack.c.l.b16 %v6149
        %v6243 = vunpack.c.h.b16 %v6149
        %v6244 = vunpack.c.l.b16 %v6150
        %v6245 = vunpack.c.h.b16 %v6150
        %v6246 = vunpack.c.l.b16 %v6151
        %v6247 = vunpack.c.h.b16 %v6151
        %v6248 = vpack.c.b16 %v6186, %v6184
        %v6249 = vpack.c.b16 %v6187, %v6185
        %v6250 = vpack.c.b16 %v6190, %v6188
        %v6251 = vpack.c.b16 %v6191, %v6189
        %v6252 = vpack.c.b16 %v6194, %v6192
        %v6253 = vpack.c.b16 %v6195, %v6193
        %v6254 = vpack.c.b16 %v6198, %v6196
        %v6255 = vpack.c.b16 %v6199, %v6197
        %v6256 = vpack.c.b16 %v6202, %v6200
        %v6257 = vpack.c.b16 %v6203, %v6201
        %v6258 = vpack.c.b16 %v6206, %v6204
        %v6259 = vpack.c.b16 %v6207, %v6205
        %v6260 = vpack.c.b16 %v6210, %v6208
        %v6261 = vpack.c.b16 %v6211, %v6209
        %v6262 = vpack.c.b16 %v6214, %v6212
        %v6263 = vpack.c.b16 %v6215, %v6213
        %v6264 = vpack.c.b16 %v6218, %v6216
        %v6265 = vpack.c.b16 %v6219, %v6217
        %v6266 = vpack.c.b16 %v6222, %v6220
        %v6267 = vpack.c.b16 %v6223, %v6221
        %v6268 = vpack.c.b16 %v6226, %v6224
        %v6269 = vpack.c.b16 %v6227, %v6225
        %v6270 = vpack.c.b16 %v6230, %v6228
        %v6271 = vpack.c.b16 %v6231, %v6229
        %v6272 = vpack.c.b16 %v6234, %v6232
        %v6273 = vpack.c.b16 %v6235, %v6233
        %v6274 = vpack.c.b16 %v6238, %v6236
        %v6275 = vpack.c.b16 %v6239, %v6237
        %v6276 = vpack.c.b16 %v6242, %v6240
        %v6277 = vpack.c.b16 %v6243, %v6241
        %v6278 = vpack.c.b16 %v6246, %v6244
        %v6279 = vpack.c.b16 %v6247, %v6245
        %6312 = vmatpush.bf16.msra.mxu0 %v6262
        %6313 = vmatpush.bf16.msra.mxu0 %v6260
        %6314 = vmatpush.bf16.msra.mxu0 %v6258
        %6315 = vmatpush.bf16.msra.mxu0 %v6256
        %6316 = vmatpush.bf16.msra.mxu0 %v6254
        %6317 = vmatpush.bf16.msra.mxu0 %v6252
        %6318 = vmatpush.bf16.msra.mxu0 %v6250
        %6319 = vmatpush.bf16.msra.mxu0 %v6248
        %6320 = vmatmul.bf16.gmra.mxu0 %v3356
        %v6321 = vpop.f32.mrf.mxu0
        %v6322 = vadd.f32 0.0, %v6321
        %v6323 = vpop.f32.mrf.mxu0
        %v6324 = vadd.f32 0.0, %v6323
        %6325 = vmatmul.bf16.gmra.mxu0 %v3358
        %v6326 = vpop.f32.mrf.mxu0
        %v6327 = vadd.f32 0.0, %v6326
        %v6328 = vpop.f32.mrf.mxu0
        %v6329 = vadd.f32 0.0, %v6328
        %6330 = vmatmul.bf16.gmra.mxu0 %v3360
        %v6331 = vpop.f32.mrf.mxu0
        %v6332 = vadd.f32 0.0, %v6331
        %v6333 = vpop.f32.mrf.mxu0
        %v6334 = vadd.f32 0.0, %v6333
        %6335 = vmatmul.bf16.gmra.mxu0 %v3362
        %v6336 = vpop.f32.mrf.mxu0
        %v6337 = vadd.f32 0.0, %v6336
        %v6338 = vpop.f32.mrf.mxu0
        %v6339 = vadd.f32 0.0, %v6338
        %6340 = vmatmul.bf16.gmra.mxu0 %v3364
        %v6341 = vpop.f32.mrf.mxu0
        %v6342 = vadd.f32 0.0, %v6341
        %v6343 = vpop.f32.mrf.mxu0
        %v6344 = vadd.f32 0.0, %v6343
        %6345 = vmatmul.bf16.gmra.mxu0 %v3366
        %v6346 = vpop.f32.mrf.mxu0
        %v6347 = vadd.f32 0.0, %v6346
        %v6348 = vpop.f32.mrf.mxu0
        %v6349 = vadd.f32 0.0, %v6348
        %6350 = vmatmul.bf16.gmra.mxu0 %v3368
        %v6351 = vpop.f32.mrf.mxu0
        %v6352 = vadd.f32 0.0, %v6351
        %v6353 = vpop.f32.mrf.mxu0
        %v6354 = vadd.f32 0.0, %v6353
        %6355 = vmatmul.bf16.gmra.mxu0 %v3370
        %v6356 = vpop.f32.mrf.mxu0
        %v6357 = vadd.f32 0.0, %v6356
        %v6358 = vpop.f32.mrf.mxu0
        %v6359 = vadd.f32 0.0, %v6358
        %6360 = vmatmul.bf16.gmra.mxu0 %v3372
        %v6361 = vpop.f32.mrf.mxu0
        %v6362 = vadd.f32 0.0, %v6361
        %v6363 = vpop.f32.mrf.mxu0
        %v6364 = vadd.f32 0.0, %v6363
        %6365 = vmatmul.bf16.gmra.mxu0 %v3374
        %v6366 = vpop.f32.mrf.mxu0
        %v6367 = vadd.f32 0.0, %v6366
        %v6368 = vpop.f32.mrf.mxu0
        %v6369 = vadd.f32 0.0, %v6368
        %6370 = vmatmul.bf16.gmra.mxu0 %v3376
        %v6371 = vpop.f32.mrf.mxu0
        %v6372 = vadd.f32 0.0, %v6371
        %v6373 = vpop.f32.mrf.mxu0
        %v6374 = vadd.f32 0.0, %v6373
        %6375 = vmatmul.bf16.gmra.mxu0 %v3378
        %v6376 = vpop.f32.mrf.mxu0
        %v6377 = vadd.f32 0.0, %v6376
        %v6378 = vpop.f32.mrf.mxu0
        %v6379 = vadd.f32 0.0, %v6378
        %6380 = vmatmul.bf16.gmra.mxu0 %v3380
        %v6381 = vpop.f32.mrf.mxu0
        %v6382 = vadd.f32 0.0, %v6381
        %v6383 = vpop.f32.mrf.mxu0
        %v6384 = vadd.f32 0.0, %v6383
        %6385 = vmatmul.bf16.gmra.mxu0 %v3382
        %v6386 = vpop.f32.mrf.mxu0
        %v6387 = vadd.f32 0.0, %v6386
        %v6388 = vpop.f32.mrf.mxu0
        %v6389 = vadd.f32 0.0, %v6388
        %6390 = vmatmul.bf16.gmra.mxu0 %v3384
        %v6391 = vpop.f32.mrf.mxu0
        %v6392 = vadd.f32 0.0, %v6391
        %v6393 = vpop.f32.mrf.mxu0
        %v6394 = vadd.f32 0.0, %v6393
        %6395 = vmatmul.bf16.gmra.mxu0 %v3386
        %v6396 = vpop.f32.mrf.mxu0
        %v6397 = vadd.f32 0.0, %v6396
        %v6398 = vpop.f32.mrf.mxu0
        %v6399 = vadd.f32 0.0, %v6398
        %6400 = vdwg.mxu0
        %6401 = vmatpush.bf16.msra.mxu0 %v6278
        %6402 = vmatpush.bf16.msra.mxu0 %v6276
        %6403 = vmatpush.bf16.msra.mxu0 %v6274
        %6404 = vmatpush.bf16.msra.mxu0 %v6272
        %6405 = vmatpush.bf16.msra.mxu0 %v6270
        %6406 = vmatpush.bf16.msra.mxu0 %v6268
        %6407 = vmatpush.bf16.msra.mxu0 %v6266
        %6408 = vmatpush.bf16.msra.mxu0 %v6264
        %6409 = vmatmul.bf16.gmra.mxu0 %v3357
        %v6410 = vpop.f32.mrf.mxu0
        %v6411 = vadd.f32 %v6322, %v6410
        %v6412 = vpop.f32.mrf.mxu0
        %v6413 = vadd.f32 %v6324, %v6412
        %6414 = vmatmul.bf16.gmra.mxu0 %v3359
        %v6415 = vpop.f32.mrf.mxu0
        %v6416 = vadd.f32 %v6327, %v6415
        %v6417 = vpop.f32.mrf.mxu0
        %v6418 = vadd.f32 %v6329, %v6417
        %6419 = vmatmul.bf16.gmra.mxu0 %v3361
        %v6420 = vpop.f32.mrf.mxu0
        %v6421 = vadd.f32 %v6332, %v6420
        %v6422 = vpop.f32.mrf.mxu0
        %v6423 = vadd.f32 %v6334, %v6422
        %6424 = vmatmul.bf16.gmra.mxu0 %v3363
        %v6425 = vpop.f32.mrf.mxu0
        %v6426 = vadd.f32 %v6337, %v6425
        %v6427 = vpop.f32.mrf.mxu0
        %v6428 = vadd.f32 %v6339, %v6427
        %6429 = vmatmul.bf16.gmra.mxu0 %v3365
        %v6430 = vpop.f32.mrf.mxu0
        %v6431 = vadd.f32 %v6342, %v6430
        %v6432 = vpop.f32.mrf.mxu0
        %v6433 = vadd.f32 %v6344, %v6432
        %6434 = vmatmul.bf16.gmra.mxu0 %v3367
        %v6435 = vpop.f32.mrf.mxu0
        %v6436 = vadd.f32 %v6347, %v6435
        %v6437 = vpop.f32.mrf.mxu0
        %v6438 = vadd.f32 %v6349, %v6437
        %6439 = vmatmul.bf16.gmra.mxu0 %v3369
        %v6440 = vpop.f32.mrf.mxu0
        %v6441 = vadd.f32 %v6352, %v6440
        %v6442 = vpop.f32.mrf.mxu0
        %v6443 = vadd.f32 %v6354, %v6442
        %6444 = vmatmul.bf16.gmra.mxu0 %v3371
        %v6445 = vpop.f32.mrf.mxu0
        %v6446 = vadd.f32 %v6357, %v6445
        %v6447 = vpop.f32.mrf.mxu0
        %v6448 = vadd.f32 %v6359, %v6447
        %6449 = vmatmul.bf16.gmra.mxu0 %v3373
        %v6450 = vpop.f32.mrf.mxu0
        %v6451 = vadd.f32 %v6362, %v6450
        %v6452 = vpop.f32.mrf.mxu0
        %v6453 = vadd.f32 %v6364, %v6452
        %6454 = vmatmul.bf16.gmra.mxu0 %v3375
        %v6455 = vpop.f32.mrf.mxu0
        %v6456 = vadd.f32 %v6367, %v6455
        %v6457 = vpop.f32.mrf.mxu0
        %v6458 = vadd.f32 %v6369, %v6457
        %6459 = vmatmul.bf16.gmra.mxu0 %v3377
        %v6460 = vpop.f32.mrf.mxu0
        %v6461 = vadd.f32 %v6372, %v6460
        %v6462 = vpop.f32.mrf.mxu0
        %v6463 = vadd.f32 %v6374, %v6462
        %6464 = vmatmul.bf16.gmra.mxu0 %v3379
        %v6465 = vpop.f32.mrf.mxu0
        %v6466 = vadd.f32 %v6377, %v6465
        %v6467 = vpop.f32.mrf.mxu0
        %v6468 = vadd.f32 %v6379, %v6467
        %6469 = vmatmul.bf16.gmra.mxu0 %v3381
        %v6470 = vpop.f32.mrf.mxu0
        %v6471 = vadd.f32 %v6382, %v6470
        %v6472 = vpop.f32.mrf.mxu0
        %v6473 = vadd.f32 %v6384, %v6472
        %6474 = vmatmul.bf16.gmra.mxu0 %v3383
        %v6475 = vpop.f32.mrf.mxu0
        %v6476 = vadd.f32 %v6387, %v6475
        %v6477 = vpop.f32.mrf.mxu0
        %v6478 = vadd.f32 %v6389, %v6477
        %6479 = vmatmul.bf16.gmra.mxu0 %v3385
        %v6480 = vpop.f32.mrf.mxu0
        %v6481 = vadd.f32 %v6392, %v6480
        %v6482 = vpop.f32.mrf.mxu0
        %v6483 = vadd.f32 %v6394, %v6482
        %6484 = vmatmul.bf16.gmra.mxu0 %v3387
        %v6485 = vpop.f32.mrf.mxu0
        %v6486 = vadd.f32 %v6397, %v6485
        %v6487 = vpop.f32.mrf.mxu0
        %v6488 = vadd.f32 %v6399, %v6487
        %6489 = vdwg.mxu0
        %6490 = vmatpush.bf16.msra.mxu0 %v6263
        %6491 = vmatpush.bf16.msra.mxu0 %v6261
        %6492 = vmatpush.bf16.msra.mxu0 %v6259
        %6493 = vmatpush.bf16.msra.mxu0 %v6257
        %6494 = vmatpush.bf16.msra.mxu0 %v6255
        %6495 = vmatpush.bf16.msra.mxu0 %v6253
        %6496 = vmatpush.bf16.msra.mxu0 %v6251
        %6497 = vmatpush.bf16.msra.mxu0 %v6249
        %6498 = vmatmul.bf16.gmra.mxu0 %v3356
        %v6499 = vpop.f32.mrf.mxu0
        %v6500 = vadd.f32 0.0, %v6499
        %v6501 = vpop.f32.mrf.mxu0
        %v6502 = vadd.f32 0.0, %v6501
        %6503 = vmatmul.bf16.gmra.mxu0 %v3358
        %v6504 = vpop.f32.mrf.mxu0
        %v6505 = vadd.f32 0.0, %v6504
        %v6506 = vpop.f32.mrf.mxu0
        %v6507 = vadd.f32 0.0, %v6506
        %6508 = vmatmul.bf16.gmra.mxu0 %v3360
        %v6509 = vpop.f32.mrf.mxu0
        %v6510 = vadd.f32 0.0, %v6509
        %v6511 = vpop.f32.mrf.mxu0
        %v6512 = vadd.f32 0.0, %v6511
        %6513 = vmatmul.bf16.gmra.mxu0 %v3362
        %v6514 = vpop.f32.mrf.mxu0
        %v6515 = vadd.f32 0.0, %v6514
        %v6516 = vpop.f32.mrf.mxu0
        %v6517 = vadd.f32 0.0, %v6516
        %6518 = vmatmul.bf16.gmra.mxu0 %v3364
        %v6519 = vpop.f32.mrf.mxu0
        %v6520 = vadd.f32 0.0, %v6519
        %v6521 = vpop.f32.mrf.mxu0
        %v6522 = vadd.f32 0.0, %v6521
        %6523 = vmatmul.bf16.gmra.mxu0 %v3366
        %v6524 = vpop.f32.mrf.mxu0
        %v6525 = vadd.f32 0.0, %v6524
        %v6526 = vpop.f32.mrf.mxu0
        %v6527 = vadd.f32 0.0, %v6526
        %6528 = vmatmul.bf16.gmra.mxu0 %v3368
        %v6529 = vpop.f32.mrf.mxu0
        %v6530 = vadd.f32 0.0, %v6529
        %v6531 = vpop.f32.mrf.mxu0
        %v6532 = vadd.f32 0.0, %v6531
        %6533 = vmatmul.bf16.gmra.mxu0 %v3370
        %v6534 = vpop.f32.mrf.mxu0
        %v6535 = vadd.f32 0.0, %v6534
        %v6536 = vpop.f32.mrf.mxu0
        %v6537 = vadd.f32 0.0, %v6536
        %6538 = vmatmul.bf16.gmra.mxu0 %v3372
        %v6539 = vpop.f32.mrf.mxu0
        %v6540 = vadd.f32 0.0, %v6539
        %v6541 = vpop.f32.mrf.mxu0
        %v6542 = vadd.f32 0.0, %v6541
        %6543 = vmatmul.bf16.gmra.mxu0 %v3374
        %v6544 = vpop.f32.mrf.mxu0
        %v6545 = vadd.f32 0.0, %v6544
        %v6546 = vpop.f32.mrf.mxu0
        %v6547 = vadd.f32 0.0, %v6546
        %6548 = vmatmul.bf16.gmra.mxu0 %v3376
        %v6549 = vpop.f32.mrf.mxu0
        %v6550 = vadd.f32 0.0, %v6549
        %v6551 = vpop.f32.mrf.mxu0
        %v6552 = vadd.f32 0.0, %v6551
        %6553 = vmatmul.bf16.gmra.mxu0 %v3378
        %v6554 = vpop.f32.mrf.mxu0
        %v6555 = vadd.f32 0.0, %v6554
        %v6556 = vpop.f32.mrf.mxu0
        %v6557 = vadd.f32 0.0, %v6556
        %6558 = vmatmul.bf16.gmra.mxu0 %v3380
        %v6559 = vpop.f32.mrf.mxu0
        %v6560 = vadd.f32 0.0, %v6559
        %v6561 = vpop.f32.mrf.mxu0
        %v6562 = vadd.f32 0.0, %v6561
        %6563 = vmatmul.bf16.gmra.mxu0 %v3382
        %v6564 = vpop.f32.mrf.mxu0
        %v6565 = vadd.f32 0.0, %v6564
        %v6566 = vpop.f32.mrf.mxu0
        %v6567 = vadd.f32 0.0, %v6566
        %6568 = vmatmul.bf16.gmra.mxu0 %v3384
        %v6569 = vpop.f32.mrf.mxu0
        %v6570 = vadd.f32 0.0, %v6569
        %v6571 = vpop.f32.mrf.mxu0
        %v6572 = vadd.f32 0.0, %v6571
        %6573 = vmatmul.bf16.gmra.mxu0 %v3386
        %v6574 = vpop.f32.mrf.mxu0
        %v6575 = vadd.f32 0.0, %v6574
        %v6576 = vpop.f32.mrf.mxu0
        %v6577 = vadd.f32 0.0, %v6576
        %6578 = vdwg.mxu0
        %6579 = vmatpush.bf16.msra.mxu0 %v6279
        %6580 = vmatpush.bf16.msra.mxu0 %v6277
        %6581 = vmatpush.bf16.msra.mxu0 %v6275
        %6582 = vmatpush.bf16.msra.mxu0 %v6273
        %6583 = vmatpush.bf16.msra.mxu0 %v6271
        %6584 = vmatpush.bf16.msra.mxu0 %v6269
        %6585 = vmatpush.bf16.msra.mxu0 %v6267
        %6586 = vmatpush.bf16.msra.mxu0 %v6265
        %6587 = vmatmul.bf16.gmra.mxu0 %v3357
        %v6588 = vpop.f32.mrf.mxu0
        %v6589 = vadd.f32 %v6500, %v6588
        %v6590 = vpop.f32.mrf.mxu0
        %v6591 = vadd.f32 %v6502, %v6590
        %6592 = vmatmul.bf16.gmra.mxu0 %v3359
        %v6593 = vpop.f32.mrf.mxu0
        %v6594 = vadd.f32 %v6505, %v6593
        %v6595 = vpop.f32.mrf.mxu0
        %v6596 = vadd.f32 %v6507, %v6595
        %6597 = vmatmul.bf16.gmra.mxu0 %v3361
        %v6598 = vpop.f32.mrf.mxu0
        %v6599 = vadd.f32 %v6510, %v6598
        %v6600 = vpop.f32.mrf.mxu0
        %v6601 = vadd.f32 %v6512, %v6600
        %6602 = vmatmul.bf16.gmra.mxu0 %v3363
        %v6603 = vpop.f32.mrf.mxu0
        %v6604 = vadd.f32 %v6515, %v6603
        %v6605 = vpop.f32.mrf.mxu0
        %v6606 = vadd.f32 %v6517, %v6605
        %6607 = vmatmul.bf16.gmra.mxu0 %v3365
        %v6608 = vpop.f32.mrf.mxu0
        %v6609 = vadd.f32 %v6520, %v6608
        %v6610 = vpop.f32.mrf.mxu0
        %v6611 = vadd.f32 %v6522, %v6610
        %6612 = vmatmul.bf16.gmra.mxu0 %v3367
        %v6613 = vpop.f32.mrf.mxu0
        %v6614 = vadd.f32 %v6525, %v6613
        %v6615 = vpop.f32.mrf.mxu0
        %v6616 = vadd.f32 %v6527, %v6615
        %6617 = vmatmul.bf16.gmra.mxu0 %v3369
        %v6618 = vpop.f32.mrf.mxu0
        %v6619 = vadd.f32 %v6530, %v6618
        %v6620 = vpop.f32.mrf.mxu0
        %v6621 = vadd.f32 %v6532, %v6620
        %6622 = vmatmul.bf16.gmra.mxu0 %v3371
        %v6623 = vpop.f32.mrf.mxu0
        %v6624 = vadd.f32 %v6535, %v6623
        %v6625 = vpop.f32.mrf.mxu0
        %v6626 = vadd.f32 %v6537, %v6625
        %6627 = vmatmul.bf16.gmra.mxu0 %v3373
        %v6628 = vpop.f32.mrf.mxu0
        %v6629 = vadd.f32 %v6540, %v6628
        %v6630 = vpop.f32.mrf.mxu0
        %v6631 = vadd.f32 %v6542, %v6630
        %6632 = vmatmul.bf16.gmra.mxu0 %v3375
        %v6633 = vpop.f32.mrf.mxu0
        %v6634 = vadd.f32 %v6545, %v6633
        %v6635 = vpop.f32.mrf.mxu0
        %v6636 = vadd.f32 %v6547, %v6635
        %6637 = vmatmul.bf16.gmra.mxu0 %v3377
        %v6638 = vpop.f32.mrf.mxu0
        %v6639 = vadd.f32 %v6550, %v6638
        %v6640 = vpop.f32.mrf.mxu0
        %v6641 = vadd.f32 %v6552, %v6640
        %6642 = vmatmul.bf16.gmra.mxu0 %v3379
        %v6643 = vpop.f32.mrf.mxu0
        %v6644 = vadd.f32 %v6555, %v6643
        %v6645 = vpop.f32.mrf.mxu0
        %v6646 = vadd.f32 %v6557, %v6645
        %6647 = vmatmul.bf16.gmra.mxu0 %v3381
        %v6648 = vpop.f32.mrf.mxu0
        %v6649 = vadd.f32 %v6560, %v6648
        %v6650 = vpop.f32.mrf.mxu0
        %v6651 = vadd.f32 %v6562, %v6650
        %6652 = vmatmul.bf16.gmra.mxu0 %v3383
        %v6653 = vpop.f32.mrf.mxu0
        %v6654 = vadd.f32 %v6565, %v6653
        %v6655 = vpop.f32.mrf.mxu0
        %v6656 = vadd.f32 %v6567, %v6655
        %6657 = vmatmul.bf16.gmra.mxu0 %v3385
        %v6658 = vpop.f32.mrf.mxu0
        %v6659 = vadd.f32 %v6570, %v6658
        %v6660 = vpop.f32.mrf.mxu0
        %v6661 = vadd.f32 %v6572, %v6660
        %6662 = vmatmul.bf16.gmra.mxu0 %v3387
        %v6663 = vpop.f32.mrf.mxu0
        %v6664 = vadd.f32 %v6575, %v6663
        %v6665 = vpop.f32.mrf.mxu0
        %v6666 = vadd.f32 %v6577, %v6665
        %6667 = vdwg.mxu0
        %v6700 = vunpack.c.l.b16 %v6088
        %v6701 = vunpack.c.h.b16 %v6088
        %v6702 = vunpack.c.l.b16 %v6089
        %v6703 = vunpack.c.h.b16 %v6089
        %v6704 = vunpack.c.l.b16 %v6090
        %v6705 = vunpack.c.h.b16 %v6090
        %v6706 = vunpack.c.l.b16 %v6091
        %v6707 = vunpack.c.h.b16 %v6091
        %v6708 = vunpack.c.l.b16 %v6092
        %v6709 = vunpack.c.h.b16 %v6092
        %v6710 = vunpack.c.l.b16 %v6093
        %v6711 = vunpack.c.h.b16 %v6093
        %v6712 = vunpack.c.l.b16 %v6094
        %v6713 = vunpack.c.h.b16 %v6094
        %v6714 = vunpack.c.l.b16 %v6095
        %v6715 = vunpack.c.h.b16 %v6095
        %v6716 = vunpack.c.l.b16 %v6096
        %v6717 = vunpack.c.h.b16 %v6096
        %v6718 = vunpack.c.l.b16 %v6097
        %v6719 = vunpack.c.h.b16 %v6097
        %v6720 = vunpack.c.l.b16 %v6098
        %v6721 = vunpack.c.h.b16 %v6098
        %v6722 = vunpack.c.l.b16 %v6099
        %v6723 = vunpack.c.h.b16 %v6099
        %v6724 = vunpack.c.l.b16 %v6100
        %v6725 = vunpack.c.h.b16 %v6100
        %v6726 = vunpack.c.l.b16 %v6101
        %v6727 = vunpack.c.h.b16 %v6101
        %v6728 = vunpack.c.l.b16 %v6102
        %v6729 = vunpack.c.h.b16 %v6102
        %v6730 = vunpack.c.l.b16 %v6103
        %v6731 = vunpack.c.h.b16 %v6103
        %v6732 = vunpack.c.l.b16 %v6104
        %v6733 = vunpack.c.h.b16 %v6104
        %v6734 = vunpack.c.l.b16 %v6105
        %v6735 = vunpack.c.h.b16 %v6105
        %v6736 = vunpack.c.l.b16 %v6106
        %v6737 = vunpack.c.h.b16 %v6106
        %v6738 = vunpack.c.l.b16 %v6107
        %v6739 = vunpack.c.h.b16 %v6107
        %v6740 = vunpack.c.l.b16 %v6108
        %v6741 = vunpack.c.h.b16 %v6108
        %v6742 = vunpack.c.l.b16 %v6109
        %v6743 = vunpack.c.h.b16 %v6109
        %v6744 = vunpack.c.l.b16 %v6110
        %v6745 = vunpack.c.h.b16 %v6110
        %v6746 = vunpack.c.l.b16 %v6111
        %v6747 = vunpack.c.h.b16 %v6111
        %v6748 = vunpack.c.l.b16 %v6112
        %v6749 = vunpack.c.h.b16 %v6112
        %v6750 = vunpack.c.l.b16 %v6113
        %v6751 = vunpack.c.h.b16 %v6113
        %v6752 = vunpack.c.l.b16 %v6114
        %v6753 = vunpack.c.h.b16 %v6114
        %v6754 = vunpack.c.l.b16 %v6115
        %v6755 = vunpack.c.h.b16 %v6115
        %v6756 = vunpack.c.l.b16 %v6116
        %v6757 = vunpack.c.h.b16 %v6116
        %v6758 = vunpack.c.l.b16 %v6117
        %v6759 = vunpack.c.h.b16 %v6117
        %v6760 = vunpack.c.l.b16 %v6118
        %v6761 = vunpack.c.h.b16 %v6118
        %v6762 = vunpack.c.l.b16 %v6119
        %v6763 = vunpack.c.h.b16 %v6119
        %v6764 = vpack.c.b16 %v6702, %v6700
        %v6765 = vpack.c.b16 %v6703, %v6701
        %v6766 = vpack.c.b16 %v6706, %v6704
        %v6767 = vpack.c.b16 %v6707, %v6705
        %v6768 = vpack.c.b16 %v6710, %v6708
        %v6769 = vpack.c.b16 %v6711, %v6709
        %v6770 = vpack.c.b16 %v6714, %v6712
        %v6771 = vpack.c.b16 %v6715, %v6713
        %v6772 = vpack.c.b16 %v6718, %v6716
        %v6773 = vpack.c.b16 %v6719, %v6717
        %v6774 = vpack.c.b16 %v6722, %v6720
        %v6775 = vpack.c.b16 %v6723, %v6721
        %v6776 = vpack.c.b16 %v6726, %v6724
        %v6777 = vpack.c.b16 %v6727, %v6725
        %v6778 = vpack.c.b16 %v6730, %v6728
        %v6779 = vpack.c.b16 %v6731, %v6729
        %v6780 = vpack.c.b16 %v6734, %v6732
        %v6781 = vpack.c.b16 %v6735, %v6733
        %v6782 = vpack.c.b16 %v6738, %v6736
        %v6783 = vpack.c.b16 %v6739, %v6737
        %v6784 = vpack.c.b16 %v6742, %v6740
        %v6785 = vpack.c.b16 %v6743, %v6741
        %v6786 = vpack.c.b16 %v6746, %v6744
        %v6787 = vpack.c.b16 %v6747, %v6745
        %v6788 = vpack.c.b16 %v6750, %v6748
        %v6789 = vpack.c.b16 %v6751, %v6749
        %v6790 = vpack.c.b16 %v6754, %v6752
        %v6791 = vpack.c.b16 %v6755, %v6753
        %v6792 = vpack.c.b16 %v6758, %v6756
        %v6793 = vpack.c.b16 %v6759, %v6757
        %v6794 = vpack.c.b16 %v6762, %v6760
        %v6795 = vpack.c.b16 %v6763, %v6761
        %6828 = vmatpush.bf16.msra.mxu0 %v6778
        %6829 = vmatpush.bf16.msra.mxu0 %v6776
        %6830 = vmatpush.bf16.msra.mxu0 %v6774
        %6831 = vmatpush.bf16.msra.mxu0 %v6772
        %6832 = vmatpush.bf16.msra.mxu0 %v6770
        %6833 = vmatpush.bf16.msra.mxu0 %v6768
        %6834 = vmatpush.bf16.msra.mxu0 %v6766
        %6835 = vmatpush.bf16.msra.mxu0 %v6764
        %6836 = vmatmul.bf16.gmra.mxu0 %v1266
        %v6837 = vpop.f32.mrf.mxu0
        %v6838 = vadd.f32 %v6411, %v6837
        %v6839 = vpop.f32.mrf.mxu0
        %v6840 = vadd.f32 %v6413, %v6839
        %6841 = vmatmul.bf16.gmra.mxu0 %v1268
        %v6842 = vpop.f32.mrf.mxu0
        %v6843 = vadd.f32 %v6416, %v6842
        %v6844 = vpop.f32.mrf.mxu0
        %v6845 = vadd.f32 %v6418, %v6844
        %6846 = vmatmul.bf16.gmra.mxu0 %v1270
        %v6847 = vpop.f32.mrf.mxu0
        %v6848 = vadd.f32 %v6421, %v6847
        %v6849 = vpop.f32.mrf.mxu0
        %v6850 = vadd.f32 %v6423, %v6849
        %6851 = vmatmul.bf16.gmra.mxu0 %v1272
        %v6852 = vpop.f32.mrf.mxu0
        %v6853 = vadd.f32 %v6426, %v6852
        %v6854 = vpop.f32.mrf.mxu0
        %v6855 = vadd.f32 %v6428, %v6854
        %6856 = vmatmul.bf16.gmra.mxu0 %v1274
        %v6857 = vpop.f32.mrf.mxu0
        %v6858 = vadd.f32 %v6431, %v6857
        %v6859 = vpop.f32.mrf.mxu0
        %v6860 = vadd.f32 %v6433, %v6859
        %6861 = vmatmul.bf16.gmra.mxu0 %v1276
        %v6862 = vpop.f32.mrf.mxu0
        %v6863 = vadd.f32 %v6436, %v6862
        %v6864 = vpop.f32.mrf.mxu0
        %v6865 = vadd.f32 %v6438, %v6864
        %6866 = vmatmul.bf16.gmra.mxu0 %v1278
        %v6867 = vpop.f32.mrf.mxu0
        %v6868 = vadd.f32 %v6441, %v6867
        %v6869 = vpop.f32.mrf.mxu0
        %v6870 = vadd.f32 %v6443, %v6869
        %6871 = vmatmul.bf16.gmra.mxu0 %v1280
        %v6872 = vpop.f32.mrf.mxu0
        %v6873 = vadd.f32 %v6446, %v6872
        %v6874 = vpop.f32.mrf.mxu0
        %v6875 = vadd.f32 %v6448, %v6874
        %6876 = vmatmul.bf16.gmra.mxu0 %v1282
        %v6877 = vpop.f32.mrf.mxu0
        %v6878 = vadd.f32 %v6451, %v6877
        %v6879 = vpop.f32.mrf.mxu0
        %v6880 = vadd.f32 %v6453, %v6879
        %6881 = vmatmul.bf16.gmra.mxu0 %v1284
        %v6882 = vpop.f32.mrf.mxu0
        %v6883 = vadd.f32 %v6456, %v6882
        %v6884 = vpop.f32.mrf.mxu0
        %v6885 = vadd.f32 %v6458, %v6884
        %6886 = vmatmul.bf16.gmra.mxu0 %v1286
        %v6887 = vpop.f32.mrf.mxu0
        %v6888 = vadd.f32 %v6461, %v6887
        %v6889 = vpop.f32.mrf.mxu0
        %v6890 = vadd.f32 %v6463, %v6889
        %6891 = vmatmul.bf16.gmra.mxu0 %v1288
        %v6892 = vpop.f32.mrf.mxu0
        %v6893 = vadd.f32 %v6466, %v6892
        %v6894 = vpop.f32.mrf.mxu0
        %v6895 = vadd.f32 %v6468, %v6894
        %6896 = vmatmul.bf16.gmra.mxu0 %v1290
        %v6897 = vpop.f32.mrf.mxu0
        %v6898 = vadd.f32 %v6471, %v6897
        %v6899 = vpop.f32.mrf.mxu0
        %v6900 = vadd.f32 %v6473, %v6899
        %6901 = vmatmul.bf16.gmra.mxu0 %v1292
        %v6902 = vpop.f32.mrf.mxu0
        %v6903 = vadd.f32 %v6476, %v6902
        %v6904 = vpop.f32.mrf.mxu0
        %v6905 = vadd.f32 %v6478, %v6904
        %6906 = vmatmul.bf16.gmra.mxu0 %v1294
        %v6907 = vpop.f32.mrf.mxu0
        %v6908 = vadd.f32 %v6481, %v6907
        %v6909 = vpop.f32.mrf.mxu0
        %v6910 = vadd.f32 %v6483, %v6909
        %6911 = vmatmul.bf16.gmra.mxu0 %v1296
        %v6912 = vpop.f32.mrf.mxu0
        %v6913 = vadd.f32 %v6486, %v6912
        %v6914 = vpop.f32.mrf.mxu0
        %v6915 = vadd.f32 %v6488, %v6914
        %6916 = vdwg.mxu0
        %6917 = vmatpush.bf16.msra.mxu0 %v6794
        %6918 = vmatpush.bf16.msra.mxu0 %v6792
        %6919 = vmatpush.bf16.msra.mxu0 %v6790
        %6920 = vmatpush.bf16.msra.mxu0 %v6788
        %6921 = vmatpush.bf16.msra.mxu0 %v6786
        %6922 = vmatpush.bf16.msra.mxu0 %v6784
        %6923 = vmatpush.bf16.msra.mxu0 %v6782
        %6924 = vmatpush.bf16.msra.mxu0 %v6780
        %6925 = vmatmul.bf16.gmra.mxu0 %v1267
        %v6926 = vpop.f32.mrf.mxu0
        %v6927 = vadd.f32 %v6838, %v6926
        %v6928 = vpop.f32.mrf.mxu0
        %v6929 = vadd.f32 %v6840, %v6928
        %6930 = vmatmul.bf16.gmra.mxu0 %v1269
        %v6931 = vpop.f32.mrf.mxu0
        %v6932 = vadd.f32 %v6843, %v6931
        %v6933 = vpop.f32.mrf.mxu0
        %v6934 = vadd.f32 %v6845, %v6933
        %6935 = vmatmul.bf16.gmra.mxu0 %v1271
        %v6936 = vpop.f32.mrf.mxu0
        %v6937 = vadd.f32 %v6848, %v6936
        %v6938 = vpop.f32.mrf.mxu0
        %v6939 = vadd.f32 %v6850, %v6938
        %6940 = vmatmul.bf16.gmra.mxu0 %v1273
        %v6941 = vpop.f32.mrf.mxu0
        %v6942 = vadd.f32 %v6853, %v6941
        %v6943 = vpop.f32.mrf.mxu0
        %v6944 = vadd.f32 %v6855, %v6943
        %6945 = vmatmul.bf16.gmra.mxu0 %v1275
        %v6946 = vpop.f32.mrf.mxu0
        %v6947 = vadd.f32 %v6858, %v6946
        %v6948 = vpop.f32.mrf.mxu0
        %v6949 = vadd.f32 %v6860, %v6948
        %6950 = vmatmul.bf16.gmra.mxu0 %v1277
        %v6951 = vpop.f32.mrf.mxu0
        %v6952 = vadd.f32 %v6863, %v6951
        %v6953 = vpop.f32.mrf.mxu0
        %v6954 = vadd.f32 %v6865, %v6953
        %6955 = vmatmul.bf16.gmra.mxu0 %v1279
        %v6956 = vpop.f32.mrf.mxu0
        %v6957 = vadd.f32 %v6868, %v6956
        %v6958 = vpop.f32.mrf.mxu0
        %v6959 = vadd.f32 %v6870, %v6958
        %6960 = vmatmul.bf16.gmra.mxu0 %v1281
        %v6961 = vpop.f32.mrf.mxu0
        %v6962 = vadd.f32 %v6873, %v6961
        %v6963 = vpop.f32.mrf.mxu0
        %v6964 = vadd.f32 %v6875, %v6963
        %6965 = vmatmul.bf16.gmra.mxu0 %v1283
        %v6966 = vpop.f32.mrf.mxu0
        %v6967 = vadd.f32 %v6878, %v6966
        %v6968 = vpop.f32.mrf.mxu0
        %v6969 = vadd.f32 %v6880, %v6968
        %6970 = vmatmul.bf16.gmra.mxu0 %v1285
        %v6971 = vpop.f32.mrf.mxu0
        %v6972 = vadd.f32 %v6883, %v6971
        %v6973 = vpop.f32.mrf.mxu0
        %v6974 = vadd.f32 %v6885, %v6973
        %6975 = vmatmul.bf16.gmra.mxu0 %v1287
        %v6976 = vpop.f32.mrf.mxu0
        %v6977 = vadd.f32 %v6888, %v6976
        %v6978 = vpop.f32.mrf.mxu0
        %v6979 = vadd.f32 %v6890, %v6978
        %6980 = vmatmul.bf16.gmra.mxu0 %v1289
        %v6981 = vpop.f32.mrf.mxu0
        %v6982 = vadd.f32 %v6893, %v6981
        %v6983 = vpop.f32.mrf.mxu0
        %v6984 = vadd.f32 %v6895, %v6983
        %6985 = vmatmul.bf16.gmra.mxu0 %v1291
        %v6986 = vpop.f32.mrf.mxu0
        %v6987 = vadd.f32 %v6898, %v6986
        %v6988 = vpop.f32.mrf.mxu0
        %v6989 = vadd.f32 %v6900, %v6988
        %6990 = vmatmul.bf16.gmra.mxu0 %v1293
        %v6991 = vpop.f32.mrf.mxu0
        %v6992 = vadd.f32 %v6903, %v6991
        %v6993 = vpop.f32.mrf.mxu0
        %v6994 = vadd.f32 %v6905, %v6993
        %6995 = vmatmul.bf16.gmra.mxu0 %v1295
        %v6996 = vpop.f32.mrf.mxu0
        %v6997 = vadd.f32 %v6908, %v6996
        %v6998 = vpop.f32.mrf.mxu0
        %v6999 = vadd.f32 %v6910, %v6998
        %7000 = vmatmul.bf16.gmra.mxu0 %v1297
        %v7001 = vpop.f32.mrf.mxu0
        %v7002 = vadd.f32 %v6913, %v7001
        %v7003 = vpop.f32.mrf.mxu0
        %v7004 = vadd.f32 %v6915, %v7003
        %7005 = vdwg.mxu0
        %7006 = vmatpush.bf16.msra.mxu0 %v6779
        %7007 = vmatpush.bf16.msra.mxu0 %v6777
        %7008 = vmatpush.bf16.msra.mxu0 %v6775
        %7009 = vmatpush.bf16.msra.mxu0 %v6773
        %7010 = vmatpush.bf16.msra.mxu0 %v6771
        %7011 = vmatpush.bf16.msra.mxu0 %v6769
        %7012 = vmatpush.bf16.msra.mxu0 %v6767
        %7013 = vmatpush.bf16.msra.mxu0 %v6765
        %7014 = vmatmul.bf16.gmra.mxu0 %v1266
        %v7015 = vpop.f32.mrf.mxu0
        %v7016 = vadd.f32 %v6589, %v7015
        %v7017 = vpop.f32.mrf.mxu0
        %v7018 = vadd.f32 %v6591, %v7017
        %7019 = vmatmul.bf16.gmra.mxu0 %v1268
        %v7020 = vpop.f32.mrf.mxu0
        %v7021 = vadd.f32 %v6594, %v7020
        %v7022 = vpop.f32.mrf.mxu0
        %v7023 = vadd.f32 %v6596, %v7022
        %7024 = vmatmul.bf16.gmra.mxu0 %v1270
        %v7025 = vpop.f32.mrf.mxu0
        %v7026 = vadd.f32 %v6599, %v7025
        %v7027 = vpop.f32.mrf.mxu0
        %v7028 = vadd.f32 %v6601, %v7027
        %7029 = vmatmul.bf16.gmra.mxu0 %v1272
        %v7030 = vpop.f32.mrf.mxu0
        %v7031 = vadd.f32 %v6604, %v7030
        %v7032 = vpop.f32.mrf.mxu0
        %v7033 = vadd.f32 %v6606, %v7032
        %7034 = vmatmul.bf16.gmra.mxu0 %v1274
        %v7035 = vpop.f32.mrf.mxu0
        %v7036 = vadd.f32 %v6609, %v7035
        %v7037 = vpop.f32.mrf.mxu0
        %v7038 = vadd.f32 %v6611, %v7037
        %7039 = vmatmul.bf16.gmra.mxu0 %v1276
        %v7040 = vpop.f32.mrf.mxu0
        %v7041 = vadd.f32 %v6614, %v7040
        %v7042 = vpop.f32.mrf.mxu0
        %v7043 = vadd.f32 %v6616, %v7042
        %7044 = vmatmul.bf16.gmra.mxu0 %v1278
        %v7045 = vpop.f32.mrf.mxu0
        %v7046 = vadd.f32 %v6619, %v7045
        %v7047 = vpop.f32.mrf.mxu0
        %v7048 = vadd.f32 %v6621, %v7047
        %7049 = vmatmul.bf16.gmra.mxu0 %v1280
        %v7050 = vpop.f32.mrf.mxu0
        %v7051 = vadd.f32 %v6624, %v7050
        %v7052 = vpop.f32.mrf.mxu0
        %v7053 = vadd.f32 %v6626, %v7052
        %7054 = vmatmul.bf16.gmra.mxu0 %v1282
        %v7055 = vpop.f32.mrf.mxu0
        %v7056 = vadd.f32 %v6629, %v7055
        %v7057 = vpop.f32.mrf.mxu0
        %v7058 = vadd.f32 %v6631, %v7057
        %7059 = vmatmul.bf16.gmra.mxu0 %v1284
        %v7060 = vpop.f32.mrf.mxu0
        %v7061 = vadd.f32 %v6634, %v7060
        %v7062 = vpop.f32.mrf.mxu0
        %v7063 = vadd.f32 %v6636, %v7062
        %7064 = vmatmul.bf16.gmra.mxu0 %v1286
        %v7065 = vpop.f32.mrf.mxu0
        %v7066 = vadd.f32 %v6639, %v7065
        %v7067 = vpop.f32.mrf.mxu0
        %v7068 = vadd.f32 %v6641, %v7067
        %7069 = vmatmul.bf16.gmra.mxu0 %v1288
        %v7070 = vpop.f32.mrf.mxu0
        %v7071 = vadd.f32 %v6644, %v7070
        %v7072 = vpop.f32.mrf.mxu0
        %v7073 = vadd.f32 %v6646, %v7072
        %7074 = vmatmul.bf16.gmra.mxu0 %v1290
        %v7075 = vpop.f32.mrf.mxu0
        %v7076 = vadd.f32 %v6649, %v7075
        %v7077 = vpop.f32.mrf.mxu0
        %v7078 = vadd.f32 %v6651, %v7077
        %7079 = vmatmul.bf16.gmra.mxu0 %v1292
        %v7080 = vpop.f32.mrf.mxu0
        %v7081 = vadd.f32 %v6654, %v7080
        %v7082 = vpop.f32.mrf.mxu0
        %v7083 = vadd.f32 %v6656, %v7082
        %7084 = vmatmul.bf16.gmra.mxu0 %v1294
        %v7085 = vpop.f32.mrf.mxu0
        %v7086 = vadd.f32 %v6659, %v7085
        %v7087 = vpop.f32.mrf.mxu0
        %v7088 = vadd.f32 %v6661, %v7087
        %7089 = vmatmul.bf16.gmra.mxu0 %v1296
        %v7090 = vpop.f32.mrf.mxu0
        %v7091 = vadd.f32 %v6664, %v7090
        %v7092 = vpop.f32.mrf.mxu0
        %v7093 = vadd.f32 %v6666, %v7092
        %7094 = vdwg.mxu0
        %7095 = vmatpush.bf16.msra.mxu0 %v6795
        %7096 = vmatpush.bf16.msra.mxu0 %v6793
        %7097 = vmatpush.bf16.msra.mxu0 %v6791
        %7098 = vmatpush.bf16.msra.mxu0 %v6789
        %7099 = vmatpush.bf16.msra.mxu0 %v6787
        %7100 = vmatpush.bf16.msra.mxu0 %v6785
        %7101 = vmatpush.bf16.msra.mxu0 %v6783
        %7102 = vmatpush.bf16.msra.mxu0 %v6781
        %7103 = vmatmul.bf16.gmra.mxu0 %v1267
        %v7104 = vpop.f32.mrf.mxu0
        %v7105 = vadd.f32 %v7016, %v7104
        %v7106 = vpop.f32.mrf.mxu0
        %v7107 = vadd.f32 %v7018, %v7106
        %7108 = vmatmul.bf16.gmra.mxu0 %v1269
        %v7109 = vpop.f32.mrf.mxu0
        %v7110 = vadd.f32 %v7021, %v7109
        %v7111 = vpop.f32.mrf.mxu0
        %v7112 = vadd.f32 %v7023, %v7111
        %7113 = vmatmul.bf16.gmra.mxu0 %v1271
        %v7114 = vpop.f32.mrf.mxu0
        %v7115 = vadd.f32 %v7026, %v7114
        %v7116 = vpop.f32.mrf.mxu0
        %v7117 = vadd.f32 %v7028, %v7116
        %7118 = vmatmul.bf16.gmra.mxu0 %v1273
        %v7119 = vpop.f32.mrf.mxu0
        %v7120 = vadd.f32 %v7031, %v7119
        %v7121 = vpop.f32.mrf.mxu0
        %v7122 = vadd.f32 %v7033, %v7121
        %7123 = vmatmul.bf16.gmra.mxu0 %v1275
        %v7124 = vpop.f32.mrf.mxu0
        %v7125 = vadd.f32 %v7036, %v7124
        %v7126 = vpop.f32.mrf.mxu0
        %v7127 = vadd.f32 %v7038, %v7126
        %7128 = vmatmul.bf16.gmra.mxu0 %v1277
        %v7129 = vpop.f32.mrf.mxu0
        %v7130 = vadd.f32 %v7041, %v7129
        %v7131 = vpop.f32.mrf.mxu0
        %v7132 = vadd.f32 %v7043, %v7131
        %7133 = vmatmul.bf16.gmra.mxu0 %v1279
        %v7134 = vpop.f32.mrf.mxu0
        %v7135 = vadd.f32 %v7046, %v7134
        %v7136 = vpop.f32.mrf.mxu0
        %v7137 = vadd.f32 %v7048, %v7136
        %7138 = vmatmul.bf16.gmra.mxu0 %v1281
        %v7139 = vpop.f32.mrf.mxu0
        %v7140 = vadd.f32 %v7051, %v7139
        %v7141 = vpop.f32.mrf.mxu0
        %v7142 = vadd.f32 %v7053, %v7141
        %7143 = vmatmul.bf16.gmra.mxu0 %v1283
        %v7144 = vpop.f32.mrf.mxu0
        %v7145 = vadd.f32 %v7056, %v7144
        %v7146 = vpop.f32.mrf.mxu0
        %v7147 = vadd.f32 %v7058, %v7146
        %7148 = vmatmul.bf16.gmra.mxu0 %v1285
        %v7149 = vpop.f32.mrf.mxu0
        %v7150 = vadd.f32 %v7061, %v7149
        %v7151 = vpop.f32.mrf.mxu0
        %v7152 = vadd.f32 %v7063, %v7151
        %7153 = vmatmul.bf16.gmra.mxu0 %v1287
        %v7154 = vpop.f32.mrf.mxu0
        %v7155 = vadd.f32 %v7066, %v7154
        %v7156 = vpop.f32.mrf.mxu0
        %v7157 = vadd.f32 %v7068, %v7156
        %7158 = vmatmul.bf16.gmra.mxu0 %v1289
        %v7159 = vpop.f32.mrf.mxu0
        %v7160 = vadd.f32 %v7071, %v7159
        %v7161 = vpop.f32.mrf.mxu0
        %v7162 = vadd.f32 %v7073, %v7161
        %7163 = vmatmul.bf16.gmra.mxu0 %v1291
        %v7164 = vpop.f32.mrf.mxu0
        %v7165 = vadd.f32 %v7076, %v7164
        %v7166 = vpop.f32.mrf.mxu0
        %v7167 = vadd.f32 %v7078, %v7166
        %7168 = vmatmul.bf16.gmra.mxu0 %v1293
        %v7169 = vpop.f32.mrf.mxu0
        %v7170 = vadd.f32 %v7081, %v7169
        %v7171 = vpop.f32.mrf.mxu0
        %v7172 = vadd.f32 %v7083, %v7171
        %7173 = vmatmul.bf16.gmra.mxu0 %v1295
        %v7174 = vpop.f32.mrf.mxu0
        %v7175 = vadd.f32 %v7086, %v7174
        %v7176 = vpop.f32.mrf.mxu0
        %v7177 = vadd.f32 %v7088, %v7176
        %7178 = vmatmul.bf16.gmra.mxu0 %v1297
        %v7179 = vpop.f32.mrf.mxu0
        %v7180 = vadd.f32 %v7091, %v7179
        %v7181 = vpop.f32.mrf.mxu0
        %v7182 = vadd.f32 %v7093, %v7181
        %7183 = vdwg.mxu0
        %v7184 = vld [vmem:[%s11] sm:$0xff]
        %v7185 = vld [vmem:[%s11 + $0x8] sm:$0xff]
        %v7186 = vld [vmem:[%s11 + $0x10] sm:$0xff]
        %v7187 = vld [vmem:[%s11 + $0x18] sm:$0xff]
        %v7188 = vld [vmem:[%s11 + $0x20] sm:$0xff]
        %v7189 = vld [vmem:[%s11 + $0x28] sm:$0xff]
        %v7190 = vld [vmem:[%s11 + $0x30] sm:$0xff]
        %v7191 = vld [vmem:[%s11 + $0x38] sm:$0xff]
        %v7192 = vld [vmem:[%s11 + $0x40] sm:$0xff]
        %v7193 = vld [vmem:[%s11 + $0x48] sm:$0xff]
        %v7194 = vld [vmem:[%s11 + $0x50] sm:$0xff]
        %v7195 = vld [vmem:[%s11 + $0x58] sm:$0xff]
        %v7196 = vld [vmem:[%s11 + $0x60] sm:$0xff]
        %v7197 = vld [vmem:[%s11 + $0x68] sm:$0xff]
        %v7198 = vld [vmem:[%s11 + $0x70] sm:$0xff]
        %v7199 = vld [vmem:[%s11 + $0x78] sm:$0xff]
        %v7200 = vld [vmem:[%s11 + $0x80] sm:$0xff]
        %v7201 = vld [vmem:[%s11 + $0x88] sm:$0xff]
        %v7202 = vld [vmem:[%s11 + $0x90] sm:$0xff]
        %v7203 = vld [vmem:[%s11 + $0x98] sm:$0xff]
        %v7204 = vld [vmem:[%s11 + $0xa0] sm:$0xff]
        %v7205 = vld [vmem:[%s11 + $0xa8] sm:$0xff]
        %v7206 = vld [vmem:[%s11 + $0xb0] sm:$0xff]
        %v7207 = vld [vmem:[%s11 + $0xb8] sm:$0xff]
        %v7208 = vld [vmem:[%s11 + $0xc0] sm:$0xff]
        %v7209 = vld [vmem:[%s11 + $0xc8] sm:$0xff]
        %v7210 = vld [vmem:[%s11 + $0xd0] sm:$0xff]
        %v7211 = vld [vmem:[%s11 + $0xd8] sm:$0xff]
        %v7212 = vld [vmem:[%s11 + $0xe0] sm:$0xff]
        %v7213 = vld [vmem:[%s11 + $0xe8] sm:$0xff]
        %v7214 = vld [vmem:[%s11 + $0xf0] sm:$0xff]
        %v7215 = vld [vmem:[%s11 + $0xf8] sm:$0xff]
        %v7248 = vunpack.c.l.b16 %v7184
        %v7249 = vunpack.c.h.b16 %v7184
        %v7250 = vunpack.c.l.b16 %v7185
        %v7251 = vunpack.c.h.b16 %v7185
        %v7252 = vunpack.c.l.b16 %v7186
        %v7253 = vunpack.c.h.b16 %v7186
        %v7254 = vunpack.c.l.b16 %v7187
        %v7255 = vunpack.c.h.b16 %v7187
        %v7256 = vunpack.c.l.b16 %v7188
        %v7257 = vunpack.c.h.b16 %v7188
        %v7258 = vunpack.c.l.b16 %v7189
        %v7259 = vunpack.c.h.b16 %v7189
        %v7260 = vunpack.c.l.b16 %v7190
        %v7261 = vunpack.c.h.b16 %v7190
        %v7262 = vunpack.c.l.b16 %v7191
        %v7263 = vunpack.c.h.b16 %v7191
        %v7264 = vunpack.c.l.b16 %v7192
        %v7265 = vunpack.c.h.b16 %v7192
        %v7266 = vunpack.c.l.b16 %v7193
        %v7267 = vunpack.c.h.b16 %v7193
        %v7268 = vunpack.c.l.b16 %v7194
        %v7269 = vunpack.c.h.b16 %v7194
        %v7270 = vunpack.c.l.b16 %v7195
        %v7271 = vunpack.c.h.b16 %v7195
        %v7272 = vunpack.c.l.b16 %v7196
        %v7273 = vunpack.c.h.b16 %v7196
        %v7274 = vunpack.c.l.b16 %v7197
        %v7275 = vunpack.c.h.b16 %v7197
        %v7276 = vunpack.c.l.b16 %v7198
        %v7277 = vunpack.c.h.b16 %v7198
        %v7278 = vunpack.c.l.b16 %v7199
        %v7279 = vunpack.c.h.b16 %v7199
        %v7280 = vunpack.c.l.b16 %v7200
        %v7281 = vunpack.c.h.b16 %v7200
        %v7282 = vunpack.c.l.b16 %v7201
        %v7283 = vunpack.c.h.b16 %v7201
        %v7284 = vunpack.c.l.b16 %v7202
        %v7285 = vunpack.c.h.b16 %v7202
        %v7286 = vunpack.c.l.b16 %v7203
        %v7287 = vunpack.c.h.b16 %v7203
        %v7288 = vunpack.c.l.b16 %v7204
        %v7289 = vunpack.c.h.b16 %v7204
        %v7290 = vunpack.c.l.b16 %v7205
        %v7291 = vunpack.c.h.b16 %v7205
        %v7292 = vunpack.c.l.b16 %v7206
        %v7293 = vunpack.c.h.b16 %v7206
        %v7294 = vunpack.c.l.b16 %v7207
        %v7295 = vunpack.c.h.b16 %v7207
        %v7296 = vunpack.c.l.b16 %v7208
        %v7297 = vunpack.c.h.b16 %v7208
        %v7298 = vunpack.c.l.b16 %v7209
        %v7299 = vunpack.c.h.b16 %v7209
        %v7300 = vunpack.c.l.b16 %v7210
        %v7301 = vunpack.c.h.b16 %v7210
        %v7302 = vunpack.c.l.b16 %v7211
        %v7303 = vunpack.c.h.b16 %v7211
        %v7304 = vunpack.c.l.b16 %v7212
        %v7305 = vunpack.c.h.b16 %v7212
        %v7306 = vunpack.c.l.b16 %v7213
        %v7307 = vunpack.c.h.b16 %v7213
        %v7308 = vunpack.c.l.b16 %v7214
        %v7309 = vunpack.c.h.b16 %v7214
        %v7310 = vunpack.c.l.b16 %v7215
        %v7311 = vunpack.c.h.b16 %v7215
        %v7312 = vpack.c.b16 %v7250, %v7248
        %v7313 = vpack.c.b16 %v7251, %v7249
        %v7314 = vpack.c.b16 %v7254, %v7252
        %v7315 = vpack.c.b16 %v7255, %v7253
        %v7316 = vpack.c.b16 %v7258, %v7256
        %v7317 = vpack.c.b16 %v7259, %v7257
        %v7318 = vpack.c.b16 %v7262, %v7260
        %v7319 = vpack.c.b16 %v7263, %v7261
        %v7320 = vpack.c.b16 %v7266, %v7264
        %v7321 = vpack.c.b16 %v7267, %v7265
        %v7322 = vpack.c.b16 %v7270, %v7268
        %v7323 = vpack.c.b16 %v7271, %v7269
        %v7324 = vpack.c.b16 %v7274, %v7272
        %v7325 = vpack.c.b16 %v7275, %v7273
        %v7326 = vpack.c.b16 %v7278, %v7276
        %v7327 = vpack.c.b16 %v7279, %v7277
        %v7328 = vpack.c.b16 %v7282, %v7280
        %v7329 = vpack.c.b16 %v7283, %v7281
        %v7330 = vpack.c.b16 %v7286, %v7284
        %v7331 = vpack.c.b16 %v7287, %v7285
        %v7332 = vpack.c.b16 %v7290, %v7288
        %v7333 = vpack.c.b16 %v7291, %v7289
        %v7334 = vpack.c.b16 %v7294, %v7292
        %v7335 = vpack.c.b16 %v7295, %v7293
        %v7336 = vpack.c.b16 %v7298, %v7296
        %v7337 = vpack.c.b16 %v7299, %v7297
        %v7338 = vpack.c.b16 %v7302, %v7300
        %v7339 = vpack.c.b16 %v7303, %v7301
        %v7340 = vpack.c.b16 %v7306, %v7304
        %v7341 = vpack.c.b16 %v7307, %v7305
        %v7342 = vpack.c.b16 %v7310, %v7308
        %v7343 = vpack.c.b16 %v7311, %v7309
        %7376 = vmatpush.bf16.msra.mxu0 %v7326
        %7377 = vmatpush.bf16.msra.mxu0 %v7324
        %7378 = vmatpush.bf16.msra.mxu0 %v7322
        %7379 = vmatpush.bf16.msra.mxu0 %v7320
        %7380 = vmatpush.bf16.msra.mxu0 %v7318
        %7381 = vmatpush.bf16.msra.mxu0 %v7316
        %7382 = vmatpush.bf16.msra.mxu0 %v7314
        %7383 = vmatpush.bf16.msra.mxu0 %v7312
        %7384 = vmatmul.bf16.gmra.mxu0 %v5446
        %v7385 = vpop.f32.mrf.mxu0
        %v7386 = vadd.f32 0.0, %v7385
        %v7387 = vpop.f32.mrf.mxu0
        %v7388 = vadd.f32 0.0, %v7387
        %7389 = vmatmul.bf16.gmra.mxu0 %v5448
        %v7390 = vpop.f32.mrf.mxu0
        %v7391 = vadd.f32 0.0, %v7390
        %v7392 = vpop.f32.mrf.mxu0
        %v7393 = vadd.f32 0.0, %v7392
        %7394 = vmatmul.bf16.gmra.mxu0 %v5450
        %v7395 = vpop.f32.mrf.mxu0
        %v7396 = vadd.f32 0.0, %v7395
        %v7397 = vpop.f32.mrf.mxu0
        %v7398 = vadd.f32 0.0, %v7397
        %7399 = vmatmul.bf16.gmra.mxu0 %v5452
        %v7400 = vpop.f32.mrf.mxu0
        %v7401 = vadd.f32 0.0, %v7400
        %v7402 = vpop.f32.mrf.mxu0
        %v7403 = vadd.f32 0.0, %v7402
        %7404 = vmatmul.bf16.gmra.mxu0 %v5454
        %v7405 = vpop.f32.mrf.mxu0
        %v7406 = vadd.f32 0.0, %v7405
        %v7407 = vpop.f32.mrf.mxu0
        %v7408 = vadd.f32 0.0, %v7407
        %7409 = vmatmul.bf16.gmra.mxu0 %v5456
        %v7410 = vpop.f32.mrf.mxu0
        %v7411 = vadd.f32 0.0, %v7410
        %v7412 = vpop.f32.mrf.mxu0
        %v7413 = vadd.f32 0.0, %v7412
        %7414 = vmatmul.bf16.gmra.mxu0 %v5458
        %v7415 = vpop.f32.mrf.mxu0
        %v7416 = vadd.f32 0.0, %v7415
        %v7417 = vpop.f32.mrf.mxu0
        %v7418 = vadd.f32 0.0, %v7417
        %7419 = vmatmul.bf16.gmra.mxu0 %v5460
        %v7420 = vpop.f32.mrf.mxu0
        %v7421 = vadd.f32 0.0, %v7420
        %v7422 = vpop.f32.mrf.mxu0
        %v7423 = vadd.f32 0.0, %v7422
        %7424 = vmatmul.bf16.gmra.mxu0 %v5462
        %v7425 = vpop.f32.mrf.mxu0
        %v7426 = vadd.f32 0.0, %v7425
        %v7427 = vpop.f32.mrf.mxu0
        %v7428 = vadd.f32 0.0, %v7427
        %7429 = vmatmul.bf16.gmra.mxu0 %v5464
        %v7430 = vpop.f32.mrf.mxu0
        %v7431 = vadd.f32 0.0, %v7430
        %v7432 = vpop.f32.mrf.mxu0
        %v7433 = vadd.f32 0.0, %v7432
        %7434 = vmatmul.bf16.gmra.mxu0 %v5466
        %v7435 = vpop.f32.mrf.mxu0
        %v7436 = vadd.f32 0.0, %v7435
        %v7437 = vpop.f32.mrf.mxu0
        %v7438 = vadd.f32 0.0, %v7437
        %7439 = vmatmul.bf16.gmra.mxu0 %v5468
        %v7440 = vpop.f32.mrf.mxu0
        %v7441 = vadd.f32 0.0, %v7440
        %v7442 = vpop.f32.mrf.mxu0
        %v7443 = vadd.f32 0.0, %v7442
        %7444 = vmatmul.bf16.gmra.mxu0 %v5470
        %v7445 = vpop.f32.mrf.mxu0
        %v7446 = vadd.f32 0.0, %v7445
        %v7447 = vpop.f32.mrf.mxu0
        %v7448 = vadd.f32 0.0, %v7447
        %7449 = vmatmul.bf16.gmra.mxu0 %v5472
        %v7450 = vpop.f32.mrf.mxu0
        %v7451 = vadd.f32 0.0, %v7450
        %v7452 = vpop.f32.mrf.mxu0
        %v7453 = vadd.f32 0.0, %v7452
        %7454 = vmatmul.bf16.gmra.mxu0 %v5474
        %v7455 = vpop.f32.mrf.mxu0
        %v7456 = vadd.f32 0.0, %v7455
        %v7457 = vpop.f32.mrf.mxu0
        %v7458 = vadd.f32 0.0, %v7457
        %7459 = vmatmul.bf16.gmra.mxu0 %v5476
        %v7460 = vpop.f32.mrf.mxu0
        %v7461 = vadd.f32 0.0, %v7460
        %v7462 = vpop.f32.mrf.mxu0
        %v7463 = vadd.f32 0.0, %v7462
        %7464 = vdwg.mxu0
        %7465 = vmatpush.bf16.msra.mxu0 %v7342
        %7466 = vmatpush.bf16.msra.mxu0 %v7340
        %7467 = vmatpush.bf16.msra.mxu0 %v7338
        %7468 = vmatpush.bf16.msra.mxu0 %v7336
        %7469 = vmatpush.bf16.msra.mxu0 %v7334
        %7470 = vmatpush.bf16.msra.mxu0 %v7332
        %7471 = vmatpush.bf16.msra.mxu0 %v7330
        %7472 = vmatpush.bf16.msra.mxu0 %v7328
        %7473 = vmatmul.bf16.gmra.mxu0 %v5447
        %v7474 = vpop.f32.mrf.mxu0
        %v7475 = vadd.f32 %v7386, %v7474
        %v7476 = vpop.f32.mrf.mxu0
        %v7477 = vadd.f32 %v7388, %v7476
        %7478 = vmatmul.bf16.gmra.mxu0 %v5449
        %v7479 = vpop.f32.mrf.mxu0
        %v7480 = vadd.f32 %v7391, %v7479
        %v7481 = vpop.f32.mrf.mxu0
        %v7482 = vadd.f32 %v7393, %v7481
        %7483 = vmatmul.bf16.gmra.mxu0 %v5451
        %v7484 = vpop.f32.mrf.mxu0
        %v7485 = vadd.f32 %v7396, %v7484
        %v7486 = vpop.f32.mrf.mxu0
        %v7487 = vadd.f32 %v7398, %v7486
        %7488 = vmatmul.bf16.gmra.mxu0 %v5453
        %v7489 = vpop.f32.mrf.mxu0
        %v7490 = vadd.f32 %v7401, %v7489
        %v7491 = vpop.f32.mrf.mxu0
        %v7492 = vadd.f32 %v7403, %v7491
        %7493 = vmatmul.bf16.gmra.mxu0 %v5455
        %v7494 = vpop.f32.mrf.mxu0
        %v7495 = vadd.f32 %v7406, %v7494
        %v7496 = vpop.f32.mrf.mxu0
        %v7497 = vadd.f32 %v7408, %v7496
        %7498 = vmatmul.bf16.gmra.mxu0 %v5457
        %v7499 = vpop.f32.mrf.mxu0
        %v7500 = vadd.f32 %v7411, %v7499
        %v7501 = vpop.f32.mrf.mxu0
        %v7502 = vadd.f32 %v7413, %v7501
        %7503 = vmatmul.bf16.gmra.mxu0 %v5459
        %v7504 = vpop.f32.mrf.mxu0
        %v7505 = vadd.f32 %v7416, %v7504
        %v7506 = vpop.f32.mrf.mxu0
        %v7507 = vadd.f32 %v7418, %v7506
        %7508 = vmatmul.bf16.gmra.mxu0 %v5461
        %v7509 = vpop.f32.mrf.mxu0
        %v7510 = vadd.f32 %v7421, %v7509
        %v7511 = vpop.f32.mrf.mxu0
        %v7512 = vadd.f32 %v7423, %v7511
        %7513 = vmatmul.bf16.gmra.mxu0 %v5463
        %v7514 = vpop.f32.mrf.mxu0
        %v7515 = vadd.f32 %v7426, %v7514
        %v7516 = vpop.f32.mrf.mxu0
        %v7517 = vadd.f32 %v7428, %v7516
        %7518 = vmatmul.bf16.gmra.mxu0 %v5465
        %v7519 = vpop.f32.mrf.mxu0
        %v7520 = vadd.f32 %v7431, %v7519
        %v7521 = vpop.f32.mrf.mxu0
        %v7522 = vadd.f32 %v7433, %v7521
        %7523 = vmatmul.bf16.gmra.mxu0 %v5467
        %v7524 = vpop.f32.mrf.mxu0
        %v7525 = vadd.f32 %v7436, %v7524
        %v7526 = vpop.f32.mrf.mxu0
        %v7527 = vadd.f32 %v7438, %v7526
        %7528 = vmatmul.bf16.gmra.mxu0 %v5469
        %v7529 = vpop.f32.mrf.mxu0
        %v7530 = vadd.f32 %v7441, %v7529
        %v7531 = vpop.f32.mrf.mxu0
        %v7532 = vadd.f32 %v7443, %v7531
        %7533 = vmatmul.bf16.gmra.mxu0 %v5471
        %v7534 = vpop.f32.mrf.mxu0
        %v7535 = vadd.f32 %v7446, %v7534
        %v7536 = vpop.f32.mrf.mxu0
        %v7537 = vadd.f32 %v7448, %v7536
        %7538 = vmatmul.bf16.gmra.mxu0 %v5473
        %v7539 = vpop.f32.mrf.mxu0
        %v7540 = vadd.f32 %v7451, %v7539
        %v7541 = vpop.f32.mrf.mxu0
        %v7542 = vadd.f32 %v7453, %v7541
        %7543 = vmatmul.bf16.gmra.mxu0 %v5475
        %v7544 = vpop.f32.mrf.mxu0
        %v7545 = vadd.f32 %v7456, %v7544
        %v7546 = vpop.f32.mrf.mxu0
        %v7547 = vadd.f32 %v7458, %v7546
        %7548 = vmatmul.bf16.gmra.mxu0 %v5477
        %v7549 = vpop.f32.mrf.mxu0
        %v7550 = vadd.f32 %v7461, %v7549
        %v7551 = vpop.f32.mrf.mxu0
        %v7552 = vadd.f32 %v7463, %v7551
        %7553 = vdwg.mxu0
        %7554 = vmatpush.bf16.msra.mxu0 %v7327
        %7555 = vmatpush.bf16.msra.mxu0 %v7325
        %7556 = vmatpush.bf16.msra.mxu0 %v7323
        %7557 = vmatpush.bf16.msra.mxu0 %v7321
        %7558 = vmatpush.bf16.msra.mxu0 %v7319
        %7559 = vmatpush.bf16.msra.mxu0 %v7317
        %7560 = vmatpush.bf16.msra.mxu0 %v7315
        %7561 = vmatpush.bf16.msra.mxu0 %v7313
        %7562 = vmatmul.bf16.gmra.mxu0 %v5446
        %v7563 = vpop.f32.mrf.mxu0
        %v7564 = vadd.f32 0.0, %v7563
        %v7565 = vpop.f32.mrf.mxu0
        %v7566 = vadd.f32 0.0, %v7565
        %7567 = vmatmul.bf16.gmra.mxu0 %v5448
        %v7568 = vpop.f32.mrf.mxu0
        %v7569 = vadd.f32 0.0, %v7568
        %v7570 = vpop.f32.mrf.mxu0
        %v7571 = vadd.f32 0.0, %v7570
        %7572 = vmatmul.bf16.gmra.mxu0 %v5450
        %v7573 = vpop.f32.mrf.mxu0
        %v7574 = vadd.f32 0.0, %v7573
        %v7575 = vpop.f32.mrf.mxu0
        %v7576 = vadd.f32 0.0, %v7575
        %7577 = vmatmul.bf16.gmra.mxu0 %v5452
        %v7578 = vpop.f32.mrf.mxu0
        %v7579 = vadd.f32 0.0, %v7578
        %v7580 = vpop.f32.mrf.mxu0
        %v7581 = vadd.f32 0.0, %v7580
        %7582 = vmatmul.bf16.gmra.mxu0 %v5454
        %v7583 = vpop.f32.mrf.mxu0
        %v7584 = vadd.f32 0.0, %v7583
        %v7585 = vpop.f32.mrf.mxu0
        %v7586 = vadd.f32 0.0, %v7585
        %7587 = vmatmul.bf16.gmra.mxu0 %v5456
        %v7588 = vpop.f32.mrf.mxu0
        %v7589 = vadd.f32 0.0, %v7588
        %v7590 = vpop.f32.mrf.mxu0
        %v7591 = vadd.f32 0.0, %v7590
        %7592 = vmatmul.bf16.gmra.mxu0 %v5458
        %v7593 = vpop.f32.mrf.mxu0
        %v7594 = vadd.f32 0.0, %v7593
        %v7595 = vpop.f32.mrf.mxu0
        %v7596 = vadd.f32 0.0, %v7595
        %7597 = vmatmul.bf16.gmra.mxu0 %v5460
        %v7598 = vpop.f32.mrf.mxu0
        %v7599 = vadd.f32 0.0, %v7598
        %v7600 = vpop.f32.mrf.mxu0
        %v7601 = vadd.f32 0.0, %v7600
        %7602 = vmatmul.bf16.gmra.mxu0 %v5462
        %v7603 = vpop.f32.mrf.mxu0
        %v7604 = vadd.f32 0.0, %v7603
        %v7605 = vpop.f32.mrf.mxu0
        %v7606 = vadd.f32 0.0, %v7605
        %7607 = vmatmul.bf16.gmra.mxu0 %v5464
        %v7608 = vpop.f32.mrf.mxu0
        %v7609 = vadd.f32 0.0, %v7608
        %v7610 = vpop.f32.mrf.mxu0
        %v7611 = vadd.f32 0.0, %v7610
        %7612 = vmatmul.bf16.gmra.mxu0 %v5466
        %v7613 = vpop.f32.mrf.mxu0
        %v7614 = vadd.f32 0.0, %v7613
        %v7615 = vpop.f32.mrf.mxu0
        %v7616 = vadd.f32 0.0, %v7615
        %7617 = vmatmul.bf16.gmra.mxu0 %v5468
        %v7618 = vpop.f32.mrf.mxu0
        %v7619 = vadd.f32 0.0, %v7618
        %v7620 = vpop.f32.mrf.mxu0
        %v7621 = vadd.f32 0.0, %v7620
        %7622 = vmatmul.bf16.gmra.mxu0 %v5470
        %v7623 = vpop.f32.mrf.mxu0
        %v7624 = vadd.f32 0.0, %v7623
        %v7625 = vpop.f32.mrf.mxu0
        %v7626 = vadd.f32 0.0, %v7625
        %7627 = vmatmul.bf16.gmra.mxu0 %v5472
        %v7628 = vpop.f32.mrf.mxu0
        %v7629 = vadd.f32 0.0, %v7628
        %v7630 = vpop.f32.mrf.mxu0
        %v7631 = vadd.f32 0.0, %v7630
        %7632 = vmatmul.bf16.gmra.mxu0 %v5474
        %v7633 = vpop.f32.mrf.mxu0
        %v7634 = vadd.f32 0.0, %v7633
        %v7635 = vpop.f32.mrf.mxu0
        %v7636 = vadd.f32 0.0, %v7635
        %7637 = vmatmul.bf16.gmra.mxu0 %v5476
        %v7638 = vpop.f32.mrf.mxu0
        %v7639 = vadd.f32 0.0, %v7638
        %v7640 = vpop.f32.mrf.mxu0
        %v7641 = vadd.f32 0.0, %v7640
        %7642 = vdwg.mxu0
        %7643 = vmatpush.bf16.msra.mxu0 %v7343
        %7644 = vmatpush.bf16.msra.mxu0 %v7341
        %7645 = vmatpush.bf16.msra.mxu0 %v7339
        %7646 = vmatpush.bf16.msra.mxu0 %v7337
        %7647 = vmatpush.bf16.msra.mxu0 %v7335
        %7648 = vmatpush.bf16.msra.mxu0 %v7333
        %7649 = vmatpush.bf16.msra.mxu0 %v7331
        %7650 = vmatpush.bf16.msra.mxu0 %v7329
        %7651 = vmatmul.bf16.gmra.mxu0 %v5447
        %v7652 = vpop.f32.mrf.mxu0
        %v7653 = vadd.f32 %v7564, %v7652
        %v7654 = vpop.f32.mrf.mxu0
        %v7655 = vadd.f32 %v7566, %v7654
        %7656 = vmatmul.bf16.gmra.mxu0 %v5449
        %v7657 = vpop.f32.mrf.mxu0
        %v7658 = vadd.f32 %v7569, %v7657
        %v7659 = vpop.f32.mrf.mxu0
        %v7660 = vadd.f32 %v7571, %v7659
        %7661 = vmatmul.bf16.gmra.mxu0 %v5451
        %v7662 = vpop.f32.mrf.mxu0
        %v7663 = vadd.f32 %v7574, %v7662
        %v7664 = vpop.f32.mrf.mxu0
        %v7665 = vadd.f32 %v7576, %v7664
        %7666 = vmatmul.bf16.gmra.mxu0 %v5453
        %v7667 = vpop.f32.mrf.mxu0
        %v7668 = vadd.f32 %v7579, %v7667
        %v7669 = vpop.f32.mrf.mxu0
        %v7670 = vadd.f32 %v7581, %v7669
        %7671 = vmatmul.bf16.gmra.mxu0 %v5455
        %v7672 = vpop.f32.mrf.mxu0
        %v7673 = vadd.f32 %v7584, %v7672
        %v7674 = vpop.f32.mrf.mxu0
        %v7675 = vadd.f32 %v7586, %v7674
        %7676 = vmatmul.bf16.gmra.mxu0 %v5457
        %v7677 = vpop.f32.mrf.mxu0
        %v7678 = vadd.f32 %v7589, %v7677
        %v7679 = vpop.f32.mrf.mxu0
        %v7680 = vadd.f32 %v7591, %v7679
        %7681 = vmatmul.bf16.gmra.mxu0 %v5459
        %v7682 = vpop.f32.mrf.mxu0
        %v7683 = vadd.f32 %v7594, %v7682
        %v7684 = vpop.f32.mrf.mxu0
        %v7685 = vadd.f32 %v7596, %v7684
        %7686 = vmatmul.bf16.gmra.mxu0 %v5461
        %v7687 = vpop.f32.mrf.mxu0
        %v7688 = vadd.f32 %v7599, %v7687
        %v7689 = vpop.f32.mrf.mxu0
        %v7690 = vadd.f32 %v7601, %v7689
        %7691 = vmatmul.bf16.gmra.mxu0 %v5463
        %v7692 = vpop.f32.mrf.mxu0
        %v7693 = vadd.f32 %v7604, %v7692
        %v7694 = vpop.f32.mrf.mxu0
        %v7695 = vadd.f32 %v7606, %v7694
        %7696 = vmatmul.bf16.gmra.mxu0 %v5465
        %v7697 = vpop.f32.mrf.mxu0
        %v7698 = vadd.f32 %v7609, %v7697
        %v7699 = vpop.f32.mrf.mxu0
        %v7700 = vadd.f32 %v7611, %v7699
        %7701 = vmatmul.bf16.gmra.mxu0 %v5467
        %v7702 = vpop.f32.mrf.mxu0
        %v7703 = vadd.f32 %v7614, %v7702
        %v7704 = vpop.f32.mrf.mxu0
        %v7705 = vadd.f32 %v7616, %v7704
        %7706 = vmatmul.bf16.gmra.mxu0 %v5469
        %v7707 = vpop.f32.mrf.mxu0
        %v7708 = vadd.f32 %v7619, %v7707
        %v7709 = vpop.f32.mrf.mxu0
        %v7710 = vadd.f32 %v7621, %v7709
        %7711 = vmatmul.bf16.gmra.mxu0 %v5471
        %v7712 = vpop.f32.mrf.mxu0
        %v7713 = vadd.f32 %v7624, %v7712
        %v7714 = vpop.f32.mrf.mxu0
        %v7715 = vadd.f32 %v7626, %v7714
        %7716 = vmatmul.bf16.gmra.mxu0 %v5473
        %v7717 = vpop.f32.mrf.mxu0
        %v7718 = vadd.f32 %v7629, %v7717
        %v7719 = vpop.f32.mrf.mxu0
        %v7720 = vadd.f32 %v7631, %v7719
        %7721 = vmatmul.bf16.gmra.mxu0 %v5475
        %v7722 = vpop.f32.mrf.mxu0
        %v7723 = vadd.f32 %v7634, %v7722
        %v7724 = vpop.f32.mrf.mxu0
        %v7725 = vadd.f32 %v7636, %v7724
        %7726 = vmatmul.bf16.gmra.mxu0 %v5477
        %v7727 = vpop.f32.mrf.mxu0
        %v7728 = vadd.f32 %v7639, %v7727
        %v7729 = vpop.f32.mrf.mxu0
        %v7730 = vadd.f32 %v7641, %v7729
        %7731 = vdwg.mxu0
        %v7732 = vadd.f32 %v6927, %v7475
        %v7733 = vadd.f32 %v7105, %v7653
        %v7734 = vadd.f32 %v6929, %v7477
        %v7735 = vadd.f32 %v7107, %v7655
        %v7736 = vadd.f32 %v6932, %v7480
        %v7737 = vadd.f32 %v7110, %v7658
        %v7738 = vadd.f32 %v6934, %v7482
        %v7739 = vadd.f32 %v7112, %v7660
        %v7740 = vadd.f32 %v6937, %v7485
        %v7741 = vadd.f32 %v7115, %v7663
        %v7742 = vadd.f32 %v6939, %v7487
        %v7743 = vadd.f32 %v7117, %v7665
        %v7744 = vadd.f32 %v6942, %v7490
        %v7745 = vadd.f32 %v7120, %v7668
        %v7746 = vadd.f32 %v6944, %v7492
        %v7747 = vadd.f32 %v7122, %v7670
        %v7748 = vadd.f32 %v6947, %v7495
        %v7749 = vadd.f32 %v7125, %v7673
        %v7750 = vadd.f32 %v6949, %v7497
        %v7751 = vadd.f32 %v7127, %v7675
        %v7752 = vadd.f32 %v6952, %v7500
        %v7753 = vadd.f32 %v7130, %v7678
        %v7754 = vadd.f32 %v6954, %v7502
        %v7755 = vadd.f32 %v7132, %v7680
        %v7756 = vadd.f32 %v6957, %v7505
        %v7757 = vadd.f32 %v7135, %v7683
        %v7758 = vadd.f32 %v6959, %v7507
        %v7759 = vadd.f32 %v7137, %v7685
        %v7760 = vadd.f32 %v6962, %v7510
        %v7761 = vadd.f32 %v7140, %v7688
        %v7762 = vadd.f32 %v6964, %v7512
        %v7763 = vadd.f32 %v7142, %v7690
        %v7764 = vadd.f32 %v6967, %v7515
        %v7765 = vadd.f32 %v7145, %v7693
        %v7766 = vadd.f32 %v6969, %v7517
        %v7767 = vadd.f32 %v7147, %v7695
        %v7768 = vadd.f32 %v6972, %v7520
        %v7769 = vadd.f32 %v7150, %v7698
        %v7770 = vadd.f32 %v6974, %v7522
        %v7771 = vadd.f32 %v7152, %v7700
        %v7772 = vadd.f32 %v6977, %v7525
        %v7773 = vadd.f32 %v7155, %v7703
        %v7774 = vadd.f32 %v6979, %v7527
        %v7775 = vadd.f32 %v7157, %v7705
        %v7776 = vadd.f32 %v6982, %v7530
        %v7777 = vadd.f32 %v7160, %v7708
        %v7778 = vadd.f32 %v6984, %v7532
        %v7779 = vadd.f32 %v7162, %v7710
        %v7780 = vadd.f32 %v6987, %v7535
        %v7781 = vadd.f32 %v7165, %v7713
        %v7782 = vadd.f32 %v6989, %v7537
        %v7783 = vadd.f32 %v7167, %v7715
        %v7784 = vadd.f32 %v6992, %v7540
        %v7785 = vadd.f32 %v7170, %v7718
        %v7786 = vadd.f32 %v6994, %v7542
        %v7787 = vadd.f32 %v7172, %v7720
        %v7788 = vadd.f32 %v6997, %v7545
        %v7789 = vadd.f32 %v7175, %v7723
        %v7790 = vadd.f32 %v6999, %v7547
        %v7791 = vadd.f32 %v7177, %v7725
        %v7792 = vadd.f32 %v7002, %v7550
        %v7793 = vadd.f32 %v7180, %v7728
        %v7794 = vadd.f32 %v7004, %v7552
        %v7795 = vadd.f32 %v7182, %v7730
        %v7796 = vld [vmem:[%s12] sm:$0xff]
        %v7797 = vld [vmem:[%s12 + $0x8] sm:$0xff]
        %v7798 = vld [vmem:[%s12 + $0x10] sm:$0xff]
        %v7799 = vld [vmem:[%s12 + $0x18] sm:$0xff]
        %v7800 = vld [vmem:[%s12 + $0x20] sm:$0xff]
        %v7801 = vld [vmem:[%s12 + $0x28] sm:$0xff]
        %v7802 = vld [vmem:[%s12 + $0x30] sm:$0xff]
        %v7803 = vld [vmem:[%s12 + $0x38] sm:$0xff]
        %v7804 = vld [vmem:[%s12 + $0x40] sm:$0xff]
        %v7805 = vld [vmem:[%s12 + $0x48] sm:$0xff]
        %v7806 = vld [vmem:[%s12 + $0x50] sm:$0xff]
        %v7807 = vld [vmem:[%s12 + $0x58] sm:$0xff]
        %v7808 = vld [vmem:[%s12 + $0x60] sm:$0xff]
        %v7809 = vld [vmem:[%s12 + $0x68] sm:$0xff]
        %v7810 = vld [vmem:[%s12 + $0x70] sm:$0xff]
        %v7811 = vld [vmem:[%s12 + $0x78] sm:$0xff]
        %v7812 = vld [vmem:[%s12 + $0x80] sm:$0xff]
        %v7813 = vld [vmem:[%s12 + $0x88] sm:$0xff]
        %v7814 = vld [vmem:[%s12 + $0x90] sm:$0xff]
        %v7815 = vld [vmem:[%s12 + $0x98] sm:$0xff]
        %v7816 = vld [vmem:[%s12 + $0xa0] sm:$0xff]
        %v7817 = vld [vmem:[%s12 + $0xa8] sm:$0xff]
        %v7818 = vld [vmem:[%s12 + $0xb0] sm:$0xff]
        %v7819 = vld [vmem:[%s12 + $0xb8] sm:$0xff]
        %v7820 = vld [vmem:[%s12 + $0xc0] sm:$0xff]
        %v7821 = vld [vmem:[%s12 + $0xc8] sm:$0xff]
        %v7822 = vld [vmem:[%s12 + $0xd0] sm:$0xff]
        %v7823 = vld [vmem:[%s12 + $0xd8] sm:$0xff]
        %v7824 = vld [vmem:[%s12 + $0xe0] sm:$0xff]
        %v7825 = vld [vmem:[%s12 + $0xe8] sm:$0xff]
        %v7826 = vld [vmem:[%s12 + $0xf0] sm:$0xff]
        %v7827 = vld [vmem:[%s12 + $0xf8] sm:$0xff]
        %v7860 = vunpack.c.l.b16 %v7796
        %v7861 = vunpack.c.h.b16 %v7796
        %v7862 = vunpack.c.l.b16 %v7797
        %v7863 = vunpack.c.h.b16 %v7797
        %v7864 = vunpack.c.l.b16 %v7798
        %v7865 = vunpack.c.h.b16 %v7798
        %v7866 = vunpack.c.l.b16 %v7799
        %v7867 = vunpack.c.h.b16 %v7799
        %v7868 = vunpack.c.l.b16 %v7800
        %v7869 = vunpack.c.h.b16 %v7800
        %v7870 = vunpack.c.l.b16 %v7801
        %v7871 = vunpack.c.h.b16 %v7801
        %v7872 = vunpack.c.l.b16 %v7802
        %v7873 = vunpack.c.h.b16 %v7802
        %v7874 = vunpack.c.l.b16 %v7803
        %v7875 = vunpack.c.h.b16 %v7803
        %v7876 = vunpack.c.l.b16 %v7804
        %v7877 = vunpack.c.h.b16 %v7804
        %v7878 = vunpack.c.l.b16 %v7805
        %v7879 = vunpack.c.h.b16 %v7805
        %v7880 = vunpack.c.l.b16 %v7806
        %v7881 = vunpack.c.h.b16 %v7806
        %v7882 = vunpack.c.l.b16 %v7807
        %v7883 = vunpack.c.h.b16 %v7807
        %v7884 = vunpack.c.l.b16 %v7808
        %v7885 = vunpack.c.h.b16 %v7808
        %v7886 = vunpack.c.l.b16 %v7809
        %v7887 = vunpack.c.h.b16 %v7809
        %v7888 = vunpack.c.l.b16 %v7810
        %v7889 = vunpack.c.h.b16 %v7810
        %v7890 = vunpack.c.l.b16 %v7811
        %v7891 = vunpack.c.h.b16 %v7811
        %v7892 = vunpack.c.l.b16 %v7812
        %v7893 = vunpack.c.h.b16 %v7812
        %v7894 = vunpack.c.l.b16 %v7813
        %v7895 = vunpack.c.h.b16 %v7813
        %v7896 = vunpack.c.l.b16 %v7814
        %v7897 = vunpack.c.h.b16 %v7814
        %v7898 = vunpack.c.l.b16 %v7815
        %v7899 = vunpack.c.h.b16 %v7815
        %v7900 = vunpack.c.l.b16 %v7816
        %v7901 = vunpack.c.h.b16 %v7816
        %v7902 = vunpack.c.l.b16 %v7817
        %v7903 = vunpack.c.h.b16 %v7817
        %v7904 = vunpack.c.l.b16 %v7818
        %v7905 = vunpack.c.h.b16 %v7818
        %v7906 = vunpack.c.l.b16 %v7819
        %v7907 = vunpack.c.h.b16 %v7819
        %v7908 = vunpack.c.l.b16 %v7820
        %v7909 = vunpack.c.h.b16 %v7820
        %v7910 = vunpack.c.l.b16 %v7821
        %v7911 = vunpack.c.h.b16 %v7821
        %v7912 = vunpack.c.l.b16 %v7822
        %v7913 = vunpack.c.h.b16 %v7822
        %v7914 = vunpack.c.l.b16 %v7823
        %v7915 = vunpack.c.h.b16 %v7823
        %v7916 = vunpack.c.l.b16 %v7824
        %v7917 = vunpack.c.h.b16 %v7824
        %v7918 = vunpack.c.l.b16 %v7825
        %v7919 = vunpack.c.h.b16 %v7825
        %v7920 = vunpack.c.l.b16 %v7826
        %v7921 = vunpack.c.h.b16 %v7826
        %v7922 = vunpack.c.l.b16 %v7827
        %v7923 = vunpack.c.h.b16 %v7827
        %v7924 = vpack.c.b16 %v7862, %v7860
        %v7925 = vpack.c.b16 %v7863, %v7861
        %v7926 = vpack.c.b16 %v7866, %v7864
        %v7927 = vpack.c.b16 %v7867, %v7865
        %v7928 = vpack.c.b16 %v7870, %v7868
        %v7929 = vpack.c.b16 %v7871, %v7869
        %v7930 = vpack.c.b16 %v7874, %v7872
        %v7931 = vpack.c.b16 %v7875, %v7873
        %v7932 = vpack.c.b16 %v7878, %v7876
        %v7933 = vpack.c.b16 %v7879, %v7877
        %v7934 = vpack.c.b16 %v7882, %v7880
        %v7935 = vpack.c.b16 %v7883, %v7881
        %v7936 = vpack.c.b16 %v7886, %v7884
        %v7937 = vpack.c.b16 %v7887, %v7885
        %v7938 = vpack.c.b16 %v7890, %v7888
        %v7939 = vpack.c.b16 %v7891, %v7889
        %v7940 = vpack.c.b16 %v7894, %v7892
        %v7941 = vpack.c.b16 %v7895, %v7893
        %v7942 = vpack.c.b16 %v7898, %v7896
        %v7943 = vpack.c.b16 %v7899, %v7897
        %v7944 = vpack.c.b16 %v7902, %v7900
        %v7945 = vpack.c.b16 %v7903, %v7901
        %v7946 = vpack.c.b16 %v7906, %v7904
        %v7947 = vpack.c.b16 %v7907, %v7905
        %v7948 = vpack.c.b16 %v7910, %v7908
        %v7949 = vpack.c.b16 %v7911, %v7909
        %v7950 = vpack.c.b16 %v7914, %v7912
        %v7951 = vpack.c.b16 %v7915, %v7913
        %v7952 = vpack.c.b16 %v7918, %v7916
        %v7953 = vpack.c.b16 %v7919, %v7917
        %v7954 = vpack.c.b16 %v7922, %v7920
        %v7955 = vpack.c.b16 %v7923, %v7921
        %7988 = vmatpush.bf16.msra.mxu0 %v7938
        %7989 = vmatpush.bf16.msra.mxu0 %v7936
        %7990 = vmatpush.bf16.msra.mxu0 %v7934
        %7991 = vmatpush.bf16.msra.mxu0 %v7932
        %7992 = vmatpush.bf16.msra.mxu0 %v7930
        %7993 = vmatpush.bf16.msra.mxu0 %v7928
        %7994 = vmatpush.bf16.msra.mxu0 %v7926
        %7995 = vmatpush.bf16.msra.mxu0 %v7924
        %7996 = vmatmul.bf16.gmra.mxu0 %v6056
        %v7997 = vpop.f32.mrf.mxu0
        %v7998 = vadd.f32 0.0, %v7997
        %v7999 = vpop.f32.mrf.mxu0
        %v8000 = vadd.f32 0.0, %v7999
        %8001 = vmatmul.bf16.gmra.mxu0 %v6058
        %v8002 = vpop.f32.mrf.mxu0
        %v8003 = vadd.f32 0.0, %v8002
        %v8004 = vpop.f32.mrf.mxu0
        %v8005 = vadd.f32 0.0, %v8004
        %8006 = vmatmul.bf16.gmra.mxu0 %v6060
        %v8007 = vpop.f32.mrf.mxu0
        %v8008 = vadd.f32 0.0, %v8007
        %v8009 = vpop.f32.mrf.mxu0
        %v8010 = vadd.f32 0.0, %v8009
        %8011 = vmatmul.bf16.gmra.mxu0 %v6062
        %v8012 = vpop.f32.mrf.mxu0
        %v8013 = vadd.f32 0.0, %v8012
        %v8014 = vpop.f32.mrf.mxu0
        %v8015 = vadd.f32 0.0, %v8014
        %8016 = vmatmul.bf16.gmra.mxu0 %v6064
        %v8017 = vpop.f32.mrf.mxu0
        %v8018 = vadd.f32 0.0, %v8017
        %v8019 = vpop.f32.mrf.mxu0
        %v8020 = vadd.f32 0.0, %v8019
        %8021 = vmatmul.bf16.gmra.mxu0 %v6066
        %v8022 = vpop.f32.mrf.mxu0
        %v8023 = vadd.f32 0.0, %v8022
        %v8024 = vpop.f32.mrf.mxu0
        %v8025 = vadd.f32 0.0, %v8024
        %8026 = vmatmul.bf16.gmra.mxu0 %v6068
        %v8027 = vpop.f32.mrf.mxu0
        %v8028 = vadd.f32 0.0, %v8027
        %v8029 = vpop.f32.mrf.mxu0
        %v8030 = vadd.f32 0.0, %v8029
        %8031 = vmatmul.bf16.gmra.mxu0 %v6070
        %v8032 = vpop.f32.mrf.mxu0
        %v8033 = vadd.f32 0.0, %v8032
        %v8034 = vpop.f32.mrf.mxu0
        %v8035 = vadd.f32 0.0, %v8034
        %8036 = vmatmul.bf16.gmra.mxu0 %v6072
        %v8037 = vpop.f32.mrf.mxu0
        %v8038 = vadd.f32 0.0, %v8037
        %v8039 = vpop.f32.mrf.mxu0
        %v8040 = vadd.f32 0.0, %v8039
        %8041 = vmatmul.bf16.gmra.mxu0 %v6074
        %v8042 = vpop.f32.mrf.mxu0
        %v8043 = vadd.f32 0.0, %v8042
        %v8044 = vpop.f32.mrf.mxu0
        %v8045 = vadd.f32 0.0, %v8044
        %8046 = vmatmul.bf16.gmra.mxu0 %v6076
        %v8047 = vpop.f32.mrf.mxu0
        %v8048 = vadd.f32 0.0, %v8047
        %v8049 = vpop.f32.mrf.mxu0
        %v8050 = vadd.f32 0.0, %v8049
        %8051 = vmatmul.bf16.gmra.mxu0 %v6078
        %v8052 = vpop.f32.mrf.mxu0
        %v8053 = vadd.f32 0.0, %v8052
        %v8054 = vpop.f32.mrf.mxu0
        %v8055 = vadd.f32 0.0, %v8054
        %8056 = vmatmul.bf16.gmra.mxu0 %v6080
        %v8057 = vpop.f32.mrf.mxu0
        %v8058 = vadd.f32 0.0, %v8057
        %v8059 = vpop.f32.mrf.mxu0
        %v8060 = vadd.f32 0.0, %v8059
        %8061 = vmatmul.bf16.gmra.mxu0 %v6082
        %v8062 = vpop.f32.mrf.mxu0
        %v8063 = vadd.f32 0.0, %v8062
        %v8064 = vpop.f32.mrf.mxu0
        %v8065 = vadd.f32 0.0, %v8064
        %8066 = vmatmul.bf16.gmra.mxu0 %v6084
        %v8067 = vpop.f32.mrf.mxu0
        %v8068 = vadd.f32 0.0, %v8067
        %v8069 = vpop.f32.mrf.mxu0
        %v8070 = vadd.f32 0.0, %v8069
        %8071 = vmatmul.bf16.gmra.mxu0 %v6086
        %v8072 = vpop.f32.mrf.mxu0
        %v8073 = vadd.f32 0.0, %v8072
        %v8074 = vpop.f32.mrf.mxu0
        %v8075 = vadd.f32 0.0, %v8074
        %8076 = vdwg.mxu0
        %8077 = vmatpush.bf16.msra.mxu0 %v7954
        %8078 = vmatpush.bf16.msra.mxu0 %v7952
        %8079 = vmatpush.bf16.msra.mxu0 %v7950
        %8080 = vmatpush.bf16.msra.mxu0 %v7948
        %8081 = vmatpush.bf16.msra.mxu0 %v7946
        %8082 = vmatpush.bf16.msra.mxu0 %v7944
        %8083 = vmatpush.bf16.msra.mxu0 %v7942
        %8084 = vmatpush.bf16.msra.mxu0 %v7940
        %8085 = vmatmul.bf16.gmra.mxu0 %v6057
        %v8086 = vpop.f32.mrf.mxu0
        %v8087 = vadd.f32 %v7998, %v8086
        %v8088 = vpop.f32.mrf.mxu0
        %v8089 = vadd.f32 %v8000, %v8088
        %8090 = vmatmul.bf16.gmra.mxu0 %v6059
        %v8091 = vpop.f32.mrf.mxu0
        %v8092 = vadd.f32 %v8003, %v8091
        %v8093 = vpop.f32.mrf.mxu0
        %v8094 = vadd.f32 %v8005, %v8093
        %8095 = vmatmul.bf16.gmra.mxu0 %v6061
        %v8096 = vpop.f32.mrf.mxu0
        %v8097 = vadd.f32 %v8008, %v8096
        %v8098 = vpop.f32.mrf.mxu0
        %v8099 = vadd.f32 %v8010, %v8098
        %8100 = vmatmul.bf16.gmra.mxu0 %v6063
        %v8101 = vpop.f32.mrf.mxu0
        %v8102 = vadd.f32 %v8013, %v8101
        %v8103 = vpop.f32.mrf.mxu0
        %v8104 = vadd.f32 %v8015, %v8103
        %8105 = vmatmul.bf16.gmra.mxu0 %v6065
        %v8106 = vpop.f32.mrf.mxu0
        %v8107 = vadd.f32 %v8018, %v8106
        %v8108 = vpop.f32.mrf.mxu0
        %v8109 = vadd.f32 %v8020, %v8108
        %8110 = vmatmul.bf16.gmra.mxu0 %v6067
        %v8111 = vpop.f32.mrf.mxu0
        %v8112 = vadd.f32 %v8023, %v8111
        %v8113 = vpop.f32.mrf.mxu0
        %v8114 = vadd.f32 %v8025, %v8113
        %8115 = vmatmul.bf16.gmra.mxu0 %v6069
        %v8116 = vpop.f32.mrf.mxu0
        %v8117 = vadd.f32 %v8028, %v8116
        %v8118 = vpop.f32.mrf.mxu0
        %v8119 = vadd.f32 %v8030, %v8118
        %8120 = vmatmul.bf16.gmra.mxu0 %v6071
        %v8121 = vpop.f32.mrf.mxu0
        %v8122 = vadd.f32 %v8033, %v8121
        %v8123 = vpop.f32.mrf.mxu0
        %v8124 = vadd.f32 %v8035, %v8123
        %8125 = vmatmul.bf16.gmra.mxu0 %v6073
        %v8126 = vpop.f32.mrf.mxu0
        %v8127 = vadd.f32 %v8038, %v8126
        %v8128 = vpop.f32.mrf.mxu0
        %v8129 = vadd.f32 %v8040, %v8128
        %8130 = vmatmul.bf16.gmra.mxu0 %v6075
        %v8131 = vpop.f32.mrf.mxu0
        %v8132 = vadd.f32 %v8043, %v8131
        %v8133 = vpop.f32.mrf.mxu0
        %v8134 = vadd.f32 %v8045, %v8133
        %8135 = vmatmul.bf16.gmra.mxu0 %v6077
        %v8136 = vpop.f32.mrf.mxu0
        %v8137 = vadd.f32 %v8048, %v8136
        %v8138 = vpop.f32.mrf.mxu0
        %v8139 = vadd.f32 %v8050, %v8138
        %8140 = vmatmul.bf16.gmra.mxu0 %v6079
        %v8141 = vpop.f32.mrf.mxu0
        %v8142 = vadd.f32 %v8053, %v8141
        %v8143 = vpop.f32.mrf.mxu0
        %v8144 = vadd.f32 %v8055, %v8143
        %8145 = vmatmul.bf16.gmra.mxu0 %v6081
        %v8146 = vpop.f32.mrf.mxu0
        %v8147 = vadd.f32 %v8058, %v8146
        %v8148 = vpop.f32.mrf.mxu0
        %v8149 = vadd.f32 %v8060, %v8148
        %8150 = vmatmul.bf16.gmra.mxu0 %v6083
        %v8151 = vpop.f32.mrf.mxu0
        %v8152 = vadd.f32 %v8063, %v8151
        %v8153 = vpop.f32.mrf.mxu0
        %v8154 = vadd.f32 %v8065, %v8153
        %8155 = vmatmul.bf16.gmra.mxu0 %v6085
        %v8156 = vpop.f32.mrf.mxu0
        %v8157 = vadd.f32 %v8068, %v8156
        %v8158 = vpop.f32.mrf.mxu0
        %v8159 = vadd.f32 %v8070, %v8158
        %8160 = vmatmul.bf16.gmra.mxu0 %v6087
        %v8161 = vpop.f32.mrf.mxu0
        %v8162 = vadd.f32 %v8073, %v8161
        %v8163 = vpop.f32.mrf.mxu0
        %v8164 = vadd.f32 %v8075, %v8163
        %8165 = vdwg.mxu0
        %8166 = vmatpush.bf16.msra.mxu0 %v7939
        %8167 = vmatpush.bf16.msra.mxu0 %v7937
        %8168 = vmatpush.bf16.msra.mxu0 %v7935
        %8169 = vmatpush.bf16.msra.mxu0 %v7933
        %8170 = vmatpush.bf16.msra.mxu0 %v7931
        %8171 = vmatpush.bf16.msra.mxu0 %v7929
        %8172 = vmatpush.bf16.msra.mxu0 %v7927
        %8173 = vmatpush.bf16.msra.mxu0 %v7925
        %8174 = vmatmul.bf16.gmra.mxu0 %v6056
        %v8175 = vpop.f32.mrf.mxu0
        %v8176 = vadd.f32 0.0, %v8175
        %v8177 = vpop.f32.mrf.mxu0
        %v8178 = vadd.f32 0.0, %v8177
        %8179 = vmatmul.bf16.gmra.mxu0 %v6058
        %v8180 = vpop.f32.mrf.mxu0
        %v8181 = vadd.f32 0.0, %v8180
        %v8182 = vpop.f32.mrf.mxu0
        %v8183 = vadd.f32 0.0, %v8182
        %8184 = vmatmul.bf16.gmra.mxu0 %v6060
        %v8185 = vpop.f32.mrf.mxu0
        %v8186 = vadd.f32 0.0, %v8185
        %v8187 = vpop.f32.mrf.mxu0
        %v8188 = vadd.f32 0.0, %v8187
        %8189 = vmatmul.bf16.gmra.mxu0 %v6062
        %v8190 = vpop.f32.mrf.mxu0
        %v8191 = vadd.f32 0.0, %v8190
        %v8192 = vpop.f32.mrf.mxu0
        %v8193 = vadd.f32 0.0, %v8192
        %8194 = vmatmul.bf16.gmra.mxu0 %v6064
        %v8195 = vpop.f32.mrf.mxu0
        %v8196 = vadd.f32 0.0, %v8195
        %v8197 = vpop.f32.mrf.mxu0
        %v8198 = vadd.f32 0.0, %v8197
        %8199 = vmatmul.bf16.gmra.mxu0 %v6066
        %v8200 = vpop.f32.mrf.mxu0
        %v8201 = vadd.f32 0.0, %v8200
        %v8202 = vpop.f32.mrf.mxu0
        %v8203 = vadd.f32 0.0, %v8202
        %8204 = vmatmul.bf16.gmra.mxu0 %v6068
        %v8205 = vpop.f32.mrf.mxu0
        %v8206 = vadd.f32 0.0, %v8205
        %v8207 = vpop.f32.mrf.mxu0
        %v8208 = vadd.f32 0.0, %v8207
        %8209 = vmatmul.bf16.gmra.mxu0 %v6070
        %v8210 = vpop.f32.mrf.mxu0
        %v8211 = vadd.f32 0.0, %v8210
        %v8212 = vpop.f32.mrf.mxu0
        %v8213 = vadd.f32 0.0, %v8212
        %8214 = vmatmul.bf16.gmra.mxu0 %v6072
        %v8215 = vpop.f32.mrf.mxu0
        %v8216 = vadd.f32 0.0, %v8215
        %v8217 = vpop.f32.mrf.mxu0
        %v8218 = vadd.f32 0.0, %v8217
        %8219 = vmatmul.bf16.gmra.mxu0 %v6074
        %v8220 = vpop.f32.mrf.mxu0
        %v8221 = vadd.f32 0.0, %v8220
        %v8222 = vpop.f32.mrf.mxu0
        %v8223 = vadd.f32 0.0, %v8222
        %8224 = vmatmul.bf16.gmra.mxu0 %v6076
        %v8225 = vpop.f32.mrf.mxu0
        %v8226 = vadd.f32 0.0, %v8225
        %v8227 = vpop.f32.mrf.mxu0
        %v8228 = vadd.f32 0.0, %v8227
        %8229 = vmatmul.bf16.gmra.mxu0 %v6078
        %v8230 = vpop.f32.mrf.mxu0
        %v8231 = vadd.f32 0.0, %v8230
        %v8232 = vpop.f32.mrf.mxu0
        %v8233 = vadd.f32 0.0, %v8232
        %8234 = vmatmul.bf16.gmra.mxu0 %v6080
        %v8235 = vpop.f32.mrf.mxu0
        %v8236 = vadd.f32 0.0, %v8235
        %v8237 = vpop.f32.mrf.mxu0
        %v8238 = vadd.f32 0.0, %v8237
        %8239 = vmatmul.bf16.gmra.mxu0 %v6082
        %v8240 = vpop.f32.mrf.mxu0
        %v8241 = vadd.f32 0.0, %v8240
        %v8242 = vpop.f32.mrf.mxu0
        %v8243 = vadd.f32 0.0, %v8242
        %8244 = vmatmul.bf16.gmra.mxu0 %v6084
        %v8245 = vpop.f32.mrf.mxu0
        %v8246 = vadd.f32 0.0, %v8245
        %v8247 = vpop.f32.mrf.mxu0
        %v8248 = vadd.f32 0.0, %v8247
        %8249 = vmatmul.bf16.gmra.mxu0 %v6086
        %v8250 = vpop.f32.mrf.mxu0
        %v8251 = vadd.f32 0.0, %v8250
        %v8252 = vpop.f32.mrf.mxu0
        %v8253 = vadd.f32 0.0, %v8252
        %8254 = vdwg.mxu0
        %8255 = vmatpush.bf16.msra.mxu0 %v7955
        %8256 = vmatpush.bf16.msra.mxu0 %v7953
        %8257 = vmatpush.bf16.msra.mxu0 %v7951
        %8258 = vmatpush.bf16.msra.mxu0 %v7949
        %8259 = vmatpush.bf16.msra.mxu0 %v7947
        %8260 = vmatpush.bf16.msra.mxu0 %v7945
        %8261 = vmatpush.bf16.msra.mxu0 %v7943
        %8262 = vmatpush.bf16.msra.mxu0 %v7941
        %8263 = vmatmul.bf16.gmra.mxu0 %v6057
        %v8264 = vpop.f32.mrf.mxu0
        %v8265 = vadd.f32 %v8176, %v8264
        %v8266 = vpop.f32.mrf.mxu0
        %v8267 = vadd.f32 %v8178, %v8266
        %8268 = vmatmul.bf16.gmra.mxu0 %v6059
        %v8269 = vpop.f32.mrf.mxu0
        %v8270 = vadd.f32 %v8181, %v8269
        %v8271 = vpop.f32.mrf.mxu0
        %v8272 = vadd.f32 %v8183, %v8271
        %8273 = vmatmul.bf16.gmra.mxu0 %v6061
        %v8274 = vpop.f32.mrf.mxu0
        %v8275 = vadd.f32 %v8186, %v8274
        %v8276 = vpop.f32.mrf.mxu0
        %v8277 = vadd.f32 %v8188, %v8276
        %8278 = vmatmul.bf16.gmra.mxu0 %v6063
        %v8279 = vpop.f32.mrf.mxu0
        %v8280 = vadd.f32 %v8191, %v8279
        %v8281 = vpop.f32.mrf.mxu0
        %v8282 = vadd.f32 %v8193, %v8281
        %8283 = vmatmul.bf16.gmra.mxu0 %v6065
        %v8284 = vpop.f32.mrf.mxu0
        %v8285 = vadd.f32 %v8196, %v8284
        %v8286 = vpop.f32.mrf.mxu0
        %v8287 = vadd.f32 %v8198, %v8286
        %8288 = vmatmul.bf16.gmra.mxu0 %v6067
        %v8289 = vpop.f32.mrf.mxu0
        %v8290 = vadd.f32 %v8201, %v8289
        %v8291 = vpop.f32.mrf.mxu0
        %v8292 = vadd.f32 %v8203, %v8291
        %8293 = vmatmul.bf16.gmra.mxu0 %v6069
        %v8294 = vpop.f32.mrf.mxu0
        %v8295 = vadd.f32 %v8206, %v8294
        %v8296 = vpop.f32.mrf.mxu0
        %v8297 = vadd.f32 %v8208, %v8296
        %8298 = vmatmul.bf16.gmra.mxu0 %v6071
        %v8299 = vpop.f32.mrf.mxu0
        %v8300 = vadd.f32 %v8211, %v8299
        %v8301 = vpop.f32.mrf.mxu0
        %v8302 = vadd.f32 %v8213, %v8301
        %8303 = vmatmul.bf16.gmra.mxu0 %v6073
        %v8304 = vpop.f32.mrf.mxu0
        %v8305 = vadd.f32 %v8216, %v8304
        %v8306 = vpop.f32.mrf.mxu0
        %v8307 = vadd.f32 %v8218, %v8306
        %8308 = vmatmul.bf16.gmra.mxu0 %v6075
        %v8309 = vpop.f32.mrf.mxu0
        %v8310 = vadd.f32 %v8221, %v8309
        %v8311 = vpop.f32.mrf.mxu0
        %v8312 = vadd.f32 %v8223, %v8311
        %8313 = vmatmul.bf16.gmra.mxu0 %v6077
        %v8314 = vpop.f32.mrf.mxu0
        %v8315 = vadd.f32 %v8226, %v8314
        %v8316 = vpop.f32.mrf.mxu0
        %v8317 = vadd.f32 %v8228, %v8316
        %8318 = vmatmul.bf16.gmra.mxu0 %v6079
        %v8319 = vpop.f32.mrf.mxu0
        %v8320 = vadd.f32 %v8231, %v8319
        %v8321 = vpop.f32.mrf.mxu0
        %v8322 = vadd.f32 %v8233, %v8321
        %8323 = vmatmul.bf16.gmra.mxu0 %v6081
        %v8324 = vpop.f32.mrf.mxu0
        %v8325 = vadd.f32 %v8236, %v8324
        %v8326 = vpop.f32.mrf.mxu0
        %v8327 = vadd.f32 %v8238, %v8326
        %8328 = vmatmul.bf16.gmra.mxu0 %v6083
        %v8329 = vpop.f32.mrf.mxu0
        %v8330 = vadd.f32 %v8241, %v8329
        %v8331 = vpop.f32.mrf.mxu0
        %v8332 = vadd.f32 %v8243, %v8331
        %8333 = vmatmul.bf16.gmra.mxu0 %v6085
        %v8334 = vpop.f32.mrf.mxu0
        %v8335 = vadd.f32 %v8246, %v8334
        %v8336 = vpop.f32.mrf.mxu0
        %v8337 = vadd.f32 %v8248, %v8336
        %8338 = vmatmul.bf16.gmra.mxu0 %v6087
        %v8339 = vpop.f32.mrf.mxu0
        %v8340 = vadd.f32 %v8251, %v8339
        %v8341 = vpop.f32.mrf.mxu0
        %v8342 = vadd.f32 %v8253, %v8341
        %8343 = vdwg.mxu0
        %v8344 = vadd.f32 %v7732, %v8087
        %v8345 = vadd.f32 %v7733, %v8265
        %v8346 = vadd.f32 %v7734, %v8089
        %v8347 = vadd.f32 %v7735, %v8267
        %v8348 = vadd.f32 %v7736, %v8092
        %v8349 = vadd.f32 %v7737, %v8270
        %v8350 = vadd.f32 %v7738, %v8094
        %v8351 = vadd.f32 %v7739, %v8272
        %v8352 = vadd.f32 %v7740, %v8097
        %v8353 = vadd.f32 %v7741, %v8275
        %v8354 = vadd.f32 %v7742, %v8099
        %v8355 = vadd.f32 %v7743, %v8277
        %v8356 = vadd.f32 %v7744, %v8102
        %v8357 = vadd.f32 %v7745, %v8280
        %v8358 = vadd.f32 %v7746, %v8104
        %v8359 = vadd.f32 %v7747, %v8282
        %v8360 = vadd.f32 %v7748, %v8107
        %v8361 = vadd.f32 %v7749, %v8285
        %v8362 = vadd.f32 %v7750, %v8109
        %v8363 = vadd.f32 %v7751, %v8287
        %v8364 = vadd.f32 %v7752, %v8112
        %v8365 = vadd.f32 %v7753, %v8290
        %v8366 = vadd.f32 %v7754, %v8114
        %v8367 = vadd.f32 %v7755, %v8292
        %v8368 = vadd.f32 %v7756, %v8117
        %v8369 = vadd.f32 %v7757, %v8295
        %v8370 = vadd.f32 %v7758, %v8119
        %v8371 = vadd.f32 %v7759, %v8297
        %v8372 = vadd.f32 %v7760, %v8122
        %v8373 = vadd.f32 %v7761, %v8300
        %v8374 = vadd.f32 %v7762, %v8124
        %v8375 = vadd.f32 %v7763, %v8302
        %v8376 = vadd.f32 %v7764, %v8127
        %v8377 = vadd.f32 %v7765, %v8305
        %v8378 = vadd.f32 %v7766, %v8129
        %v8379 = vadd.f32 %v7767, %v8307
        %v8380 = vadd.f32 %v7768, %v8132
        %v8381 = vadd.f32 %v7769, %v8310
        %v8382 = vadd.f32 %v7770, %v8134
        %v8383 = vadd.f32 %v7771, %v8312
        %v8384 = vadd.f32 %v7772, %v8137
        %v8385 = vadd.f32 %v7773, %v8315
        %v8386 = vadd.f32 %v7774, %v8139
        %v8387 = vadd.f32 %v7775, %v8317
        %v8388 = vadd.f32 %v7776, %v8142
        %v8389 = vadd.f32 %v7777, %v8320
        %v8390 = vadd.f32 %v7778, %v8144
        %v8391 = vadd.f32 %v7779, %v8322
        %v8392 = vadd.f32 %v7780, %v8147
        %v8393 = vadd.f32 %v7781, %v8325
        %v8394 = vadd.f32 %v7782, %v8149
        %v8395 = vadd.f32 %v7783, %v8327
        %v8396 = vadd.f32 %v7784, %v8152
        %v8397 = vadd.f32 %v7785, %v8330
        %v8398 = vadd.f32 %v7786, %v8154
        %v8399 = vadd.f32 %v7787, %v8332
        %v8400 = vadd.f32 %v7788, %v8157
        %v8401 = vadd.f32 %v7789, %v8335
        %v8402 = vadd.f32 %v7790, %v8159
        %v8403 = vadd.f32 %v7791, %v8337
        %v8404 = vadd.f32 %v7792, %v8162
        %v8405 = vadd.f32 %v7793, %v8340
        %v8406 = vadd.f32 %v7794, %v8164
        %v8407 = vadd.f32 %v7795, %v8342
        %v8408 = vld [vmem:[%s671] sm:$0xff]
        %v8409 = vld [vmem:[%s671 + $0x8] sm:$0xff]
        %v8410 = vld [vmem:[%s671 + $0x10] sm:$0xff]
        %v8411 = vld [vmem:[%s671 + $0x18] sm:$0xff]
        %v8412 = vld [vmem:[%s671 + $0x20] sm:$0xff]
        %v8413 = vld [vmem:[%s671 + $0x28] sm:$0xff]
        %v8414 = vld [vmem:[%s671 + $0x30] sm:$0xff]
        %v8415 = vld [vmem:[%s671 + $0x38] sm:$0xff]
        %v8416 = vld [vmem:[%s671 + $0x40] sm:$0xff]
        %v8417 = vld [vmem:[%s671 + $0x48] sm:$0xff]
        %v8418 = vld [vmem:[%s671 + $0x50] sm:$0xff]
        %v8419 = vld [vmem:[%s671 + $0x58] sm:$0xff]
        %v8420 = vld [vmem:[%s671 + $0x60] sm:$0xff]
        %v8421 = vld [vmem:[%s671 + $0x68] sm:$0xff]
        %v8422 = vld [vmem:[%s671 + $0x70] sm:$0xff]
        %v8423 = vld [vmem:[%s671 + $0x78] sm:$0xff]
        %v8424 = vld [vmem:[%s671 + $0x80] sm:$0xff]
        %v8425 = vld [vmem:[%s671 + $0x88] sm:$0xff]
        %v8426 = vld [vmem:[%s671 + $0x90] sm:$0xff]
        %v8427 = vld [vmem:[%s671 + $0x98] sm:$0xff]
        %v8428 = vld [vmem:[%s671 + $0xa0] sm:$0xff]
        %v8429 = vld [vmem:[%s671 + $0xa8] sm:$0xff]
        %v8430 = vld [vmem:[%s671 + $0xb0] sm:$0xff]
        %v8431 = vld [vmem:[%s671 + $0xb8] sm:$0xff]
        %v8432 = vld [vmem:[%s671 + $0xc0] sm:$0xff]
        %v8433 = vld [vmem:[%s671 + $0xc8] sm:$0xff]
        %v8434 = vld [vmem:[%s671 + $0xd0] sm:$0xff]
        %v8435 = vld [vmem:[%s671 + $0xd8] sm:$0xff]
        %v8436 = vld [vmem:[%s671 + $0xe0] sm:$0xff]
        %v8437 = vld [vmem:[%s671 + $0xe8] sm:$0xff]
        %v8438 = vld [vmem:[%s671 + $0xf0] sm:$0xff]
        %v8439 = vld [vmem:[%s671 + $0xf8] sm:$0xff]
        %v8440 = vld [vmem:[%s13] sm:$0xff]
        %v8441 = vld [vmem:[%s13 + $0x8] sm:$0xff]
        %v8442 = vld [vmem:[%s13 + $0x10] sm:$0xff]
        %v8443 = vld [vmem:[%s13 + $0x18] sm:$0xff]
        %v8444 = vld [vmem:[%s13 + $0x20] sm:$0xff]
        %v8445 = vld [vmem:[%s13 + $0x28] sm:$0xff]
        %v8446 = vld [vmem:[%s13 + $0x30] sm:$0xff]
        %v8447 = vld [vmem:[%s13 + $0x38] sm:$0xff]
        %v8448 = vld [vmem:[%s13 + $0x40] sm:$0xff]
        %v8449 = vld [vmem:[%s13 + $0x48] sm:$0xff]
        %v8450 = vld [vmem:[%s13 + $0x50] sm:$0xff]
        %v8451 = vld [vmem:[%s13 + $0x58] sm:$0xff]
        %v8452 = vld [vmem:[%s13 + $0x60] sm:$0xff]
        %v8453 = vld [vmem:[%s13 + $0x68] sm:$0xff]
        %v8454 = vld [vmem:[%s13 + $0x70] sm:$0xff]
        %v8455 = vld [vmem:[%s13 + $0x78] sm:$0xff]
        %v8456 = vld [vmem:[%s13 + $0x80] sm:$0xff]
        %v8457 = vld [vmem:[%s13 + $0x88] sm:$0xff]
        %v8458 = vld [vmem:[%s13 + $0x90] sm:$0xff]
        %v8459 = vld [vmem:[%s13 + $0x98] sm:$0xff]
        %v8460 = vld [vmem:[%s13 + $0xa0] sm:$0xff]
        %v8461 = vld [vmem:[%s13 + $0xa8] sm:$0xff]
        %v8462 = vld [vmem:[%s13 + $0xb0] sm:$0xff]
        %v8463 = vld [vmem:[%s13 + $0xb8] sm:$0xff]
        %v8464 = vld [vmem:[%s13 + $0xc0] sm:$0xff]
        %v8465 = vld [vmem:[%s13 + $0xc8] sm:$0xff]
        %v8466 = vld [vmem:[%s13 + $0xd0] sm:$0xff]
        %v8467 = vld [vmem:[%s13 + $0xd8] sm:$0xff]
        %v8468 = vld [vmem:[%s13 + $0xe0] sm:$0xff]
        %v8469 = vld [vmem:[%s13 + $0xe8] sm:$0xff]
        %v8470 = vld [vmem:[%s13 + $0xf0] sm:$0xff]
        %v8471 = vld [vmem:[%s13 + $0xf8] sm:$0xff]
        %v8504 = vunpack.c.l.b16 %v8408
        %v8505 = vunpack.c.h.b16 %v8408
        %v8506 = vunpack.c.l.b16 %v8409
        %v8507 = vunpack.c.h.b16 %v8409
        %v8508 = vunpack.c.l.b16 %v8410
        %v8509 = vunpack.c.h.b16 %v8410
        %v8510 = vunpack.c.l.b16 %v8411
        %v8511 = vunpack.c.h.b16 %v8411
        %v8512 = vunpack.c.l.b16 %v8412
        %v8513 = vunpack.c.h.b16 %v8412
        %v8514 = vunpack.c.l.b16 %v8413
        %v8515 = vunpack.c.h.b16 %v8413
        %v8516 = vunpack.c.l.b16 %v8414
        %v8517 = vunpack.c.h.b16 %v8414
        %v8518 = vunpack.c.l.b16 %v8415
        %v8519 = vunpack.c.h.b16 %v8415
        %v8520 = vunpack.c.l.b16 %v8416
        %v8521 = vunpack.c.h.b16 %v8416
        %v8522 = vunpack.c.l.b16 %v8417
        %v8523 = vunpack.c.h.b16 %v8417
        %v8524 = vunpack.c.l.b16 %v8418
        %v8525 = vunpack.c.h.b16 %v8418
        %v8526 = vunpack.c.l.b16 %v8419
        %v8527 = vunpack.c.h.b16 %v8419
        %v8528 = vunpack.c.l.b16 %v8420
        %v8529 = vunpack.c.h.b16 %v8420
        %v8530 = vunpack.c.l.b16 %v8421
        %v8531 = vunpack.c.h.b16 %v8421
        %v8532 = vunpack.c.l.b16 %v8422
        %v8533 = vunpack.c.h.b16 %v8422
        %v8534 = vunpack.c.l.b16 %v8423
        %v8535 = vunpack.c.h.b16 %v8423
        %v8536 = vunpack.c.l.b16 %v8424
        %v8537 = vunpack.c.h.b16 %v8424
        %v8538 = vunpack.c.l.b16 %v8425
        %v8539 = vunpack.c.h.b16 %v8425
        %v8540 = vunpack.c.l.b16 %v8426
        %v8541 = vunpack.c.h.b16 %v8426
        %v8542 = vunpack.c.l.b16 %v8427
        %v8543 = vunpack.c.h.b16 %v8427
        %v8544 = vunpack.c.l.b16 %v8428
        %v8545 = vunpack.c.h.b16 %v8428
        %v8546 = vunpack.c.l.b16 %v8429
        %v8547 = vunpack.c.h.b16 %v8429
        %v8548 = vunpack.c.l.b16 %v8430
        %v8549 = vunpack.c.h.b16 %v8430
        %v8550 = vunpack.c.l.b16 %v8431
        %v8551 = vunpack.c.h.b16 %v8431
        %v8552 = vunpack.c.l.b16 %v8432
        %v8553 = vunpack.c.h.b16 %v8432
        %v8554 = vunpack.c.l.b16 %v8433
        %v8555 = vunpack.c.h.b16 %v8433
        %v8556 = vunpack.c.l.b16 %v8434
        %v8557 = vunpack.c.h.b16 %v8434
        %v8558 = vunpack.c.l.b16 %v8435
        %v8559 = vunpack.c.h.b16 %v8435
        %v8560 = vunpack.c.l.b16 %v8436
        %v8561 = vunpack.c.h.b16 %v8436
        %v8562 = vunpack.c.l.b16 %v8437
        %v8563 = vunpack.c.h.b16 %v8437
        %v8564 = vunpack.c.l.b16 %v8438
        %v8565 = vunpack.c.h.b16 %v8438
        %v8566 = vunpack.c.l.b16 %v8439
        %v8567 = vunpack.c.h.b16 %v8439
        %v8568 = vpack.c.b16 %v8506, %v8504
        %v8569 = vpack.c.b16 %v8507, %v8505
        %v8570 = vpack.c.b16 %v8510, %v8508
        %v8571 = vpack.c.b16 %v8511, %v8509
        %v8572 = vpack.c.b16 %v8514, %v8512
        %v8573 = vpack.c.b16 %v8515, %v8513
        %v8574 = vpack.c.b16 %v8518, %v8516
        %v8575 = vpack.c.b16 %v8519, %v8517
        %v8576 = vpack.c.b16 %v8522, %v8520
        %v8577 = vpack.c.b16 %v8523, %v8521
        %v8578 = vpack.c.b16 %v8526, %v8524
        %v8579 = vpack.c.b16 %v8527, %v8525
        %v8580 = vpack.c.b16 %v8530, %v8528
        %v8581 = vpack.c.b16 %v8531, %v8529
        %v8582 = vpack.c.b16 %v8534, %v8532
        %v8583 = vpack.c.b16 %v8535, %v8533
        %v8584 = vpack.c.b16 %v8538, %v8536
        %v8585 = vpack.c.b16 %v8539, %v8537
        %v8586 = vpack.c.b16 %v8542, %v8540
        %v8587 = vpack.c.b16 %v8543, %v8541
        %v8588 = vpack.c.b16 %v8546, %v8544
        %v8589 = vpack.c.b16 %v8547, %v8545
        %v8590 = vpack.c.b16 %v8550, %v8548
        %v8591 = vpack.c.b16 %v8551, %v8549
        %v8592 = vpack.c.b16 %v8554, %v8552
        %v8593 = vpack.c.b16 %v8555, %v8553
        %v8594 = vpack.c.b16 %v8558, %v8556
        %v8595 = vpack.c.b16 %v8559, %v8557
        %v8596 = vpack.c.b16 %v8562, %v8560
        %v8597 = vpack.c.b16 %v8563, %v8561
        %v8598 = vpack.c.b16 %v8566, %v8564
        %v8599 = vpack.c.b16 %v8567, %v8565
        %v8664 = vunpack.c.l.b16 %v8440
        %v8665 = vunpack.c.h.b16 %v8440
        %v8666 = vunpack.c.l.b16 %v8441
        %v8667 = vunpack.c.h.b16 %v8441
        %v8668 = vunpack.c.l.b16 %v8442
        %v8669 = vunpack.c.h.b16 %v8442
        %v8670 = vunpack.c.l.b16 %v8443
        %v8671 = vunpack.c.h.b16 %v8443
        %v8672 = vunpack.c.l.b16 %v8444
        %v8673 = vunpack.c.h.b16 %v8444
        %v8674 = vunpack.c.l.b16 %v8445
        %v8675 = vunpack.c.h.b16 %v8445
        %v8676 = vunpack.c.l.b16 %v8446
        %v8677 = vunpack.c.h.b16 %v8446
        %v8678 = vunpack.c.l.b16 %v8447
        %v8679 = vunpack.c.h.b16 %v8447
        %v8680 = vunpack.c.l.b16 %v8448
        %v8681 = vunpack.c.h.b16 %v8448
        %v8682 = vunpack.c.l.b16 %v8449
        %v8683 = vunpack.c.h.b16 %v8449
        %v8684 = vunpack.c.l.b16 %v8450
        %v8685 = vunpack.c.h.b16 %v8450
        %v8686 = vunpack.c.l.b16 %v8451
        %v8687 = vunpack.c.h.b16 %v8451
        %v8688 = vunpack.c.l.b16 %v8452
        %v8689 = vunpack.c.h.b16 %v8452
        %v8690 = vunpack.c.l.b16 %v8453
        %v8691 = vunpack.c.h.b16 %v8453
        %v8692 = vunpack.c.l.b16 %v8454
        %v8693 = vunpack.c.h.b16 %v8454
        %v8694 = vunpack.c.l.b16 %v8455
        %v8695 = vunpack.c.h.b16 %v8455
        %v8696 = vunpack.c.l.b16 %v8456
        %v8697 = vunpack.c.h.b16 %v8456
        %v8698 = vunpack.c.l.b16 %v8457
        %v8699 = vunpack.c.h.b16 %v8457
        %v8700 = vunpack.c.l.b16 %v8458
        %v8701 = vunpack.c.h.b16 %v8458
        %v8702 = vunpack.c.l.b16 %v8459
        %v8703 = vunpack.c.h.b16 %v8459
        %v8704 = vunpack.c.l.b16 %v8460
        %v8705 = vunpack.c.h.b16 %v8460
        %v8706 = vunpack.c.l.b16 %v8461
        %v8707 = vunpack.c.h.b16 %v8461
        %v8708 = vunpack.c.l.b16 %v8462
        %v8709 = vunpack.c.h.b16 %v8462
        %v8710 = vunpack.c.l.b16 %v8463
        %v8711 = vunpack.c.h.b16 %v8463
        %v8712 = vunpack.c.l.b16 %v8464
        %v8713 = vunpack.c.h.b16 %v8464
        %v8714 = vunpack.c.l.b16 %v8465
        %v8715 = vunpack.c.h.b16 %v8465
        %v8716 = vunpack.c.l.b16 %v8466
        %v8717 = vunpack.c.h.b16 %v8466
        %v8718 = vunpack.c.l.b16 %v8467
        %v8719 = vunpack.c.h.b16 %v8467
        %v8720 = vunpack.c.l.b16 %v8468
        %v8721 = vunpack.c.h.b16 %v8468
        %v8722 = vunpack.c.l.b16 %v8469
        %v8723 = vunpack.c.h.b16 %v8469
        %v8724 = vunpack.c.l.b16 %v8470
        %v8725 = vunpack.c.h.b16 %v8470
        %v8726 = vunpack.c.l.b16 %v8471
        %v8727 = vunpack.c.h.b16 %v8471
        %v8728 = vpack.c.b16 %v8666, %v8664
        %v8729 = vpack.c.b16 %v8667, %v8665
        %v8730 = vpack.c.b16 %v8670, %v8668
        %v8731 = vpack.c.b16 %v8671, %v8669
        %v8732 = vpack.c.b16 %v8674, %v8672
        %v8733 = vpack.c.b16 %v8675, %v8673
        %v8734 = vpack.c.b16 %v8678, %v8676
        %v8735 = vpack.c.b16 %v8679, %v8677
        %v8736 = vpack.c.b16 %v8682, %v8680
        %v8737 = vpack.c.b16 %v8683, %v8681
        %v8738 = vpack.c.b16 %v8686, %v8684
        %v8739 = vpack.c.b16 %v8687, %v8685
        %v8740 = vpack.c.b16 %v8690, %v8688
        %v8741 = vpack.c.b16 %v8691, %v8689
        %v8742 = vpack.c.b16 %v8694, %v8692
        %v8743 = vpack.c.b16 %v8695, %v8693
        %v8744 = vpack.c.b16 %v8698, %v8696
        %v8745 = vpack.c.b16 %v8699, %v8697
        %v8746 = vpack.c.b16 %v8702, %v8700
        %v8747 = vpack.c.b16 %v8703, %v8701
        %v8748 = vpack.c.b16 %v8706, %v8704
        %v8749 = vpack.c.b16 %v8707, %v8705
        %v8750 = vpack.c.b16 %v8710, %v8708
        %v8751 = vpack.c.b16 %v8711, %v8709
        %v8752 = vpack.c.b16 %v8714, %v8712
        %v8753 = vpack.c.b16 %v8715, %v8713
        %v8754 = vpack.c.b16 %v8718, %v8716
        %v8755 = vpack.c.b16 %v8719, %v8717
        %v8756 = vpack.c.b16 %v8722, %v8720
        %v8757 = vpack.c.b16 %v8723, %v8721
        %v8758 = vpack.c.b16 %v8726, %v8724
        %v8759 = vpack.c.b16 %v8727, %v8725
        %8792 = vmatpush.bf16.msra.mxu0 %v8742
        %8793 = vmatpush.bf16.msra.mxu0 %v8740
        %8794 = vmatpush.bf16.msra.mxu0 %v8738
        %8795 = vmatpush.bf16.msra.mxu0 %v8736
        %8796 = vmatpush.bf16.msra.mxu0 %v8734
        %8797 = vmatpush.bf16.msra.mxu0 %v8732
        %8798 = vmatpush.bf16.msra.mxu0 %v8730
        %8799 = vmatpush.bf16.msra.mxu0 %v8728
        %8800 = vmatmul.bf16.gmra.mxu0 %v8568
        %v8801 = vpop.f32.mrf.mxu0
        %v8802 = vadd.f32 0.0, %v8801
        %v8803 = vpop.f32.mrf.mxu0
        %v8804 = vadd.f32 0.0, %v8803
        %8805 = vmatmul.bf16.gmra.mxu0 %v8570
        %v8806 = vpop.f32.mrf.mxu0
        %v8807 = vadd.f32 0.0, %v8806
        %v8808 = vpop.f32.mrf.mxu0
        %v8809 = vadd.f32 0.0, %v8808
        %8810 = vmatmul.bf16.gmra.mxu0 %v8572
        %v8811 = vpop.f32.mrf.mxu0
        %v8812 = vadd.f32 0.0, %v8811
        %v8813 = vpop.f32.mrf.mxu0
        %v8814 = vadd.f32 0.0, %v8813
        %8815 = vmatmul.bf16.gmra.mxu0 %v8574
        %v8816 = vpop.f32.mrf.mxu0
        %v8817 = vadd.f32 0.0, %v8816
        %v8818 = vpop.f32.mrf.mxu0
        %v8819 = vadd.f32 0.0, %v8818
        %8820 = vmatmul.bf16.gmra.mxu0 %v8576
        %v8821 = vpop.f32.mrf.mxu0
        %v8822 = vadd.f32 0.0, %v8821
        %v8823 = vpop.f32.mrf.mxu0
        %v8824 = vadd.f32 0.0, %v8823
        %8825 = vmatmul.bf16.gmra.mxu0 %v8578
        %v8826 = vpop.f32.mrf.mxu0
        %v8827 = vadd.f32 0.0, %v8826
        %v8828 = vpop.f32.mrf.mxu0
        %v8829 = vadd.f32 0.0, %v8828
        %8830 = vmatmul.bf16.gmra.mxu0 %v8580
        %v8831 = vpop.f32.mrf.mxu0
        %v8832 = vadd.f32 0.0, %v8831
        %v8833 = vpop.f32.mrf.mxu0
        %v8834 = vadd.f32 0.0, %v8833
        %8835 = vmatmul.bf16.gmra.mxu0 %v8582
        %v8836 = vpop.f32.mrf.mxu0
        %v8837 = vadd.f32 0.0, %v8836
        %v8838 = vpop.f32.mrf.mxu0
        %v8839 = vadd.f32 0.0, %v8838
        %8840 = vmatmul.bf16.gmra.mxu0 %v8584
        %v8841 = vpop.f32.mrf.mxu0
        %v8842 = vadd.f32 0.0, %v8841
        %v8843 = vpop.f32.mrf.mxu0
        %v8844 = vadd.f32 0.0, %v8843
        %8845 = vmatmul.bf16.gmra.mxu0 %v8586
        %v8846 = vpop.f32.mrf.mxu0
        %v8847 = vadd.f32 0.0, %v8846
        %v8848 = vpop.f32.mrf.mxu0
        %v8849 = vadd.f32 0.0, %v8848
        %8850 = vmatmul.bf16.gmra.mxu0 %v8588
        %v8851 = vpop.f32.mrf.mxu0
        %v8852 = vadd.f32 0.0, %v8851
        %v8853 = vpop.f32.mrf.mxu0
        %v8854 = vadd.f32 0.0, %v8853
        %8855 = vmatmul.bf16.gmra.mxu0 %v8590
        %v8856 = vpop.f32.mrf.mxu0
        %v8857 = vadd.f32 0.0, %v8856
        %v8858 = vpop.f32.mrf.mxu0
        %v8859 = vadd.f32 0.0, %v8858
        %8860 = vmatmul.bf16.gmra.mxu0 %v8592
        %v8861 = vpop.f32.mrf.mxu0
        %v8862 = vadd.f32 0.0, %v8861
        %v8863 = vpop.f32.mrf.mxu0
        %v8864 = vadd.f32 0.0, %v8863
        %8865 = vmatmul.bf16.gmra.mxu0 %v8594
        %v8866 = vpop.f32.mrf.mxu0
        %v8867 = vadd.f32 0.0, %v8866
        %v8868 = vpop.f32.mrf.mxu0
        %v8869 = vadd.f32 0.0, %v8868
        %8870 = vmatmul.bf16.gmra.mxu0 %v8596
        %v8871 = vpop.f32.mrf.mxu0
        %v8872 = vadd.f32 0.0, %v8871
        %v8873 = vpop.f32.mrf.mxu0
        %v8874 = vadd.f32 0.0, %v8873
        %8875 = vmatmul.bf16.gmra.mxu0 %v8598
        %v8876 = vpop.f32.mrf.mxu0
        %v8877 = vadd.f32 0.0, %v8876
        %v8878 = vpop.f32.mrf.mxu0
        %v8879 = vadd.f32 0.0, %v8878
        %8880 = vdwg.mxu0
        %8881 = vmatpush.bf16.msra.mxu0 %v8758
        %8882 = vmatpush.bf16.msra.mxu0 %v8756
        %8883 = vmatpush.bf16.msra.mxu0 %v8754
        %8884 = vmatpush.bf16.msra.mxu0 %v8752
        %8885 = vmatpush.bf16.msra.mxu0 %v8750
        %8886 = vmatpush.bf16.msra.mxu0 %v8748
        %8887 = vmatpush.bf16.msra.mxu0 %v8746
        %8888 = vmatpush.bf16.msra.mxu0 %v8744
        %8889 = vmatmul.bf16.gmra.mxu0 %v8569
        %v8890 = vpop.f32.mrf.mxu0
        %v8891 = vadd.f32 %v8802, %v8890
        %v8892 = vpop.f32.mrf.mxu0
        %v8893 = vadd.f32 %v8804, %v8892
        %8894 = vmatmul.bf16.gmra.mxu0 %v8571
        %v8895 = vpop.f32.mrf.mxu0
        %v8896 = vadd.f32 %v8807, %v8895
        %v8897 = vpop.f32.mrf.mxu0
        %v8898 = vadd.f32 %v8809, %v8897
        %8899 = vmatmul.bf16.gmra.mxu0 %v8573
        %v8900 = vpop.f32.mrf.mxu0
        %v8901 = vadd.f32 %v8812, %v8900
        %v8902 = vpop.f32.mrf.mxu0
        %v8903 = vadd.f32 %v8814, %v8902
        %8904 = vmatmul.bf16.gmra.mxu0 %v8575
        %v8905 = vpop.f32.mrf.mxu0
        %v8906 = vadd.f32 %v8817, %v8905
        %v8907 = vpop.f32.mrf.mxu0
        %v8908 = vadd.f32 %v8819, %v8907
        %8909 = vmatmul.bf16.gmra.mxu0 %v8577
        %v8910 = vpop.f32.mrf.mxu0
        %v8911 = vadd.f32 %v8822, %v8910
        %v8912 = vpop.f32.mrf.mxu0
        %v8913 = vadd.f32 %v8824, %v8912
        %8914 = vmatmul.bf16.gmra.mxu0 %v8579
        %v8915 = vpop.f32.mrf.mxu0
        %v8916 = vadd.f32 %v8827, %v8915
        %v8917 = vpop.f32.mrf.mxu0
        %v8918 = vadd.f32 %v8829, %v8917
        %8919 = vmatmul.bf16.gmra.mxu0 %v8581
        %v8920 = vpop.f32.mrf.mxu0
        %v8921 = vadd.f32 %v8832, %v8920
        %v8922 = vpop.f32.mrf.mxu0
        %v8923 = vadd.f32 %v8834, %v8922
        %8924 = vmatmul.bf16.gmra.mxu0 %v8583
        %v8925 = vpop.f32.mrf.mxu0
        %v8926 = vadd.f32 %v8837, %v8925
        %v8927 = vpop.f32.mrf.mxu0
        %v8928 = vadd.f32 %v8839, %v8927
        %8929 = vmatmul.bf16.gmra.mxu0 %v8585
        %v8930 = vpop.f32.mrf.mxu0
        %v8931 = vadd.f32 %v8842, %v8930
        %v8932 = vpop.f32.mrf.mxu0
        %v8933 = vadd.f32 %v8844, %v8932
        %8934 = vmatmul.bf16.gmra.mxu0 %v8587
        %v8935 = vpop.f32.mrf.mxu0
        %v8936 = vadd.f32 %v8847, %v8935
        %v8937 = vpop.f32.mrf.mxu0
        %v8938 = vadd.f32 %v8849, %v8937
        %8939 = vmatmul.bf16.gmra.mxu0 %v8589
        %v8940 = vpop.f32.mrf.mxu0
        %v8941 = vadd.f32 %v8852, %v8940
        %v8942 = vpop.f32.mrf.mxu0
        %v8943 = vadd.f32 %v8854, %v8942
        %8944 = vmatmul.bf16.gmra.mxu0 %v8591
        %v8945 = vpop.f32.mrf.mxu0
        %v8946 = vadd.f32 %v8857, %v8945
        %v8947 = vpop.f32.mrf.mxu0
        %v8948 = vadd.f32 %v8859, %v8947
        %8949 = vmatmul.bf16.gmra.mxu0 %v8593
        %v8950 = vpop.f32.mrf.mxu0
        %v8951 = vadd.f32 %v8862, %v8950
        %v8952 = vpop.f32.mrf.mxu0
        %v8953 = vadd.f32 %v8864, %v8952
        %8954 = vmatmul.bf16.gmra.mxu0 %v8595
        %v8955 = vpop.f32.mrf.mxu0
        %v8956 = vadd.f32 %v8867, %v8955
        %v8957 = vpop.f32.mrf.mxu0
        %v8958 = vadd.f32 %v8869, %v8957
        %8959 = vmatmul.bf16.gmra.mxu0 %v8597
        %v8960 = vpop.f32.mrf.mxu0
        %v8961 = vadd.f32 %v8872, %v8960
        %v8962 = vpop.f32.mrf.mxu0
        %v8963 = vadd.f32 %v8874, %v8962
        %8964 = vmatmul.bf16.gmra.mxu0 %v8599
        %v8965 = vpop.f32.mrf.mxu0
        %v8966 = vadd.f32 %v8877, %v8965
        %v8967 = vpop.f32.mrf.mxu0
        %v8968 = vadd.f32 %v8879, %v8967
        %8969 = vdwg.mxu0
        %8970 = vmatpush.bf16.msra.mxu0 %v8743
        %8971 = vmatpush.bf16.msra.mxu0 %v8741
        %8972 = vmatpush.bf16.msra.mxu0 %v8739
        %8973 = vmatpush.bf16.msra.mxu0 %v8737
        %8974 = vmatpush.bf16.msra.mxu0 %v8735
        %8975 = vmatpush.bf16.msra.mxu0 %v8733
        %8976 = vmatpush.bf16.msra.mxu0 %v8731
        %8977 = vmatpush.bf16.msra.mxu0 %v8729
        %8978 = vmatmul.bf16.gmra.mxu0 %v8568
        %v8979 = vpop.f32.mrf.mxu0
        %v8980 = vadd.f32 0.0, %v8979
        %v8981 = vpop.f32.mrf.mxu0
        %v8982 = vadd.f32 0.0, %v8981
        %8983 = vmatmul.bf16.gmra.mxu0 %v8570
        %v8984 = vpop.f32.mrf.mxu0
        %v8985 = vadd.f32 0.0, %v8984
        %v8986 = vpop.f32.mrf.mxu0
        %v8987 = vadd.f32 0.0, %v8986
        %8988 = vmatmul.bf16.gmra.mxu0 %v8572
        %v8989 = vpop.f32.mrf.mxu0
        %v8990 = vadd.f32 0.0, %v8989
        %v8991 = vpop.f32.mrf.mxu0
        %v8992 = vadd.f32 0.0, %v8991
        %8993 = vmatmul.bf16.gmra.mxu0 %v8574
        %v8994 = vpop.f32.mrf.mxu0
        %v8995 = vadd.f32 0.0, %v8994
        %v8996 = vpop.f32.mrf.mxu0
        %v8997 = vadd.f32 0.0, %v8996
        %8998 = vmatmul.bf16.gmra.mxu0 %v8576
        %v8999 = vpop.f32.mrf.mxu0
        %v9000 = vadd.f32 0.0, %v8999
        %v9001 = vpop.f32.mrf.mxu0
        %v9002 = vadd.f32 0.0, %v9001
        %9003 = vmatmul.bf16.gmra.mxu0 %v8578
        %v9004 = vpop.f32.mrf.mxu0
        %v9005 = vadd.f32 0.0, %v9004
        %v9006 = vpop.f32.mrf.mxu0
        %v9007 = vadd.f32 0.0, %v9006
        %9008 = vmatmul.bf16.gmra.mxu0 %v8580
        %v9009 = vpop.f32.mrf.mxu0
        %v9010 = vadd.f32 0.0, %v9009
        %v9011 = vpop.f32.mrf.mxu0
        %v9012 = vadd.f32 0.0, %v9011
        %9013 = vmatmul.bf16.gmra.mxu0 %v8582
        %v9014 = vpop.f32.mrf.mxu0
        %v9015 = vadd.f32 0.0, %v9014
        %v9016 = vpop.f32.mrf.mxu0
        %v9017 = vadd.f32 0.0, %v9016
        %9018 = vmatmul.bf16.gmra.mxu0 %v8584
        %v9019 = vpop.f32.mrf.mxu0
        %v9020 = vadd.f32 0.0, %v9019
        %v9021 = vpop.f32.mrf.mxu0
        %v9022 = vadd.f32 0.0, %v9021
        %9023 = vmatmul.bf16.gmra.mxu0 %v8586
        %v9024 = vpop.f32.mrf.mxu0
        %v9025 = vadd.f32 0.0, %v9024
        %v9026 = vpop.f32.mrf.mxu0
        %v9027 = vadd.f32 0.0, %v9026
        %9028 = vmatmul.bf16.gmra.mxu0 %v8588
        %v9029 = vpop.f32.mrf.mxu0
        %v9030 = vadd.f32 0.0, %v9029
        %v9031 = vpop.f32.mrf.mxu0
        %v9032 = vadd.f32 0.0, %v9031
        %9033 = vmatmul.bf16.gmra.mxu0 %v8590
        %v9034 = vpop.f32.mrf.mxu0
        %v9035 = vadd.f32 0.0, %v9034
        %v9036 = vpop.f32.mrf.mxu0
        %v9037 = vadd.f32 0.0, %v9036
        %9038 = vmatmul.bf16.gmra.mxu0 %v8592
        %v9039 = vpop.f32.mrf.mxu0
        %v9040 = vadd.f32 0.0, %v9039
        %v9041 = vpop.f32.mrf.mxu0
        %v9042 = vadd.f32 0.0, %v9041
        %9043 = vmatmul.bf16.gmra.mxu0 %v8594
        %v9044 = vpop.f32.mrf.mxu0
        %v9045 = vadd.f32 0.0, %v9044
        %v9046 = vpop.f32.mrf.mxu0
        %v9047 = vadd.f32 0.0, %v9046
        %9048 = vmatmul.bf16.gmra.mxu0 %v8596
        %v9049 = vpop.f32.mrf.mxu0
        %v9050 = vadd.f32 0.0, %v9049
        %v9051 = vpop.f32.mrf.mxu0
        %v9052 = vadd.f32 0.0, %v9051
        %9053 = vmatmul.bf16.gmra.mxu0 %v8598
        %v9054 = vpop.f32.mrf.mxu0
        %v9055 = vadd.f32 0.0, %v9054
        %v9056 = vpop.f32.mrf.mxu0
        %v9057 = vadd.f32 0.0, %v9056
        %9058 = vdwg.mxu0
        %9059 = vmatpush.bf16.msra.mxu0 %v8759
        %9060 = vmatpush.bf16.msra.mxu0 %v8757
        %9061 = vmatpush.bf16.msra.mxu0 %v8755
        %9062 = vmatpush.bf16.msra.mxu0 %v8753
        %9063 = vmatpush.bf16.msra.mxu0 %v8751
        %9064 = vmatpush.bf16.msra.mxu0 %v8749
        %9065 = vmatpush.bf16.msra.mxu0 %v8747
        %9066 = vmatpush.bf16.msra.mxu0 %v8745
        %9067 = vmatmul.bf16.gmra.mxu0 %v8569
        %v9068 = vpop.f32.mrf.mxu0
        %v9069 = vadd.f32 %v8980, %v9068
        %v9070 = vpop.f32.mrf.mxu0
        %v9071 = vadd.f32 %v8982, %v9070
        %9072 = vmatmul.bf16.gmra.mxu0 %v8571
        %v9073 = vpop.f32.mrf.mxu0
        %v9074 = vadd.f32 %v8985, %v9073
        %v9075 = vpop.f32.mrf.mxu0
        %v9076 = vadd.f32 %v8987, %v9075
        %9077 = vmatmul.bf16.gmra.mxu0 %v8573
        %v9078 = vpop.f32.mrf.mxu0
        %v9079 = vadd.f32 %v8990, %v9078
        %v9080 = vpop.f32.mrf.mxu0
        %v9081 = vadd.f32 %v8992, %v9080
        %9082 = vmatmul.bf16.gmra.mxu0 %v8575
        %v9083 = vpop.f32.mrf.mxu0
        %v9084 = vadd.f32 %v8995, %v9083
        %v9085 = vpop.f32.mrf.mxu0
        %v9086 = vadd.f32 %v8997, %v9085
        %9087 = vmatmul.bf16.gmra.mxu0 %v8577
        %v9088 = vpop.f32.mrf.mxu0
        %v9089 = vadd.f32 %v9000, %v9088
        %v9090 = vpop.f32.mrf.mxu0
        %v9091 = vadd.f32 %v9002, %v9090
        %9092 = vmatmul.bf16.gmra.mxu0 %v8579
        %v9093 = vpop.f32.mrf.mxu0
        %v9094 = vadd.f32 %v9005, %v9093
        %v9095 = vpop.f32.mrf.mxu0
        %v9096 = vadd.f32 %v9007, %v9095
        %9097 = vmatmul.bf16.gmra.mxu0 %v8581
        %v9098 = vpop.f32.mrf.mxu0
        %v9099 = vadd.f32 %v9010, %v9098
        %v9100 = vpop.f32.mrf.mxu0
        %v9101 = vadd.f32 %v9012, %v9100
        %9102 = vmatmul.bf16.gmra.mxu0 %v8583
        %v9103 = vpop.f32.mrf.mxu0
        %v9104 = vadd.f32 %v9015, %v9103
        %v9105 = vpop.f32.mrf.mxu0
        %v9106 = vadd.f32 %v9017, %v9105
        %9107 = vmatmul.bf16.gmra.mxu0 %v8585
        %v9108 = vpop.f32.mrf.mxu0
        %v9109 = vadd.f32 %v9020, %v9108
        %v9110 = vpop.f32.mrf.mxu0
        %v9111 = vadd.f32 %v9022, %v9110
        %9112 = vmatmul.bf16.gmra.mxu0 %v8587
        %v9113 = vpop.f32.mrf.mxu0
        %v9114 = vadd.f32 %v9025, %v9113
        %v9115 = vpop.f32.mrf.mxu0
        %v9116 = vadd.f32 %v9027, %v9115
        %9117 = vmatmul.bf16.gmra.mxu0 %v8589
        %v9118 = vpop.f32.mrf.mxu0
        %v9119 = vadd.f32 %v9030, %v9118
        %v9120 = vpop.f32.mrf.mxu0
        %v9121 = vadd.f32 %v9032, %v9120
        %9122 = vmatmul.bf16.gmra.mxu0 %v8591
        %v9123 = vpop.f32.mrf.mxu0
        %v9124 = vadd.f32 %v9035, %v9123
        %v9125 = vpop.f32.mrf.mxu0
        %v9126 = vadd.f32 %v9037, %v9125
        %9127 = vmatmul.bf16.gmra.mxu0 %v8593
        %v9128 = vpop.f32.mrf.mxu0
        %v9129 = vadd.f32 %v9040, %v9128
        %v9130 = vpop.f32.mrf.mxu0
        %v9131 = vadd.f32 %v9042, %v9130
        %9132 = vmatmul.bf16.gmra.mxu0 %v8595
        %v9133 = vpop.f32.mrf.mxu0
        %v9134 = vadd.f32 %v9045, %v9133
        %v9135 = vpop.f32.mrf.mxu0
        %v9136 = vadd.f32 %v9047, %v9135
        %9137 = vmatmul.bf16.gmra.mxu0 %v8597
        %v9138 = vpop.f32.mrf.mxu0
        %v9139 = vadd.f32 %v9050, %v9138
        %v9140 = vpop.f32.mrf.mxu0
        %v9141 = vadd.f32 %v9052, %v9140
        %9142 = vmatmul.bf16.gmra.mxu0 %v8599
        %v9143 = vpop.f32.mrf.mxu0
        %v9144 = vadd.f32 %v9055, %v9143
        %v9145 = vpop.f32.mrf.mxu0
        %v9146 = vadd.f32 %v9057, %v9145
        %9147 = vdwg.mxu0
        %v9148 = vadd.f32 %v8344, %v8891
        %v9149 = vadd.f32 %v8345, %v9069
        %v9150 = vadd.f32 %v8346, %v8893
        %v9151 = vadd.f32 %v8347, %v9071
        %v9152 = vadd.f32 %v8348, %v8896
        %v9153 = vadd.f32 %v8349, %v9074
        %v9154 = vadd.f32 %v8350, %v8898
        %v9155 = vadd.f32 %v8351, %v9076
        %v9156 = vadd.f32 %v8352, %v8901
        %v9157 = vadd.f32 %v8353, %v9079
        %v9158 = vadd.f32 %v8354, %v8903
        %v9159 = vadd.f32 %v8355, %v9081
        %v9160 = vadd.f32 %v8356, %v8906
        %v9161 = vadd.f32 %v8357, %v9084
        %v9162 = vadd.f32 %v8358, %v8908
        %v9163 = vadd.f32 %v8359, %v9086
        %v9164 = vadd.f32 %v8360, %v8911
        %v9165 = vadd.f32 %v8361, %v9089
        %v9166 = vadd.f32 %v8362, %v8913
        %v9167 = vadd.f32 %v8363, %v9091
        %v9168 = vadd.f32 %v8364, %v8916
        %v9169 = vadd.f32 %v8365, %v9094
        %v9170 = vadd.f32 %v8366, %v8918
        %v9171 = vadd.f32 %v8367, %v9096
        %v9172 = vadd.f32 %v8368, %v8921
        %v9173 = vadd.f32 %v8369, %v9099
        %v9174 = vadd.f32 %v8370, %v8923
        %v9175 = vadd.f32 %v8371, %v9101
        %v9176 = vadd.f32 %v8372, %v8926
        %v9177 = vadd.f32 %v8373, %v9104
        %v9178 = vadd.f32 %v8374, %v8928
        %v9179 = vadd.f32 %v8375, %v9106
        %v9180 = vadd.f32 %v8376, %v8931
        %v9181 = vadd.f32 %v8377, %v9109
        %v9182 = vadd.f32 %v8378, %v8933
        %v9183 = vadd.f32 %v8379, %v9111
        %v9184 = vadd.f32 %v8380, %v8936
        %v9185 = vadd.f32 %v8381, %v9114
        %v9186 = vadd.f32 %v8382, %v8938
        %v9187 = vadd.f32 %v8383, %v9116
        %v9188 = vadd.f32 %v8384, %v8941
        %v9189 = vadd.f32 %v8385, %v9119
        %v9190 = vadd.f32 %v8386, %v8943
        %v9191 = vadd.f32 %v8387, %v9121
        %v9192 = vadd.f32 %v8388, %v8946
        %v9193 = vadd.f32 %v8389, %v9124
        %v9194 = vadd.f32 %v8390, %v8948
        %v9195 = vadd.f32 %v8391, %v9126
        %v9196 = vadd.f32 %v8392, %v8951
        %v9197 = vadd.f32 %v8393, %v9129
        %v9198 = vadd.f32 %v8394, %v8953
        %v9199 = vadd.f32 %v8395, %v9131
        %v9200 = vadd.f32 %v8396, %v8956
        %v9201 = vadd.f32 %v8397, %v9134
        %v9202 = vadd.f32 %v8398, %v8958
        %v9203 = vadd.f32 %v8399, %v9136
        %v9204 = vadd.f32 %v8400, %v8961
        %v9205 = vadd.f32 %v8401, %v9139
        %v9206 = vadd.f32 %v8402, %v8963
        %v9207 = vadd.f32 %v8403, %v9141
        %v9208 = vadd.f32 %v8404, %v8966
        %v9209 = vadd.f32 %v8405, %v9144
        %v9210 = vadd.f32 %v8406, %v8968
        %v9211 = vadd.f32 %v8407, %v9146
        %v9212 = vld [vmem:[%s16] sm:$0x3]
        %v9214 = vperm.slane %v9212, 0
        %v9215 = vperm.slane %v9212, 1
        %v9218 = vmul.f32 %v9148, %v9214
        %v9219 = vmul.f32 %v9149, %v9215
        %v9220 = vmul.f32 %v9150, %v9214
        %v9221 = vmul.f32 %v9151, %v9215
        %v9222 = vmul.f32 %v9152, %v9214
        %v9223 = vmul.f32 %v9153, %v9215
        %v9224 = vmul.f32 %v9154, %v9214
        %v9225 = vmul.f32 %v9155, %v9215
        %v9226 = vmul.f32 %v9156, %v9214
        %v9227 = vmul.f32 %v9157, %v9215
        %v9228 = vmul.f32 %v9158, %v9214
        %v9229 = vmul.f32 %v9159, %v9215
        %v9230 = vmul.f32 %v9160, %v9214
        %v9231 = vmul.f32 %v9161, %v9215
        %v9232 = vmul.f32 %v9162, %v9214
        %v9233 = vmul.f32 %v9163, %v9215
        %v9234 = vmul.f32 %v9164, %v9214
        %v9235 = vmul.f32 %v9165, %v9215
        %v9236 = vmul.f32 %v9166, %v9214
        %v9237 = vmul.f32 %v9167, %v9215
        %v9238 = vmul.f32 %v9168, %v9214
        %v9239 = vmul.f32 %v9169, %v9215
        %v9240 = vmul.f32 %v9170, %v9214
        %v9241 = vmul.f32 %v9171, %v9215
        %v9242 = vmul.f32 %v9172, %v9214
        %v9243 = vmul.f32 %v9173, %v9215
        %v9244 = vmul.f32 %v9174, %v9214
        %v9245 = vmul.f32 %v9175, %v9215
        %v9246 = vmul.f32 %v9176, %v9214
        %v9247 = vmul.f32 %v9177, %v9215
        %v9248 = vmul.f32 %v9178, %v9214
        %v9249 = vmul.f32 %v9179, %v9215
        %v9250 = vmul.f32 %v9180, %v9214
        %v9251 = vmul.f32 %v9181, %v9215
        %v9252 = vmul.f32 %v9182, %v9214
        %v9253 = vmul.f32 %v9183, %v9215
        %v9254 = vmul.f32 %v9184, %v9214
        %v9255 = vmul.f32 %v9185, %v9215
        %v9256 = vmul.f32 %v9186, %v9214
        %v9257 = vmul.f32 %v9187, %v9215
        %v9258 = vmul.f32 %v9188, %v9214
        %v9259 = vmul.f32 %v9189, %v9215
        %v9260 = vmul.f32 %v9190, %v9214
        %v9261 = vmul.f32 %v9191, %v9215
        %v9262 = vmul.f32 %v9192, %v9214
        %v9263 = vmul.f32 %v9193, %v9215
        %v9264 = vmul.f32 %v9194, %v9214
        %v9265 = vmul.f32 %v9195, %v9215
        %v9266 = vmul.f32 %v9196, %v9214
        %v9267 = vmul.f32 %v9197, %v9215
        %v9268 = vmul.f32 %v9198, %v9214
        %v9269 = vmul.f32 %v9199, %v9215
        %v9270 = vmul.f32 %v9200, %v9214
        %v9271 = vmul.f32 %v9201, %v9215
        %v9272 = vmul.f32 %v9202, %v9214
        %v9273 = vmul.f32 %v9203, %v9215
        %v9274 = vmul.f32 %v9204, %v9214
        %v9275 = vmul.f32 %v9205, %v9215
        %v9276 = vmul.f32 %v9206, %v9214
        %v9277 = vmul.f32 %v9207, %v9215
        %v9278 = vmul.f32 %v9208, %v9214
        %v9279 = vmul.f32 %v9209, %v9215
        %v9280 = vmul.f32 %v9210, %v9214
        %v9281 = vmul.f32 %v9211, %v9215
        %v9282 = vld [vmem:[%s17] sm:$0x3]
        %v9284 = vperm.slane %v9282, 0
        %v9285 = vperm.slane %v9282, 1
        %v9288 = vadd.f32 %v9218, %v9284
        %v9289 = vadd.f32 %v9219, %v9285
        %v9290 = vadd.f32 %v9220, %v9284
        %v9291 = vadd.f32 %v9221, %v9285
        %v9292 = vadd.f32 %v9222, %v9284
        %v9293 = vadd.f32 %v9223, %v9285
        %v9294 = vadd.f32 %v9224, %v9284
        %v9295 = vadd.f32 %v9225, %v9285
        %v9296 = vadd.f32 %v9226, %v9284
        %v9297 = vadd.f32 %v9227, %v9285
        %v9298 = vadd.f32 %v9228, %v9284
        %v9299 = vadd.f32 %v9229, %v9285
        %v9300 = vadd.f32 %v9230, %v9284
        %v9301 = vadd.f32 %v9231, %v9285
        %v9302 = vadd.f32 %v9232, %v9284
        %v9303 = vadd.f32 %v9233, %v9285
        %v9304 = vadd.f32 %v9234, %v9284
        %v9305 = vadd.f32 %v9235, %v9285
        %v9306 = vadd.f32 %v9236, %v9284
        %v9307 = vadd.f32 %v9237, %v9285
        %v9308 = vadd.f32 %v9238, %v9284
        %v9309 = vadd.f32 %v9239, %v9285
        %v9310 = vadd.f32 %v9240, %v9284
        %v9311 = vadd.f32 %v9241, %v9285
        %v9312 = vadd.f32 %v9242, %v9284
        %v9313 = vadd.f32 %v9243, %v9285
        %v9314 = vadd.f32 %v9244, %v9284
        %v9315 = vadd.f32 %v9245, %v9285
        %v9316 = vadd.f32 %v9246, %v9284
        %v9317 = vadd.f32 %v9247, %v9285
        %v9318 = vadd.f32 %v9248, %v9284
        %v9319 = vadd.f32 %v9249, %v9285
        %v9320 = vadd.f32 %v9250, %v9284
        %v9321 = vadd.f32 %v9251, %v9285
        %v9322 = vadd.f32 %v9252, %v9284
        %v9323 = vadd.f32 %v9253, %v9285
        %v9324 = vadd.f32 %v9254, %v9284
        %v9325 = vadd.f32 %v9255, %v9285
        %v9326 = vadd.f32 %v9256, %v9284
        %v9327 = vadd.f32 %v9257, %v9285
        %v9328 = vadd.f32 %v9258, %v9284
        %v9329 = vadd.f32 %v9259, %v9285
        %v9330 = vadd.f32 %v9260, %v9284
        %v9331 = vadd.f32 %v9261, %v9285
        %v9332 = vadd.f32 %v9262, %v9284
        %v9333 = vadd.f32 %v9263, %v9285
        %v9334 = vadd.f32 %v9264, %v9284
        %v9335 = vadd.f32 %v9265, %v9285
        %v9336 = vadd.f32 %v9266, %v9284
        %v9337 = vadd.f32 %v9267, %v9285
        %v9338 = vadd.f32 %v9268, %v9284
        %v9339 = vadd.f32 %v9269, %v9285
        %v9340 = vadd.f32 %v9270, %v9284
        %v9341 = vadd.f32 %v9271, %v9285
        %v9342 = vadd.f32 %v9272, %v9284
        %v9343 = vadd.f32 %v9273, %v9285
        %v9344 = vadd.f32 %v9274, %v9284
        %v9345 = vadd.f32 %v9275, %v9285
        %v9346 = vadd.f32 %v9276, %v9284
        %v9347 = vadd.f32 %v9277, %v9285
        %v9348 = vadd.f32 %v9278, %v9284
        %v9349 = vadd.f32 %v9279, %v9285
        %v9350 = vadd.f32 %v9280, %v9284
        %v9351 = vadd.f32 %v9281, %v9285
        %v9352 = vmax.f32 %v9288, 0.0
        %v9353 = vmax.f32 %v9289, 0.0
        %v9354 = vmax.f32 %v9290, 0.0
        %v9355 = vmax.f32 %v9291, 0.0
        %v9356 = vmax.f32 %v9292, 0.0
        %v9357 = vmax.f32 %v9293, 0.0
        %v9358 = vmax.f32 %v9294, 0.0
        %v9359 = vmax.f32 %v9295, 0.0
        %v9360 = vmax.f32 %v9296, 0.0
        %v9361 = vmax.f32 %v9297, 0.0
        %v9362 = vmax.f32 %v9298, 0.0
        %v9363 = vmax.f32 %v9299, 0.0
        %v9364 = vmax.f32 %v9300, 0.0
        %v9365 = vmax.f32 %v9301, 0.0
        %v9366 = vmax.f32 %v9302, 0.0
        %v9367 = vmax.f32 %v9303, 0.0
        %v9368 = vmax.f32 %v9304, 0.0
        %v9369 = vmax.f32 %v9305, 0.0
        %v9370 = vmax.f32 %v9306, 0.0
        %v9371 = vmax.f32 %v9307, 0.0
        %v9372 = vmax.f32 %v9308, 0.0
        %v9373 = vmax.f32 %v9309, 0.0
        %v9374 = vmax.f32 %v9310, 0.0
        %v9375 = vmax.f32 %v9311, 0.0
        %v9376 = vmax.f32 %v9312, 0.0
        %v9377 = vmax.f32 %v9313, 0.0
        %v9378 = vmax.f32 %v9314, 0.0
        %v9379 = vmax.f32 %v9315, 0.0
        %v9380 = vmax.f32 %v9316, 0.0
        %v9381 = vmax.f32 %v9317, 0.0
        %v9382 = vmax.f32 %v9318, 0.0
        %v9383 = vmax.f32 %v9319, 0.0
        %v9384 = vmax.f32 %v9320, 0.0
        %v9385 = vmax.f32 %v9321, 0.0
        %v9386 = vmax.f32 %v9322, 0.0
        %v9387 = vmax.f32 %v9323, 0.0
        %v9388 = vmax.f32 %v9324, 0.0
        %v9389 = vmax.f32 %v9325, 0.0
        %v9390 = vmax.f32 %v9326, 0.0
        %v9391 = vmax.f32 %v9327, 0.0
        %v9392 = vmax.f32 %v9328, 0.0
        %v9393 = vmax.f32 %v9329, 0.0
        %v9394 = vmax.f32 %v9330, 0.0
        %v9395 = vmax.f32 %v9331, 0.0
        %v9396 = vmax.f32 %v9332, 0.0
        %v9397 = vmax.f32 %v9333, 0.0
        %v9398 = vmax.f32 %v9334, 0.0
        %v9399 = vmax.f32 %v9335, 0.0
        %v9400 = vmax.f32 %v9336, 0.0
        %v9401 = vmax.f32 %v9337, 0.0
        %v9402 = vmax.f32 %v9338, 0.0
        %v9403 = vmax.f32 %v9339, 0.0
        %v9404 = vmax.f32 %v9340, 0.0
        %v9405 = vmax.f32 %v9341, 0.0
        %v9406 = vmax.f32 %v9342, 0.0
        %v9407 = vmax.f32 %v9343, 0.0
        %v9408 = vmax.f32 %v9344, 0.0
        %v9409 = vmax.f32 %v9345, 0.0
        %v9410 = vmax.f32 %v9346, 0.0
        %v9411 = vmax.f32 %v9347, 0.0
        %v9412 = vmax.f32 %v9348, 0.0
        %v9413 = vmax.f32 %v9349, 0.0
        %v9414 = vmax.f32 %v9350, 0.0
        %v9415 = vmax.f32 %v9351, 0.0
        %9416 = vst [vmem:[%s639] sm:$0xff] %v9352
        %9417 = vst [vmem:[%s639 + $0x8] sm:$0xff] %v9353
        %9418 = vst [vmem:[%s639 + $0x10] sm:$0xff] %v9354
        %9419 = vst [vmem:[%s639 + $0x18] sm:$0xff] %v9355
        %9420 = vst [vmem:[%s639 + $0x20] sm:$0xff] %v9356
        %9421 = vst [vmem:[%s639 + $0x28] sm:$0xff] %v9357
        %9422 = vst [vmem:[%s639 + $0x30] sm:$0xff] %v9358
        %9423 = vst [vmem:[%s639 + $0x38] sm:$0xff] %v9359
        %9424 = vst [vmem:[%s639 + $0x40] sm:$0xff] %v9360
        %9425 = vst [vmem:[%s639 + $0x48] sm:$0xff] %v9361
        %9426 = vst [vmem:[%s639 + $0x50] sm:$0xff] %v9362
        %9427 = vst [vmem:[%s639 + $0x58] sm:$0xff] %v9363
        %9428 = vst [vmem:[%s639 + $0x60] sm:$0xff] %v9364
        %9429 = vst [vmem:[%s639 + $0x68] sm:$0xff] %v9365
        %9430 = vst [vmem:[%s639 + $0x70] sm:$0xff] %v9366
        %9431 = vst [vmem:[%s639 + $0x78] sm:$0xff] %v9367
        %9432 = vst [vmem:[%s639 + $0x80] sm:$0xff] %v9368
        %9433 = vst [vmem:[%s639 + $0x88] sm:$0xff] %v9369
        %9434 = vst [vmem:[%s639 + $0x90] sm:$0xff] %v9370
        %9435 = vst [vmem:[%s639 + $0x98] sm:$0xff] %v9371
        %9436 = vst [vmem:[%s639 + $0xa0] sm:$0xff] %v9372
        %9437 = vst [vmem:[%s639 + $0xa8] sm:$0xff] %v9373
        %9438 = vst [vmem:[%s639 + $0xb0] sm:$0xff] %v9374
        %9439 = vst [vmem:[%s639 + $0xb8] sm:$0xff] %v9375
        %9440 = vst [vmem:[%s639 + $0xc0] sm:$0xff] %v9376
        %9441 = vst [vmem:[%s639 + $0xc8] sm:$0xff] %v9377
        %9442 = vst [vmem:[%s639 + $0xd0] sm:$0xff] %v9378
        %9443 = vst [vmem:[%s639 + $0xd8] sm:$0xff] %v9379
        %9444 = vst [vmem:[%s639 + $0xe0] sm:$0xff] %v9380
        %9445 = vst [vmem:[%s639 + $0xe8] sm:$0xff] %v9381
        %9446 = vst [vmem:[%s639 + $0xf0] sm:$0xff] %v9382
        %9447 = vst [vmem:[%s639 + $0xf8] sm:$0xff] %v9383
        %9448 = vst [vmem:[%s639 + $0x100] sm:$0xff] %v9384
        %9449 = vst [vmem:[%s639 + $0x108] sm:$0xff] %v9385
        %9450 = vst [vmem:[%s639 + $0x110] sm:$0xff] %v9386
        %9451 = vst [vmem:[%s639 + $0x118] sm:$0xff] %v9387
        %9452 = vst [vmem:[%s639 + $0x120] sm:$0xff] %v9388
        %9453 = vst [vmem:[%s639 + $0x128] sm:$0xff] %v9389
        %9454 = vst [vmem:[%s639 + $0x130] sm:$0xff] %v9390
        %9455 = vst [vmem:[%s639 + $0x138] sm:$0xff] %v9391
        %9456 = vst [vmem:[%s639 + $0x140] sm:$0xff] %v9392
        %9457 = vst [vmem:[%s639 + $0x148] sm:$0xff] %v9393
        %9458 = vst [vmem:[%s639 + $0x150] sm:$0xff] %v9394
        %9459 = vst [vmem:[%s639 + $0x158] sm:$0xff] %v9395
        %9460 = vst [vmem:[%s639 + $0x160] sm:$0xff] %v9396
        %9461 = vst [vmem:[%s639 + $0x168] sm:$0xff] %v9397
        %9462 = vst [vmem:[%s639 + $0x170] sm:$0xff] %v9398
        %9463 = vst [vmem:[%s639 + $0x178] sm:$0xff] %v9399
        %9464 = vst [vmem:[%s639 + $0x180] sm:$0xff] %v9400
        %9465 = vst [vmem:[%s639 + $0x188] sm:$0xff] %v9401
        %9466 = vst [vmem:[%s639 + $0x190] sm:$0xff] %v9402
        %9467 = vst [vmem:[%s639 + $0x198] sm:$0xff] %v9403
        %9468 = vst [vmem:[%s639 + $0x1a0] sm:$0xff] %v9404
        %9469 = vst [vmem:[%s639 + $0x1a8] sm:$0xff] %v9405
        %9470 = vst [vmem:[%s639 + $0x1b0] sm:$0xff] %v9406
        %9471 = vst [vmem:[%s639 + $0x1b8] sm:$0xff] %v9407
        %9472 = vst [vmem:[%s639 + $0x1c0] sm:$0xff] %v9408
        %9473 = vst [vmem:[%s639 + $0x1c8] sm:$0xff] %v9409
        %9474 = vst [vmem:[%s639 + $0x1d0] sm:$0xff] %v9410
        %9475 = vst [vmem:[%s639 + $0x1d8] sm:$0xff] %v9411
        %9476 = vst [vmem:[%s639 + $0x1e0] sm:$0xff] %v9412
        %9477 = vst [vmem:[%s639 + $0x1e8] sm:$0xff] %v9413
        %9478 = vst [vmem:[%s639 + $0x1f0] sm:$0xff] %v9414
        %9479 = vst [vmem:[%s639 + $0x1f8] sm:$0xff] %v9415
        %s9480 = sand.u32 %s443, 1
        %s9481 = scalar_lea.sflag [#allocation3], %s9480
        %s9482 = sand.u32 %s443, 1
        %s9483 = smul.addr %s9482, 512
        %s9484 = scalar_lea.vmem [#allocation2], %s9483
        // Predicated region
        $region93: #{aspp_forward.3} parent=91 // pred_check
          %p9485 = pneg %p453
        $region94: #{aspp_forward.3} parent=91 // pred_check_branch
          %9487 = sbr.rel (%p9485) target = $region96
        $region95: #{aspp_forward.3} parent=91 // pred_region
          %s9488 = smul.u32 32, %s32
          %9490 = vsyncadd %s9481, 0
          %s9491 = smul.addr %s9488, 2
          %s9492 = smul.addr %s9491, 8
          %s9493 = scalar_lea.hbm %s18, %s9492
          %s9494 = sshll.u32 %s9484, 4
          %s9495 = int_to_ptr.vmem [resolvable:$true] %s9494
          %s9496 = sshll.u32 %s9493, 4
          %s9497 = int_to_ptr.hbm [resolvable:$true] %s9496
          %9502 = dma.vmem_to_hbm [thread:$0]  %s9495, 8192, %s9497, %s9481, 256, 256, 16
        $region96: #{aspp_forward.3} parent=91 // pred_fallthru
          _
      $region92: #{aspp_forward.3} parent=5 // pred_fallthru
        _
      %p9503 = scmp.le.s32.totalorder 2, %s27
      // Predicated region
      $region97: #{aspp_forward.3} parent=5 // pred_check
        %p9504 = pneg %p9503
      $region98: #{aspp_forward.3} parent=5 // pred_check_branch
        %9506 = sbr.rel (%p9504) target = $region100
      $region99: #{aspp_forward.3} parent=5 // pred_region
        %s9507 = ssub.s32 %s27, 2
        // Predicated region
        $region101: #{aspp_forward.3} parent=99 // pred_check
          %p9508 = pneg %p459
        $region102: #{aspp_forward.3} parent=99 // pred_check_branch
          %9510 = sbr.rel (%p9508) target = $region104
        $region103: #{aspp_forward.3} parent=99 // pred_region
          %s9511 = sand.u32 %s444, 1
          %s9512 = scalar_lea.sflag [#allocation3], %s9511
          %s9513 = sand.u32 %s444, 1
          %s9514 = smul.addr %s9513, 512
          %s9515 = scalar_lea.vmem [#allocation2], %s9514
          %9517 = dma.done %s9512, 8192
        $region104: #{aspp_forward.3} parent=99 // pred_fallthru
          _
      $region100: #{aspp_forward.3} parent=5 // pred_fallthru
        _
    $region6: #{aspp_forward.3} parent=1 // loop_footer
      %s31 = sadd.s32 1, %s27
    $region7: #{aspp_forward.3} parent=1 // loop_footer_branch
      %26 = sbr.rel target = $region3
    $region8: #{aspp_forward.3} parent=1 // loop_exit
      _
    %9518 = vsyncpa [#allocation3], 1
    %s9519 = scalar_lea.sflag [#allocation3], 1
    %9520 = vsyncpa %s9519, 1

</llo_original>
